<compile_context>
chip_gen: v6e
topology: v6e:2x2x1
jax: 0.10.0
libtpu: 0.0.40
codegen_flags: <defaults>
</compile_context>

<pallas_src>
import functools

import jax
import jax.numpy as jnp
from jax import lax
from jax.experimental import pallas as pl
from jax.experimental.pallas import tpu as pltpu

IN_DIM = 3
HIDDEN = 64
OUT_DIM = 3

H_PAD = 128    # each gate / the hidden state padded to one full 128-lane block
OUT_PAD = 128  # lane-dense output slab; wrapper slices to OUT_DIM


# ----------------------------------------------------------------------------
# Kernel
# ----------------------------------------------------------------------------
def _lstm_pinn_kernel(x_ref, wih0_ref, b0_ref, whh0_ref,
                      wih1_ref, whh1_ref, b1_ref,
                      wf1_ref, bf1_ref, wf2_ref, bf2_ref,
                      out_ref,
                      ih0_scr, h1_scr,
                      *, batch_pad, unroll):
    rows = x_ref.shape[0]
    t_steps = rows // batch_pad

    # ---- prologue: non-recurrent layer-0 input projection (one big matmul) ----
    ih0_scr[...] = (
        jnp.dot(x_ref[...], wih0_ref[...], preferred_element_type=jnp.float32)
        + b0_ref[...])

    # hoist the layer-1 bias broadcast out of the loop
    b1 = jnp.broadcast_to(b1_ref[...], (batch_pad, 4 * H_PAD))

    def cell(ih, h, c, whh):
        # gates packed as [i | f | o | g], each gate in its own 128-lane block
        gates = ih + jnp.dot(h, whh, preferred_element_type=jnp.float32)
        ifo = jax.nn.sigmoid(gates[:, :3 * H_PAD])      # one contiguous EUP slab
        i = ifo[:, 0 * H_PAD:1 * H_PAD]
        f = ifo[:, 1 * H_PAD:2 * H_PAD]
        o = ifo[:, 2 * H_PAD:3 * H_PAD]
        g = jnp.tanh(gates[:, 3 * H_PAD:4 * H_PAD])
        c_new = f * c + i * g
        h_new = o * jnp.tanh(c_new)
        return h_new, c_new

    def step(t, carry):
        h0, c0, h1, c1 = carry
        off = pl.multiple_of(t * batch_pad, batch_pad)
        ih0 = ih0_scr[pl.ds(off, batch_pad), :]
        h0, c0 = cell(ih0, h0, c0, whh0_ref[...])
        ih1 = jnp.dot(h0, wih1_ref[...], preferred_element_type=jnp.float32) + b1
        h1, c1 = cell(ih1, h1, c1, whh1_ref[...])
        h1_scr[pl.ds(off, batch_pad), :] = h1
        return h0, c0, h1, c1

    zeros = jnp.zeros((batch_pad, H_PAD), jnp.float32)
    lax.fori_loop(0, t_steps, step, (zeros, zeros, zeros, zeros), unroll=unroll)

    # ---- epilogue: fc head over the whole sequence (MXU-friendly matmuls) ----
    h_all = h1_scr[...]
    z = jnp.tanh(jnp.dot(h_all, wf1_ref[...], preferred_element_type=jnp.float32)
                 + bf1_ref[...])
    y = jnp.dot(z, wf2_ref[...], preferred_element_type=jnp.float32) + bf2_ref[...]
    out_ref[...] = y.astype(out_ref.dtype)   # single lane-dense store


# ----------------------------------------------------------------------------
# Parameter packing (wrapper-side, one-time): gate reorder + 128-lane padding
# ----------------------------------------------------------------------------
def _pack_gate_cols(w):
    """(rows, 4*HIDDEN) in PyTorch i,f,g,o order -> (rows, 4*H_PAD), order i,f,o,g,
    each gate zero-padded to its own 128-lane-aligned block."""
    rows = w.shape[0]
    w4 = w.reshape(rows, 4, HIDDEN)
    w4 = jnp.take(w4, jnp.array([0, 1, 3, 2]), axis=1)     # i,f,g,o -> i,f,o,g
    out = jnp.zeros((rows, 4, H_PAD), w.dtype).at[:, :, :HIDDEN].set(w4)
    return out.reshape(rows, 4 * H_PAD)


def _pad_rows(w, rows_pad):
    return jnp.zeros((rows_pad, w.shape[1]), w.dtype).at[:w.shape[0], :].set(w)


def _pack_params(p):
    wf1 = jnp.zeros((H_PAD, H_PAD), jnp.float32).at[:HIDDEN, :HIDDEN].set(p['wf1'])
    bf1 = jnp.zeros((1, H_PAD), jnp.float32).at[:, :HIDDEN].set(p['bf1'])
    wf2 = jnp.zeros((H_PAD, OUT_PAD), jnp.float32).at[:HIDDEN, :OUT_DIM].set(p['wf2'])
    bf2 = jnp.zeros((1, OUT_PAD), jnp.float32).at[:, :OUT_DIM].set(p['bf2'])
    return {
        'wih0': _pack_gate_cols(p['wih0']),                    # (IN_DIM, 4*H_PAD)
        'whh0': _pad_rows(_pack_gate_cols(p['whh0']), H_PAD),  # (H_PAD, 4*H_PAD)
        'b0':   _pack_gate_cols(p['b0']),                      # (1, 4*H_PAD)
        'wih1': _pad_rows(_pack_gate_cols(p['wih1']), H_PAD),
        'whh1': _pad_rows(_pack_gate_cols(p['whh1']), H_PAD),
        'b1':   _pack_gate_cols(p['b1']),
        'wf1': wf1, 'bf1': bf1, 'wf2': wf2, 'bf2': bf2,
    }


# ----------------------------------------------------------------------------
# Wrapper
# ----------------------------------------------------------------------------
def lstm_pinn_forward(x, params):
    """x: (B, T, IN_DIM), batch-first like PyTorch. Returns (B, T, OUT_DIM)."""
    B, T, Din = x.shape
    assert Din == IN_DIM
    B_pad = max(8, ((B + 7) // 8) * 8)   # pad batch to the 8-sublane tile
    rows = T * B_pad

    packed = _pack_params(params)

    # (B,T,D) -> time-major, batch padded, flattened to (T*B_pad, D)
    x_tm = jnp.transpose(x, (1, 0, 2)).astype(jnp.float32)
    x_tm = jnp.pad(x_tm, ((0, 0), (0, B_pad - B), (0, 0)))
    x_flat = x_tm.reshape(rows, IN_DIM)

    def full(shape):
        return pl.BlockSpec(shape, lambda i, _s=shape: (0,) * len(_s))

    weight_args = (packed['wih0'], packed['b0'], packed['whh0'],
                   packed['wih1'], packed['whh1'], packed['b1'],
                   packed['wf1'], packed['bf1'], packed['wf2'], packed['bf2'])

    kernel = functools.partial(_lstm_pinn_kernel,
                               batch_pad=B_pad, unroll=(T <= 32))

    out_flat = pl.pallas_call(
        kernel,
        out_shape=jax.ShapeDtypeStruct((rows, OUT_PAD), jnp.float32),
        grid_spec=pltpu.PrefetchScalarGridSpec(
            num_scalar_prefetch=0,
            grid=(1,),  # single invocation: whole sequence resident in VMEM
            in_specs=[full((rows, IN_DIM))] + [full(w.shape) for w in weight_args],
            out_specs=full((rows, OUT_PAD)),
            scratch_shapes=[
                pltpu.VMEM((rows, 4 * H_PAD), jnp.float32),  # ih0 = x @ Wih0 + b0
                pltpu.VMEM((rows, H_PAD), jnp.float32),      # h1 history for fc head
            ],
        ),
        compiler_params=pltpu.CompilerParams(
            dimension_semantics=("arbitrary",)),
    )(x_flat, *weight_args)
    # TODO(synk): for very long T, chunk the time axis (grid over blocks of a few
    # hundred steps) so the ih0 / h1 scratch buffers stay within VMEM (64 MiB on v7x).

    out = out_flat.reshape(T, B_pad, OUT_PAD)[:, :B, :OUT_DIM]
    return jnp.transpose(out, (1, 0, 2)).astype(x.dtype)


# ----------------------------------------------------------------------------
# Params + pure-JAX reference (PyTorch semantics)
# ----------------------------------------------------------------------------
def init_params(key):
    """Deterministic params matching nn.LSTM(3,64,2) + Linear(64,64)+Linear(64,3).

    Weights stored transposed (in_features, out_features), gate order i,f,g,o,
    both LSTM biases (b_ih + b_hh) pre-summed into one vector."""
    ks = jax.random.split(key, 10)
    scale = 1.0 / jnp.sqrt(HIDDEN)
    u = lambda k, shape: jax.random.uniform(k, shape, jnp.float32, -scale, scale)
    return {
        'wih0': u(ks[0], (IN_DIM, 4 * HIDDEN)),
        'whh0': u(ks[1], (HIDDEN, 4 * HIDDEN)),
        'b0':   u(ks[2], (1, 4 * HIDDEN)),
        'wih1': u(ks[3], (HIDDEN, 4 * HIDDEN)),
        'whh1': u(ks[4], (HIDDEN, 4 * HIDDEN)),
        'b1':   u(ks[5], (1, 4 * HIDDEN)),
        'wf1':  u(ks[6], (HIDDEN, HIDDEN)),
        'bf1':  u(ks[7], (1, HIDDEN)),
        'wf2':  u(ks[8], (HIDDEN, OUT_DIM)),
        'bf2':  u(ks[9], (1, OUT_DIM)),
    }


def reference_forward(x, params):
    """Pure-JAX reference of the PyTorch forward (for correctness check)."""
    B, T, _ = x.shape

    def run_layer(xs, wih, whh, b):
        def step(carry, xt):
            h, c = carry
            gates = xt @ wih + h @ whh + b
            i, f, g, o = jnp.split(gates, 4, axis=-1)
            i = jax.nn.sigmoid(i)
            f = jax.nn.sigmoid(f)
            g = jnp.tanh(g)
            o = jax.nn.sigmoid(o)
            c = f * c + i * g
            h = o * jnp.tanh(c)
            return (h, c), h

        init = (jnp.zeros((B, HIDDEN), jnp.float32),
                jnp.zeros((B, HIDDEN), jnp.float32))
        _, hs = jax.lax.scan(step, init, jnp.transpose(xs, (1, 0, 2)))
        return jnp.transpose(hs, (1, 0, 2))

    h = run_layer(x, params['wih0'], params['whh0'], params['b0'])
    h = run_layer(h, params['wih1'], params['whh1'], params['b1'])
    z = jnp.tanh(h @ params['wf1'] + params['bf1'])
    return z @ params['wf2'] + params['bf2']


if __name__ == "__main__":
    key = jax.random.PRNGKey(0)
    k_x, k_p = jax.random.split(key)

    B, T = 2, 8
    x = jax.random.normal(k_x, (B, T, IN_DIM), jnp.float32)
    params = init_params(k_p)

    out = jax.block_until_ready(lstm_pinn_forward(x, params))
    ref = jax.block_until_ready(reference_forward(x, params))

    assert out.shape == (B, T, OUT_DIM)
    assert jnp.allclose(out, ref, rtol=1e-4, atol=1e-4), "mismatch vs JAX reference"
    print("KERNEL_OK")
</pallas_src>

<mosaic_0001>
module attributes {stable_mosaic.version = 11 : i64} {
  func.func @_lstm_pinn_kernel(%arg0: i32, %arg1: memref<64x3xf32, #tpu.memory_space<vmem>>, %arg2: memref<3x512xf32, #tpu.memory_space<vmem>>, %arg3: memref<1x512xf32, #tpu.memory_space<vmem>>, %arg4: memref<128x512xf32, #tpu.memory_space<vmem>>, %arg5: memref<128x512xf32, #tpu.memory_space<vmem>>, %arg6: memref<128x512xf32, #tpu.memory_space<vmem>>, %arg7: memref<1x512xf32, #tpu.memory_space<vmem>>, %arg8: memref<128x128xf32, #tpu.memory_space<vmem>>, %arg9: memref<1x128xf32, #tpu.memory_space<vmem>>, %arg10: memref<128x128xf32, #tpu.memory_space<vmem>>, %arg11: memref<1x128xf32, #tpu.memory_space<vmem>>, %arg12: memref<64x128xf32, #tpu.memory_space<vmem>>, %arg13: memref<64x512xf32, #tpu.memory_space<vmem>>, %arg14: memref<64x128xf32, #tpu.memory_space<vmem>>) attributes {dimension_semantics = [#tpu.dimension_semantics<arbitrary>], iteration_bounds = array<i64: 1>, scalar_prefetch = 0 : i64, scratch_operands = 2 : i64, tpu.core_type = #tpu.core_type<tc>, window_params = [{pipeline_mode = #tpu.pipeline_mode<synchronous>, transform_indices = @transform_0, window_bounds = array<i64: 64, 3>}, {pipeline_mode = #tpu.pipeline_mode<synchronous>, transform_indices = @transform_1, window_bounds = array<i64: 3, 512>}, {pipeline_mode = #tpu.pipeline_mode<synchronous>, transform_indices = @transform_2, window_bounds = array<i64: 1, 512>}, {pipeline_mode = #tpu.pipeline_mode<synchronous>, transform_indices = @transform_3, window_bounds = array<i64: 128, 512>}, {pipeline_mode = #tpu.pipeline_mode<synchronous>, transform_indices = @transform_4, window_bounds = array<i64: 128, 512>}, {pipeline_mode = #tpu.pipeline_mode<synchronous>, transform_indices = @transform_5, window_bounds = array<i64: 128, 512>}, {pipeline_mode = #tpu.pipeline_mode<synchronous>, transform_indices = @transform_6, window_bounds = array<i64: 1, 512>}, {pipeline_mode = #tpu.pipeline_mode<synchronous>, transform_indices = @transform_7, window_bounds = array<i64: 128, 128>}, {pipeline_mode = #tpu.pipeline_mode<synchronous>, transform_indices = @transform_8, window_bounds = array<i64: 1, 128>}, {pipeline_mode = #tpu.pipeline_mode<synchronous>, transform_indices = @transform_9, window_bounds = array<i64: 128, 128>}, {pipeline_mode = #tpu.pipeline_mode<synchronous>, transform_indices = @transform_10, window_bounds = array<i64: 1, 128>}, {pipeline_mode = #tpu.pipeline_mode<synchronous>, transform_indices = @transform_11, window_bounds = array<i64: 64, 128>}]} {
    %c0 = arith.constant 0 : index
    %c0_0 = arith.constant 0 : index
    %0 = vector.load %arg1[%c0, %c0_0] : memref<64x3xf32, #tpu.memory_space<vmem>>, vector<64x3xf32>
    %c0_1 = arith.constant 0 : index
    %c0_2 = arith.constant 0 : index
    %1 = vector.load %arg2[%c0_1, %c0_2] : memref<3x512xf32, #tpu.memory_space<vmem>>, vector<3x512xf32>
    %cst = arith.constant dense<0.000000e+00> : vector<64x512xf32>
    %2 = tpu.matmul %0, %1, %cst {dimension_numbers = #tpu.dot_dimension_numbers<[1], [0], [0], [1], [0, 0, 1, 1], [], []>} : vector<64x3xf32>, vector<3x512xf32>, vector<64x512xf32> -> vector<64x512xf32>
    %c0_3 = arith.constant 0 : index
    %c0_4 = arith.constant 0 : index
    %3 = vector.load %arg3[%c0_3, %c0_4] : memref<1x512xf32, #tpu.memory_space<vmem>>, vector<1x512xf32>
    %4 = vector.broadcast %3 : vector<1x512xf32> to vector<64x512xf32>
    %5 = arith.addf %2, %4 : vector<64x512xf32>
    %c0_5 = arith.constant 0 : index
    %c0_6 = arith.constant 0 : index
    %6 = vector.load %arg13[%c0_5, %c0_6] : memref<64x512xf32, #tpu.memory_space<vmem>>, vector<64x512xf32>
    tpu.vector_store %arg13[%c0_5, %c0_6], %5 {strides = array<i32>} : memref<64x512xf32, #tpu.memory_space<vmem>>, vector<64x512xf32>,
    %c0_7 = arith.constant 0 : index
    %c0_8 = arith.constant 0 : index
    %7 = vector.load %arg7[%c0_7, %c0_8] : memref<1x512xf32, #tpu.memory_space<vmem>>, vector<1x512xf32>
    %8 = vector.shape_cast %7 : vector<1x512xf32> to vector<1x512xf32>
    %9 = vector.broadcast %8 : vector<1x512xf32> to vector<8x512xf32>
    %cst_9 = arith.constant 0.000000e+00 : f32
    %10 = vector.broadcast %cst_9 : f32 to vector<8x128xf32>
    %c0_i32 = arith.constant 0 : i32
    %c8_i32 = arith.constant 8 : i32
    %11 = arith.muli %c0_i32, %c8_i32 : i32
    %12 = tpu.assume_multiple %11, 8 : i32
    %13 = arith.index_cast %12 : i32 to index
    %c0_10 = arith.constant 0 : index
    %14 = vector.load %arg13[%13, %c0_10] : memref<64x512xf32, #tpu.memory_space<vmem>>, vector<8x512xf32>
    %c0_11 = arith.constant 0 : index
    %c0_12 = arith.constant 0 : index
    %15 = vector.load %arg4[%c0_11, %c0_12] : memref<128x512xf32, #tpu.memory_space<vmem>>, vector<128x512xf32>
    %cst_13 = arith.constant dense<0.000000e+00> : vector<8x512xf32>
    %16 = tpu.matmul %10, %15, %cst_13 {dimension_numbers = #tpu.dot_dimension_numbers<[1], [0], [0], [1], [0, 0, 1, 1], [], []>} : vector<8x128xf32>, vector<128x512xf32>, vector<8x512xf32> -> vector<8x512xf32>
    %17 = arith.addf %14, %16 : vector<8x512xf32>
    %18 = vector.extract_strided_slice %17 {offsets = [0, 0], sizes = [8, 384], strides = [1, 1]} : vector<8x512xf32> to vector<8x384xf32>
    %19 = arith.negf %18 : vector<8x384xf32>
    %20 = math.exp %19 : vector<8x384xf32>
    %cst_14 = arith.constant 1.000000e+00 : f32
    %21 = vector.broadcast %cst_14 : f32 to vector<8x384xf32>
    %22 = arith.addf %21, %20 : vector<8x384xf32>
    %23 = arith.divf %21, %22 : vector<8x384xf32>
    %24 = vector.extract_strided_slice %23 {offsets = [0, 0], sizes = [8, 128], strides = [1, 1]} : vector<8x384xf32> to vector<8x128xf32>
    %25 = vector.extract_strided_slice %23 {offsets = [0, 128], sizes = [8, 128], strides = [1, 1]} : vector<8x384xf32> to vector<8x128xf32>
    %26 = vector.extract_strided_slice %23 {offsets = [0, 256], sizes = [8, 128], strides = [1, 1]} : vector<8x384xf32> to vector<8x128xf32>
    %27 = vector.extract_strided_slice %17 {offsets = [0, 384], sizes = [8, 128], strides = [1, 1]} : vector<8x512xf32> to vector<8x128xf32>
    %28 = math.tanh %27 : vector<8x128xf32>
    %29 = arith.mulf %25, %10 : vector<8x128xf32>
    %30 = arith.mulf %24, %28 : vector<8x128xf32>
    %31 = arith.addf %29, %30 : vector<8x128xf32>
    %32 = math.tanh %31 : vector<8x128xf32>
    %33 = arith.mulf %26, %32 : vector<8x128xf32>
    %c0_15 = arith.constant 0 : index
    %c0_16 = arith.constant 0 : index
    %34 = vector.load %arg5[%c0_15, %c0_16] : memref<128x512xf32, #tpu.memory_space<vmem>>, vector<128x512xf32>
    %cst_17 = arith.constant dense<0.000000e+00> : vector<8x512xf32>
    %35 = tpu.matmul %33, %34, %cst_17 {dimension_numbers = #tpu.dot_dimension_numbers<[1], [0], [0], [1], [0, 0, 1, 1], [], []>} : vector<8x128xf32>, vector<128x512xf32>, vector<8x512xf32> -> vector<8x512xf32>
    %36 = arith.addf %35, %9 : vector<8x512xf32>
    %c0_18 = arith.constant 0 : index
    %c0_19 = arith.constant 0 : index
    %37 = vector.load %arg6[%c0_18, %c0_19] : memref<128x512xf32, #tpu.memory_space<vmem>>, vector<128x512xf32>
    %cst_20 = arith.constant dense<0.000000e+00> : vector<8x512xf32>
    %38 = tpu.matmul %10, %37, %cst_20 {dimension_numbers = #tpu.dot_dimension_numbers<[1], [0], [0], [1], [0, 0, 1, 1], [], []>} : vector<8x128xf32>, vector<128x512xf32>, vector<8x512xf32> -> vector<8x512xf32>
    %39 = arith.addf %36, %38 : vector<8x512xf32>
    %40 = vector.extract_strided_slice %39 {offsets = [0, 0], sizes = [8, 384], strides = [1, 1]} : vector<8x512xf32> to vector<8x384xf32>
    %41 = arith.negf %40 : vector<8x384xf32>
    %42 = math.exp %41 : vector<8x384xf32>
    %cst_21 = arith.constant 1.000000e+00 : f32
    %43 = vector.broadcast %cst_21 : f32 to vector<8x384xf32>
    %44 = arith.addf %43, %42 : vector<8x384xf32>
    %45 = arith.divf %43, %44 : vector<8x384xf32>
    %46 = vector.extract_strided_slice %45 {offsets = [0, 0], sizes = [8, 128], strides = [1, 1]} : vector<8x384xf32> to vector<8x128xf32>
    %47 = vector.extract_strided_slice %45 {offsets = [0, 128], sizes = [8, 128], strides = [1, 1]} : vector<8x384xf32> to vector<8x128xf32>
    %48 = vector.extract_strided_slice %45 {offsets = [0, 256], sizes = [8, 128], strides = [1, 1]} : vector<8x384xf32> to vector<8x128xf32>
    %49 = vector.extract_strided_slice %39 {offsets = [0, 384], sizes = [8, 128], strides = [1, 1]} : vector<8x512xf32> to vector<8x128xf32>
    %50 = math.tanh %49 : vector<8x128xf32>
    %51 = arith.mulf %47, %10 : vector<8x128xf32>
    %52 = arith.mulf %46, %50 : vector<8x128xf32>
    %53 = arith.addf %51, %52 : vector<8x128xf32>
    %54 = math.tanh %53 : vector<8x128xf32>
    %55 = arith.mulf %48, %54 : vector<8x128xf32>
    %56 = arith.index_cast %12 : i32 to index
    %c0_22 = arith.constant 0 : index
    %57 = vector.load %arg14[%56, %c0_22] : memref<64x128xf32, #tpu.memory_space<vmem>>, vector<8x128xf32>
    tpu.vector_store %arg14[%56, %c0_22], %55 {strides = array<i32>} : memref<64x128xf32, #tpu.memory_space<vmem>>, vector<8x128xf32>,
    %c1_i32 = arith.constant 1 : i32
    %c8_i32_23 = arith.constant 8 : i32
    %58 = arith.muli %c1_i32, %c8_i32_23 : i32
    %59 = tpu.assume_multiple %58, 8 : i32
    %60 = arith.index_cast %59 : i32 to index
    %c0_24 = arith.constant 0 : index
    %61 = vector.load %arg13[%60, %c0_24] : memref<64x512xf32, #tpu.memory_space<vmem>>, vector<8x512xf32>
    %c0_25 = arith.constant 0 : index
    %c0_26 = arith.constant 0 : index
    %62 = vector.load %arg4[%c0_25, %c0_26] : memref<128x512xf32, #tpu.memory_space<vmem>>, vector<128x512xf32>
    %cst_27 = arith.constant dense<0.000000e+00> : vector<8x512xf32>
    %63 = tpu.matmul %33, %62, %cst_27 {dimension_numbers = #tpu.dot_dimension_numbers<[1], [0], [0], [1], [0, 0, 1, 1], [], []>} : vector<8x128xf32>, vector<128x512xf32>, vector<8x512xf32> -> vector<8x512xf32>
    %64 = arith.addf %61, %63 : vector<8x512xf32>
    %65 = vector.extract_strided_slice %64 {offsets = [0, 0], sizes = [8, 384], strides = [1, 1]} : vector<8x512xf32> to vector<8x384xf32>
    %66 = arith.negf %65 : vector<8x384xf32>
    %67 = math.exp %66 : vector<8x384xf32>
    %cst_28 = arith.constant 1.000000e+00 : f32
    %68 = vector.broadcast %cst_28 : f32 to vector<8x384xf32>
    %69 = arith.addf %68, %67 : vector<8x384xf32>
    %70 = arith.divf %68, %69 : vector<8x384xf32>
    %71 = vector.extract_strided_slice %70 {offsets = [0, 0], sizes = [8, 128], strides = [1, 1]} : vector<8x384xf32> to vector<8x128xf32>
    %72 = vector.extract_strided_slice %70 {offsets = [0, 128], sizes = [8, 128], strides = [1, 1]} : vector<8x384xf32> to vector<8x128xf32>
    %73 = vector.extract_strided_slice %70 {offsets = [0, 256], sizes = [8, 128], strides = [1, 1]} : vector<8x384xf32> to vector<8x128xf32>
    %74 = vector.extract_strided_slice %64 {offsets = [0, 384], sizes = [8, 128], strides = [1, 1]} : vector<8x512xf32> to vector<8x128xf32>
    %75 = math.tanh %74 : vector<8x128xf32>
    %76 = arith.mulf %72, %31 : vector<8x128xf32>
    %77 = arith.mulf %71, %75 : vector<8x128xf32>
    %78 = arith.addf %76, %77 : vector<8x128xf32>
    %79 = math.tanh %78 : vector<8x128xf32>
    %80 = arith.mulf %73, %79 : vector<8x128xf32>
    %c0_29 = arith.constant 0 : index
    %c0_30 = arith.constant 0 : index
    %81 = vector.load %arg5[%c0_29, %c0_30] : memref<128x512xf32, #tpu.memory_space<vmem>>, vector<128x512xf32>
    %cst_31 = arith.constant dense<0.000000e+00> : vector<8x512xf32>
    %82 = tpu.matmul %80, %81, %cst_31 {dimension_numbers = #tpu.dot_dimension_numbers<[1], [0], [0], [1], [0, 0, 1, 1], [], []>} : vector<8x128xf32>, vector<128x512xf32>, vector<8x512xf32> -> vector<8x512xf32>
    %83 = arith.addf %82, %9 : vector<8x512xf32>
    %c0_32 = arith.constant 0 : index
    %c0_33 = arith.constant 0 : index
    %84 = vector.load %arg6[%c0_32, %c0_33] : memref<128x512xf32, #tpu.memory_space<vmem>>, vector<128x512xf32>
    %cst_34 = arith.constant dense<0.000000e+00> : vector<8x512xf32>
    %85 = tpu.matmul %55, %84, %cst_34 {dimension_numbers = #tpu.dot_dimension_numbers<[1], [0], [0], [1], [0, 0, 1, 1], [], []>} : vector<8x128xf32>, vector<128x512xf32>, vector<8x512xf32> -> vector<8x512xf32>
    %86 = arith.addf %83, %85 : vector<8x512xf32>
    %87 = vector.extract_strided_slice %86 {offsets = [0, 0], sizes = [8, 384], strides = [1, 1]} : vector<8x512xf32> to vector<8x384xf32>
    %88 = arith.negf %87 : vector<8x384xf32>
    %89 = math.exp %88 : vector<8x384xf32>
    %cst_35 = arith.constant 1.000000e+00 : f32
    %90 = vector.broadcast %cst_35 : f32 to vector<8x384xf32>
    %91 = arith.addf %90, %89 : vector<8x384xf32>
    %92 = arith.divf %90, %91 : vector<8x384xf32>
    %93 = vector.extract_strided_slice %92 {offsets = [0, 0], sizes = [8, 128], strides = [1, 1]} : vector<8x384xf32> to vector<8x128xf32>
    %94 = vector.extract_strided_slice %92 {offsets = [0, 128], sizes = [8, 128], strides = [1, 1]} : vector<8x384xf32> to vector<8x128xf32>
    %95 = vector.extract_strided_slice %92 {offsets = [0, 256], sizes = [8, 128], strides = [1, 1]} : vector<8x384xf32> to vector<8x128xf32>
    %96 = vector.extract_strided_slice %86 {offsets = [0, 384], sizes = [8, 128], strides = [1, 1]} : vector<8x512xf32> to vector<8x128xf32>
    %97 = math.tanh %96 : vector<8x128xf32>
    %98 = arith.mulf %94, %53 : vector<8x128xf32>
    %99 = arith.mulf %93, %97 : vector<8x128xf32>
    %100 = arith.addf %98, %99 : vector<8x128xf32>
    %101 = math.tanh %100 : vector<8x128xf32>
    %102 = arith.mulf %95, %101 : vector<8x128xf32>
    %103 = arith.index_cast %59 : i32 to index
    %c0_36 = arith.constant 0 : index
    %104 = vector.load %arg14[%103, %c0_36] : memref<64x128xf32, #tpu.memory_space<vmem>>, vector<8x128xf32>
    tpu.vector_store %arg14[%103, %c0_36], %102 {strides = array<i32>} : memref<64x128xf32, #tpu.memory_space<vmem>>, vector<8x128xf32>,
    %c2_i32 = arith.constant 2 : i32
    %c8_i32_37 = arith.constant 8 : i32
    %105 = arith.muli %c2_i32, %c8_i32_37 : i32
    %106 = tpu.assume_multiple %105, 8 : i32
    %107 = arith.index_cast %106 : i32 to index
    %c0_38 = arith.constant 0 : index
    %108 = vector.load %arg13[%107, %c0_38] : memref<64x512xf32, #tpu.memory_space<vmem>>, vector<8x512xf32>
    %c0_39 = arith.constant 0 : index
    %c0_40 = arith.constant 0 : index
    %109 = vector.load %arg4[%c0_39, %c0_40] : memref<128x512xf32, #tpu.memory_space<vmem>>, vector<128x512xf32>
    %cst_41 = arith.constant dense<0.000000e+00> : vector<8x512xf32>
    %110 = tpu.matmul %80, %109, %cst_41 {dimension_numbers = #tpu.dot_dimension_numbers<[1], [0], [0], [1], [0, 0, 1, 1], [], []>} : vector<8x128xf32>, vector<128x512xf32>, vector<8x512xf32> -> vector<8x512xf32>
    %111 = arith.addf %108, %110 : vector<8x512xf32>
    %112 = vector.extract_strided_slice %111 {offsets = [0, 0], sizes = [8, 384], strides = [1, 1]} : vector<8x512xf32> to vector<8x384xf32>
    %113 = arith.negf %112 : vector<8x384xf32>
    %114 = math.exp %113 : vector<8x384xf32>
    %cst_42 = arith.constant 1.000000e+00 : f32
    %115 = vector.broadcast %cst_42 : f32 to vector<8x384xf32>
    %116 = arith.addf %115, %114 : vector<8x384xf32>
    %117 = arith.divf %115, %116 : vector<8x384xf32>
    %118 = vector.extract_strided_slice %117 {offsets = [0, 0], sizes = [8, 128], strides = [1, 1]} : vector<8x384xf32> to vector<8x128xf32>
    %119 = vector.extract_strided_slice %117 {offsets = [0, 128], sizes = [8, 128], strides = [1, 1]} : vector<8x384xf32> to vector<8x128xf32>
    %120 = vector.extract_strided_slice %117 {offsets = [0, 256], sizes = [8, 128], strides = [1, 1]} : vector<8x384xf32> to vector<8x128xf32>
    %121 = vector.extract_strided_slice %111 {offsets = [0, 384], sizes = [8, 128], strides = [1, 1]} : vector<8x512xf32> to vector<8x128xf32>
    %122 = math.tanh %121 : vector<8x128xf32>
    %123 = arith.mulf %119, %78 : vector<8x128xf32>
    %124 = arith.mulf %118, %122 : vector<8x128xf32>
    %125 = arith.addf %123, %124 : vector<8x128xf32>
    %126 = math.tanh %125 : vector<8x128xf32>
    %127 = arith.mulf %120, %126 : vector<8x128xf32>
    %c0_43 = arith.constant 0 : index
    %c0_44 = arith.constant 0 : index
    %128 = vector.load %arg5[%c0_43, %c0_44] : memref<128x512xf32, #tpu.memory_space<vmem>>, vector<128x512xf32>
    %cst_45 = arith.constant dense<0.000000e+00> : vector<8x512xf32>
    %129 = tpu.matmul %127, %128, %cst_45 {dimension_numbers = #tpu.dot_dimension_numbers<[1], [0], [0], [1], [0, 0, 1, 1], [], []>} : vector<8x128xf32>, vector<128x512xf32>, vector<8x512xf32> -> vector<8x512xf32>
    %130 = arith.addf %129, %9 : vector<8x512xf32>
    %c0_46 = arith.constant 0 : index
    %c0_47 = arith.constant 0 : index
    %131 = vector.load %arg6[%c0_46, %c0_47] : memref<128x512xf32, #tpu.memory_space<vmem>>, vector<128x512xf32>
    %cst_48 = arith.constant dense<0.000000e+00> : vector<8x512xf32>
    %132 = tpu.matmul %102, %131, %cst_48 {dimension_numbers = #tpu.dot_dimension_numbers<[1], [0], [0], [1], [0, 0, 1, 1], [], []>} : vector<8x128xf32>, vector<128x512xf32>, vector<8x512xf32> -> vector<8x512xf32>
    %133 = arith.addf %130, %132 : vector<8x512xf32>
    %134 = vector.extract_strided_slice %133 {offsets = [0, 0], sizes = [8, 384], strides = [1, 1]} : vector<8x512xf32> to vector<8x384xf32>
    %135 = arith.negf %134 : vector<8x384xf32>
    %136 = math.exp %135 : vector<8x384xf32>
    %cst_49 = arith.constant 1.000000e+00 : f32
    %137 = vector.broadcast %cst_49 : f32 to vector<8x384xf32>
    %138 = arith.addf %137, %136 : vector<8x384xf32>
    %139 = arith.divf %137, %138 : vector<8x384xf32>
    %140 = vector.extract_strided_slice %139 {offsets = [0, 0], sizes = [8, 128], strides = [1, 1]} : vector<8x384xf32> to vector<8x128xf32>
    %141 = vector.extract_strided_slice %139 {offsets = [0, 128], sizes = [8, 128], strides = [1, 1]} : vector<8x384xf32> to vector<8x128xf32>
    %142 = vector.extract_strided_slice %139 {offsets = [0, 256], sizes = [8, 128], strides = [1, 1]} : vector<8x384xf32> to vector<8x128xf32>
    %143 = vector.extract_strided_slice %133 {offsets = [0, 384], sizes = [8, 128], strides = [1, 1]} : vector<8x512xf32> to vector<8x128xf32>
    %144 = math.tanh %143 : vector<8x128xf32>
    %145 = arith.mulf %141, %100 : vector<8x128xf32>
    %146 = arith.mulf %140, %144 : vector<8x128xf32>
    %147 = arith.addf %145, %146 : vector<8x128xf32>
    %148 = math.tanh %147 : vector<8x128xf32>
    %149 = arith.mulf %142, %148 : vector<8x128xf32>
    %150 = arith.index_cast %106 : i32 to index
    %c0_50 = arith.constant 0 : index
    %151 = vector.load %arg14[%150, %c0_50] : memref<64x128xf32, #tpu.memory_space<vmem>>, vector<8x128xf32>
    tpu.vector_store %arg14[%150, %c0_50], %149 {strides = array<i32>} : memref<64x128xf32, #tpu.memory_space<vmem>>, vector<8x128xf32>,
    %c3_i32 = arith.constant 3 : i32
    %c8_i32_51 = arith.constant 8 : i32
    %152 = arith.muli %c3_i32, %c8_i32_51 : i32
    %153 = tpu.assume_multiple %152, 8 : i32
    %154 = arith.index_cast %153 : i32 to index
    %c0_52 = arith.constant 0 : index
    %155 = vector.load %arg13[%154, %c0_52] : memref<64x512xf32, #tpu.memory_space<vmem>>, vector<8x512xf32>
    %c0_53 = arith.constant 0 : index
    %c0_54 = arith.constant 0 : index
    %156 = vector.load %arg4[%c0_53, %c0_54] : memref<128x512xf32, #tpu.memory_space<vmem>>, vector<128x512xf32>
    %cst_55 = arith.constant dense<0.000000e+00> : vector<8x512xf32>
    %157 = tpu.matmul %127, %156, %cst_55 {dimension_numbers = #tpu.dot_dimension_numbers<[1], [0], [0], [1], [0, 0, 1, 1], [], []>} : vector<8x128xf32>, vector<128x512xf32>, vector<8x512xf32> -> vector<8x512xf32>
    %158 = arith.addf %155, %157 : vector<8x512xf32>
    %159 = vector.extract_strided_slice %158 {offsets = [0, 0], sizes = [8, 384], strides = [1, 1]} : vector<8x512xf32> to vector<8x384xf32>
    %160 = arith.negf %159 : vector<8x384xf32>
    %161 = math.exp %160 : vector<8x384xf32>
    %cst_56 = arith.constant 1.000000e+00 : f32
    %162 = vector.broadcast %cst_56 : f32 to vector<8x384xf32>
    %163 = arith.addf %162, %161 : vector<8x384xf32>
    %164 = arith.divf %162, %163 : vector<8x384xf32>
    %165 = vector.extract_strided_slice %164 {offsets = [0, 0], sizes = [8, 128], strides = [1, 1]} : vector<8x384xf32> to vector<8x128xf32>
    %166 = vector.extract_strided_slice %164 {offsets = [0, 128], sizes = [8, 128], strides = [1, 1]} : vector<8x384xf32> to vector<8x128xf32>
    %167 = vector.extract_strided_slice %164 {offsets = [0, 256], sizes = [8, 128], strides = [1, 1]} : vector<8x384xf32> to vector<8x128xf32>
    %168 = vector.extract_strided_slice %158 {offsets = [0, 384], sizes = [8, 128], strides = [1, 1]} : vector<8x512xf32> to vector<8x128xf32>
    %169 = math.tanh %168 : vector<8x128xf32>
    %170 = arith.mulf %166, %125 : vector<8x128xf32>
    %171 = arith.mulf %165, %169 : vector<8x128xf32>
    %172 = arith.addf %170, %171 : vector<8x128xf32>
    %173 = math.tanh %172 : vector<8x128xf32>
    %174 = arith.mulf %167, %173 : vector<8x128xf32>
    %c0_57 = arith.constant 0 : index
    %c0_58 = arith.constant 0 : index
    %175 = vector.load %arg5[%c0_57, %c0_58] : memref<128x512xf32, #tpu.memory_space<vmem>>, vector<128x512xf32>
    %cst_59 = arith.constant dense<0.000000e+00> : vector<8x512xf32>
    %176 = tpu.matmul %174, %175, %cst_59 {dimension_numbers = #tpu.dot_dimension_numbers<[1], [0], [0], [1], [0, 0, 1, 1], [], []>} : vector<8x128xf32>, vector<128x512xf32>, vector<8x512xf32> -> vector<8x512xf32>
    %177 = arith.addf %176, %9 : vector<8x512xf32>
    %c0_60 = arith.constant 0 : index
    %c0_61 = arith.constant 0 : index
    %178 = vector.load %arg6[%c0_60, %c0_61] : memref<128x512xf32, #tpu.memory_space<vmem>>, vector<128x512xf32>
    %cst_62 = arith.constant dense<0.000000e+00> : vector<8x512xf32>
    %179 = tpu.matmul %149, %178, %cst_62 {dimension_numbers = #tpu.dot_dimension_numbers<[1], [0], [0], [1], [0, 0, 1, 1], [], []>} : vector<8x128xf32>, vector<128x512xf32>, vector<8x512xf32> -> vector<8x512xf32>
    %180 = arith.addf %177, %179 : vector<8x512xf32>
    %181 = vector.extract_strided_slice %180 {offsets = [0, 0], sizes = [8, 384], strides = [1, 1]} : vector<8x512xf32> to vector<8x384xf32>
    %182 = arith.negf %181 : vector<8x384xf32>
    %183 = math.exp %182 : vector<8x384xf32>
    %cst_63 = arith.constant 1.000000e+00 : f32
    %184 = vector.broadcast %cst_63 : f32 to vector<8x384xf32>
    %185 = arith.addf %184, %183 : vector<8x384xf32>
    %186 = arith.divf %184, %185 : vector<8x384xf32>
    %187 = vector.extract_strided_slice %186 {offsets = [0, 0], sizes = [8, 128], strides = [1, 1]} : vector<8x384xf32> to vector<8x128xf32>
    %188 = vector.extract_strided_slice %186 {offsets = [0, 128], sizes = [8, 128], strides = [1, 1]} : vector<8x384xf32> to vector<8x128xf32>
    %189 = vector.extract_strided_slice %186 {offsets = [0, 256], sizes = [8, 128], strides = [1, 1]} : vector<8x384xf32> to vector<8x128xf32>
    %190 = vector.extract_strided_slice %180 {offsets = [0, 384], sizes = [8, 128], strides = [1, 1]} : vector<8x512xf32> to vector<8x128xf32>
    %191 = math.tanh %190 : vector<8x128xf32>
    %192 = arith.mulf %188, %147 : vector<8x128xf32>
    %193 = arith.mulf %187, %191 : vector<8x128xf32>
    %194 = arith.addf %192, %193 : vector<8x128xf32>
    %195 = math.tanh %194 : vector<8x128xf32>
    %196 = arith.mulf %189, %195 : vector<8x128xf32>
    %197 = arith.index_cast %153 : i32 to index
    %c0_64 = arith.constant 0 : index
    %198 = vector.load %arg14[%197, %c0_64] : memref<64x128xf32, #tpu.memory_space<vmem>>, vector<8x128xf32>
    tpu.vector_store %arg14[%197, %c0_64], %196 {strides = array<i32>} : memref<64x128xf32, #tpu.memory_space<vmem>>, vector<8x128xf32>,
    %c4_i32 = arith.constant 4 : i32
    %c8_i32_65 = arith.constant 8 : i32
    %199 = arith.muli %c4_i32, %c8_i32_65 : i32
    %200 = tpu.assume_multiple %199, 8 : i32
    %201 = arith.index_cast %200 : i32 to index
    %c0_66 = arith.constant 0 : index
    %202 = vector.load %arg13[%201, %c0_66] : memref<64x512xf32, #tpu.memory_space<vmem>>, vector<8x512xf32>
    %c0_67 = arith.constant 0 : index
    %c0_68 = arith.constant 0 : index
    %203 = vector.load %arg4[%c0_67, %c0_68] : memref<128x512xf32, #tpu.memory_space<vmem>>, vector<128x512xf32>
    %cst_69 = arith.constant dense<0.000000e+00> : vector<8x512xf32>
    %204 = tpu.matmul %174, %203, %cst_69 {dimension_numbers = #tpu.dot_dimension_numbers<[1], [0], [0], [1], [0, 0, 1, 1], [], []>} : vector<8x128xf32>, vector<128x512xf32>, vector<8x512xf32> -> vector<8x512xf32>
    %205 = arith.addf %202, %204 : vector<8x512xf32>
    %206 = vector.extract_strided_slice %205 {offsets = [0, 0], sizes = [8, 384], strides = [1, 1]} : vector<8x512xf32> to vector<8x384xf32>
    %207 = arith.negf %206 : vector<8x384xf32>
    %208 = math.exp %207 : vector<8x384xf32>
    %cst_70 = arith.constant 1.000000e+00 : f32
    %209 = vector.broadcast %cst_70 : f32 to vector<8x384xf32>
    %210 = arith.addf %209, %208 : vector<8x384xf32>
    %211 = arith.divf %209, %210 : vector<8x384xf32>
    %212 = vector.extract_strided_slice %211 {offsets = [0, 0], sizes = [8, 128], strides = [1, 1]} : vector<8x384xf32> to vector<8x128xf32>
    %213 = vector.extract_strided_slice %211 {offsets = [0, 128], sizes = [8, 128], strides = [1, 1]} : vector<8x384xf32> to vector<8x128xf32>
    %214 = vector.extract_strided_slice %211 {offsets = [0, 256], sizes = [8, 128], strides = [1, 1]} : vector<8x384xf32> to vector<8x128xf32>
    %215 = vector.extract_strided_slice %205 {offsets = [0, 384], sizes = [8, 128], strides = [1, 1]} : vector<8x512xf32> to vector<8x128xf32>
    %216 = math.tanh %215 : vector<8x128xf32>
    %217 = arith.mulf %213, %172 : vector<8x128xf32>
    %218 = arith.mulf %212, %216 : vector<8x128xf32>
    %219 = arith.addf %217, %218 : vector<8x128xf32>
    %220 = math.tanh %219 : vector<8x128xf32>
    %221 = arith.mulf %214, %220 : vector<8x128xf32>
    %c0_71 = arith.constant 0 : index
    %c0_72 = arith.constant 0 : index
    %222 = vector.load %arg5[%c0_71, %c0_72] : memref<128x512xf32, #tpu.memory_space<vmem>>, vector<128x512xf32>
    %cst_73 = arith.constant dense<0.000000e+00> : vector<8x512xf32>
    %223 = tpu.matmul %221, %222, %cst_73 {dimension_numbers = #tpu.dot_dimension_numbers<[1], [0], [0], [1], [0, 0, 1, 1], [], []>} : vector<8x128xf32>, vector<128x512xf32>, vector<8x512xf32> -> vector<8x512xf32>
    %224 = arith.addf %223, %9 : vector<8x512xf32>
    %c0_74 = arith.constant 0 : index
    %c0_75 = arith.constant 0 : index
    %225 = vector.load %arg6[%c0_74, %c0_75] : memref<128x512xf32, #tpu.memory_space<vmem>>, vector<128x512xf32>
    %cst_76 = arith.constant dense<0.000000e+00> : vector<8x512xf32>
    %226 = tpu.matmul %196, %225, %cst_76 {dimension_numbers = #tpu.dot_dimension_numbers<[1], [0], [0], [1], [0, 0, 1, 1], [], []>} : vector<8x128xf32>, vector<128x512xf32>, vector<8x512xf32> -> vector<8x512xf32>
    %227 = arith.addf %224, %226 : vector<8x512xf32>
    %228 = vector.extract_strided_slice %227 {offsets = [0, 0], sizes = [8, 384], strides = [1, 1]} : vector<8x512xf32> to vector<8x384xf32>
    %229 = arith.negf %228 : vector<8x384xf32>
    %230 = math.exp %229 : vector<8x384xf32>
    %cst_77 = arith.constant 1.000000e+00 : f32
    %231 = vector.broadcast %cst_77 : f32 to vector<8x384xf32>
    %232 = arith.addf %231, %230 : vector<8x384xf32>
    %233 = arith.divf %231, %232 : vector<8x384xf32>
    %234 = vector.extract_strided_slice %233 {offsets = [0, 0], sizes = [8, 128], strides = [1, 1]} : vector<8x384xf32> to vector<8x128xf32>
    %235 = vector.extract_strided_slice %233 {offsets = [0, 128], sizes = [8, 128], strides = [1, 1]} : vector<8x384xf32> to vector<8x128xf32>
    %236 = vector.extract_strided_slice %233 {offsets = [0, 256], sizes = [8, 128], strides = [1, 1]} : vector<8x384xf32> to vector<8x128xf32>
    %237 = vector.extract_strided_slice %227 {offsets = [0, 384], sizes = [8, 128], strides = [1, 1]} : vector<8x512xf32> to vector<8x128xf32>
    %238 = math.tanh %237 : vector<8x128xf32>
    %239 = arith.mulf %235, %194 : vector<8x128xf32>
    %240 = arith.mulf %234, %238 : vector<8x128xf32>
    %241 = arith.addf %239, %240 : vector<8x128xf32>
    %242 = math.tanh %241 : vector<8x128xf32>
    %243 = arith.mulf %236, %242 : vector<8x128xf32>
    %244 = arith.index_cast %200 : i32 to index
    %c0_78 = arith.constant 0 : index
    %245 = vector.load %arg14[%244, %c0_78] : memref<64x128xf32, #tpu.memory_space<vmem>>, vector<8x128xf32>
    tpu.vector_store %arg14[%244, %c0_78], %243 {strides = array<i32>} : memref<64x128xf32, #tpu.memory_space<vmem>>, vector<8x128xf32>,
    %c5_i32 = arith.constant 5 : i32
    %c8_i32_79 = arith.constant 8 : i32
    %246 = arith.muli %c5_i32, %c8_i32_79 : i32
    %247 = tpu.assume_multiple %246, 8 : i32
    %248 = arith.index_cast %247 : i32 to index
    %c0_80 = arith.constant 0 : index
    %249 = vector.load %arg13[%248, %c0_80] : memref<64x512xf32, #tpu.memory_space<vmem>>, vector<8x512xf32>
    %c0_81 = arith.constant 0 : index
    %c0_82 = arith.constant 0 : index
    %250 = vector.load %arg4[%c0_81, %c0_82] : memref<128x512xf32, #tpu.memory_space<vmem>>, vector<128x512xf32>
    %cst_83 = arith.constant dense<0.000000e+00> : vector<8x512xf32>
    %251 = tpu.matmul %221, %250, %cst_83 {dimension_numbers = #tpu.dot_dimension_numbers<[1], [0], [0], [1], [0, 0, 1, 1], [], []>} : vector<8x128xf32>, vector<128x512xf32>, vector<8x512xf32> -> vector<8x512xf32>
    %252 = arith.addf %249, %251 : vector<8x512xf32>
    %253 = vector.extract_strided_slice %252 {offsets = [0, 0], sizes = [8, 384], strides = [1, 1]} : vector<8x512xf32> to vector<8x384xf32>
    %254 = arith.negf %253 : vector<8x384xf32>
    %255 = math.exp %254 : vector<8x384xf32>
    %cst_84 = arith.constant 1.000000e+00 : f32
    %256 = vector.broadcast %cst_84 : f32 to vector<8x384xf32>
    %257 = arith.addf %256, %255 : vector<8x384xf32>
    %258 = arith.divf %256, %257 : vector<8x384xf32>
    %259 = vector.extract_strided_slice %258 {offsets = [0, 0], sizes = [8, 128], strides = [1, 1]} : vector<8x384xf32> to vector<8x128xf32>
    %260 = vector.extract_strided_slice %258 {offsets = [0, 128], sizes = [8, 128], strides = [1, 1]} : vector<8x384xf32> to vector<8x128xf32>
    %261 = vector.extract_strided_slice %258 {offsets = [0, 256], sizes = [8, 128], strides = [1, 1]} : vector<8x384xf32> to vector<8x128xf32>
    %262 = vector.extract_strided_slice %252 {offsets = [0, 384], sizes = [8, 128], strides = [1, 1]} : vector<8x512xf32> to vector<8x128xf32>
    %263 = math.tanh %262 : vector<8x128xf32>
    %264 = arith.mulf %260, %219 : vector<8x128xf32>
    %265 = arith.mulf %259, %263 : vector<8x128xf32>
    %266 = arith.addf %264, %265 : vector<8x128xf32>
    %267 = math.tanh %266 : vector<8x128xf32>
    %268 = arith.mulf %261, %267 : vector<8x128xf32>
    %c0_85 = arith.constant 0 : index
    %c0_86 = arith.constant 0 : index
    %269 = vector.load %arg5[%c0_85, %c0_86] : memref<128x512xf32, #tpu.memory_space<vmem>>, vector<128x512xf32>
    %cst_87 = arith.constant dense<0.000000e+00> : vector<8x512xf32>
    %270 = tpu.matmul %268, %269, %cst_87 {dimension_numbers = #tpu.dot_dimension_numbers<[1], [0], [0], [1], [0, 0, 1, 1], [], []>} : vector<8x128xf32>, vector<128x512xf32>, vector<8x512xf32> -> vector<8x512xf32>
    %271 = arith.addf %270, %9 : vector<8x512xf32>
    %c0_88 = arith.constant 0 : index
    %c0_89 = arith.constant 0 : index
    %272 = vector.load %arg6[%c0_88, %c0_89] : memref<128x512xf32, #tpu.memory_space<vmem>>, vector<128x512xf32>
    %cst_90 = arith.constant dense<0.000000e+00> : vector<8x512xf32>
    %273 = tpu.matmul %243, %272, %cst_90 {dimension_numbers = #tpu.dot_dimension_numbers<[1], [0], [0], [1], [0, 0, 1, 1], [], []>} : vector<8x128xf32>, vector<128x512xf32>, vector<8x512xf32> -> vector<8x512xf32>
    %274 = arith.addf %271, %273 : vector<8x512xf32>
    %275 = vector.extract_strided_slice %274 {offsets = [0, 0], sizes = [8, 384], strides = [1, 1]} : vector<8x512xf32> to vector<8x384xf32>
    %276 = arith.negf %275 : vector<8x384xf32>
    %277 = math.exp %276 : vector<8x384xf32>
    %cst_91 = arith.constant 1.000000e+00 : f32
    %278 = vector.broadcast %cst_91 : f32 to vector<8x384xf32>
    %279 = arith.addf %278, %277 : vector<8x384xf32>
    %280 = arith.divf %278, %279 : vector<8x384xf32>
    %281 = vector.extract_strided_slice %280 {offsets = [0, 0], sizes = [8, 128], strides = [1, 1]} : vector<8x384xf32> to vector<8x128xf32>
    %282 = vector.extract_strided_slice %280 {offsets = [0, 128], sizes = [8, 128], strides = [1, 1]} : vector<8x384xf32> to vector<8x128xf32>
    %283 = vector.extract_strided_slice %280 {offsets = [0, 256], sizes = [8, 128], strides = [1, 1]} : vector<8x384xf32> to vector<8x128xf32>
    %284 = vector.extract_strided_slice %274 {offsets = [0, 384], sizes = [8, 128], strides = [1, 1]} : vector<8x512xf32> to vector<8x128xf32>
    %285 = math.tanh %284 : vector<8x128xf32>
    %286 = arith.mulf %282, %241 : vector<8x128xf32>
    %287 = arith.mulf %281, %285 : vector<8x128xf32>
    %288 = arith.addf %286, %287 : vector<8x128xf32>
    %289 = math.tanh %288 : vector<8x128xf32>
    %290 = arith.mulf %283, %289 : vector<8x128xf32>
    %291 = arith.index_cast %247 : i32 to index
    %c0_92 = arith.constant 0 : index
    %292 = vector.load %arg14[%291, %c0_92] : memref<64x128xf32, #tpu.memory_space<vmem>>, vector<8x128xf32>
    tpu.vector_store %arg14[%291, %c0_92], %290 {strides = array<i32>} : memref<64x128xf32, #tpu.memory_space<vmem>>, vector<8x128xf32>,
    %c6_i32 = arith.constant 6 : i32
    %c8_i32_93 = arith.constant 8 : i32
    %293 = arith.muli %c6_i32, %c8_i32_93 : i32
    %294 = tpu.assume_multiple %293, 8 : i32
    %295 = arith.index_cast %294 : i32 to index
    %c0_94 = arith.constant 0 : index
    %296 = vector.load %arg13[%295, %c0_94] : memref<64x512xf32, #tpu.memory_space<vmem>>, vector<8x512xf32>
    %c0_95 = arith.constant 0 : index
    %c0_96 = arith.constant 0 : index
    %297 = vector.load %arg4[%c0_95, %c0_96] : memref<128x512xf32, #tpu.memory_space<vmem>>, vector<128x512xf32>
    %cst_97 = arith.constant dense<0.000000e+00> : vector<8x512xf32>
    %298 = tpu.matmul %268, %297, %cst_97 {dimension_numbers = #tpu.dot_dimension_numbers<[1], [0], [0], [1], [0, 0, 1, 1], [], []>} : vector<8x128xf32>, vector<128x512xf32>, vector<8x512xf32> -> vector<8x512xf32>
    %299 = arith.addf %296, %298 : vector<8x512xf32>
    %300 = vector.extract_strided_slice %299 {offsets = [0, 0], sizes = [8, 384], strides = [1, 1]} : vector<8x512xf32> to vector<8x384xf32>
    %301 = arith.negf %300 : vector<8x384xf32>
    %302 = math.exp %301 : vector<8x384xf32>
    %cst_98 = arith.constant 1.000000e+00 : f32
    %303 = vector.broadcast %cst_98 : f32 to vector<8x384xf32>
    %304 = arith.addf %303, %302 : vector<8x384xf32>
    %305 = arith.divf %303, %304 : vector<8x384xf32>
    %306 = vector.extract_strided_slice %305 {offsets = [0, 0], sizes = [8, 128], strides = [1, 1]} : vector<8x384xf32> to vector<8x128xf32>
    %307 = vector.extract_strided_slice %305 {offsets = [0, 128], sizes = [8, 128], strides = [1, 1]} : vector<8x384xf32> to vector<8x128xf32>
    %308 = vector.extract_strided_slice %305 {offsets = [0, 256], sizes = [8, 128], strides = [1, 1]} : vector<8x384xf32> to vector<8x128xf32>
    %309 = vector.extract_strided_slice %299 {offsets = [0, 384], sizes = [8, 128], strides = [1, 1]} : vector<8x512xf32> to vector<8x128xf32>
    %310 = math.tanh %309 : vector<8x128xf32>
    %311 = arith.mulf %307, %266 : vector<8x128xf32>
    %312 = arith.mulf %306, %310 : vector<8x128xf32>
    %313 = arith.addf %311, %312 : vector<8x128xf32>
    %314 = math.tanh %313 : vector<8x128xf32>
    %315 = arith.mulf %308, %314 : vector<8x128xf32>
    %c0_99 = arith.constant 0 : index
    %c0_100 = arith.constant 0 : index
    %316 = vector.load %arg5[%c0_99, %c0_100] : memref<128x512xf32, #tpu.memory_space<vmem>>, vector<128x512xf32>
    %cst_101 = arith.constant dense<0.000000e+00> : vector<8x512xf32>
    %317 = tpu.matmul %315, %316, %cst_101 {dimension_numbers = #tpu.dot_dimension_numbers<[1], [0], [0], [1], [0, 0, 1, 1], [], []>} : vector<8x128xf32>, vector<128x512xf32>, vector<8x512xf32> -> vector<8x512xf32>
    %318 = arith.addf %317, %9 : vector<8x512xf32>
    %c0_102 = arith.constant 0 : index
    %c0_103 = arith.constant 0 : index
    %319 = vector.load %arg6[%c0_102, %c0_103] : memref<128x512xf32, #tpu.memory_space<vmem>>, vector<128x512xf32>
    %cst_104 = arith.constant dense<0.000000e+00> : vector<8x512xf32>
    %320 = tpu.matmul %290, %319, %cst_104 {dimension_numbers = #tpu.dot_dimension_numbers<[1], [0], [0], [1], [0, 0, 1, 1], [], []>} : vector<8x128xf32>, vector<128x512xf32>, vector<8x512xf32> -> vector<8x512xf32>
    %321 = arith.addf %318, %320 : vector<8x512xf32>
    %322 = vector.extract_strided_slice %321 {offsets = [0, 0], sizes = [8, 384], strides = [1, 1]} : vector<8x512xf32> to vector<8x384xf32>
    %323 = arith.negf %322 : vector<8x384xf32>
    %324 = math.exp %323 : vector<8x384xf32>
    %cst_105 = arith.constant 1.000000e+00 : f32
    %325 = vector.broadcast %cst_105 : f32 to vector<8x384xf32>
    %326 = arith.addf %325, %324 : vector<8x384xf32>
    %327 = arith.divf %325, %326 : vector<8x384xf32>
    %328 = vector.extract_strided_slice %327 {offsets = [0, 0], sizes = [8, 128], strides = [1, 1]} : vector<8x384xf32> to vector<8x128xf32>
    %329 = vector.extract_strided_slice %327 {offsets = [0, 128], sizes = [8, 128], strides = [1, 1]} : vector<8x384xf32> to vector<8x128xf32>
    %330 = vector.extract_strided_slice %327 {offsets = [0, 256], sizes = [8, 128], strides = [1, 1]} : vector<8x384xf32> to vector<8x128xf32>
    %331 = vector.extract_strided_slice %321 {offsets = [0, 384], sizes = [8, 128], strides = [1, 1]} : vector<8x512xf32> to vector<8x128xf32>
    %332 = math.tanh %331 : vector<8x128xf32>
    %333 = arith.mulf %329, %288 : vector<8x128xf32>
    %334 = arith.mulf %328, %332 : vector<8x128xf32>
    %335 = arith.addf %333, %334 : vector<8x128xf32>
    %336 = math.tanh %335 : vector<8x128xf32>
    %337 = arith.mulf %330, %336 : vector<8x128xf32>
    %338 = arith.index_cast %294 : i32 to index
    %c0_106 = arith.constant 0 : index
    %339 = vector.load %arg14[%338, %c0_106] : memref<64x128xf32, #tpu.memory_space<vmem>>, vector<8x128xf32>
    tpu.vector_store %arg14[%338, %c0_106], %337 {strides = array<i32>} : memref<64x128xf32, #tpu.memory_space<vmem>>, vector<8x128xf32>,
    %c7_i32 = arith.constant 7 : i32
    %c8_i32_107 = arith.constant 8 : i32
    %340 = arith.muli %c7_i32, %c8_i32_107 : i32
    %341 = tpu.assume_multiple %340, 8 : i32
    %342 = arith.index_cast %341 : i32 to index
    %c0_108 = arith.constant 0 : index
    %343 = vector.load %arg13[%342, %c0_108] : memref<64x512xf32, #tpu.memory_space<vmem>>, vector<8x512xf32>
    %c0_109 = arith.constant 0 : index
    %c0_110 = arith.constant 0 : index
    %344 = vector.load %arg4[%c0_109, %c0_110] : memref<128x512xf32, #tpu.memory_space<vmem>>, vector<128x512xf32>
    %cst_111 = arith.constant dense<0.000000e+00> : vector<8x512xf32>
    %345 = tpu.matmul %315, %344, %cst_111 {dimension_numbers = #tpu.dot_dimension_numbers<[1], [0], [0], [1], [0, 0, 1, 1], [], []>} : vector<8x128xf32>, vector<128x512xf32>, vector<8x512xf32> -> vector<8x512xf32>
    %346 = arith.addf %343, %345 : vector<8x512xf32>
    %347 = vector.extract_strided_slice %346 {offsets = [0, 0], sizes = [8, 384], strides = [1, 1]} : vector<8x512xf32> to vector<8x384xf32>
    %348 = arith.negf %347 : vector<8x384xf32>
    %349 = math.exp %348 : vector<8x384xf32>
    %cst_112 = arith.constant 1.000000e+00 : f32
    %350 = vector.broadcast %cst_112 : f32 to vector<8x384xf32>
    %351 = arith.addf %350, %349 : vector<8x384xf32>
    %352 = arith.divf %350, %351 : vector<8x384xf32>
    %353 = vector.extract_strided_slice %352 {offsets = [0, 0], sizes = [8, 128], strides = [1, 1]} : vector<8x384xf32> to vector<8x128xf32>
    %354 = vector.extract_strided_slice %352 {offsets = [0, 128], sizes = [8, 128], strides = [1, 1]} : vector<8x384xf32> to vector<8x128xf32>
    %355 = vector.extract_strided_slice %352 {offsets = [0, 256], sizes = [8, 128], strides = [1, 1]} : vector<8x384xf32> to vector<8x128xf32>
    %356 = vector.extract_strided_slice %346 {offsets = [0, 384], sizes = [8, 128], strides = [1, 1]} : vector<8x512xf32> to vector<8x128xf32>
    %357 = math.tanh %356 : vector<8x128xf32>
    %358 = arith.mulf %354, %313 : vector<8x128xf32>
    %359 = arith.mulf %353, %357 : vector<8x128xf32>
    %360 = arith.addf %358, %359 : vector<8x128xf32>
    %361 = math.tanh %360 : vector<8x128xf32>
    %362 = arith.mulf %355, %361 : vector<8x128xf32>
    %c0_113 = arith.constant 0 : index
    %c0_114 = arith.constant 0 : index
    %363 = vector.load %arg5[%c0_113, %c0_114] : memref<128x512xf32, #tpu.memory_space<vmem>>, vector<128x512xf32>
    %cst_115 = arith.constant dense<0.000000e+00> : vector<8x512xf32>
    %364 = tpu.matmul %362, %363, %cst_115 {dimension_numbers = #tpu.dot_dimension_numbers<[1], [0], [0], [1], [0, 0, 1, 1], [], []>} : vector<8x128xf32>, vector<128x512xf32>, vector<8x512xf32> -> vector<8x512xf32>
    %365 = arith.addf %364, %9 : vector<8x512xf32>
    %c0_116 = arith.constant 0 : index
    %c0_117 = arith.constant 0 : index
    %366 = vector.load %arg6[%c0_116, %c0_117] : memref<128x512xf32, #tpu.memory_space<vmem>>, vector<128x512xf32>
    %cst_118 = arith.constant dense<0.000000e+00> : vector<8x512xf32>
    %367 = tpu.matmul %337, %366, %cst_118 {dimension_numbers = #tpu.dot_dimension_numbers<[1], [0], [0], [1], [0, 0, 1, 1], [], []>} : vector<8x128xf32>, vector<128x512xf32>, vector<8x512xf32> -> vector<8x512xf32>
    %368 = arith.addf %365, %367 : vector<8x512xf32>
    %369 = vector.extract_strided_slice %368 {offsets = [0, 0], sizes = [8, 384], strides = [1, 1]} : vector<8x512xf32> to vector<8x384xf32>
    %370 = arith.negf %369 : vector<8x384xf32>
    %371 = math.exp %370 : vector<8x384xf32>
    %cst_119 = arith.constant 1.000000e+00 : f32
    %372 = vector.broadcast %cst_119 : f32 to vector<8x384xf32>
    %373 = arith.addf %372, %371 : vector<8x384xf32>
    %374 = arith.divf %372, %373 : vector<8x384xf32>
    %375 = vector.extract_strided_slice %374 {offsets = [0, 0], sizes = [8, 128], strides = [1, 1]} : vector<8x384xf32> to vector<8x128xf32>
    %376 = vector.extract_strided_slice %374 {offsets = [0, 128], sizes = [8, 128], strides = [1, 1]} : vector<8x384xf32> to vector<8x128xf32>
    %377 = vector.extract_strided_slice %374 {offsets = [0, 256], sizes = [8, 128], strides = [1, 1]} : vector<8x384xf32> to vector<8x128xf32>
    %378 = vector.extract_strided_slice %368 {offsets = [0, 384], sizes = [8, 128], strides = [1, 1]} : vector<8x512xf32> to vector<8x128xf32>
    %379 = math.tanh %378 : vector<8x128xf32>
    %380 = arith.mulf %376, %335 : vector<8x128xf32>
    %381 = arith.mulf %375, %379 : vector<8x128xf32>
    %382 = arith.addf %380, %381 : vector<8x128xf32>
    %383 = math.tanh %382 : vector<8x128xf32>
    %384 = arith.mulf %377, %383 : vector<8x128xf32>
    %385 = arith.index_cast %341 : i32 to index
    %c0_120 = arith.constant 0 : index
    %386 = vector.load %arg14[%385, %c0_120] : memref<64x128xf32, #tpu.memory_space<vmem>>, vector<8x128xf32>
    tpu.vector_store %arg14[%385, %c0_120], %384 {strides = array<i32>} : memref<64x128xf32, #tpu.memory_space<vmem>>, vector<8x128xf32>,
    %c8_i32_121 = arith.constant 8 : i32
    %c0_122 = arith.constant 0 : index
    %c0_123 = arith.constant 0 : index
    %387 = vector.load %arg14[%c0_122, %c0_123] : memref<64x128xf32, #tpu.memory_space<vmem>>, vector<64x128xf32>
    %c0_124 = arith.constant 0 : index
    %c0_125 = arith.constant 0 : index
    %388 = vector.load %arg8[%c0_124, %c0_125] : memref<128x128xf32, #tpu.memory_space<vmem>>, vector<128x128xf32>
    %cst_126 = arith.constant dense<0.000000e+00> : vector<64x128xf32>
    %389 = tpu.matmul %387, %388, %cst_126 {dimension_numbers = #tpu.dot_dimension_numbers<[1], [0], [0], [1], [0, 0, 1, 1], [], []>} : vector<64x128xf32>, vector<128x128xf32>, vector<64x128xf32> -> vector<64x128xf32>
    %c0_127 = arith.constant 0 : index
    %c0_128 = arith.constant 0 : index
    %390 = vector.load %arg9[%c0_127, %c0_128] : memref<1x128xf32, #tpu.memory_space<vmem>>, vector<1x128xf32>
    %391 = vector.broadcast %390 : vector<1x128xf32> to vector<64x128xf32>
    %392 = arith.addf %389, %391 : vector<64x128xf32>
    %393 = math.tanh %392 : vector<64x128xf32>
    %c0_129 = arith.constant 0 : index
    %c0_130 = arith.constant 0 : index
    %394 = vector.load %arg10[%c0_129, %c0_130] : memref<128x128xf32, #tpu.memory_space<vmem>>, vector<128x128xf32>
    %cst_131 = arith.constant dense<0.000000e+00> : vector<64x128xf32>
    %395 = tpu.matmul %393, %394, %cst_131 {dimension_numbers = #tpu.dot_dimension_numbers<[1], [0], [0], [1], [0, 0, 1, 1], [], []>} : vector<64x128xf32>, vector<128x128xf32>, vector<64x128xf32> -> vector<64x128xf32>
    %c0_132 = arith.constant 0 : index
    %c0_133 = arith.constant 0 : index
    %396 = vector.load %arg11[%c0_132, %c0_133] : memref<1x128xf32, #tpu.memory_space<vmem>>, vector<1x128xf32>
    %397 = vector.broadcast %396 : vector<1x128xf32> to vector<64x128xf32>
    %398 = arith.addf %395, %397 : vector<64x128xf32>
    %c0_134 = arith.constant 0 : index
    %c0_135 = arith.constant 0 : index
    %399 = vector.load %arg12[%c0_134, %c0_135] : memref<64x128xf32, #tpu.memory_space<vmem>>, vector<64x128xf32>
    tpu.vector_store %arg12[%c0_134, %c0_135], %398 {strides = array<i32>} : memref<64x128xf32, #tpu.memory_space<vmem>>, vector<64x128xf32>,
    return
  }
  func.func @transform_0(%arg0: i32) -> (i32, i32) {
    %c0_i32 = arith.constant 0 : i32
    %c0_i32_0 = arith.constant 0 : i32
    %c0_i32_1 = arith.constant 0 : i32
    return %c0_i32, %c0_i32_0 : i32, i32
  }
  func.func @transform_1(%arg0: i32) -> (i32, i32) {
    %c0_i32 = arith.constant 0 : i32
    %c0_i32_0 = arith.constant 0 : i32
    %c0_i32_1 = arith.constant 0 : i32
    return %c0_i32, %c0_i32_0 : i32, i32
  }
  func.func @transform_2(%arg0: i32) -> (i32, i32) {
    %c0_i32 = arith.constant 0 : i32
    %c0_i32_0 = arith.constant 0 : i32
    %c0_i32_1 = arith.constant 0 : i32
    return %c0_i32, %c0_i32_0 : i32, i32
  }
  func.func @transform_3(%arg0: i32) -> (i32, i32) {
    %c0_i32 = arith.constant 0 : i32
    %c0_i32_0 = arith.constant 0 : i32
    %c0_i32_1 = arith.constant 0 : i32
    return %c0_i32, %c0_i32_0 : i32, i32
  }
  func.func @transform_4(%arg0: i32) -> (i32, i32) {
    %c0_i32 = arith.constant 0 : i32
    %c0_i32_0 = arith.constant 0 : i32
    %c0_i32_1 = arith.constant 0 : i32
    return %c0_i32, %c0_i32_0 : i32, i32
  }
  func.func @transform_5(%arg0: i32) -> (i32, i32) {
    %c0_i32 = arith.constant 0 : i32
    %c0_i32_0 = arith.constant 0 : i32
    %c0_i32_1 = arith.constant 0 : i32
    return %c0_i32, %c0_i32_0 : i32, i32
  }
  func.func @transform_6(%arg0: i32) -> (i32, i32) {
    %c0_i32 = arith.constant 0 : i32
    %c0_i32_0 = arith.constant 0 : i32
    %c0_i32_1 = arith.constant 0 : i32
    return %c0_i32, %c0_i32_0 : i32, i32
  }
  func.func @transform_7(%arg0: i32) -> (i32, i32) {
    %c0_i32 = arith.constant 0 : i32
    %c0_i32_0 = arith.constant 0 : i32
    %c0_i32_1 = arith.constant 0 : i32
    return %c0_i32, %c0_i32_0 : i32, i32
  }
  func.func @transform_8(%arg0: i32) -> (i32, i32) {
    %c0_i32 = arith.constant 0 : i32
    %c0_i32_0 = arith.constant 0 : i32
    %c0_i32_1 = arith.constant 0 : i32
    return %c0_i32, %c0_i32_0 : i32, i32
  }
  func.func @transform_9(%arg0: i32) -> (i32, i32) {
    %c0_i32 = arith.constant 0 : i32
    %c0_i32_0 = arith.constant 0 : i32
    %c0_i32_1 = arith.constant 0 : i32
    return %c0_i32, %c0_i32_0 : i32, i32
  }
  func.func @transform_10(%arg0: i32) -> (i32, i32) {
    %c0_i32 = arith.constant 0 : i32
    %c0_i32_0 = arith.constant 0 : i32
    %c0_i32_1 = arith.constant 0 : i32
    return %c0_i32, %c0_i32_0 : i32, i32
  }
  func.func @transform_11(%arg0: i32) -> (i32, i32) {
    %c0_i32 = arith.constant 0 : i32
    %c0_i32_0 = arith.constant 0 : i32
    %c0_i32_1 = arith.constant 0 : i32
    return %c0_i32, %c0_i32_0 : i32, i32
  }
}

</mosaic_0001>

<llo_original>
// kernel: tpu_custom_call.1
$region0: #{tpu_custom_call.1}
  #allocation0 [shape = 'u32[]', space=smem, size = 0x4, offset = 0x4, fixed_abs, tag = 'smem constant byte address 0x4 - core index']
  #allocation1 [shape = 'u32[144,128]{1,0:T(1,128)}', space=vmem, size = 0x12000, scoped, tag = 'internal scratch']
  #allocation2 [shape = 'f32[64,512]{1,0:T(8,128)}', space=vmem, size = 0x20000, scoped, tag = 'scratch operand']
  #allocation3 [shape = 'f32[64,128]{1,0:T(8,128)}', space=vmem, size = 0x8000, scoped, tag = 'scratch operand']
  %s0 = inlined_call_operand.vmem [shape: f32[64,3], index: 0, kind: input, shape index: {}]
  %s1 = inlined_call_operand.vmem [shape: f32[3,512], index: 1, kind: input, shape index: {}]
  %s2 = inlined_call_operand.vmem [shape: f32[1,512], index: 2, kind: input, shape index: {}]
  %s3 = inlined_call_operand.hbm [shape: f32[128,512], index: 3, kind: input, shape index: {}]
  %s4 = inlined_call_operand.hbm [shape: f32[128,512], index: 4, kind: input, shape index: {}]
  %s5 = inlined_call_operand.hbm [shape: f32[128,512], index: 5, kind: input, shape index: {}]
  %s6 = inlined_call_operand.vmem [shape: f32[1,512], index: 6, kind: input, shape index: {}]
  %s7 = inlined_call_operand.hbm [shape: f32[128,128], index: 7, kind: input, shape index: {}]
  %s8 = inlined_call_operand.vmem [shape: f32[1,128], index: 8, kind: input, shape index: {}]
  %s9 = inlined_call_operand.hbm [shape: f32[128,128], index: 9, kind: input, shape index: {}]
  %s10 = inlined_call_operand.vmem [shape: f32[1,128], index: 10, kind: input, shape index: {}]
  %s11 = inlined_call_operand.hbm [shape: f32[64,128], index: 11, kind: output, shape index: {}]
  %s12 = sld [smem:[#allocation0]]
  $region74: #{tpu_custom_call.1} parent=0
    _
  %s14 = ssub.s32 1, %s12
  %s15 = scalar_select 0, %s14, %s12
  $region1: #{tpu_custom_call.1} parent=0
    #allocation4 [shape = 'u8[262144]{0}', space=vmem, size = 0x40000, scoped, tag = 'input window, operand 3, single buffered']
    #allocation5 [shape = 's32[1]{0}', space=sflag, size = 0x4, scoped, tag = 'scoped memory for tpu_custom_call.1']
    #allocation6 [shape = 's32[1]{0}', space=sflag, size = 0x4, scoped, tag = 'scoped memory for tpu_custom_call.1']
    #allocation7 [shape = 'u8[262144]{0}', space=vmem, size = 0x40000, scoped, tag = 'input window, operand 4, single buffered']
    #allocation8 [shape = 's32[1]{0}', space=sflag, size = 0x4, scoped, tag = 'scoped memory for tpu_custom_call.1']
    #allocation9 [shape = 'u8[262144]{0}', space=vmem, size = 0x40000, scoped, tag = 'input window, operand 5, single buffered']
    #allocation10 [shape = 'u8[65536]{0}', space=vmem, size = 0x10000, scoped, tag = 'input window, operand 7, single buffered']
    #allocation11 [shape = 's32[1]{0}', space=sflag, size = 0x4, scoped, tag = 'scoped memory for tpu_custom_call.1']
    #allocation12 [shape = 'u8[65536]{0}', space=vmem, size = 0x10000, scoped, tag = 'input window, operand 9, single buffered']
    #allocation13 [shape = 'u8[32768]{0}', space=vmem, size = 0x8000, scoped, tag = 'output window, operand 0, single buffered']
    %16 = vsyncpa [#allocation5], 0
    %17 = vsyncpa [#allocation8], 0
    %18 = vsyncpa [#allocation11], 0
    %19 = vsyncpa [#allocation6], 0
    // Predicated region
    $region2: #{tpu_custom_call.1} parent=1 // pred_check
      _
    $region3: #{tpu_custom_call.1} parent=1 // pred_check_branch
      %21 = sbr.rel (0) target = $region5
    $region4: #{tpu_custom_call.1} parent=1 // pred_region
      _
    $region5: #{tpu_custom_call.1} parent=1 // pred_fallthru
      _
    // Predicated region
    $region6: #{tpu_custom_call.1} parent=1 // pred_check
      _
    $region7: #{tpu_custom_call.1} parent=1 // pred_check_branch
      %23 = sbr.rel (0) target = $region9
    $region8: #{tpu_custom_call.1} parent=1 // pred_region
      _
    $region9: #{tpu_custom_call.1} parent=1 // pred_fallthru
      _
    // Predicated region
    $region10: #{tpu_custom_call.1} parent=1 // pred_check
      _
    $region11: #{tpu_custom_call.1} parent=1 // pred_check_branch
      %25 = sbr.rel (0) target = $region13
    $region12: #{tpu_custom_call.1} parent=1 // pred_region
      _
    $region13: #{tpu_custom_call.1} parent=1 // pred_fallthru
      _
    // Predicated region
    $region14: #{tpu_custom_call.1} parent=1 // pred_check
      _
    $region15: #{tpu_custom_call.1} parent=1 // pred_check_branch
      %27 = sbr.rel (0) target = $region17
    $region16: #{tpu_custom_call.1} parent=1 // pred_region
      %s29 = ssub.s32 8192, 8192
      %30 = vsyncadd [#allocation5], %s29
      %s31 = sshll.u32 [#allocation4], 4
      %s32 = int_to_ptr.vmem [resolvable:$true] %s31
      %37 = dma.hbm_to_vmem [thread:$0]  %s3, 8192, %s32, [#allocation5], 512, 512, 32
    $region17: #{tpu_custom_call.1} parent=1 // pred_fallthru
      _
    // Predicated region
    $region18: #{tpu_custom_call.1} parent=1 // pred_check
      _
    $region19: #{tpu_custom_call.1} parent=1 // pred_check_branch
      %39 = sbr.rel (0) target = $region21
    $region20: #{tpu_custom_call.1} parent=1 // pred_region
      %s41 = ssub.s32 8192, 8192
      %42 = vsyncadd [#allocation8], %s41
      %s43 = sshll.u32 [#allocation7], 4
      %s44 = int_to_ptr.vmem [resolvable:$true] %s43
      %49 = dma.hbm_to_vmem [thread:$0]  %s4, 8192, %s44, [#allocation8], 512, 512, 32
    $region21: #{tpu_custom_call.1} parent=1 // pred_fallthru
      _
    // Predicated region
    $region22: #{tpu_custom_call.1} parent=1 // pred_check
      _
    $region23: #{tpu_custom_call.1} parent=1 // pred_check_branch
      %51 = sbr.rel (0) target = $region25
    $region24: #{tpu_custom_call.1} parent=1 // pred_region
      %s53 = ssub.s32 8192, 8192
      %54 = vsyncadd [#allocation8], %s53
      %s55 = sshll.u32 [#allocation9], 4
      %s56 = int_to_ptr.vmem [resolvable:$true] %s55
      %61 = dma.hbm_to_vmem [thread:$0]  %s5, 8192, %s56, [#allocation8], 512, 512, 32
    $region25: #{tpu_custom_call.1} parent=1 // pred_fallthru
      _
    // Predicated region
    $region26: #{tpu_custom_call.1} parent=1 // pred_check
      _
    $region27: #{tpu_custom_call.1} parent=1 // pred_check_branch
      %63 = sbr.rel (0) target = $region29
    $region28: #{tpu_custom_call.1} parent=1 // pred_region
      _
    $region29: #{tpu_custom_call.1} parent=1 // pred_fallthru
      _
    // Predicated region
    $region30: #{tpu_custom_call.1} parent=1 // pred_check
      _
    $region31: #{tpu_custom_call.1} parent=1 // pred_check_branch
      %65 = sbr.rel (0) target = $region33
    $region32: #{tpu_custom_call.1} parent=1 // pred_region
      %s67 = ssub.s32 2048, 2048
      %68 = vsyncadd [#allocation11], %s67
      %s69 = sshll.u32 [#allocation10], 4
      %s70 = int_to_ptr.vmem [resolvable:$true] %s69
      %75 = dma.hbm_to_vmem [thread:$0]  %s7, 2048, %s70, [#allocation11], 128, 128, 8
    $region33: #{tpu_custom_call.1} parent=1 // pred_fallthru
      _
    // Predicated region
    $region34: #{tpu_custom_call.1} parent=1 // pred_check
      _
    $region35: #{tpu_custom_call.1} parent=1 // pred_check_branch
      %77 = sbr.rel (0) target = $region37
    $region36: #{tpu_custom_call.1} parent=1 // pred_region
      _
    $region37: #{tpu_custom_call.1} parent=1 // pred_fallthru
      _
    // Predicated region
    $region38: #{tpu_custom_call.1} parent=1 // pred_check
      _
    $region39: #{tpu_custom_call.1} parent=1 // pred_check_branch
      %79 = sbr.rel (0) target = $region41
    $region40: #{tpu_custom_call.1} parent=1 // pred_region
      %s81 = ssub.s32 2048, 2048
      %82 = vsyncadd [#allocation11], %s81
      %s83 = sshll.u32 [#allocation12], 4
      %s84 = int_to_ptr.vmem [resolvable:$true] %s83
      %89 = dma.hbm_to_vmem [thread:$0]  %s9, 2048, %s84, [#allocation11], 128, 128, 8
    $region41: #{tpu_custom_call.1} parent=1 // pred_fallthru
      _
    // Predicated region
    $region42: #{tpu_custom_call.1} parent=1 // pred_check
      _
    $region43: #{tpu_custom_call.1} parent=1 // pred_check_branch
      %91 = sbr.rel (0) target = $region45
    $region44: #{tpu_custom_call.1} parent=1 // pred_region
      _
    $region45: #{tpu_custom_call.1} parent=1 // pred_fallthru
      _
    // Predicated region
    $region46: #{tpu_custom_call.1} parent=1 // pred_check
      _
    $region47: #{tpu_custom_call.1} parent=1 // pred_check_branch
      %93 = sbr.rel (0) target = $region49
    $region48: #{tpu_custom_call.1} parent=1 // pred_region
      %94 = dma.done [#allocation5], 8192
    $region49: #{tpu_custom_call.1} parent=1 // pred_fallthru
      _
    // Predicated region
    $region50: #{tpu_custom_call.1} parent=1 // pred_check
      _
    $region51: #{tpu_custom_call.1} parent=1 // pred_check_branch
      %96 = sbr.rel (0) target = $region53
    $region52: #{tpu_custom_call.1} parent=1 // pred_region
      %97 = dma.done [#allocation8], 8192
    $region53: #{tpu_custom_call.1} parent=1 // pred_fallthru
      _
    // Predicated region
    $region54: #{tpu_custom_call.1} parent=1 // pred_check
      _
    $region55: #{tpu_custom_call.1} parent=1 // pred_check_branch
      %99 = sbr.rel (0) target = $region57
    $region56: #{tpu_custom_call.1} parent=1 // pred_region
      %100 = dma.done [#allocation8], 8192
    $region57: #{tpu_custom_call.1} parent=1 // pred_fallthru
      _
    // Predicated region
    $region58: #{tpu_custom_call.1} parent=1 // pred_check
      _
    $region59: #{tpu_custom_call.1} parent=1 // pred_check_branch
      %102 = sbr.rel (0) target = $region61
    $region60: #{tpu_custom_call.1} parent=1 // pred_region
      %103 = dma.done [#allocation11], 2048
    $region61: #{tpu_custom_call.1} parent=1 // pred_fallthru
      _
    // Predicated region
    $region62: #{tpu_custom_call.1} parent=1 // pred_check
      _
    $region63: #{tpu_custom_call.1} parent=1 // pred_check_branch
      %105 = sbr.rel (0) target = $region65
    $region64: #{tpu_custom_call.1} parent=1 // pred_region
      %106 = dma.done [#allocation11], 2048
    $region65: #{tpu_custom_call.1} parent=1 // pred_fallthru
      _
    %v107 = vld [vmem:[%s0] sm:$0xff]
    %v108 = vld [vmem:[%s0 + $0x8] sm:$0xff]
    %v109 = vld [vmem:[%s0 + $0x10] sm:$0xff]
    %v110 = vld [vmem:[%s0 + $0x18] sm:$0xff]
    %v111 = vld [vmem:[%s0 + $0x20] sm:$0xff]
    %v112 = vld [vmem:[%s0 + $0x28] sm:$0xff]
    %v113 = vld [vmem:[%s0 + $0x30] sm:$0xff]
    %v114 = vld [vmem:[%s0 + $0x38] sm:$0xff]
    %v115 = vld [vmem:[%s1] sm:$0x77]
    %v116 = vld [vmem:[%s1 + $0x8] sm:$0x77]
    %v117 = vld [vmem:[%s2] sm:$0xf]
    %v119 = vlaneseq
    %v120 = vshrl.u32 %v119, 7
    %v121 = vsub.s32 0, %v120
    %v122 = vrot.slane %v117, %v121
    %v123 = vlaneseq
    %v124 = vshrl.u32 %v123, 7
    %v125 = vsub.s32 1, %v124
    %v126 = vrot.slane %v117, %v125
    %v127 = vlaneseq
    %v128 = vshrl.u32 %v127, 7
    %v129 = vsub.s32 2, %v128
    %v130 = vrot.slane %v117, %v129
    %v131 = vlaneseq
    %v132 = vshrl.u32 %v131, 7
    %v133 = vsub.s32 3, %v132
    %v134 = vrot.slane %v117, %v133
    %v141 = vcombine.high %v115, %v115
    %v142 = vcombine.high %v116, %v116
    %vm143 = vcmask 23552
    %v145 = vsel %vm143, %v107, 0
    %v148 = vsel %vm143, %v108, 0
    %v151 = vsel %vm143, %v109, 0
    %v154 = vsel %vm143, %v110, 0
    %v157 = vsel %vm143, %v111, 0
    %v160 = vsel %vm143, %v112, 0
    %v163 = vsel %vm143, %v113, 0
    %v166 = vsel %vm143, %v114, 0
    %vm168 = vcmask 1042432
    %v169 = vsel %vm168, %v115, 0
    %v171 = vsel %vm168, %v141, 0
    %v173 = vsel %vm168, %v116, 0
    %v175 = vsel %vm168, %v142, 0
    %177 = vmatprep.subr.mxu0 0.0
    %178 = vmatpush1.msra.mxu0 0.0
    %179 = vmatprep.subr.mxu0 0.0
    %180 = vmatpush1.msra.mxu0 0.0
    %181 = vmatprep.subr.mxu0 0.0
    %182 = vmatpush1.msra.mxu0 0.0
    %183 = vmatprep.subr.mxu0 0.0
    %184 = vmatpush1.msra.mxu0 0.0
    %185 = vmatprep.subr.mxu0 0.0
    %186 = vmatpush1.msra.mxu0 0.0
    %187 = vmatprep.subr.mxu0 0.0
    %188 = vmatpush1.msra.mxu0 0.0
    %189 = vmatprep.subr.mxu0 0.0
    %190 = vmatpush1.msra.mxu0 0.0
    %191 = vmatprep.subr.mxu0 0.0
    %192 = vmatpush1.msra.mxu0 0.0
    %193 = vmatprep.subr.mxu0 0.0
    %194 = vmatpush1.msra.mxu0 0.0
    %195 = vmatprep.subr.mxu0 0.0
    %196 = vmatpush1.msra.mxu0 0.0
    %197 = vmatprep.subr.mxu0 0.0
    %198 = vmatpush1.msra.mxu0 0.0
    %199 = vmatprep.subr.mxu0 0.0
    %200 = vmatpush1.msra.mxu0 0.0
    %201 = vmatprep.subr.mxu0 0.0
    %202 = vmatpush1.msra.mxu0 0.0
    %203 = vmatprep.subr.mxu0 0.0
    %204 = vmatpush1.msra.mxu0 0.0
    %205 = vmatprep.subr.mxu0 0.0
    %206 = vmatpush1.msra.mxu0 0.0
    %207 = vmatprep.subr.mxu0 %v171
    %208 = vmatpush1.msra.mxu0 %v169
    %209 = vmatprep.subr.mxu0 0.0
    %210 = vmatpush2.msra.mxu0 0.0
    %211 = vmatprep.subr.mxu0 0.0
    %212 = vmatpush2.msra.mxu0 0.0
    %213 = vmatprep.subr.mxu0 0.0
    %214 = vmatpush2.msra.mxu0 0.0
    %215 = vmatprep.subr.mxu0 0.0
    %216 = vmatpush2.msra.mxu0 0.0
    %217 = vmatprep.subr.mxu0 0.0
    %218 = vmatpush2.msra.mxu0 0.0
    %219 = vmatprep.subr.mxu0 0.0
    %220 = vmatpush2.msra.mxu0 0.0
    %221 = vmatprep.subr.mxu0 0.0
    %222 = vmatpush2.msra.mxu0 0.0
    %223 = vmatprep.subr.mxu0 0.0
    %224 = vmatpush2.msra.mxu0 0.0
    %225 = vmatprep.subr.mxu0 0.0
    %226 = vmatpush2.msra.mxu0 0.0
    %227 = vmatprep.subr.mxu0 0.0
    %228 = vmatpush2.msra.mxu0 0.0
    %229 = vmatprep.subr.mxu0 0.0
    %230 = vmatpush2.msra.mxu0 0.0
    %231 = vmatprep.subr.mxu0 0.0
    %232 = vmatpush2.msra.mxu0 0.0
    %233 = vmatprep.subr.mxu0 0.0
    %234 = vmatpush2.msra.mxu0 0.0
    %235 = vmatprep.subr.mxu0 0.0
    %236 = vmatpush2.msra.mxu0 0.0
    %237 = vmatprep.subr.mxu0 0.0
    %238 = vmatpush2.msra.mxu0 0.0
    %239 = vmatprep.subr.mxu0 0.0
    %240 = vmatpush2.msra.mxu0 0.0
    %241 = vmatprep.mubr.f32.mxu0 0.0
    %242 = vmatmul.mubr.f32.gmra.mxu0 %v145
    %v243 = vpop.f32.mrf.mxu0
    %v244 = vadd.f32 %v122, %v243
    %v245 = vpop.f32.mrf.mxu0
    %v246 = vadd.f32 %v126, %v245
    %247 = vmatprep.mubr.f32.mxu0 0.0
    %248 = vmatmul.mubr.f32.gmra.mxu0 %v148
    %v249 = vpop.f32.mrf.mxu0
    %v250 = vadd.f32 %v122, %v249
    %v251 = vpop.f32.mrf.mxu0
    %v252 = vadd.f32 %v126, %v251
    %253 = vmatprep.mubr.f32.mxu0 0.0
    %254 = vmatmul.mubr.f32.gmra.mxu0 %v151
    %v255 = vpop.f32.mrf.mxu0
    %v256 = vadd.f32 %v122, %v255
    %v257 = vpop.f32.mrf.mxu0
    %v258 = vadd.f32 %v126, %v257
    %259 = vmatprep.mubr.f32.mxu0 0.0
    %260 = vmatmul.mubr.f32.gmra.mxu0 %v154
    %v261 = vpop.f32.mrf.mxu0
    %v262 = vadd.f32 %v122, %v261
    %v263 = vpop.f32.mrf.mxu0
    %v264 = vadd.f32 %v126, %v263
    %265 = vmatprep.mubr.f32.mxu0 0.0
    %266 = vmatmul.mubr.f32.gmra.mxu0 %v157
    %v267 = vpop.f32.mrf.mxu0
    %v268 = vadd.f32 %v122, %v267
    %v269 = vpop.f32.mrf.mxu0
    %v270 = vadd.f32 %v126, %v269
    %271 = vmatprep.mubr.f32.mxu0 0.0
    %272 = vmatmul.mubr.f32.gmra.mxu0 %v160
    %v273 = vpop.f32.mrf.mxu0
    %v274 = vadd.f32 %v122, %v273
    %v275 = vpop.f32.mrf.mxu0
    %v276 = vadd.f32 %v126, %v275
    %277 = vmatprep.mubr.f32.mxu0 0.0
    %278 = vmatmul.mubr.f32.gmra.mxu0 %v163
    %v279 = vpop.f32.mrf.mxu0
    %v280 = vadd.f32 %v122, %v279
    %v281 = vpop.f32.mrf.mxu0
    %v282 = vadd.f32 %v126, %v281
    %283 = vmatprep.mubr.f32.mxu0 0.0
    %284 = vmatmul.mubr.f32.gmra.mxu0 %v166
    %v285 = vpop.f32.mrf.mxu0
    %v286 = vadd.f32 %v122, %v285
    %v287 = vpop.f32.mrf.mxu0
    %v288 = vadd.f32 %v126, %v287
    %289 = vdwg.mxu0
    %290 = vmatprep.subr.mxu0 0.0
    %291 = vmatpush1.msra.mxu0 0.0
    %292 = vmatprep.subr.mxu0 0.0
    %293 = vmatpush1.msra.mxu0 0.0
    %294 = vmatprep.subr.mxu0 0.0
    %295 = vmatpush1.msra.mxu0 0.0
    %296 = vmatprep.subr.mxu0 0.0
    %297 = vmatpush1.msra.mxu0 0.0
    %298 = vmatprep.subr.mxu0 0.0
    %299 = vmatpush1.msra.mxu0 0.0
    %300 = vmatprep.subr.mxu0 0.0
    %301 = vmatpush1.msra.mxu0 0.0
    %302 = vmatprep.subr.mxu0 0.0
    %303 = vmatpush1.msra.mxu0 0.0
    %304 = vmatprep.subr.mxu0 0.0
    %305 = vmatpush1.msra.mxu0 0.0
    %306 = vmatprep.subr.mxu0 0.0
    %307 = vmatpush1.msra.mxu0 0.0
    %308 = vmatprep.subr.mxu0 0.0
    %309 = vmatpush1.msra.mxu0 0.0
    %310 = vmatprep.subr.mxu0 0.0
    %311 = vmatpush1.msra.mxu0 0.0
    %312 = vmatprep.subr.mxu0 0.0
    %313 = vmatpush1.msra.mxu0 0.0
    %314 = vmatprep.subr.mxu0 0.0
    %315 = vmatpush1.msra.mxu0 0.0
    %316 = vmatprep.subr.mxu0 0.0
    %317 = vmatpush1.msra.mxu0 0.0
    %318 = vmatprep.subr.mxu0 0.0
    %319 = vmatpush1.msra.mxu0 0.0
    %320 = vmatprep.subr.mxu0 %v175
    %321 = vmatpush1.msra.mxu0 %v173
    %322 = vmatprep.subr.mxu0 0.0
    %323 = vmatpush2.msra.mxu0 0.0
    %324 = vmatprep.subr.mxu0 0.0
    %325 = vmatpush2.msra.mxu0 0.0
    %326 = vmatprep.subr.mxu0 0.0
    %327 = vmatpush2.msra.mxu0 0.0
    %328 = vmatprep.subr.mxu0 0.0
    %329 = vmatpush2.msra.mxu0 0.0
    %330 = vmatprep.subr.mxu0 0.0
    %331 = vmatpush2.msra.mxu0 0.0
    %332 = vmatprep.subr.mxu0 0.0
    %333 = vmatpush2.msra.mxu0 0.0
    %334 = vmatprep.subr.mxu0 0.0
    %335 = vmatpush2.msra.mxu0 0.0
    %336 = vmatprep.subr.mxu0 0.0
    %337 = vmatpush2.msra.mxu0 0.0
    %338 = vmatprep.subr.mxu0 0.0
    %339 = vmatpush2.msra.mxu0 0.0
    %340 = vmatprep.subr.mxu0 0.0
    %341 = vmatpush2.msra.mxu0 0.0
    %342 = vmatprep.subr.mxu0 0.0
    %343 = vmatpush2.msra.mxu0 0.0
    %344 = vmatprep.subr.mxu0 0.0
    %345 = vmatpush2.msra.mxu0 0.0
    %346 = vmatprep.subr.mxu0 0.0
    %347 = vmatpush2.msra.mxu0 0.0
    %348 = vmatprep.subr.mxu0 0.0
    %349 = vmatpush2.msra.mxu0 0.0
    %350 = vmatprep.subr.mxu0 0.0
    %351 = vmatpush2.msra.mxu0 0.0
    %352 = vmatprep.subr.mxu0 0.0
    %353 = vmatpush2.msra.mxu0 0.0
    %354 = vmatprep.mubr.f32.mxu0 0.0
    %355 = vmatmul.mubr.f32.gmra.mxu0 %v145
    %v356 = vpop.f32.mrf.mxu0
    %v357 = vadd.f32 %v130, %v356
    %v358 = vpop.f32.mrf.mxu0
    %v359 = vadd.f32 %v134, %v358
    %360 = vmatprep.mubr.f32.mxu0 0.0
    %361 = vmatmul.mubr.f32.gmra.mxu0 %v148
    %v362 = vpop.f32.mrf.mxu0
    %v363 = vadd.f32 %v130, %v362
    %v364 = vpop.f32.mrf.mxu0
    %v365 = vadd.f32 %v134, %v364
    %366 = vmatprep.mubr.f32.mxu0 0.0
    %367 = vmatmul.mubr.f32.gmra.mxu0 %v151
    %v368 = vpop.f32.mrf.mxu0
    %v369 = vadd.f32 %v130, %v368
    %v370 = vpop.f32.mrf.mxu0
    %v371 = vadd.f32 %v134, %v370
    %372 = vmatprep.mubr.f32.mxu0 0.0
    %373 = vmatmul.mubr.f32.gmra.mxu0 %v154
    %v374 = vpop.f32.mrf.mxu0
    %v375 = vadd.f32 %v130, %v374
    %v376 = vpop.f32.mrf.mxu0
    %v377 = vadd.f32 %v134, %v376
    %378 = vmatprep.mubr.f32.mxu0 0.0
    %379 = vmatmul.mubr.f32.gmra.mxu0 %v157
    %v380 = vpop.f32.mrf.mxu0
    %v381 = vadd.f32 %v130, %v380
    %v382 = vpop.f32.mrf.mxu0
    %v383 = vadd.f32 %v134, %v382
    %384 = vmatprep.mubr.f32.mxu0 0.0
    %385 = vmatmul.mubr.f32.gmra.mxu0 %v160
    %v386 = vpop.f32.mrf.mxu0
    %v387 = vadd.f32 %v130, %v386
    %v388 = vpop.f32.mrf.mxu0
    %v389 = vadd.f32 %v134, %v388
    %390 = vmatprep.mubr.f32.mxu0 0.0
    %391 = vmatmul.mubr.f32.gmra.mxu0 %v163
    %v392 = vpop.f32.mrf.mxu0
    %v393 = vadd.f32 %v130, %v392
    %v394 = vpop.f32.mrf.mxu0
    %v395 = vadd.f32 %v134, %v394
    %396 = vmatprep.mubr.f32.mxu0 0.0
    %397 = vmatmul.mubr.f32.gmra.mxu0 %v166
    %v398 = vpop.f32.mrf.mxu0
    %v399 = vadd.f32 %v130, %v398
    %v400 = vpop.f32.mrf.mxu0
    %v401 = vadd.f32 %v134, %v400
    %402 = vdwg.mxu0
    %403 = vst [vmem:[#allocation2] sm:$0xff] %v244
    %404 = vst [vmem:[#allocation2 + $0x8] sm:$0xff] %v246
    %405 = vst [vmem:[#allocation2 + $0x10] sm:$0xff] %v357
    %406 = vst [vmem:[#allocation2 + $0x18] sm:$0xff] %v359
    %407 = vst [vmem:[#allocation2 + $0x20] sm:$0xff] %v250
    %408 = vst [vmem:[#allocation2 + $0x28] sm:$0xff] %v252
    %409 = vst [vmem:[#allocation2 + $0x30] sm:$0xff] %v363
    %410 = vst [vmem:[#allocation2 + $0x38] sm:$0xff] %v365
    %411 = vst [vmem:[#allocation2 + $0x40] sm:$0xff] %v256
    %412 = vst [vmem:[#allocation2 + $0x48] sm:$0xff] %v258
    %413 = vst [vmem:[#allocation2 + $0x50] sm:$0xff] %v369
    %414 = vst [vmem:[#allocation2 + $0x58] sm:$0xff] %v371
    %415 = vst [vmem:[#allocation2 + $0x60] sm:$0xff] %v262
    %416 = vst [vmem:[#allocation2 + $0x68] sm:$0xff] %v264
    %417 = vst [vmem:[#allocation2 + $0x70] sm:$0xff] %v375
    %418 = vst [vmem:[#allocation2 + $0x78] sm:$0xff] %v377
    %419 = vst [vmem:[#allocation2 + $0x80] sm:$0xff] %v268
    %420 = vst [vmem:[#allocation2 + $0x88] sm:$0xff] %v270
    %421 = vst [vmem:[#allocation2 + $0x90] sm:$0xff] %v381
    %422 = vst [vmem:[#allocation2 + $0x98] sm:$0xff] %v383
    %423 = vst [vmem:[#allocation2 + $0xa0] sm:$0xff] %v274
    %424 = vst [vmem:[#allocation2 + $0xa8] sm:$0xff] %v276
    %425 = vst [vmem:[#allocation2 + $0xb0] sm:$0xff] %v387
    %426 = vst [vmem:[#allocation2 + $0xb8] sm:$0xff] %v389
    %427 = vst [vmem:[#allocation2 + $0xc0] sm:$0xff] %v280
    %428 = vst [vmem:[#allocation2 + $0xc8] sm:$0xff] %v282
    %429 = vst [vmem:[#allocation2 + $0xd0] sm:$0xff] %v393
    %430 = vst [vmem:[#allocation2 + $0xd8] sm:$0xff] %v395
    %431 = vst [vmem:[#allocation2 + $0xe0] sm:$0xff] %v286
    %432 = vst [vmem:[#allocation2 + $0xe8] sm:$0xff] %v288
    %433 = vst [vmem:[#allocation2 + $0xf0] sm:$0xff] %v399
    %434 = vst [vmem:[#allocation2 + $0xf8] sm:$0xff] %v401
    %v435 = vld [vmem:[%s6] sm:$0xf]
    %v437 = vlaneseq
    %v438 = vshrl.u32 %v437, 7
    %v439 = vsub.s32 0, %v438
    %v440 = vrot.slane %v435, %v439
    %v441 = vlaneseq
    %v442 = vshrl.u32 %v441, 7
    %v443 = vsub.s32 1, %v442
    %v444 = vrot.slane %v435, %v443
    %v445 = vlaneseq
    %v446 = vshrl.u32 %v445, 7
    %v447 = vsub.s32 2, %v446
    %v448 = vrot.slane %v435, %v447
    %v449 = vlaneseq
    %v450 = vshrl.u32 %v449, 7
    %v451 = vsub.s32 3, %v450
    %v452 = vrot.slane %v435, %v451
    %s457 = smul.u32 0, 4
    %s458 = smul.addr %s457, 8
    %s459 = scalar_lea.vmem [#allocation2], %s458
    %v460 = vld [vmem:[%s459] sm:$0xff]
    %v461 = vld [vmem:[%s459 + $0x8] sm:$0xff]
    %v462 = vld [vmem:[%s459 + $0x10] sm:$0xff]
    %v463 = vld [vmem:[%s459 + $0x18] sm:$0xff]
    %v464 = vld [vmem:[#allocation4] sm:$0xff]
    %v465 = vld [vmem:[#allocation4 + $0x8] sm:$0xff]
    %v466 = vld [vmem:[#allocation4 + $0x10] sm:$0xff]
    %v467 = vld [vmem:[#allocation4 + $0x18] sm:$0xff]
    %v468 = vld [vmem:[#allocation4 + $0x20] sm:$0xff]
    %v469 = vld [vmem:[#allocation4 + $0x28] sm:$0xff]
    %v470 = vld [vmem:[#allocation4 + $0x30] sm:$0xff]
    %v471 = vld [vmem:[#allocation4 + $0x38] sm:$0xff]
    %v472 = vld [vmem:[#allocation4 + $0x40] sm:$0xff]
    %v473 = vld [vmem:[#allocation4 + $0x48] sm:$0xff]
    %v474 = vld [vmem:[#allocation4 + $0x50] sm:$0xff]
    %v475 = vld [vmem:[#allocation4 + $0x58] sm:$0xff]
    %v476 = vld [vmem:[#allocation4 + $0x60] sm:$0xff]
    %v477 = vld [vmem:[#allocation4 + $0x68] sm:$0xff]
    %v478 = vld [vmem:[#allocation4 + $0x70] sm:$0xff]
    %v479 = vld [vmem:[#allocation4 + $0x78] sm:$0xff]
    %v480 = vld [vmem:[#allocation4 + $0x80] sm:$0xff]
    %v481 = vld [vmem:[#allocation4 + $0x88] sm:$0xff]
    %v482 = vld [vmem:[#allocation4 + $0x90] sm:$0xff]
    %v483 = vld [vmem:[#allocation4 + $0x98] sm:$0xff]
    %v484 = vld [vmem:[#allocation4 + $0xa0] sm:$0xff]
    %v485 = vld [vmem:[#allocation4 + $0xa8] sm:$0xff]
    %v486 = vld [vmem:[#allocation4 + $0xb0] sm:$0xff]
    %v487 = vld [vmem:[#allocation4 + $0xb8] sm:$0xff]
    %v488 = vld [vmem:[#allocation4 + $0xc0] sm:$0xff]
    %v489 = vld [vmem:[#allocation4 + $0xc8] sm:$0xff]
    %v490 = vld [vmem:[#allocation4 + $0xd0] sm:$0xff]
    %v491 = vld [vmem:[#allocation4 + $0xd8] sm:$0xff]
    %v492 = vld [vmem:[#allocation4 + $0xe0] sm:$0xff]
    %v493 = vld [vmem:[#allocation4 + $0xe8] sm:$0xff]
    %v494 = vld [vmem:[#allocation4 + $0xf0] sm:$0xff]
    %v495 = vld [vmem:[#allocation4 + $0xf8] sm:$0xff]
    %v496 = vld [vmem:[#allocation4 + $0x100] sm:$0xff]
    %v497 = vld [vmem:[#allocation4 + $0x108] sm:$0xff]
    %v498 = vld [vmem:[#allocation4 + $0x110] sm:$0xff]
    %v499 = vld [vmem:[#allocation4 + $0x118] sm:$0xff]
    %v500 = vld [vmem:[#allocation4 + $0x120] sm:$0xff]
    %v501 = vld [vmem:[#allocation4 + $0x128] sm:$0xff]
    %v502 = vld [vmem:[#allocation4 + $0x130] sm:$0xff]
    %v503 = vld [vmem:[#allocation4 + $0x138] sm:$0xff]
    %v504 = vld [vmem:[#allocation4 + $0x140] sm:$0xff]
    %v505 = vld [vmem:[#allocation4 + $0x148] sm:$0xff]
    %v506 = vld [vmem:[#allocation4 + $0x150] sm:$0xff]
    %v507 = vld [vmem:[#allocation4 + $0x158] sm:$0xff]
    %v508 = vld [vmem:[#allocation4 + $0x160] sm:$0xff]
    %v509 = vld [vmem:[#allocation4 + $0x168] sm:$0xff]
    %v510 = vld [vmem:[#allocation4 + $0x170] sm:$0xff]
    %v511 = vld [vmem:[#allocation4 + $0x178] sm:$0xff]
    %v512 = vld [vmem:[#allocation4 + $0x180] sm:$0xff]
    %v513 = vld [vmem:[#allocation4 + $0x188] sm:$0xff]
    %v514 = vld [vmem:[#allocation4 + $0x190] sm:$0xff]
    %v515 = vld [vmem:[#allocation4 + $0x198] sm:$0xff]
    %v516 = vld [vmem:[#allocation4 + $0x1a0] sm:$0xff]
    %v517 = vld [vmem:[#allocation4 + $0x1a8] sm:$0xff]
    %v518 = vld [vmem:[#allocation4 + $0x1b0] sm:$0xff]
    %v519 = vld [vmem:[#allocation4 + $0x1b8] sm:$0xff]
    %v520 = vld [vmem:[#allocation4 + $0x1c0] sm:$0xff]
    %v521 = vld [vmem:[#allocation4 + $0x1c8] sm:$0xff]
    %v522 = vld [vmem:[#allocation4 + $0x1d0] sm:$0xff]
    %v523 = vld [vmem:[#allocation4 + $0x1d8] sm:$0xff]
    %v524 = vld [vmem:[#allocation4 + $0x1e0] sm:$0xff]
    %v525 = vld [vmem:[#allocation4 + $0x1e8] sm:$0xff]
    %v526 = vld [vmem:[#allocation4 + $0x1f0] sm:$0xff]
    %v527 = vld [vmem:[#allocation4 + $0x1f8] sm:$0xff]
    %528 = vmatprep.subr.mxu0 %v525
    %529 = vmatpush1.msra.mxu0 %v524
    %530 = vmatprep.subr.mxu0 %v521
    %531 = vmatpush1.msra.mxu0 %v520
    %532 = vmatprep.subr.mxu0 %v517
    %533 = vmatpush1.msra.mxu0 %v516
    %534 = vmatprep.subr.mxu0 %v513
    %535 = vmatpush1.msra.mxu0 %v512
    %536 = vmatprep.subr.mxu0 %v509
    %537 = vmatpush1.msra.mxu0 %v508
    %538 = vmatprep.subr.mxu0 %v505
    %539 = vmatpush1.msra.mxu0 %v504
    %540 = vmatprep.subr.mxu0 %v501
    %541 = vmatpush1.msra.mxu0 %v500
    %542 = vmatprep.subr.mxu0 %v497
    %543 = vmatpush1.msra.mxu0 %v496
    %544 = vmatprep.subr.mxu0 %v493
    %545 = vmatpush1.msra.mxu0 %v492
    %546 = vmatprep.subr.mxu0 %v489
    %547 = vmatpush1.msra.mxu0 %v488
    %548 = vmatprep.subr.mxu0 %v485
    %549 = vmatpush1.msra.mxu0 %v484
    %550 = vmatprep.subr.mxu0 %v481
    %551 = vmatpush1.msra.mxu0 %v480
    %552 = vmatprep.subr.mxu0 %v477
    %553 = vmatpush1.msra.mxu0 %v476
    %554 = vmatprep.subr.mxu0 %v473
    %555 = vmatpush1.msra.mxu0 %v472
    %556 = vmatprep.subr.mxu0 %v469
    %557 = vmatpush1.msra.mxu0 %v468
    %558 = vmatprep.subr.mxu0 %v465
    %559 = vmatpush1.msra.mxu0 %v464
    %560 = vmatprep.subr.mxu0 0.0
    %561 = vmatpush2.msra.mxu0 0.0
    %562 = vmatprep.subr.mxu0 0.0
    %563 = vmatpush2.msra.mxu0 0.0
    %564 = vmatprep.subr.mxu0 0.0
    %565 = vmatpush2.msra.mxu0 0.0
    %566 = vmatprep.subr.mxu0 0.0
    %567 = vmatpush2.msra.mxu0 0.0
    %568 = vmatprep.subr.mxu0 0.0
    %569 = vmatpush2.msra.mxu0 0.0
    %570 = vmatprep.subr.mxu0 0.0
    %571 = vmatpush2.msra.mxu0 0.0
    %572 = vmatprep.subr.mxu0 0.0
    %573 = vmatpush2.msra.mxu0 0.0
    %574 = vmatprep.subr.mxu0 0.0
    %575 = vmatpush2.msra.mxu0 0.0
    %576 = vmatprep.subr.mxu0 0.0
    %577 = vmatpush2.msra.mxu0 0.0
    %578 = vmatprep.subr.mxu0 0.0
    %579 = vmatpush2.msra.mxu0 0.0
    %580 = vmatprep.subr.mxu0 0.0
    %581 = vmatpush2.msra.mxu0 0.0
    %582 = vmatprep.subr.mxu0 0.0
    %583 = vmatpush2.msra.mxu0 0.0
    %584 = vmatprep.subr.mxu0 0.0
    %585 = vmatpush2.msra.mxu0 0.0
    %586 = vmatprep.subr.mxu0 0.0
    %587 = vmatpush2.msra.mxu0 0.0
    %588 = vmatprep.subr.mxu0 0.0
    %589 = vmatpush2.msra.mxu0 0.0
    %590 = vmatprep.subr.mxu0 0.0
    %591 = vmatpush2.msra.mxu0 0.0
    %592 = vmatprep.mubr.f32.mxu0 0.0
    %593 = vmatmul.mubr.f32.gmra.mxu0 0.0
    %v594 = vpop.f32.mrf.mxu0
    %v595 = vadd.f32 0.0, %v594
    %v596 = vpop.f32.mrf.mxu0
    %v597 = vadd.f32 0.0, %v596
    %598 = vdwg.mxu0
    %599 = vmatprep.subr.mxu0 %v527
    %600 = vmatpush1.msra.mxu0 %v526
    %601 = vmatprep.subr.mxu0 %v523
    %602 = vmatpush1.msra.mxu0 %v522
    %603 = vmatprep.subr.mxu0 %v519
    %604 = vmatpush1.msra.mxu0 %v518
    %605 = vmatprep.subr.mxu0 %v515
    %606 = vmatpush1.msra.mxu0 %v514
    %607 = vmatprep.subr.mxu0 %v511
    %608 = vmatpush1.msra.mxu0 %v510
    %609 = vmatprep.subr.mxu0 %v507
    %610 = vmatpush1.msra.mxu0 %v506
    %611 = vmatprep.subr.mxu0 %v503
    %612 = vmatpush1.msra.mxu0 %v502
    %613 = vmatprep.subr.mxu0 %v499
    %614 = vmatpush1.msra.mxu0 %v498
    %615 = vmatprep.subr.mxu0 %v495
    %616 = vmatpush1.msra.mxu0 %v494
    %617 = vmatprep.subr.mxu0 %v491
    %618 = vmatpush1.msra.mxu0 %v490
    %619 = vmatprep.subr.mxu0 %v487
    %620 = vmatpush1.msra.mxu0 %v486
    %621 = vmatprep.subr.mxu0 %v483
    %622 = vmatpush1.msra.mxu0 %v482
    %623 = vmatprep.subr.mxu0 %v479
    %624 = vmatpush1.msra.mxu0 %v478
    %625 = vmatprep.subr.mxu0 %v475
    %626 = vmatpush1.msra.mxu0 %v474
    %627 = vmatprep.subr.mxu0 %v471
    %628 = vmatpush1.msra.mxu0 %v470
    %629 = vmatprep.subr.mxu0 %v467
    %630 = vmatpush1.msra.mxu0 %v466
    %631 = vmatprep.subr.mxu0 0.0
    %632 = vmatpush2.msra.mxu0 0.0
    %633 = vmatprep.subr.mxu0 0.0
    %634 = vmatpush2.msra.mxu0 0.0
    %635 = vmatprep.subr.mxu0 0.0
    %636 = vmatpush2.msra.mxu0 0.0
    %637 = vmatprep.subr.mxu0 0.0
    %638 = vmatpush2.msra.mxu0 0.0
    %639 = vmatprep.subr.mxu0 0.0
    %640 = vmatpush2.msra.mxu0 0.0
    %641 = vmatprep.subr.mxu0 0.0
    %642 = vmatpush2.msra.mxu0 0.0
    %643 = vmatprep.subr.mxu0 0.0
    %644 = vmatpush2.msra.mxu0 0.0
    %645 = vmatprep.subr.mxu0 0.0
    %646 = vmatpush2.msra.mxu0 0.0
    %647 = vmatprep.subr.mxu0 0.0
    %648 = vmatpush2.msra.mxu0 0.0
    %649 = vmatprep.subr.mxu0 0.0
    %650 = vmatpush2.msra.mxu0 0.0
    %651 = vmatprep.subr.mxu0 0.0
    %652 = vmatpush2.msra.mxu0 0.0
    %653 = vmatprep.subr.mxu0 0.0
    %654 = vmatpush2.msra.mxu0 0.0
    %655 = vmatprep.subr.mxu0 0.0
    %656 = vmatpush2.msra.mxu0 0.0
    %657 = vmatprep.subr.mxu0 0.0
    %658 = vmatpush2.msra.mxu0 0.0
    %659 = vmatprep.subr.mxu0 0.0
    %660 = vmatpush2.msra.mxu0 0.0
    %661 = vmatprep.subr.mxu0 0.0
    %662 = vmatpush2.msra.mxu0 0.0
    %663 = vmatprep.mubr.f32.mxu0 0.0
    %664 = vmatmul.mubr.f32.gmra.mxu0 0.0
    %v665 = vpop.f32.mrf.mxu0
    %v666 = vadd.f32 0.0, %v665
    %v667 = vpop.f32.mrf.mxu0
    %v668 = vadd.f32 0.0, %v667
    %669 = vdwg.mxu0
    %v670 = vadd.f32 %v460, %v595
    %v671 = vadd.f32 %v461, %v597
    %v672 = vadd.f32 %v462, %v666
    %v673 = vadd.f32 %v463, %v668
    %v674 = vxor.u32 %v670, 2147483648
    %v675 = vxor.u32 %v671, 2147483648
    %v676 = vxor.u32 %v672, 2147483648
    %v677 = vmul.f32 %v674, 1.442695
    %v678 = vpow.pop %v677
    %v679 = vmul.f32 %v675, 1.442695
    %v680 = vpow.pop %v679
    %v681 = vmul.f32 %v676, 1.442695
    %v682 = vpow.pop %v681
    %v683 = vadd.f32 %v678, 1.0
    %v684 = vadd.f32 %v680, 1.0
    %v685 = vadd.f32 %v682, 1.0
    %v686 = vrcp.pop %v683
    %v687 = vmul.f32 1.0, %v686
    %v688 = vrcp.pop %v684
    %v689 = vmul.f32 1.0, %v688
    %v690 = vrcp.pop %v685
    %v691 = vmul.f32 1.0, %v690
    %v692 = vtanh.pop %v673
    %v693 = vmul.f32 %v689, 0.0
    %v694 = vmul.f32 %v687, %v692
    %v695 = vadd.f32 %v693, %v694
    %v696 = vtanh.pop %v695
    %v697 = vmul.f32 %v691, %v696
    %v698 = vld [vmem:[#allocation7] sm:$0xff]
    %v699 = vld [vmem:[#allocation7 + $0x8] sm:$0xff]
    %v700 = vld [vmem:[#allocation7 + $0x10] sm:$0xff]
    %v701 = vld [vmem:[#allocation7 + $0x18] sm:$0xff]
    %v702 = vld [vmem:[#allocation7 + $0x20] sm:$0xff]
    %v703 = vld [vmem:[#allocation7 + $0x28] sm:$0xff]
    %v704 = vld [vmem:[#allocation7 + $0x30] sm:$0xff]
    %v705 = vld [vmem:[#allocation7 + $0x38] sm:$0xff]
    %v706 = vld [vmem:[#allocation7 + $0x40] sm:$0xff]
    %v707 = vld [vmem:[#allocation7 + $0x48] sm:$0xff]
    %v708 = vld [vmem:[#allocation7 + $0x50] sm:$0xff]
    %v709 = vld [vmem:[#allocation7 + $0x58] sm:$0xff]
    %v710 = vld [vmem:[#allocation7 + $0x60] sm:$0xff]
    %v711 = vld [vmem:[#allocation7 + $0x68] sm:$0xff]
    %v712 = vld [vmem:[#allocation7 + $0x70] sm:$0xff]
    %v713 = vld [vmem:[#allocation7 + $0x78] sm:$0xff]
    %v714 = vld [vmem:[#allocation7 + $0x80] sm:$0xff]
    %v715 = vld [vmem:[#allocation7 + $0x88] sm:$0xff]
    %v716 = vld [vmem:[#allocation7 + $0x90] sm:$0xff]
    %v717 = vld [vmem:[#allocation7 + $0x98] sm:$0xff]
    %v718 = vld [vmem:[#allocation7 + $0xa0] sm:$0xff]
    %v719 = vld [vmem:[#allocation7 + $0xa8] sm:$0xff]
    %v720 = vld [vmem:[#allocation7 + $0xb0] sm:$0xff]
    %v721 = vld [vmem:[#allocation7 + $0xb8] sm:$0xff]
    %v722 = vld [vmem:[#allocation7 + $0xc0] sm:$0xff]
    %v723 = vld [vmem:[#allocation7 + $0xc8] sm:$0xff]
    %v724 = vld [vmem:[#allocation7 + $0xd0] sm:$0xff]
    %v725 = vld [vmem:[#allocation7 + $0xd8] sm:$0xff]
    %v726 = vld [vmem:[#allocation7 + $0xe0] sm:$0xff]
    %v727 = vld [vmem:[#allocation7 + $0xe8] sm:$0xff]
    %v728 = vld [vmem:[#allocation7 + $0xf0] sm:$0xff]
    %v729 = vld [vmem:[#allocation7 + $0xf8] sm:$0xff]
    %v730 = vld [vmem:[#allocation7 + $0x100] sm:$0xff]
    %v731 = vld [vmem:[#allocation7 + $0x108] sm:$0xff]
    %v732 = vld [vmem:[#allocation7 + $0x110] sm:$0xff]
    %v733 = vld [vmem:[#allocation7 + $0x118] sm:$0xff]
    %v734 = vld [vmem:[#allocation7 + $0x120] sm:$0xff]
    %v735 = vld [vmem:[#allocation7 + $0x128] sm:$0xff]
    %v736 = vld [vmem:[#allocation7 + $0x130] sm:$0xff]
    %v737 = vld [vmem:[#allocation7 + $0x138] sm:$0xff]
    %v738 = vld [vmem:[#allocation7 + $0x140] sm:$0xff]
    %v739 = vld [vmem:[#allocation7 + $0x148] sm:$0xff]
    %v740 = vld [vmem:[#allocation7 + $0x150] sm:$0xff]
    %v741 = vld [vmem:[#allocation7 + $0x158] sm:$0xff]
    %v742 = vld [vmem:[#allocation7 + $0x160] sm:$0xff]
    %v743 = vld [vmem:[#allocation7 + $0x168] sm:$0xff]
    %v744 = vld [vmem:[#allocation7 + $0x170] sm:$0xff]
    %v745 = vld [vmem:[#allocation7 + $0x178] sm:$0xff]
    %v746 = vld [vmem:[#allocation7 + $0x180] sm:$0xff]
    %v747 = vld [vmem:[#allocation7 + $0x188] sm:$0xff]
    %v748 = vld [vmem:[#allocation7 + $0x190] sm:$0xff]
    %v749 = vld [vmem:[#allocation7 + $0x198] sm:$0xff]
    %v750 = vld [vmem:[#allocation7 + $0x1a0] sm:$0xff]
    %v751 = vld [vmem:[#allocation7 + $0x1a8] sm:$0xff]
    %v752 = vld [vmem:[#allocation7 + $0x1b0] sm:$0xff]
    %v753 = vld [vmem:[#allocation7 + $0x1b8] sm:$0xff]
    %v754 = vld [vmem:[#allocation7 + $0x1c0] sm:$0xff]
    %v755 = vld [vmem:[#allocation7 + $0x1c8] sm:$0xff]
    %v756 = vld [vmem:[#allocation7 + $0x1d0] sm:$0xff]
    %v757 = vld [vmem:[#allocation7 + $0x1d8] sm:$0xff]
    %v758 = vld [vmem:[#allocation7 + $0x1e0] sm:$0xff]
    %v759 = vld [vmem:[#allocation7 + $0x1e8] sm:$0xff]
    %v760 = vld [vmem:[#allocation7 + $0x1f0] sm:$0xff]
    %v761 = vld [vmem:[#allocation7 + $0x1f8] sm:$0xff]
    %762 = vmatprep.subr.mxu0 %v759
    %763 = vmatpush1.msra.mxu0 %v758
    %764 = vmatprep.subr.mxu0 %v755
    %765 = vmatpush1.msra.mxu0 %v754
    %766 = vmatprep.subr.mxu0 %v751
    %767 = vmatpush1.msra.mxu0 %v750
    %768 = vmatprep.subr.mxu0 %v747
    %769 = vmatpush1.msra.mxu0 %v746
    %770 = vmatprep.subr.mxu0 %v743
    %771 = vmatpush1.msra.mxu0 %v742
    %772 = vmatprep.subr.mxu0 %v739
    %773 = vmatpush1.msra.mxu0 %v738
    %774 = vmatprep.subr.mxu0 %v735
    %775 = vmatpush1.msra.mxu0 %v734
    %776 = vmatprep.subr.mxu0 %v731
    %777 = vmatpush1.msra.mxu0 %v730
    %778 = vmatprep.subr.mxu0 %v727
    %779 = vmatpush1.msra.mxu0 %v726
    %780 = vmatprep.subr.mxu0 %v723
    %781 = vmatpush1.msra.mxu0 %v722
    %782 = vmatprep.subr.mxu0 %v719
    %783 = vmatpush1.msra.mxu0 %v718
    %784 = vmatprep.subr.mxu0 %v715
    %785 = vmatpush1.msra.mxu0 %v714
    %786 = vmatprep.subr.mxu0 %v711
    %787 = vmatpush1.msra.mxu0 %v710
    %788 = vmatprep.subr.mxu0 %v707
    %789 = vmatpush1.msra.mxu0 %v706
    %790 = vmatprep.subr.mxu0 %v703
    %791 = vmatpush1.msra.mxu0 %v702
    %792 = vmatprep.subr.mxu0 %v699
    %793 = vmatpush1.msra.mxu0 %v698
    %794 = vmatprep.subr.mxu0 0.0
    %795 = vmatpush2.msra.mxu0 0.0
    %796 = vmatprep.subr.mxu0 0.0
    %797 = vmatpush2.msra.mxu0 0.0
    %798 = vmatprep.subr.mxu0 0.0
    %799 = vmatpush2.msra.mxu0 0.0
    %800 = vmatprep.subr.mxu0 0.0
    %801 = vmatpush2.msra.mxu0 0.0
    %802 = vmatprep.subr.mxu0 0.0
    %803 = vmatpush2.msra.mxu0 0.0
    %804 = vmatprep.subr.mxu0 0.0
    %805 = vmatpush2.msra.mxu0 0.0
    %806 = vmatprep.subr.mxu0 0.0
    %807 = vmatpush2.msra.mxu0 0.0
    %808 = vmatprep.subr.mxu0 0.0
    %809 = vmatpush2.msra.mxu0 0.0
    %810 = vmatprep.subr.mxu0 0.0
    %811 = vmatpush2.msra.mxu0 0.0
    %812 = vmatprep.subr.mxu0 0.0
    %813 = vmatpush2.msra.mxu0 0.0
    %814 = vmatprep.subr.mxu0 0.0
    %815 = vmatpush2.msra.mxu0 0.0
    %816 = vmatprep.subr.mxu0 0.0
    %817 = vmatpush2.msra.mxu0 0.0
    %818 = vmatprep.subr.mxu0 0.0
    %819 = vmatpush2.msra.mxu0 0.0
    %820 = vmatprep.subr.mxu0 0.0
    %821 = vmatpush2.msra.mxu0 0.0
    %822 = vmatprep.subr.mxu0 0.0
    %823 = vmatpush2.msra.mxu0 0.0
    %824 = vmatprep.subr.mxu0 0.0
    %825 = vmatpush2.msra.mxu0 0.0
    %826 = vmatprep.mubr.f32.mxu0 0.0
    %827 = vmatmul.mubr.f32.gmra.mxu0 %v697
    %v828 = vpop.f32.mrf.mxu0
    %v829 = vadd.f32 %v440, %v828
    %v830 = vpop.f32.mrf.mxu0
    %v831 = vadd.f32 %v444, %v830
    %832 = vdwg.mxu0
    %833 = vmatprep.subr.mxu0 %v761
    %834 = vmatpush1.msra.mxu0 %v760
    %835 = vmatprep.subr.mxu0 %v757
    %836 = vmatpush1.msra.mxu0 %v756
    %837 = vmatprep.subr.mxu0 %v753
    %838 = vmatpush1.msra.mxu0 %v752
    %839 = vmatprep.subr.mxu0 %v749
    %840 = vmatpush1.msra.mxu0 %v748
    %841 = vmatprep.subr.mxu0 %v745
    %842 = vmatpush1.msra.mxu0 %v744
    %843 = vmatprep.subr.mxu0 %v741
    %844 = vmatpush1.msra.mxu0 %v740
    %845 = vmatprep.subr.mxu0 %v737
    %846 = vmatpush1.msra.mxu0 %v736
    %847 = vmatprep.subr.mxu0 %v733
    %848 = vmatpush1.msra.mxu0 %v732
    %849 = vmatprep.subr.mxu0 %v729
    %850 = vmatpush1.msra.mxu0 %v728
    %851 = vmatprep.subr.mxu0 %v725
    %852 = vmatpush1.msra.mxu0 %v724
    %853 = vmatprep.subr.mxu0 %v721
    %854 = vmatpush1.msra.mxu0 %v720
    %855 = vmatprep.subr.mxu0 %v717
    %856 = vmatpush1.msra.mxu0 %v716
    %857 = vmatprep.subr.mxu0 %v713
    %858 = vmatpush1.msra.mxu0 %v712
    %859 = vmatprep.subr.mxu0 %v709
    %860 = vmatpush1.msra.mxu0 %v708
    %861 = vmatprep.subr.mxu0 %v705
    %862 = vmatpush1.msra.mxu0 %v704
    %863 = vmatprep.subr.mxu0 %v701
    %864 = vmatpush1.msra.mxu0 %v700
    %865 = vmatprep.subr.mxu0 0.0
    %866 = vmatpush2.msra.mxu0 0.0
    %867 = vmatprep.subr.mxu0 0.0
    %868 = vmatpush2.msra.mxu0 0.0
    %869 = vmatprep.subr.mxu0 0.0
    %870 = vmatpush2.msra.mxu0 0.0
    %871 = vmatprep.subr.mxu0 0.0
    %872 = vmatpush2.msra.mxu0 0.0
    %873 = vmatprep.subr.mxu0 0.0
    %874 = vmatpush2.msra.mxu0 0.0
    %875 = vmatprep.subr.mxu0 0.0
    %876 = vmatpush2.msra.mxu0 0.0
    %877 = vmatprep.subr.mxu0 0.0
    %878 = vmatpush2.msra.mxu0 0.0
    %879 = vmatprep.subr.mxu0 0.0
    %880 = vmatpush2.msra.mxu0 0.0
    %881 = vmatprep.subr.mxu0 0.0
    %882 = vmatpush2.msra.mxu0 0.0
    %883 = vmatprep.subr.mxu0 0.0
    %884 = vmatpush2.msra.mxu0 0.0
    %885 = vmatprep.subr.mxu0 0.0
    %886 = vmatpush2.msra.mxu0 0.0
    %887 = vmatprep.subr.mxu0 0.0
    %888 = vmatpush2.msra.mxu0 0.0
    %889 = vmatprep.subr.mxu0 0.0
    %890 = vmatpush2.msra.mxu0 0.0
    %891 = vmatprep.subr.mxu0 0.0
    %892 = vmatpush2.msra.mxu0 0.0
    %893 = vmatprep.subr.mxu0 0.0
    %894 = vmatpush2.msra.mxu0 0.0
    %895 = vmatprep.subr.mxu0 0.0
    %896 = vmatpush2.msra.mxu0 0.0
    %897 = vmatprep.mubr.f32.mxu0 0.0
    %898 = vmatmul.mubr.f32.gmra.mxu0 %v697
    %v899 = vpop.f32.mrf.mxu0
    %v900 = vadd.f32 %v448, %v899
    %v901 = vpop.f32.mrf.mxu0
    %v902 = vadd.f32 %v452, %v901
    %903 = vdwg.mxu0
    %v904 = vld [vmem:[#allocation9] sm:$0xff]
    %v905 = vld [vmem:[#allocation9 + $0x8] sm:$0xff]
    %v906 = vld [vmem:[#allocation9 + $0x10] sm:$0xff]
    %v907 = vld [vmem:[#allocation9 + $0x18] sm:$0xff]
    %v908 = vld [vmem:[#allocation9 + $0x20] sm:$0xff]
    %v909 = vld [vmem:[#allocation9 + $0x28] sm:$0xff]
    %v910 = vld [vmem:[#allocation9 + $0x30] sm:$0xff]
    %v911 = vld [vmem:[#allocation9 + $0x38] sm:$0xff]
    %v912 = vld [vmem:[#allocation9 + $0x40] sm:$0xff]
    %v913 = vld [vmem:[#allocation9 + $0x48] sm:$0xff]
    %v914 = vld [vmem:[#allocation9 + $0x50] sm:$0xff]
    %v915 = vld [vmem:[#allocation9 + $0x58] sm:$0xff]
    %v916 = vld [vmem:[#allocation9 + $0x60] sm:$0xff]
    %v917 = vld [vmem:[#allocation9 + $0x68] sm:$0xff]
    %v918 = vld [vmem:[#allocation9 + $0x70] sm:$0xff]
    %v919 = vld [vmem:[#allocation9 + $0x78] sm:$0xff]
    %v920 = vld [vmem:[#allocation9 + $0x80] sm:$0xff]
    %v921 = vld [vmem:[#allocation9 + $0x88] sm:$0xff]
    %v922 = vld [vmem:[#allocation9 + $0x90] sm:$0xff]
    %v923 = vld [vmem:[#allocation9 + $0x98] sm:$0xff]
    %v924 = vld [vmem:[#allocation9 + $0xa0] sm:$0xff]
    %v925 = vld [vmem:[#allocation9 + $0xa8] sm:$0xff]
    %v926 = vld [vmem:[#allocation9 + $0xb0] sm:$0xff]
    %v927 = vld [vmem:[#allocation9 + $0xb8] sm:$0xff]
    %v928 = vld [vmem:[#allocation9 + $0xc0] sm:$0xff]
    %v929 = vld [vmem:[#allocation9 + $0xc8] sm:$0xff]
    %v930 = vld [vmem:[#allocation9 + $0xd0] sm:$0xff]
    %v931 = vld [vmem:[#allocation9 + $0xd8] sm:$0xff]
    %v932 = vld [vmem:[#allocation9 + $0xe0] sm:$0xff]
    %v933 = vld [vmem:[#allocation9 + $0xe8] sm:$0xff]
    %v934 = vld [vmem:[#allocation9 + $0xf0] sm:$0xff]
    %v935 = vld [vmem:[#allocation9 + $0xf8] sm:$0xff]
    %v936 = vld [vmem:[#allocation9 + $0x100] sm:$0xff]
    %v937 = vld [vmem:[#allocation9 + $0x108] sm:$0xff]
    %v938 = vld [vmem:[#allocation9 + $0x110] sm:$0xff]
    %v939 = vld [vmem:[#allocation9 + $0x118] sm:$0xff]
    %v940 = vld [vmem:[#allocation9 + $0x120] sm:$0xff]
    %v941 = vld [vmem:[#allocation9 + $0x128] sm:$0xff]
    %v942 = vld [vmem:[#allocation9 + $0x130] sm:$0xff]
    %v943 = vld [vmem:[#allocation9 + $0x138] sm:$0xff]
    %v944 = vld [vmem:[#allocation9 + $0x140] sm:$0xff]
    %v945 = vld [vmem:[#allocation9 + $0x148] sm:$0xff]
    %v946 = vld [vmem:[#allocation9 + $0x150] sm:$0xff]
    %v947 = vld [vmem:[#allocation9 + $0x158] sm:$0xff]
    %v948 = vld [vmem:[#allocation9 + $0x160] sm:$0xff]
    %v949 = vld [vmem:[#allocation9 + $0x168] sm:$0xff]
    %v950 = vld [vmem:[#allocation9 + $0x170] sm:$0xff]
    %v951 = vld [vmem:[#allocation9 + $0x178] sm:$0xff]
    %v952 = vld [vmem:[#allocation9 + $0x180] sm:$0xff]
    %v953 = vld [vmem:[#allocation9 + $0x188] sm:$0xff]
    %v954 = vld [vmem:[#allocation9 + $0x190] sm:$0xff]
    %v955 = vld [vmem:[#allocation9 + $0x198] sm:$0xff]
    %v956 = vld [vmem:[#allocation9 + $0x1a0] sm:$0xff]
    %v957 = vld [vmem:[#allocation9 + $0x1a8] sm:$0xff]
    %v958 = vld [vmem:[#allocation9 + $0x1b0] sm:$0xff]
    %v959 = vld [vmem:[#allocation9 + $0x1b8] sm:$0xff]
    %v960 = vld [vmem:[#allocation9 + $0x1c0] sm:$0xff]
    %v961 = vld [vmem:[#allocation9 + $0x1c8] sm:$0xff]
    %v962 = vld [vmem:[#allocation9 + $0x1d0] sm:$0xff]
    %v963 = vld [vmem:[#allocation9 + $0x1d8] sm:$0xff]
    %v964 = vld [vmem:[#allocation9 + $0x1e0] sm:$0xff]
    %v965 = vld [vmem:[#allocation9 + $0x1e8] sm:$0xff]
    %v966 = vld [vmem:[#allocation9 + $0x1f0] sm:$0xff]
    %v967 = vld [vmem:[#allocation9 + $0x1f8] sm:$0xff]
    %968 = vmatprep.subr.mxu0 %v965
    %969 = vmatpush1.msra.mxu0 %v964
    %970 = vmatprep.subr.mxu0 %v961
    %971 = vmatpush1.msra.mxu0 %v960
    %972 = vmatprep.subr.mxu0 %v957
    %973 = vmatpush1.msra.mxu0 %v956
    %974 = vmatprep.subr.mxu0 %v953
    %975 = vmatpush1.msra.mxu0 %v952
    %976 = vmatprep.subr.mxu0 %v949
    %977 = vmatpush1.msra.mxu0 %v948
    %978 = vmatprep.subr.mxu0 %v945
    %979 = vmatpush1.msra.mxu0 %v944
    %980 = vmatprep.subr.mxu0 %v941
    %981 = vmatpush1.msra.mxu0 %v940
    %982 = vmatprep.subr.mxu0 %v937
    %983 = vmatpush1.msra.mxu0 %v936
    %984 = vmatprep.subr.mxu0 %v933
    %985 = vmatpush1.msra.mxu0 %v932
    %986 = vmatprep.subr.mxu0 %v929
    %987 = vmatpush1.msra.mxu0 %v928
    %988 = vmatprep.subr.mxu0 %v925
    %989 = vmatpush1.msra.mxu0 %v924
    %990 = vmatprep.subr.mxu0 %v921
    %991 = vmatpush1.msra.mxu0 %v920
    %992 = vmatprep.subr.mxu0 %v917
    %993 = vmatpush1.msra.mxu0 %v916
    %994 = vmatprep.subr.mxu0 %v913
    %995 = vmatpush1.msra.mxu0 %v912
    %996 = vmatprep.subr.mxu0 %v909
    %997 = vmatpush1.msra.mxu0 %v908
    %998 = vmatprep.subr.mxu0 %v905
    %999 = vmatpush1.msra.mxu0 %v904
    %1000 = vmatprep.subr.mxu0 0.0
    %1001 = vmatpush2.msra.mxu0 0.0
    %1002 = vmatprep.subr.mxu0 0.0
    %1003 = vmatpush2.msra.mxu0 0.0
    %1004 = vmatprep.subr.mxu0 0.0
    %1005 = vmatpush2.msra.mxu0 0.0
    %1006 = vmatprep.subr.mxu0 0.0
    %1007 = vmatpush2.msra.mxu0 0.0
    %1008 = vmatprep.subr.mxu0 0.0
    %1009 = vmatpush2.msra.mxu0 0.0
    %1010 = vmatprep.subr.mxu0 0.0
    %1011 = vmatpush2.msra.mxu0 0.0
    %1012 = vmatprep.subr.mxu0 0.0
    %1013 = vmatpush2.msra.mxu0 0.0
    %1014 = vmatprep.subr.mxu0 0.0
    %1015 = vmatpush2.msra.mxu0 0.0
    %1016 = vmatprep.subr.mxu0 0.0
    %1017 = vmatpush2.msra.mxu0 0.0
    %1018 = vmatprep.subr.mxu0 0.0
    %1019 = vmatpush2.msra.mxu0 0.0
    %1020 = vmatprep.subr.mxu0 0.0
    %1021 = vmatpush2.msra.mxu0 0.0
    %1022 = vmatprep.subr.mxu0 0.0
    %1023 = vmatpush2.msra.mxu0 0.0
    %1024 = vmatprep.subr.mxu0 0.0
    %1025 = vmatpush2.msra.mxu0 0.0
    %1026 = vmatprep.subr.mxu0 0.0
    %1027 = vmatpush2.msra.mxu0 0.0
    %1028 = vmatprep.subr.mxu0 0.0
    %1029 = vmatpush2.msra.mxu0 0.0
    %1030 = vmatprep.subr.mxu0 0.0
    %1031 = vmatpush2.msra.mxu0 0.0
    %1032 = vmatprep.mubr.f32.mxu0 0.0
    %1033 = vmatmul.mubr.f32.gmra.mxu0 0.0
    %v1034 = vpop.f32.mrf.mxu0
    %v1035 = vadd.f32 0.0, %v1034
    %v1036 = vpop.f32.mrf.mxu0
    %v1037 = vadd.f32 0.0, %v1036
    %1038 = vdwg.mxu0
    %1039 = vmatprep.subr.mxu0 %v967
    %1040 = vmatpush1.msra.mxu0 %v966
    %1041 = vmatprep.subr.mxu0 %v963
    %1042 = vmatpush1.msra.mxu0 %v962
    %1043 = vmatprep.subr.mxu0 %v959
    %1044 = vmatpush1.msra.mxu0 %v958
    %1045 = vmatprep.subr.mxu0 %v955
    %1046 = vmatpush1.msra.mxu0 %v954
    %1047 = vmatprep.subr.mxu0 %v951
    %1048 = vmatpush1.msra.mxu0 %v950
    %1049 = vmatprep.subr.mxu0 %v947
    %1050 = vmatpush1.msra.mxu0 %v946
    %1051 = vmatprep.subr.mxu0 %v943
    %1052 = vmatpush1.msra.mxu0 %v942
    %1053 = vmatprep.subr.mxu0 %v939
    %1054 = vmatpush1.msra.mxu0 %v938
    %1055 = vmatprep.subr.mxu0 %v935
    %1056 = vmatpush1.msra.mxu0 %v934
    %1057 = vmatprep.subr.mxu0 %v931
    %1058 = vmatpush1.msra.mxu0 %v930
    %1059 = vmatprep.subr.mxu0 %v927
    %1060 = vmatpush1.msra.mxu0 %v926
    %1061 = vmatprep.subr.mxu0 %v923
    %1062 = vmatpush1.msra.mxu0 %v922
    %1063 = vmatprep.subr.mxu0 %v919
    %1064 = vmatpush1.msra.mxu0 %v918
    %1065 = vmatprep.subr.mxu0 %v915
    %1066 = vmatpush1.msra.mxu0 %v914
    %1067 = vmatprep.subr.mxu0 %v911
    %1068 = vmatpush1.msra.mxu0 %v910
    %1069 = vmatprep.subr.mxu0 %v907
    %1070 = vmatpush1.msra.mxu0 %v906
    %1071 = vmatprep.subr.mxu0 0.0
    %1072 = vmatpush2.msra.mxu0 0.0
    %1073 = vmatprep.subr.mxu0 0.0
    %1074 = vmatpush2.msra.mxu0 0.0
    %1075 = vmatprep.subr.mxu0 0.0
    %1076 = vmatpush2.msra.mxu0 0.0
    %1077 = vmatprep.subr.mxu0 0.0
    %1078 = vmatpush2.msra.mxu0 0.0
    %1079 = vmatprep.subr.mxu0 0.0
    %1080 = vmatpush2.msra.mxu0 0.0
    %1081 = vmatprep.subr.mxu0 0.0
    %1082 = vmatpush2.msra.mxu0 0.0
    %1083 = vmatprep.subr.mxu0 0.0
    %1084 = vmatpush2.msra.mxu0 0.0
    %1085 = vmatprep.subr.mxu0 0.0
    %1086 = vmatpush2.msra.mxu0 0.0
    %1087 = vmatprep.subr.mxu0 0.0
    %1088 = vmatpush2.msra.mxu0 0.0
    %1089 = vmatprep.subr.mxu0 0.0
    %1090 = vmatpush2.msra.mxu0 0.0
    %1091 = vmatprep.subr.mxu0 0.0
    %1092 = vmatpush2.msra.mxu0 0.0
    %1093 = vmatprep.subr.mxu0 0.0
    %1094 = vmatpush2.msra.mxu0 0.0
    %1095 = vmatprep.subr.mxu0 0.0
    %1096 = vmatpush2.msra.mxu0 0.0
    %1097 = vmatprep.subr.mxu0 0.0
    %1098 = vmatpush2.msra.mxu0 0.0
    %1099 = vmatprep.subr.mxu0 0.0
    %1100 = vmatpush2.msra.mxu0 0.0
    %1101 = vmatprep.subr.mxu0 0.0
    %1102 = vmatpush2.msra.mxu0 0.0
    %1103 = vmatprep.mubr.f32.mxu0 0.0
    %1104 = vmatmul.mubr.f32.gmra.mxu0 0.0
    %v1105 = vpop.f32.mrf.mxu0
    %v1106 = vadd.f32 0.0, %v1105
    %v1107 = vpop.f32.mrf.mxu0
    %v1108 = vadd.f32 0.0, %v1107
    %1109 = vdwg.mxu0
    %v1110 = vadd.f32 %v829, %v1035
    %v1111 = vadd.f32 %v831, %v1037
    %v1112 = vadd.f32 %v900, %v1106
    %v1113 = vadd.f32 %v902, %v1108
    %v1114 = vxor.u32 %v1110, 2147483648
    %v1115 = vxor.u32 %v1111, 2147483648
    %v1116 = vxor.u32 %v1112, 2147483648
    %v1117 = vmul.f32 %v1114, 1.442695
    %v1118 = vpow.pop %v1117
    %v1119 = vmul.f32 %v1115, 1.442695
    %v1120 = vpow.pop %v1119
    %v1121 = vmul.f32 %v1116, 1.442695
    %v1122 = vpow.pop %v1121
    %v1123 = vadd.f32 %v1118, 1.0
    %v1124 = vadd.f32 %v1120, 1.0
    %v1125 = vadd.f32 %v1122, 1.0
    %v1126 = vrcp.pop %v1123
    %v1127 = vmul.f32 1.0, %v1126
    %v1128 = vrcp.pop %v1124
    %v1129 = vmul.f32 1.0, %v1128
    %v1130 = vrcp.pop %v1125
    %v1131 = vmul.f32 1.0, %v1130
    %v1132 = vtanh.pop %v1113
    %v1133 = vmul.f32 %v1129, 0.0
    %v1134 = vmul.f32 %v1127, %v1132
    %v1135 = vadd.f32 %v1133, %v1134
    %v1136 = vtanh.pop %v1135
    %v1137 = vmul.f32 %v1131, %v1136
    %1138 = vst [vmem:[#allocation3] sm:$0xff] %v1137
    %s1139 = smul.u32 1, 4
    %s1140 = smul.addr %s1139, 8
    %s1141 = scalar_lea.vmem [#allocation2], %s1140
    %v1142 = vld [vmem:[%s1141] sm:$0xff]
    %v1143 = vld [vmem:[%s1141 + $0x8] sm:$0xff]
    %v1144 = vld [vmem:[%s1141 + $0x10] sm:$0xff]
    %v1145 = vld [vmem:[%s1141 + $0x18] sm:$0xff]
    %v1146 = vld [vmem:[#allocation4] sm:$0xff]
    %v1147 = vld [vmem:[#allocation4 + $0x8] sm:$0xff]
    %v1148 = vld [vmem:[#allocation4 + $0x10] sm:$0xff]
    %v1149 = vld [vmem:[#allocation4 + $0x18] sm:$0xff]
    %v1150 = vld [vmem:[#allocation4 + $0x20] sm:$0xff]
    %v1151 = vld [vmem:[#allocation4 + $0x28] sm:$0xff]
    %v1152 = vld [vmem:[#allocation4 + $0x30] sm:$0xff]
    %v1153 = vld [vmem:[#allocation4 + $0x38] sm:$0xff]
    %v1154 = vld [vmem:[#allocation4 + $0x40] sm:$0xff]
    %v1155 = vld [vmem:[#allocation4 + $0x48] sm:$0xff]
    %v1156 = vld [vmem:[#allocation4 + $0x50] sm:$0xff]
    %v1157 = vld [vmem:[#allocation4 + $0x58] sm:$0xff]
    %v1158 = vld [vmem:[#allocation4 + $0x60] sm:$0xff]
    %v1159 = vld [vmem:[#allocation4 + $0x68] sm:$0xff]
    %v1160 = vld [vmem:[#allocation4 + $0x70] sm:$0xff]
    %v1161 = vld [vmem:[#allocation4 + $0x78] sm:$0xff]
    %v1162 = vld [vmem:[#allocation4 + $0x80] sm:$0xff]
    %v1163 = vld [vmem:[#allocation4 + $0x88] sm:$0xff]
    %v1164 = vld [vmem:[#allocation4 + $0x90] sm:$0xff]
    %v1165 = vld [vmem:[#allocation4 + $0x98] sm:$0xff]
    %v1166 = vld [vmem:[#allocation4 + $0xa0] sm:$0xff]
    %v1167 = vld [vmem:[#allocation4 + $0xa8] sm:$0xff]
    %v1168 = vld [vmem:[#allocation4 + $0xb0] sm:$0xff]
    %v1169 = vld [vmem:[#allocation4 + $0xb8] sm:$0xff]
    %v1170 = vld [vmem:[#allocation4 + $0xc0] sm:$0xff]
    %v1171 = vld [vmem:[#allocation4 + $0xc8] sm:$0xff]
    %v1172 = vld [vmem:[#allocation4 + $0xd0] sm:$0xff]
    %v1173 = vld [vmem:[#allocation4 + $0xd8] sm:$0xff]
    %v1174 = vld [vmem:[#allocation4 + $0xe0] sm:$0xff]
    %v1175 = vld [vmem:[#allocation4 + $0xe8] sm:$0xff]
    %v1176 = vld [vmem:[#allocation4 + $0xf0] sm:$0xff]
    %v1177 = vld [vmem:[#allocation4 + $0xf8] sm:$0xff]
    %v1178 = vld [vmem:[#allocation4 + $0x100] sm:$0xff]
    %v1179 = vld [vmem:[#allocation4 + $0x108] sm:$0xff]
    %v1180 = vld [vmem:[#allocation4 + $0x110] sm:$0xff]
    %v1181 = vld [vmem:[#allocation4 + $0x118] sm:$0xff]
    %v1182 = vld [vmem:[#allocation4 + $0x120] sm:$0xff]
    %v1183 = vld [vmem:[#allocation4 + $0x128] sm:$0xff]
    %v1184 = vld [vmem:[#allocation4 + $0x130] sm:$0xff]
    %v1185 = vld [vmem:[#allocation4 + $0x138] sm:$0xff]
    %v1186 = vld [vmem:[#allocation4 + $0x140] sm:$0xff]
    %v1187 = vld [vmem:[#allocation4 + $0x148] sm:$0xff]
    %v1188 = vld [vmem:[#allocation4 + $0x150] sm:$0xff]
    %v1189 = vld [vmem:[#allocation4 + $0x158] sm:$0xff]
    %v1190 = vld [vmem:[#allocation4 + $0x160] sm:$0xff]
    %v1191 = vld [vmem:[#allocation4 + $0x168] sm:$0xff]
    %v1192 = vld [vmem:[#allocation4 + $0x170] sm:$0xff]
    %v1193 = vld [vmem:[#allocation4 + $0x178] sm:$0xff]
    %v1194 = vld [vmem:[#allocation4 + $0x180] sm:$0xff]
    %v1195 = vld [vmem:[#allocation4 + $0x188] sm:$0xff]
    %v1196 = vld [vmem:[#allocation4 + $0x190] sm:$0xff]
    %v1197 = vld [vmem:[#allocation4 + $0x198] sm:$0xff]
    %v1198 = vld [vmem:[#allocation4 + $0x1a0] sm:$0xff]
    %v1199 = vld [vmem:[#allocation4 + $0x1a8] sm:$0xff]
    %v1200 = vld [vmem:[#allocation4 + $0x1b0] sm:$0xff]
    %v1201 = vld [vmem:[#allocation4 + $0x1b8] sm:$0xff]
    %v1202 = vld [vmem:[#allocation4 + $0x1c0] sm:$0xff]
    %v1203 = vld [vmem:[#allocation4 + $0x1c8] sm:$0xff]
    %v1204 = vld [vmem:[#allocation4 + $0x1d0] sm:$0xff]
    %v1205 = vld [vmem:[#allocation4 + $0x1d8] sm:$0xff]
    %v1206 = vld [vmem:[#allocation4 + $0x1e0] sm:$0xff]
    %v1207 = vld [vmem:[#allocation4 + $0x1e8] sm:$0xff]
    %v1208 = vld [vmem:[#allocation4 + $0x1f0] sm:$0xff]
    %v1209 = vld [vmem:[#allocation4 + $0x1f8] sm:$0xff]
    %1210 = vmatprep.subr.mxu0 %v1207
    %1211 = vmatpush1.msra.mxu0 %v1206
    %1212 = vmatprep.subr.mxu0 %v1203
    %1213 = vmatpush1.msra.mxu0 %v1202
    %1214 = vmatprep.subr.mxu0 %v1199
    %1215 = vmatpush1.msra.mxu0 %v1198
    %1216 = vmatprep.subr.mxu0 %v1195
    %1217 = vmatpush1.msra.mxu0 %v1194
    %1218 = vmatprep.subr.mxu0 %v1191
    %1219 = vmatpush1.msra.mxu0 %v1190
    %1220 = vmatprep.subr.mxu0 %v1187
    %1221 = vmatpush1.msra.mxu0 %v1186
    %1222 = vmatprep.subr.mxu0 %v1183
    %1223 = vmatpush1.msra.mxu0 %v1182
    %1224 = vmatprep.subr.mxu0 %v1179
    %1225 = vmatpush1.msra.mxu0 %v1178
    %1226 = vmatprep.subr.mxu0 %v1175
    %1227 = vmatpush1.msra.mxu0 %v1174
    %1228 = vmatprep.subr.mxu0 %v1171
    %1229 = vmatpush1.msra.mxu0 %v1170
    %1230 = vmatprep.subr.mxu0 %v1167
    %1231 = vmatpush1.msra.mxu0 %v1166
    %1232 = vmatprep.subr.mxu0 %v1163
    %1233 = vmatpush1.msra.mxu0 %v1162
    %1234 = vmatprep.subr.mxu0 %v1159
    %1235 = vmatpush1.msra.mxu0 %v1158
    %1236 = vmatprep.subr.mxu0 %v1155
    %1237 = vmatpush1.msra.mxu0 %v1154
    %1238 = vmatprep.subr.mxu0 %v1151
    %1239 = vmatpush1.msra.mxu0 %v1150
    %1240 = vmatprep.subr.mxu0 %v1147
    %1241 = vmatpush1.msra.mxu0 %v1146
    %1242 = vmatprep.subr.mxu0 0.0
    %1243 = vmatpush2.msra.mxu0 0.0
    %1244 = vmatprep.subr.mxu0 0.0
    %1245 = vmatpush2.msra.mxu0 0.0
    %1246 = vmatprep.subr.mxu0 0.0
    %1247 = vmatpush2.msra.mxu0 0.0
    %1248 = vmatprep.subr.mxu0 0.0
    %1249 = vmatpush2.msra.mxu0 0.0
    %1250 = vmatprep.subr.mxu0 0.0
    %1251 = vmatpush2.msra.mxu0 0.0
    %1252 = vmatprep.subr.mxu0 0.0
    %1253 = vmatpush2.msra.mxu0 0.0
    %1254 = vmatprep.subr.mxu0 0.0
    %1255 = vmatpush2.msra.mxu0 0.0
    %1256 = vmatprep.subr.mxu0 0.0
    %1257 = vmatpush2.msra.mxu0 0.0
    %1258 = vmatprep.subr.mxu0 0.0
    %1259 = vmatpush2.msra.mxu0 0.0
    %1260 = vmatprep.subr.mxu0 0.0
    %1261 = vmatpush2.msra.mxu0 0.0
    %1262 = vmatprep.subr.mxu0 0.0
    %1263 = vmatpush2.msra.mxu0 0.0
    %1264 = vmatprep.subr.mxu0 0.0
    %1265 = vmatpush2.msra.mxu0 0.0
    %1266 = vmatprep.subr.mxu0 0.0
    %1267 = vmatpush2.msra.mxu0 0.0
    %1268 = vmatprep.subr.mxu0 0.0
    %1269 = vmatpush2.msra.mxu0 0.0
    %1270 = vmatprep.subr.mxu0 0.0
    %1271 = vmatpush2.msra.mxu0 0.0
    %1272 = vmatprep.subr.mxu0 0.0
    %1273 = vmatpush2.msra.mxu0 0.0
    %1274 = vmatprep.mubr.f32.mxu0 0.0
    %1275 = vmatmul.mubr.f32.gmra.mxu0 %v697
    %v1276 = vpop.f32.mrf.mxu0
    %v1277 = vadd.f32 0.0, %v1276
    %v1278 = vpop.f32.mrf.mxu0
    %v1279 = vadd.f32 0.0, %v1278
    %1280 = vdwg.mxu0
    %1281 = vmatprep.subr.mxu0 %v1209
    %1282 = vmatpush1.msra.mxu0 %v1208
    %1283 = vmatprep.subr.mxu0 %v1205
    %1284 = vmatpush1.msra.mxu0 %v1204
    %1285 = vmatprep.subr.mxu0 %v1201
    %1286 = vmatpush1.msra.mxu0 %v1200
    %1287 = vmatprep.subr.mxu0 %v1197
    %1288 = vmatpush1.msra.mxu0 %v1196
    %1289 = vmatprep.subr.mxu0 %v1193
    %1290 = vmatpush1.msra.mxu0 %v1192
    %1291 = vmatprep.subr.mxu0 %v1189
    %1292 = vmatpush1.msra.mxu0 %v1188
    %1293 = vmatprep.subr.mxu0 %v1185
    %1294 = vmatpush1.msra.mxu0 %v1184
    %1295 = vmatprep.subr.mxu0 %v1181
    %1296 = vmatpush1.msra.mxu0 %v1180
    %1297 = vmatprep.subr.mxu0 %v1177
    %1298 = vmatpush1.msra.mxu0 %v1176
    %1299 = vmatprep.subr.mxu0 %v1173
    %1300 = vmatpush1.msra.mxu0 %v1172
    %1301 = vmatprep.subr.mxu0 %v1169
    %1302 = vmatpush1.msra.mxu0 %v1168
    %1303 = vmatprep.subr.mxu0 %v1165
    %1304 = vmatpush1.msra.mxu0 %v1164
    %1305 = vmatprep.subr.mxu0 %v1161
    %1306 = vmatpush1.msra.mxu0 %v1160
    %1307 = vmatprep.subr.mxu0 %v1157
    %1308 = vmatpush1.msra.mxu0 %v1156
    %1309 = vmatprep.subr.mxu0 %v1153
    %1310 = vmatpush1.msra.mxu0 %v1152
    %1311 = vmatprep.subr.mxu0 %v1149
    %1312 = vmatpush1.msra.mxu0 %v1148
    %1313 = vmatprep.subr.mxu0 0.0
    %1314 = vmatpush2.msra.mxu0 0.0
    %1315 = vmatprep.subr.mxu0 0.0
    %1316 = vmatpush2.msra.mxu0 0.0
    %1317 = vmatprep.subr.mxu0 0.0
    %1318 = vmatpush2.msra.mxu0 0.0
    %1319 = vmatprep.subr.mxu0 0.0
    %1320 = vmatpush2.msra.mxu0 0.0
    %1321 = vmatprep.subr.mxu0 0.0
    %1322 = vmatpush2.msra.mxu0 0.0
    %1323 = vmatprep.subr.mxu0 0.0
    %1324 = vmatpush2.msra.mxu0 0.0
    %1325 = vmatprep.subr.mxu0 0.0
    %1326 = vmatpush2.msra.mxu0 0.0
    %1327 = vmatprep.subr.mxu0 0.0
    %1328 = vmatpush2.msra.mxu0 0.0
    %1329 = vmatprep.subr.mxu0 0.0
    %1330 = vmatpush2.msra.mxu0 0.0
    %1331 = vmatprep.subr.mxu0 0.0
    %1332 = vmatpush2.msra.mxu0 0.0
    %1333 = vmatprep.subr.mxu0 0.0
    %1334 = vmatpush2.msra.mxu0 0.0
    %1335 = vmatprep.subr.mxu0 0.0
    %1336 = vmatpush2.msra.mxu0 0.0
    %1337 = vmatprep.subr.mxu0 0.0
    %1338 = vmatpush2.msra.mxu0 0.0
    %1339 = vmatprep.subr.mxu0 0.0
    %1340 = vmatpush2.msra.mxu0 0.0
    %1341 = vmatprep.subr.mxu0 0.0
    %1342 = vmatpush2.msra.mxu0 0.0
    %1343 = vmatprep.subr.mxu0 0.0
    %1344 = vmatpush2.msra.mxu0 0.0
    %1345 = vmatprep.mubr.f32.mxu0 0.0
    %1346 = vmatmul.mubr.f32.gmra.mxu0 %v697
    %v1347 = vpop.f32.mrf.mxu0
    %v1348 = vadd.f32 0.0, %v1347
    %v1349 = vpop.f32.mrf.mxu0
    %v1350 = vadd.f32 0.0, %v1349
    %1351 = vdwg.mxu0
    %v1352 = vadd.f32 %v1142, %v1277
    %v1353 = vadd.f32 %v1143, %v1279
    %v1354 = vadd.f32 %v1144, %v1348
    %v1355 = vadd.f32 %v1145, %v1350
    %v1356 = vxor.u32 %v1352, 2147483648
    %v1357 = vxor.u32 %v1353, 2147483648
    %v1358 = vxor.u32 %v1354, 2147483648
    %v1359 = vmul.f32 %v1356, 1.442695
    %v1360 = vpow.pop %v1359
    %v1361 = vmul.f32 %v1357, 1.442695
    %v1362 = vpow.pop %v1361
    %v1363 = vmul.f32 %v1358, 1.442695
    %v1364 = vpow.pop %v1363
    %v1365 = vadd.f32 %v1360, 1.0
    %v1366 = vadd.f32 %v1362, 1.0
    %v1367 = vadd.f32 %v1364, 1.0
    %v1368 = vrcp.pop %v1365
    %v1369 = vmul.f32 1.0, %v1368
    %v1370 = vrcp.pop %v1366
    %v1371 = vmul.f32 1.0, %v1370
    %v1372 = vrcp.pop %v1367
    %v1373 = vmul.f32 1.0, %v1372
    %v1374 = vtanh.pop %v1355
    %v1375 = vmul.f32 %v1371, %v695
    %v1376 = vmul.f32 %v1369, %v1374
    %v1377 = vadd.f32 %v1375, %v1376
    %v1378 = vtanh.pop %v1377
    %v1379 = vmul.f32 %v1373, %v1378
    %v1380 = vld [vmem:[#allocation7] sm:$0xff]
    %v1381 = vld [vmem:[#allocation7 + $0x8] sm:$0xff]
    %v1382 = vld [vmem:[#allocation7 + $0x10] sm:$0xff]
    %v1383 = vld [vmem:[#allocation7 + $0x18] sm:$0xff]
    %v1384 = vld [vmem:[#allocation7 + $0x20] sm:$0xff]
    %v1385 = vld [vmem:[#allocation7 + $0x28] sm:$0xff]
    %v1386 = vld [vmem:[#allocation7 + $0x30] sm:$0xff]
    %v1387 = vld [vmem:[#allocation7 + $0x38] sm:$0xff]
    %v1388 = vld [vmem:[#allocation7 + $0x40] sm:$0xff]
    %v1389 = vld [vmem:[#allocation7 + $0x48] sm:$0xff]
    %v1390 = vld [vmem:[#allocation7 + $0x50] sm:$0xff]
    %v1391 = vld [vmem:[#allocation7 + $0x58] sm:$0xff]
    %v1392 = vld [vmem:[#allocation7 + $0x60] sm:$0xff]
    %v1393 = vld [vmem:[#allocation7 + $0x68] sm:$0xff]
    %v1394 = vld [vmem:[#allocation7 + $0x70] sm:$0xff]
    %v1395 = vld [vmem:[#allocation7 + $0x78] sm:$0xff]
    %v1396 = vld [vmem:[#allocation7 + $0x80] sm:$0xff]
    %v1397 = vld [vmem:[#allocation7 + $0x88] sm:$0xff]
    %v1398 = vld [vmem:[#allocation7 + $0x90] sm:$0xff]
    %v1399 = vld [vmem:[#allocation7 + $0x98] sm:$0xff]
    %v1400 = vld [vmem:[#allocation7 + $0xa0] sm:$0xff]
    %v1401 = vld [vmem:[#allocation7 + $0xa8] sm:$0xff]
    %v1402 = vld [vmem:[#allocation7 + $0xb0] sm:$0xff]
    %v1403 = vld [vmem:[#allocation7 + $0xb8] sm:$0xff]
    %v1404 = vld [vmem:[#allocation7 + $0xc0] sm:$0xff]
    %v1405 = vld [vmem:[#allocation7 + $0xc8] sm:$0xff]
    %v1406 = vld [vmem:[#allocation7 + $0xd0] sm:$0xff]
    %v1407 = vld [vmem:[#allocation7 + $0xd8] sm:$0xff]
    %v1408 = vld [vmem:[#allocation7 + $0xe0] sm:$0xff]
    %v1409 = vld [vmem:[#allocation7 + $0xe8] sm:$0xff]
    %v1410 = vld [vmem:[#allocation7 + $0xf0] sm:$0xff]
    %v1411 = vld [vmem:[#allocation7 + $0xf8] sm:$0xff]
    %v1412 = vld [vmem:[#allocation7 + $0x100] sm:$0xff]
    %v1413 = vld [vmem:[#allocation7 + $0x108] sm:$0xff]
    %v1414 = vld [vmem:[#allocation7 + $0x110] sm:$0xff]
    %v1415 = vld [vmem:[#allocation7 + $0x118] sm:$0xff]
    %v1416 = vld [vmem:[#allocation7 + $0x120] sm:$0xff]
    %v1417 = vld [vmem:[#allocation7 + $0x128] sm:$0xff]
    %v1418 = vld [vmem:[#allocation7 + $0x130] sm:$0xff]
    %v1419 = vld [vmem:[#allocation7 + $0x138] sm:$0xff]
    %v1420 = vld [vmem:[#allocation7 + $0x140] sm:$0xff]
    %v1421 = vld [vmem:[#allocation7 + $0x148] sm:$0xff]
    %v1422 = vld [vmem:[#allocation7 + $0x150] sm:$0xff]
    %v1423 = vld [vmem:[#allocation7 + $0x158] sm:$0xff]
    %v1424 = vld [vmem:[#allocation7 + $0x160] sm:$0xff]
    %v1425 = vld [vmem:[#allocation7 + $0x168] sm:$0xff]
    %v1426 = vld [vmem:[#allocation7 + $0x170] sm:$0xff]
    %v1427 = vld [vmem:[#allocation7 + $0x178] sm:$0xff]
    %v1428 = vld [vmem:[#allocation7 + $0x180] sm:$0xff]
    %v1429 = vld [vmem:[#allocation7 + $0x188] sm:$0xff]
    %v1430 = vld [vmem:[#allocation7 + $0x190] sm:$0xff]
    %v1431 = vld [vmem:[#allocation7 + $0x198] sm:$0xff]
    %v1432 = vld [vmem:[#allocation7 + $0x1a0] sm:$0xff]
    %v1433 = vld [vmem:[#allocation7 + $0x1a8] sm:$0xff]
    %v1434 = vld [vmem:[#allocation7 + $0x1b0] sm:$0xff]
    %v1435 = vld [vmem:[#allocation7 + $0x1b8] sm:$0xff]
    %v1436 = vld [vmem:[#allocation7 + $0x1c0] sm:$0xff]
    %v1437 = vld [vmem:[#allocation7 + $0x1c8] sm:$0xff]
    %v1438 = vld [vmem:[#allocation7 + $0x1d0] sm:$0xff]
    %v1439 = vld [vmem:[#allocation7 + $0x1d8] sm:$0xff]
    %v1440 = vld [vmem:[#allocation7 + $0x1e0] sm:$0xff]
    %v1441 = vld [vmem:[#allocation7 + $0x1e8] sm:$0xff]
    %v1442 = vld [vmem:[#allocation7 + $0x1f0] sm:$0xff]
    %v1443 = vld [vmem:[#allocation7 + $0x1f8] sm:$0xff]
    %1444 = vmatprep.subr.mxu0 %v1441
    %1445 = vmatpush1.msra.mxu0 %v1440
    %1446 = vmatprep.subr.mxu0 %v1437
    %1447 = vmatpush1.msra.mxu0 %v1436
    %1448 = vmatprep.subr.mxu0 %v1433
    %1449 = vmatpush1.msra.mxu0 %v1432
    %1450 = vmatprep.subr.mxu0 %v1429
    %1451 = vmatpush1.msra.mxu0 %v1428
    %1452 = vmatprep.subr.mxu0 %v1425
    %1453 = vmatpush1.msra.mxu0 %v1424
    %1454 = vmatprep.subr.mxu0 %v1421
    %1455 = vmatpush1.msra.mxu0 %v1420
    %1456 = vmatprep.subr.mxu0 %v1417
    %1457 = vmatpush1.msra.mxu0 %v1416
    %1458 = vmatprep.subr.mxu0 %v1413
    %1459 = vmatpush1.msra.mxu0 %v1412
    %1460 = vmatprep.subr.mxu0 %v1409
    %1461 = vmatpush1.msra.mxu0 %v1408
    %1462 = vmatprep.subr.mxu0 %v1405
    %1463 = vmatpush1.msra.mxu0 %v1404
    %1464 = vmatprep.subr.mxu0 %v1401
    %1465 = vmatpush1.msra.mxu0 %v1400
    %1466 = vmatprep.subr.mxu0 %v1397
    %1467 = vmatpush1.msra.mxu0 %v1396
    %1468 = vmatprep.subr.mxu0 %v1393
    %1469 = vmatpush1.msra.mxu0 %v1392
    %1470 = vmatprep.subr.mxu0 %v1389
    %1471 = vmatpush1.msra.mxu0 %v1388
    %1472 = vmatprep.subr.mxu0 %v1385
    %1473 = vmatpush1.msra.mxu0 %v1384
    %1474 = vmatprep.subr.mxu0 %v1381
    %1475 = vmatpush1.msra.mxu0 %v1380
    %1476 = vmatprep.subr.mxu0 0.0
    %1477 = vmatpush2.msra.mxu0 0.0
    %1478 = vmatprep.subr.mxu0 0.0
    %1479 = vmatpush2.msra.mxu0 0.0
    %1480 = vmatprep.subr.mxu0 0.0
    %1481 = vmatpush2.msra.mxu0 0.0
    %1482 = vmatprep.subr.mxu0 0.0
    %1483 = vmatpush2.msra.mxu0 0.0
    %1484 = vmatprep.subr.mxu0 0.0
    %1485 = vmatpush2.msra.mxu0 0.0
    %1486 = vmatprep.subr.mxu0 0.0
    %1487 = vmatpush2.msra.mxu0 0.0
    %1488 = vmatprep.subr.mxu0 0.0
    %1489 = vmatpush2.msra.mxu0 0.0
    %1490 = vmatprep.subr.mxu0 0.0
    %1491 = vmatpush2.msra.mxu0 0.0
    %1492 = vmatprep.subr.mxu0 0.0
    %1493 = vmatpush2.msra.mxu0 0.0
    %1494 = vmatprep.subr.mxu0 0.0
    %1495 = vmatpush2.msra.mxu0 0.0
    %1496 = vmatprep.subr.mxu0 0.0
    %1497 = vmatpush2.msra.mxu0 0.0
    %1498 = vmatprep.subr.mxu0 0.0
    %1499 = vmatpush2.msra.mxu0 0.0
    %1500 = vmatprep.subr.mxu0 0.0
    %1501 = vmatpush2.msra.mxu0 0.0
    %1502 = vmatprep.subr.mxu0 0.0
    %1503 = vmatpush2.msra.mxu0 0.0
    %1504 = vmatprep.subr.mxu0 0.0
    %1505 = vmatpush2.msra.mxu0 0.0
    %1506 = vmatprep.subr.mxu0 0.0
    %1507 = vmatpush2.msra.mxu0 0.0
    %1508 = vmatprep.mubr.f32.mxu0 0.0
    %1509 = vmatmul.mubr.f32.gmra.mxu0 %v1379
    %v1510 = vpop.f32.mrf.mxu0
    %v1511 = vadd.f32 %v440, %v1510
    %v1512 = vpop.f32.mrf.mxu0
    %v1513 = vadd.f32 %v444, %v1512
    %1514 = vdwg.mxu0
    %1515 = vmatprep.subr.mxu0 %v1443
    %1516 = vmatpush1.msra.mxu0 %v1442
    %1517 = vmatprep.subr.mxu0 %v1439
    %1518 = vmatpush1.msra.mxu0 %v1438
    %1519 = vmatprep.subr.mxu0 %v1435
    %1520 = vmatpush1.msra.mxu0 %v1434
    %1521 = vmatprep.subr.mxu0 %v1431
    %1522 = vmatpush1.msra.mxu0 %v1430
    %1523 = vmatprep.subr.mxu0 %v1427
    %1524 = vmatpush1.msra.mxu0 %v1426
    %1525 = vmatprep.subr.mxu0 %v1423
    %1526 = vmatpush1.msra.mxu0 %v1422
    %1527 = vmatprep.subr.mxu0 %v1419
    %1528 = vmatpush1.msra.mxu0 %v1418
    %1529 = vmatprep.subr.mxu0 %v1415
    %1530 = vmatpush1.msra.mxu0 %v1414
    %1531 = vmatprep.subr.mxu0 %v1411
    %1532 = vmatpush1.msra.mxu0 %v1410
    %1533 = vmatprep.subr.mxu0 %v1407
    %1534 = vmatpush1.msra.mxu0 %v1406
    %1535 = vmatprep.subr.mxu0 %v1403
    %1536 = vmatpush1.msra.mxu0 %v1402
    %1537 = vmatprep.subr.mxu0 %v1399
    %1538 = vmatpush1.msra.mxu0 %v1398
    %1539 = vmatprep.subr.mxu0 %v1395
    %1540 = vmatpush1.msra.mxu0 %v1394
    %1541 = vmatprep.subr.mxu0 %v1391
    %1542 = vmatpush1.msra.mxu0 %v1390
    %1543 = vmatprep.subr.mxu0 %v1387
    %1544 = vmatpush1.msra.mxu0 %v1386
    %1545 = vmatprep.subr.mxu0 %v1383
    %1546 = vmatpush1.msra.mxu0 %v1382
    %1547 = vmatprep.subr.mxu0 0.0
    %1548 = vmatpush2.msra.mxu0 0.0
    %1549 = vmatprep.subr.mxu0 0.0
    %1550 = vmatpush2.msra.mxu0 0.0
    %1551 = vmatprep.subr.mxu0 0.0
    %1552 = vmatpush2.msra.mxu0 0.0
    %1553 = vmatprep.subr.mxu0 0.0
    %1554 = vmatpush2.msra.mxu0 0.0
    %1555 = vmatprep.subr.mxu0 0.0
    %1556 = vmatpush2.msra.mxu0 0.0
    %1557 = vmatprep.subr.mxu0 0.0
    %1558 = vmatpush2.msra.mxu0 0.0
    %1559 = vmatprep.subr.mxu0 0.0
    %1560 = vmatpush2.msra.mxu0 0.0
    %1561 = vmatprep.subr.mxu0 0.0
    %1562 = vmatpush2.msra.mxu0 0.0
    %1563 = vmatprep.subr.mxu0 0.0
    %1564 = vmatpush2.msra.mxu0 0.0
    %1565 = vmatprep.subr.mxu0 0.0
    %1566 = vmatpush2.msra.mxu0 0.0
    %1567 = vmatprep.subr.mxu0 0.0
    %1568 = vmatpush2.msra.mxu0 0.0
    %1569 = vmatprep.subr.mxu0 0.0
    %1570 = vmatpush2.msra.mxu0 0.0
    %1571 = vmatprep.subr.mxu0 0.0
    %1572 = vmatpush2.msra.mxu0 0.0
    %1573 = vmatprep.subr.mxu0 0.0
    %1574 = vmatpush2.msra.mxu0 0.0
    %1575 = vmatprep.subr.mxu0 0.0
    %1576 = vmatpush2.msra.mxu0 0.0
    %1577 = vmatprep.subr.mxu0 0.0
    %1578 = vmatpush2.msra.mxu0 0.0
    %1579 = vmatprep.mubr.f32.mxu0 0.0
    %1580 = vmatmul.mubr.f32.gmra.mxu0 %v1379
    %v1581 = vpop.f32.mrf.mxu0
    %v1582 = vadd.f32 %v448, %v1581
    %v1583 = vpop.f32.mrf.mxu0
    %v1584 = vadd.f32 %v452, %v1583
    %1585 = vdwg.mxu0
    %v1586 = vld [vmem:[#allocation9] sm:$0xff]
    %v1587 = vld [vmem:[#allocation9 + $0x8] sm:$0xff]
    %v1588 = vld [vmem:[#allocation9 + $0x10] sm:$0xff]
    %v1589 = vld [vmem:[#allocation9 + $0x18] sm:$0xff]
    %v1590 = vld [vmem:[#allocation9 + $0x20] sm:$0xff]
    %v1591 = vld [vmem:[#allocation9 + $0x28] sm:$0xff]
    %v1592 = vld [vmem:[#allocation9 + $0x30] sm:$0xff]
    %v1593 = vld [vmem:[#allocation9 + $0x38] sm:$0xff]
    %v1594 = vld [vmem:[#allocation9 + $0x40] sm:$0xff]
    %v1595 = vld [vmem:[#allocation9 + $0x48] sm:$0xff]
    %v1596 = vld [vmem:[#allocation9 + $0x50] sm:$0xff]
    %v1597 = vld [vmem:[#allocation9 + $0x58] sm:$0xff]
    %v1598 = vld [vmem:[#allocation9 + $0x60] sm:$0xff]
    %v1599 = vld [vmem:[#allocation9 + $0x68] sm:$0xff]
    %v1600 = vld [vmem:[#allocation9 + $0x70] sm:$0xff]
    %v1601 = vld [vmem:[#allocation9 + $0x78] sm:$0xff]
    %v1602 = vld [vmem:[#allocation9 + $0x80] sm:$0xff]
    %v1603 = vld [vmem:[#allocation9 + $0x88] sm:$0xff]
    %v1604 = vld [vmem:[#allocation9 + $0x90] sm:$0xff]
    %v1605 = vld [vmem:[#allocation9 + $0x98] sm:$0xff]
    %v1606 = vld [vmem:[#allocation9 + $0xa0] sm:$0xff]
    %v1607 = vld [vmem:[#allocation9 + $0xa8] sm:$0xff]
    %v1608 = vld [vmem:[#allocation9 + $0xb0] sm:$0xff]
    %v1609 = vld [vmem:[#allocation9 + $0xb8] sm:$0xff]
    %v1610 = vld [vmem:[#allocation9 + $0xc0] sm:$0xff]
    %v1611 = vld [vmem:[#allocation9 + $0xc8] sm:$0xff]
    %v1612 = vld [vmem:[#allocation9 + $0xd0] sm:$0xff]
    %v1613 = vld [vmem:[#allocation9 + $0xd8] sm:$0xff]
    %v1614 = vld [vmem:[#allocation9 + $0xe0] sm:$0xff]
    %v1615 = vld [vmem:[#allocation9 + $0xe8] sm:$0xff]
    %v1616 = vld [vmem:[#allocation9 + $0xf0] sm:$0xff]
    %v1617 = vld [vmem:[#allocation9 + $0xf8] sm:$0xff]
    %v1618 = vld [vmem:[#allocation9 + $0x100] sm:$0xff]
    %v1619 = vld [vmem:[#allocation9 + $0x108] sm:$0xff]
    %v1620 = vld [vmem:[#allocation9 + $0x110] sm:$0xff]
    %v1621 = vld [vmem:[#allocation9 + $0x118] sm:$0xff]
    %v1622 = vld [vmem:[#allocation9 + $0x120] sm:$0xff]
    %v1623 = vld [vmem:[#allocation9 + $0x128] sm:$0xff]
    %v1624 = vld [vmem:[#allocation9 + $0x130] sm:$0xff]
    %v1625 = vld [vmem:[#allocation9 + $0x138] sm:$0xff]
    %v1626 = vld [vmem:[#allocation9 + $0x140] sm:$0xff]
    %v1627 = vld [vmem:[#allocation9 + $0x148] sm:$0xff]
    %v1628 = vld [vmem:[#allocation9 + $0x150] sm:$0xff]
    %v1629 = vld [vmem:[#allocation9 + $0x158] sm:$0xff]
    %v1630 = vld [vmem:[#allocation9 + $0x160] sm:$0xff]
    %v1631 = vld [vmem:[#allocation9 + $0x168] sm:$0xff]
    %v1632 = vld [vmem:[#allocation9 + $0x170] sm:$0xff]
    %v1633 = vld [vmem:[#allocation9 + $0x178] sm:$0xff]
    %v1634 = vld [vmem:[#allocation9 + $0x180] sm:$0xff]
    %v1635 = vld [vmem:[#allocation9 + $0x188] sm:$0xff]
    %v1636 = vld [vmem:[#allocation9 + $0x190] sm:$0xff]
    %v1637 = vld [vmem:[#allocation9 + $0x198] sm:$0xff]
    %v1638 = vld [vmem:[#allocation9 + $0x1a0] sm:$0xff]
    %v1639 = vld [vmem:[#allocation9 + $0x1a8] sm:$0xff]
    %v1640 = vld [vmem:[#allocation9 + $0x1b0] sm:$0xff]
    %v1641 = vld [vmem:[#allocation9 + $0x1b8] sm:$0xff]
    %v1642 = vld [vmem:[#allocation9 + $0x1c0] sm:$0xff]
    %v1643 = vld [vmem:[#allocation9 + $0x1c8] sm:$0xff]
    %v1644 = vld [vmem:[#allocation9 + $0x1d0] sm:$0xff]
    %v1645 = vld [vmem:[#allocation9 + $0x1d8] sm:$0xff]
    %v1646 = vld [vmem:[#allocation9 + $0x1e0] sm:$0xff]
    %v1647 = vld [vmem:[#allocation9 + $0x1e8] sm:$0xff]
    %v1648 = vld [vmem:[#allocation9 + $0x1f0] sm:$0xff]
    %v1649 = vld [vmem:[#allocation9 + $0x1f8] sm:$0xff]
    %1650 = vmatprep.subr.mxu0 %v1647
    %1651 = vmatpush1.msra.mxu0 %v1646
    %1652 = vmatprep.subr.mxu0 %v1643
    %1653 = vmatpush1.msra.mxu0 %v1642
    %1654 = vmatprep.subr.mxu0 %v1639
    %1655 = vmatpush1.msra.mxu0 %v1638
    %1656 = vmatprep.subr.mxu0 %v1635
    %1657 = vmatpush1.msra.mxu0 %v1634
    %1658 = vmatprep.subr.mxu0 %v1631
    %1659 = vmatpush1.msra.mxu0 %v1630
    %1660 = vmatprep.subr.mxu0 %v1627
    %1661 = vmatpush1.msra.mxu0 %v1626
    %1662 = vmatprep.subr.mxu0 %v1623
    %1663 = vmatpush1.msra.mxu0 %v1622
    %1664 = vmatprep.subr.mxu0 %v1619
    %1665 = vmatpush1.msra.mxu0 %v1618
    %1666 = vmatprep.subr.mxu0 %v1615
    %1667 = vmatpush1.msra.mxu0 %v1614
    %1668 = vmatprep.subr.mxu0 %v1611
    %1669 = vmatpush1.msra.mxu0 %v1610
    %1670 = vmatprep.subr.mxu0 %v1607
    %1671 = vmatpush1.msra.mxu0 %v1606
    %1672 = vmatprep.subr.mxu0 %v1603
    %1673 = vmatpush1.msra.mxu0 %v1602
    %1674 = vmatprep.subr.mxu0 %v1599
    %1675 = vmatpush1.msra.mxu0 %v1598
    %1676 = vmatprep.subr.mxu0 %v1595
    %1677 = vmatpush1.msra.mxu0 %v1594
    %1678 = vmatprep.subr.mxu0 %v1591
    %1679 = vmatpush1.msra.mxu0 %v1590
    %1680 = vmatprep.subr.mxu0 %v1587
    %1681 = vmatpush1.msra.mxu0 %v1586
    %1682 = vmatprep.subr.mxu0 0.0
    %1683 = vmatpush2.msra.mxu0 0.0
    %1684 = vmatprep.subr.mxu0 0.0
    %1685 = vmatpush2.msra.mxu0 0.0
    %1686 = vmatprep.subr.mxu0 0.0
    %1687 = vmatpush2.msra.mxu0 0.0
    %1688 = vmatprep.subr.mxu0 0.0
    %1689 = vmatpush2.msra.mxu0 0.0
    %1690 = vmatprep.subr.mxu0 0.0
    %1691 = vmatpush2.msra.mxu0 0.0
    %1692 = vmatprep.subr.mxu0 0.0
    %1693 = vmatpush2.msra.mxu0 0.0
    %1694 = vmatprep.subr.mxu0 0.0
    %1695 = vmatpush2.msra.mxu0 0.0
    %1696 = vmatprep.subr.mxu0 0.0
    %1697 = vmatpush2.msra.mxu0 0.0
    %1698 = vmatprep.subr.mxu0 0.0
    %1699 = vmatpush2.msra.mxu0 0.0
    %1700 = vmatprep.subr.mxu0 0.0
    %1701 = vmatpush2.msra.mxu0 0.0
    %1702 = vmatprep.subr.mxu0 0.0
    %1703 = vmatpush2.msra.mxu0 0.0
    %1704 = vmatprep.subr.mxu0 0.0
    %1705 = vmatpush2.msra.mxu0 0.0
    %1706 = vmatprep.subr.mxu0 0.0
    %1707 = vmatpush2.msra.mxu0 0.0
    %1708 = vmatprep.subr.mxu0 0.0
    %1709 = vmatpush2.msra.mxu0 0.0
    %1710 = vmatprep.subr.mxu0 0.0
    %1711 = vmatpush2.msra.mxu0 0.0
    %1712 = vmatprep.subr.mxu0 0.0
    %1713 = vmatpush2.msra.mxu0 0.0
    %1714 = vmatprep.mubr.f32.mxu0 0.0
    %1715 = vmatmul.mubr.f32.gmra.mxu0 %v1137
    %v1716 = vpop.f32.mrf.mxu0
    %v1717 = vadd.f32 0.0, %v1716
    %v1718 = vpop.f32.mrf.mxu0
    %v1719 = vadd.f32 0.0, %v1718
    %1720 = vdwg.mxu0
    %1721 = vmatprep.subr.mxu0 %v1649
    %1722 = vmatpush1.msra.mxu0 %v1648
    %1723 = vmatprep.subr.mxu0 %v1645
    %1724 = vmatpush1.msra.mxu0 %v1644
    %1725 = vmatprep.subr.mxu0 %v1641
    %1726 = vmatpush1.msra.mxu0 %v1640
    %1727 = vmatprep.subr.mxu0 %v1637
    %1728 = vmatpush1.msra.mxu0 %v1636
    %1729 = vmatprep.subr.mxu0 %v1633
    %1730 = vmatpush1.msra.mxu0 %v1632
    %1731 = vmatprep.subr.mxu0 %v1629
    %1732 = vmatpush1.msra.mxu0 %v1628
    %1733 = vmatprep.subr.mxu0 %v1625
    %1734 = vmatpush1.msra.mxu0 %v1624
    %1735 = vmatprep.subr.mxu0 %v1621
    %1736 = vmatpush1.msra.mxu0 %v1620
    %1737 = vmatprep.subr.mxu0 %v1617
    %1738 = vmatpush1.msra.mxu0 %v1616
    %1739 = vmatprep.subr.mxu0 %v1613
    %1740 = vmatpush1.msra.mxu0 %v1612
    %1741 = vmatprep.subr.mxu0 %v1609
    %1742 = vmatpush1.msra.mxu0 %v1608
    %1743 = vmatprep.subr.mxu0 %v1605
    %1744 = vmatpush1.msra.mxu0 %v1604
    %1745 = vmatprep.subr.mxu0 %v1601
    %1746 = vmatpush1.msra.mxu0 %v1600
    %1747 = vmatprep.subr.mxu0 %v1597
    %1748 = vmatpush1.msra.mxu0 %v1596
    %1749 = vmatprep.subr.mxu0 %v1593
    %1750 = vmatpush1.msra.mxu0 %v1592
    %1751 = vmatprep.subr.mxu0 %v1589
    %1752 = vmatpush1.msra.mxu0 %v1588
    %1753 = vmatprep.subr.mxu0 0.0
    %1754 = vmatpush2.msra.mxu0 0.0
    %1755 = vmatprep.subr.mxu0 0.0
    %1756 = vmatpush2.msra.mxu0 0.0
    %1757 = vmatprep.subr.mxu0 0.0
    %1758 = vmatpush2.msra.mxu0 0.0
    %1759 = vmatprep.subr.mxu0 0.0
    %1760 = vmatpush2.msra.mxu0 0.0
    %1761 = vmatprep.subr.mxu0 0.0
    %1762 = vmatpush2.msra.mxu0 0.0
    %1763 = vmatprep.subr.mxu0 0.0
    %1764 = vmatpush2.msra.mxu0 0.0
    %1765 = vmatprep.subr.mxu0 0.0
    %1766 = vmatpush2.msra.mxu0 0.0
    %1767 = vmatprep.subr.mxu0 0.0
    %1768 = vmatpush2.msra.mxu0 0.0
    %1769 = vmatprep.subr.mxu0 0.0
    %1770 = vmatpush2.msra.mxu0 0.0
    %1771 = vmatprep.subr.mxu0 0.0
    %1772 = vmatpush2.msra.mxu0 0.0
    %1773 = vmatprep.subr.mxu0 0.0
    %1774 = vmatpush2.msra.mxu0 0.0
    %1775 = vmatprep.subr.mxu0 0.0
    %1776 = vmatpush2.msra.mxu0 0.0
    %1777 = vmatprep.subr.mxu0 0.0
    %1778 = vmatpush2.msra.mxu0 0.0
    %1779 = vmatprep.subr.mxu0 0.0
    %1780 = vmatpush2.msra.mxu0 0.0
    %1781 = vmatprep.subr.mxu0 0.0
    %1782 = vmatpush2.msra.mxu0 0.0
    %1783 = vmatprep.subr.mxu0 0.0
    %1784 = vmatpush2.msra.mxu0 0.0
    %1785 = vmatprep.mubr.f32.mxu0 0.0
    %1786 = vmatmul.mubr.f32.gmra.mxu0 %v1137
    %v1787 = vpop.f32.mrf.mxu0
    %v1788 = vadd.f32 0.0, %v1787
    %v1789 = vpop.f32.mrf.mxu0
    %v1790 = vadd.f32 0.0, %v1789
    %1791 = vdwg.mxu0
    %v1792 = vadd.f32 %v1511, %v1717
    %v1793 = vadd.f32 %v1513, %v1719
    %v1794 = vadd.f32 %v1582, %v1788
    %v1795 = vadd.f32 %v1584, %v1790
    %v1796 = vxor.u32 %v1792, 2147483648
    %v1797 = vxor.u32 %v1793, 2147483648
    %v1798 = vxor.u32 %v1794, 2147483648
    %v1799 = vmul.f32 %v1796, 1.442695
    %v1800 = vpow.pop %v1799
    %v1801 = vmul.f32 %v1797, 1.442695
    %v1802 = vpow.pop %v1801
    %v1803 = vmul.f32 %v1798, 1.442695
    %v1804 = vpow.pop %v1803
    %v1805 = vadd.f32 %v1800, 1.0
    %v1806 = vadd.f32 %v1802, 1.0
    %v1807 = vadd.f32 %v1804, 1.0
    %v1808 = vrcp.pop %v1805
    %v1809 = vmul.f32 1.0, %v1808
    %v1810 = vrcp.pop %v1806
    %v1811 = vmul.f32 1.0, %v1810
    %v1812 = vrcp.pop %v1807
    %v1813 = vmul.f32 1.0, %v1812
    %v1814 = vtanh.pop %v1795
    %v1815 = vmul.f32 %v1811, %v1135
    %v1816 = vmul.f32 %v1809, %v1814
    %v1817 = vadd.f32 %v1815, %v1816
    %v1818 = vtanh.pop %v1817
    %v1819 = vmul.f32 %v1813, %v1818
    %s1820 = scalar_lea.vmem [#allocation3], 8
    %1821 = vst [vmem:[%s1820] sm:$0xff] %v1819
    %s1822 = smul.u32 2, 4
    %s1823 = smul.addr %s1822, 8
    %s1824 = scalar_lea.vmem [#allocation2], %s1823
    %v1825 = vld [vmem:[%s1824] sm:$0xff]
    %v1826 = vld [vmem:[%s1824 + $0x8] sm:$0xff]
    %v1827 = vld [vmem:[%s1824 + $0x10] sm:$0xff]
    %v1828 = vld [vmem:[%s1824 + $0x18] sm:$0xff]
    %v1829 = vld [vmem:[#allocation4] sm:$0xff]
    %v1830 = vld [vmem:[#allocation4 + $0x8] sm:$0xff]
    %v1831 = vld [vmem:[#allocation4 + $0x10] sm:$0xff]
    %v1832 = vld [vmem:[#allocation4 + $0x18] sm:$0xff]
    %v1833 = vld [vmem:[#allocation4 + $0x20] sm:$0xff]
    %v1834 = vld [vmem:[#allocation4 + $0x28] sm:$0xff]
    %v1835 = vld [vmem:[#allocation4 + $0x30] sm:$0xff]
    %v1836 = vld [vmem:[#allocation4 + $0x38] sm:$0xff]
    %v1837 = vld [vmem:[#allocation4 + $0x40] sm:$0xff]
    %v1838 = vld [vmem:[#allocation4 + $0x48] sm:$0xff]
    %v1839 = vld [vmem:[#allocation4 + $0x50] sm:$0xff]
    %v1840 = vld [vmem:[#allocation4 + $0x58] sm:$0xff]
    %v1841 = vld [vmem:[#allocation4 + $0x60] sm:$0xff]
    %v1842 = vld [vmem:[#allocation4 + $0x68] sm:$0xff]
    %v1843 = vld [vmem:[#allocation4 + $0x70] sm:$0xff]
    %v1844 = vld [vmem:[#allocation4 + $0x78] sm:$0xff]
    %v1845 = vld [vmem:[#allocation4 + $0x80] sm:$0xff]
    %v1846 = vld [vmem:[#allocation4 + $0x88] sm:$0xff]
    %v1847 = vld [vmem:[#allocation4 + $0x90] sm:$0xff]
    %v1848 = vld [vmem:[#allocation4 + $0x98] sm:$0xff]
    %v1849 = vld [vmem:[#allocation4 + $0xa0] sm:$0xff]
    %v1850 = vld [vmem:[#allocation4 + $0xa8] sm:$0xff]
    %v1851 = vld [vmem:[#allocation4 + $0xb0] sm:$0xff]
    %v1852 = vld [vmem:[#allocation4 + $0xb8] sm:$0xff]
    %v1853 = vld [vmem:[#allocation4 + $0xc0] sm:$0xff]
    %v1854 = vld [vmem:[#allocation4 + $0xc8] sm:$0xff]
    %v1855 = vld [vmem:[#allocation4 + $0xd0] sm:$0xff]
    %v1856 = vld [vmem:[#allocation4 + $0xd8] sm:$0xff]
    %v1857 = vld [vmem:[#allocation4 + $0xe0] sm:$0xff]
    %v1858 = vld [vmem:[#allocation4 + $0xe8] sm:$0xff]
    %v1859 = vld [vmem:[#allocation4 + $0xf0] sm:$0xff]
    %v1860 = vld [vmem:[#allocation4 + $0xf8] sm:$0xff]
    %v1861 = vld [vmem:[#allocation4 + $0x100] sm:$0xff]
    %v1862 = vld [vmem:[#allocation4 + $0x108] sm:$0xff]
    %v1863 = vld [vmem:[#allocation4 + $0x110] sm:$0xff]
    %v1864 = vld [vmem:[#allocation4 + $0x118] sm:$0xff]
    %v1865 = vld [vmem:[#allocation4 + $0x120] sm:$0xff]
    %v1866 = vld [vmem:[#allocation4 + $0x128] sm:$0xff]
    %v1867 = vld [vmem:[#allocation4 + $0x130] sm:$0xff]
    %v1868 = vld [vmem:[#allocation4 + $0x138] sm:$0xff]
    %v1869 = vld [vmem:[#allocation4 + $0x140] sm:$0xff]
    %v1870 = vld [vmem:[#allocation4 + $0x148] sm:$0xff]
    %v1871 = vld [vmem:[#allocation4 + $0x150] sm:$0xff]
    %v1872 = vld [vmem:[#allocation4 + $0x158] sm:$0xff]
    %v1873 = vld [vmem:[#allocation4 + $0x160] sm:$0xff]
    %v1874 = vld [vmem:[#allocation4 + $0x168] sm:$0xff]
    %v1875 = vld [vmem:[#allocation4 + $0x170] sm:$0xff]
    %v1876 = vld [vmem:[#allocation4 + $0x178] sm:$0xff]
    %v1877 = vld [vmem:[#allocation4 + $0x180] sm:$0xff]
    %v1878 = vld [vmem:[#allocation4 + $0x188] sm:$0xff]
    %v1879 = vld [vmem:[#allocation4 + $0x190] sm:$0xff]
    %v1880 = vld [vmem:[#allocation4 + $0x198] sm:$0xff]
    %v1881 = vld [vmem:[#allocation4 + $0x1a0] sm:$0xff]
    %v1882 = vld [vmem:[#allocation4 + $0x1a8] sm:$0xff]
    %v1883 = vld [vmem:[#allocation4 + $0x1b0] sm:$0xff]
    %v1884 = vld [vmem:[#allocation4 + $0x1b8] sm:$0xff]
    %v1885 = vld [vmem:[#allocation4 + $0x1c0] sm:$0xff]
    %v1886 = vld [vmem:[#allocation4 + $0x1c8] sm:$0xff]
    %v1887 = vld [vmem:[#allocation4 + $0x1d0] sm:$0xff]
    %v1888 = vld [vmem:[#allocation4 + $0x1d8] sm:$0xff]
    %v1889 = vld [vmem:[#allocation4 + $0x1e0] sm:$0xff]
    %v1890 = vld [vmem:[#allocation4 + $0x1e8] sm:$0xff]
    %v1891 = vld [vmem:[#allocation4 + $0x1f0] sm:$0xff]
    %v1892 = vld [vmem:[#allocation4 + $0x1f8] sm:$0xff]
    %1893 = vmatprep.subr.mxu0 %v1890
    %1894 = vmatpush1.msra.mxu0 %v1889
    %1895 = vmatprep.subr.mxu0 %v1886
    %1896 = vmatpush1.msra.mxu0 %v1885
    %1897 = vmatprep.subr.mxu0 %v1882
    %1898 = vmatpush1.msra.mxu0 %v1881
    %1899 = vmatprep.subr.mxu0 %v1878
    %1900 = vmatpush1.msra.mxu0 %v1877
    %1901 = vmatprep.subr.mxu0 %v1874
    %1902 = vmatpush1.msra.mxu0 %v1873
    %1903 = vmatprep.subr.mxu0 %v1870
    %1904 = vmatpush1.msra.mxu0 %v1869
    %1905 = vmatprep.subr.mxu0 %v1866
    %1906 = vmatpush1.msra.mxu0 %v1865
    %1907 = vmatprep.subr.mxu0 %v1862
    %1908 = vmatpush1.msra.mxu0 %v1861
    %1909 = vmatprep.subr.mxu0 %v1858
    %1910 = vmatpush1.msra.mxu0 %v1857
    %1911 = vmatprep.subr.mxu0 %v1854
    %1912 = vmatpush1.msra.mxu0 %v1853
    %1913 = vmatprep.subr.mxu0 %v1850
    %1914 = vmatpush1.msra.mxu0 %v1849
    %1915 = vmatprep.subr.mxu0 %v1846
    %1916 = vmatpush1.msra.mxu0 %v1845
    %1917 = vmatprep.subr.mxu0 %v1842
    %1918 = vmatpush1.msra.mxu0 %v1841
    %1919 = vmatprep.subr.mxu0 %v1838
    %1920 = vmatpush1.msra.mxu0 %v1837
    %1921 = vmatprep.subr.mxu0 %v1834
    %1922 = vmatpush1.msra.mxu0 %v1833
    %1923 = vmatprep.subr.mxu0 %v1830
    %1924 = vmatpush1.msra.mxu0 %v1829
    %1925 = vmatprep.subr.mxu0 0.0
    %1926 = vmatpush2.msra.mxu0 0.0
    %1927 = vmatprep.subr.mxu0 0.0
    %1928 = vmatpush2.msra.mxu0 0.0
    %1929 = vmatprep.subr.mxu0 0.0
    %1930 = vmatpush2.msra.mxu0 0.0
    %1931 = vmatprep.subr.mxu0 0.0
    %1932 = vmatpush2.msra.mxu0 0.0
    %1933 = vmatprep.subr.mxu0 0.0
    %1934 = vmatpush2.msra.mxu0 0.0
    %1935 = vmatprep.subr.mxu0 0.0
    %1936 = vmatpush2.msra.mxu0 0.0
    %1937 = vmatprep.subr.mxu0 0.0
    %1938 = vmatpush2.msra.mxu0 0.0
    %1939 = vmatprep.subr.mxu0 0.0
    %1940 = vmatpush2.msra.mxu0 0.0
    %1941 = vmatprep.subr.mxu0 0.0
    %1942 = vmatpush2.msra.mxu0 0.0
    %1943 = vmatprep.subr.mxu0 0.0
    %1944 = vmatpush2.msra.mxu0 0.0
    %1945 = vmatprep.subr.mxu0 0.0
    %1946 = vmatpush2.msra.mxu0 0.0
    %1947 = vmatprep.subr.mxu0 0.0
    %1948 = vmatpush2.msra.mxu0 0.0
    %1949 = vmatprep.subr.mxu0 0.0
    %1950 = vmatpush2.msra.mxu0 0.0
    %1951 = vmatprep.subr.mxu0 0.0
    %1952 = vmatpush2.msra.mxu0 0.0
    %1953 = vmatprep.subr.mxu0 0.0
    %1954 = vmatpush2.msra.mxu0 0.0
    %1955 = vmatprep.subr.mxu0 0.0
    %1956 = vmatpush2.msra.mxu0 0.0
    %1957 = vmatprep.mubr.f32.mxu0 0.0
    %1958 = vmatmul.mubr.f32.gmra.mxu0 %v1379
    %v1959 = vpop.f32.mrf.mxu0
    %v1960 = vadd.f32 0.0, %v1959
    %v1961 = vpop.f32.mrf.mxu0
    %v1962 = vadd.f32 0.0, %v1961
    %1963 = vdwg.mxu0
    %1964 = vmatprep.subr.mxu0 %v1892
    %1965 = vmatpush1.msra.mxu0 %v1891
    %1966 = vmatprep.subr.mxu0 %v1888
    %1967 = vmatpush1.msra.mxu0 %v1887
    %1968 = vmatprep.subr.mxu0 %v1884
    %1969 = vmatpush1.msra.mxu0 %v1883
    %1970 = vmatprep.subr.mxu0 %v1880
    %1971 = vmatpush1.msra.mxu0 %v1879
    %1972 = vmatprep.subr.mxu0 %v1876
    %1973 = vmatpush1.msra.mxu0 %v1875
    %1974 = vmatprep.subr.mxu0 %v1872
    %1975 = vmatpush1.msra.mxu0 %v1871
    %1976 = vmatprep.subr.mxu0 %v1868
    %1977 = vmatpush1.msra.mxu0 %v1867
    %1978 = vmatprep.subr.mxu0 %v1864
    %1979 = vmatpush1.msra.mxu0 %v1863
    %1980 = vmatprep.subr.mxu0 %v1860
    %1981 = vmatpush1.msra.mxu0 %v1859
    %1982 = vmatprep.subr.mxu0 %v1856
    %1983 = vmatpush1.msra.mxu0 %v1855
    %1984 = vmatprep.subr.mxu0 %v1852
    %1985 = vmatpush1.msra.mxu0 %v1851
    %1986 = vmatprep.subr.mxu0 %v1848
    %1987 = vmatpush1.msra.mxu0 %v1847
    %1988 = vmatprep.subr.mxu0 %v1844
    %1989 = vmatpush1.msra.mxu0 %v1843
    %1990 = vmatprep.subr.mxu0 %v1840
    %1991 = vmatpush1.msra.mxu0 %v1839
    %1992 = vmatprep.subr.mxu0 %v1836
    %1993 = vmatpush1.msra.mxu0 %v1835
    %1994 = vmatprep.subr.mxu0 %v1832
    %1995 = vmatpush1.msra.mxu0 %v1831
    %1996 = vmatprep.subr.mxu0 0.0
    %1997 = vmatpush2.msra.mxu0 0.0
    %1998 = vmatprep.subr.mxu0 0.0
    %1999 = vmatpush2.msra.mxu0 0.0
    %2000 = vmatprep.subr.mxu0 0.0
    %2001 = vmatpush2.msra.mxu0 0.0
    %2002 = vmatprep.subr.mxu0 0.0
    %2003 = vmatpush2.msra.mxu0 0.0
    %2004 = vmatprep.subr.mxu0 0.0
    %2005 = vmatpush2.msra.mxu0 0.0
    %2006 = vmatprep.subr.mxu0 0.0
    %2007 = vmatpush2.msra.mxu0 0.0
    %2008 = vmatprep.subr.mxu0 0.0
    %2009 = vmatpush2.msra.mxu0 0.0
    %2010 = vmatprep.subr.mxu0 0.0
    %2011 = vmatpush2.msra.mxu0 0.0
    %2012 = vmatprep.subr.mxu0 0.0
    %2013 = vmatpush2.msra.mxu0 0.0
    %2014 = vmatprep.subr.mxu0 0.0
    %2015 = vmatpush2.msra.mxu0 0.0
    %2016 = vmatprep.subr.mxu0 0.0
    %2017 = vmatpush2.msra.mxu0 0.0
    %2018 = vmatprep.subr.mxu0 0.0
    %2019 = vmatpush2.msra.mxu0 0.0
    %2020 = vmatprep.subr.mxu0 0.0
    %2021 = vmatpush2.msra.mxu0 0.0
    %2022 = vmatprep.subr.mxu0 0.0
    %2023 = vmatpush2.msra.mxu0 0.0
    %2024 = vmatprep.subr.mxu0 0.0
    %2025 = vmatpush2.msra.mxu0 0.0
    %2026 = vmatprep.subr.mxu0 0.0
    %2027 = vmatpush2.msra.mxu0 0.0
    %2028 = vmatprep.mubr.f32.mxu0 0.0
    %2029 = vmatmul.mubr.f32.gmra.mxu0 %v1379
    %v2030 = vpop.f32.mrf.mxu0
    %v2031 = vadd.f32 0.0, %v2030
    %v2032 = vpop.f32.mrf.mxu0
    %v2033 = vadd.f32 0.0, %v2032
    %2034 = vdwg.mxu0
    %v2035 = vadd.f32 %v1825, %v1960
    %v2036 = vadd.f32 %v1826, %v1962
    %v2037 = vadd.f32 %v1827, %v2031
    %v2038 = vadd.f32 %v1828, %v2033
    %v2039 = vxor.u32 %v2035, 2147483648
    %v2040 = vxor.u32 %v2036, 2147483648
    %v2041 = vxor.u32 %v2037, 2147483648
    %v2042 = vmul.f32 %v2039, 1.442695
    %v2043 = vpow.pop %v2042
    %v2044 = vmul.f32 %v2040, 1.442695
    %v2045 = vpow.pop %v2044
    %v2046 = vmul.f32 %v2041, 1.442695
    %v2047 = vpow.pop %v2046
    %v2048 = vadd.f32 %v2043, 1.0
    %v2049 = vadd.f32 %v2045, 1.0
    %v2050 = vadd.f32 %v2047, 1.0
    %v2051 = vrcp.pop %v2048
    %v2052 = vmul.f32 1.0, %v2051
    %v2053 = vrcp.pop %v2049
    %v2054 = vmul.f32 1.0, %v2053
    %v2055 = vrcp.pop %v2050
    %v2056 = vmul.f32 1.0, %v2055
    %v2057 = vtanh.pop %v2038
    %v2058 = vmul.f32 %v2054, %v1377
    %v2059 = vmul.f32 %v2052, %v2057
    %v2060 = vadd.f32 %v2058, %v2059
    %v2061 = vtanh.pop %v2060
    %v2062 = vmul.f32 %v2056, %v2061
    %v2063 = vld [vmem:[#allocation7] sm:$0xff]
    %v2064 = vld [vmem:[#allocation7 + $0x8] sm:$0xff]
    %v2065 = vld [vmem:[#allocation7 + $0x10] sm:$0xff]
    %v2066 = vld [vmem:[#allocation7 + $0x18] sm:$0xff]
    %v2067 = vld [vmem:[#allocation7 + $0x20] sm:$0xff]
    %v2068 = vld [vmem:[#allocation7 + $0x28] sm:$0xff]
    %v2069 = vld [vmem:[#allocation7 + $0x30] sm:$0xff]
    %v2070 = vld [vmem:[#allocation7 + $0x38] sm:$0xff]
    %v2071 = vld [vmem:[#allocation7 + $0x40] sm:$0xff]
    %v2072 = vld [vmem:[#allocation7 + $0x48] sm:$0xff]
    %v2073 = vld [vmem:[#allocation7 + $0x50] sm:$0xff]
    %v2074 = vld [vmem:[#allocation7 + $0x58] sm:$0xff]
    %v2075 = vld [vmem:[#allocation7 + $0x60] sm:$0xff]
    %v2076 = vld [vmem:[#allocation7 + $0x68] sm:$0xff]
    %v2077 = vld [vmem:[#allocation7 + $0x70] sm:$0xff]
    %v2078 = vld [vmem:[#allocation7 + $0x78] sm:$0xff]
    %v2079 = vld [vmem:[#allocation7 + $0x80] sm:$0xff]
    %v2080 = vld [vmem:[#allocation7 + $0x88] sm:$0xff]
    %v2081 = vld [vmem:[#allocation7 + $0x90] sm:$0xff]
    %v2082 = vld [vmem:[#allocation7 + $0x98] sm:$0xff]
    %v2083 = vld [vmem:[#allocation7 + $0xa0] sm:$0xff]
    %v2084 = vld [vmem:[#allocation7 + $0xa8] sm:$0xff]
    %v2085 = vld [vmem:[#allocation7 + $0xb0] sm:$0xff]
    %v2086 = vld [vmem:[#allocation7 + $0xb8] sm:$0xff]
    %v2087 = vld [vmem:[#allocation7 + $0xc0] sm:$0xff]
    %v2088 = vld [vmem:[#allocation7 + $0xc8] sm:$0xff]
    %v2089 = vld [vmem:[#allocation7 + $0xd0] sm:$0xff]
    %v2090 = vld [vmem:[#allocation7 + $0xd8] sm:$0xff]
    %v2091 = vld [vmem:[#allocation7 + $0xe0] sm:$0xff]
    %v2092 = vld [vmem:[#allocation7 + $0xe8] sm:$0xff]
    %v2093 = vld [vmem:[#allocation7 + $0xf0] sm:$0xff]
    %v2094 = vld [vmem:[#allocation7 + $0xf8] sm:$0xff]
    %v2095 = vld [vmem:[#allocation7 + $0x100] sm:$0xff]
    %v2096 = vld [vmem:[#allocation7 + $0x108] sm:$0xff]
    %v2097 = vld [vmem:[#allocation7 + $0x110] sm:$0xff]
    %v2098 = vld [vmem:[#allocation7 + $0x118] sm:$0xff]
    %v2099 = vld [vmem:[#allocation7 + $0x120] sm:$0xff]
    %v2100 = vld [vmem:[#allocation7 + $0x128] sm:$0xff]
    %v2101 = vld [vmem:[#allocation7 + $0x130] sm:$0xff]
    %v2102 = vld [vmem:[#allocation7 + $0x138] sm:$0xff]
    %v2103 = vld [vmem:[#allocation7 + $0x140] sm:$0xff]
    %v2104 = vld [vmem:[#allocation7 + $0x148] sm:$0xff]
    %v2105 = vld [vmem:[#allocation7 + $0x150] sm:$0xff]
    %v2106 = vld [vmem:[#allocation7 + $0x158] sm:$0xff]
    %v2107 = vld [vmem:[#allocation7 + $0x160] sm:$0xff]
    %v2108 = vld [vmem:[#allocation7 + $0x168] sm:$0xff]
    %v2109 = vld [vmem:[#allocation7 + $0x170] sm:$0xff]
    %v2110 = vld [vmem:[#allocation7 + $0x178] sm:$0xff]
    %v2111 = vld [vmem:[#allocation7 + $0x180] sm:$0xff]
    %v2112 = vld [vmem:[#allocation7 + $0x188] sm:$0xff]
    %v2113 = vld [vmem:[#allocation7 + $0x190] sm:$0xff]
    %v2114 = vld [vmem:[#allocation7 + $0x198] sm:$0xff]
    %v2115 = vld [vmem:[#allocation7 + $0x1a0] sm:$0xff]
    %v2116 = vld [vmem:[#allocation7 + $0x1a8] sm:$0xff]
    %v2117 = vld [vmem:[#allocation7 + $0x1b0] sm:$0xff]
    %v2118 = vld [vmem:[#allocation7 + $0x1b8] sm:$0xff]
    %v2119 = vld [vmem:[#allocation7 + $0x1c0] sm:$0xff]
    %v2120 = vld [vmem:[#allocation7 + $0x1c8] sm:$0xff]
    %v2121 = vld [vmem:[#allocation7 + $0x1d0] sm:$0xff]
    %v2122 = vld [vmem:[#allocation7 + $0x1d8] sm:$0xff]
    %v2123 = vld [vmem:[#allocation7 + $0x1e0] sm:$0xff]
    %v2124 = vld [vmem:[#allocation7 + $0x1e8] sm:$0xff]
    %v2125 = vld [vmem:[#allocation7 + $0x1f0] sm:$0xff]
    %v2126 = vld [vmem:[#allocation7 + $0x1f8] sm:$0xff]
    %2127 = vmatprep.subr.mxu0 %v2124
    %2128 = vmatpush1.msra.mxu0 %v2123
    %2129 = vmatprep.subr.mxu0 %v2120
    %2130 = vmatpush1.msra.mxu0 %v2119
    %2131 = vmatprep.subr.mxu0 %v2116
    %2132 = vmatpush1.msra.mxu0 %v2115
    %2133 = vmatprep.subr.mxu0 %v2112
    %2134 = vmatpush1.msra.mxu0 %v2111
    %2135 = vmatprep.subr.mxu0 %v2108
    %2136 = vmatpush1.msra.mxu0 %v2107
    %2137 = vmatprep.subr.mxu0 %v2104
    %2138 = vmatpush1.msra.mxu0 %v2103
    %2139 = vmatprep.subr.mxu0 %v2100
    %2140 = vmatpush1.msra.mxu0 %v2099
    %2141 = vmatprep.subr.mxu0 %v2096
    %2142 = vmatpush1.msra.mxu0 %v2095
    %2143 = vmatprep.subr.mxu0 %v2092
    %2144 = vmatpush1.msra.mxu0 %v2091
    %2145 = vmatprep.subr.mxu0 %v2088
    %2146 = vmatpush1.msra.mxu0 %v2087
    %2147 = vmatprep.subr.mxu0 %v2084
    %2148 = vmatpush1.msra.mxu0 %v2083
    %2149 = vmatprep.subr.mxu0 %v2080
    %2150 = vmatpush1.msra.mxu0 %v2079
    %2151 = vmatprep.subr.mxu0 %v2076
    %2152 = vmatpush1.msra.mxu0 %v2075
    %2153 = vmatprep.subr.mxu0 %v2072
    %2154 = vmatpush1.msra.mxu0 %v2071
    %2155 = vmatprep.subr.mxu0 %v2068
    %2156 = vmatpush1.msra.mxu0 %v2067
    %2157 = vmatprep.subr.mxu0 %v2064
    %2158 = vmatpush1.msra.mxu0 %v2063
    %2159 = vmatprep.subr.mxu0 0.0
    %2160 = vmatpush2.msra.mxu0 0.0
    %2161 = vmatprep.subr.mxu0 0.0
    %2162 = vmatpush2.msra.mxu0 0.0
    %2163 = vmatprep.subr.mxu0 0.0
    %2164 = vmatpush2.msra.mxu0 0.0
    %2165 = vmatprep.subr.mxu0 0.0
    %2166 = vmatpush2.msra.mxu0 0.0
    %2167 = vmatprep.subr.mxu0 0.0
    %2168 = vmatpush2.msra.mxu0 0.0
    %2169 = vmatprep.subr.mxu0 0.0
    %2170 = vmatpush2.msra.mxu0 0.0
    %2171 = vmatprep.subr.mxu0 0.0
    %2172 = vmatpush2.msra.mxu0 0.0
    %2173 = vmatprep.subr.mxu0 0.0
    %2174 = vmatpush2.msra.mxu0 0.0
    %2175 = vmatprep.subr.mxu0 0.0
    %2176 = vmatpush2.msra.mxu0 0.0
    %2177 = vmatprep.subr.mxu0 0.0
    %2178 = vmatpush2.msra.mxu0 0.0
    %2179 = vmatprep.subr.mxu0 0.0
    %2180 = vmatpush2.msra.mxu0 0.0
    %2181 = vmatprep.subr.mxu0 0.0
    %2182 = vmatpush2.msra.mxu0 0.0
    %2183 = vmatprep.subr.mxu0 0.0
    %2184 = vmatpush2.msra.mxu0 0.0
    %2185 = vmatprep.subr.mxu0 0.0
    %2186 = vmatpush2.msra.mxu0 0.0
    %2187 = vmatprep.subr.mxu0 0.0
    %2188 = vmatpush2.msra.mxu0 0.0
    %2189 = vmatprep.subr.mxu0 0.0
    %2190 = vmatpush2.msra.mxu0 0.0
    %2191 = vmatprep.mubr.f32.mxu0 0.0
    %2192 = vmatmul.mubr.f32.gmra.mxu0 %v2062
    %v2193 = vpop.f32.mrf.mxu0
    %v2194 = vadd.f32 %v440, %v2193
    %v2195 = vpop.f32.mrf.mxu0
    %v2196 = vadd.f32 %v444, %v2195
    %2197 = vdwg.mxu0
    %2198 = vmatprep.subr.mxu0 %v2126
    %2199 = vmatpush1.msra.mxu0 %v2125
    %2200 = vmatprep.subr.mxu0 %v2122
    %2201 = vmatpush1.msra.mxu0 %v2121
    %2202 = vmatprep.subr.mxu0 %v2118
    %2203 = vmatpush1.msra.mxu0 %v2117
    %2204 = vmatprep.subr.mxu0 %v2114
    %2205 = vmatpush1.msra.mxu0 %v2113
    %2206 = vmatprep.subr.mxu0 %v2110
    %2207 = vmatpush1.msra.mxu0 %v2109
    %2208 = vmatprep.subr.mxu0 %v2106
    %2209 = vmatpush1.msra.mxu0 %v2105
    %2210 = vmatprep.subr.mxu0 %v2102
    %2211 = vmatpush1.msra.mxu0 %v2101
    %2212 = vmatprep.subr.mxu0 %v2098
    %2213 = vmatpush1.msra.mxu0 %v2097
    %2214 = vmatprep.subr.mxu0 %v2094
    %2215 = vmatpush1.msra.mxu0 %v2093
    %2216 = vmatprep.subr.mxu0 %v2090
    %2217 = vmatpush1.msra.mxu0 %v2089
    %2218 = vmatprep.subr.mxu0 %v2086
    %2219 = vmatpush1.msra.mxu0 %v2085
    %2220 = vmatprep.subr.mxu0 %v2082
    %2221 = vmatpush1.msra.mxu0 %v2081
    %2222 = vmatprep.subr.mxu0 %v2078
    %2223 = vmatpush1.msra.mxu0 %v2077
    %2224 = vmatprep.subr.mxu0 %v2074
    %2225 = vmatpush1.msra.mxu0 %v2073
    %2226 = vmatprep.subr.mxu0 %v2070
    %2227 = vmatpush1.msra.mxu0 %v2069
    %2228 = vmatprep.subr.mxu0 %v2066
    %2229 = vmatpush1.msra.mxu0 %v2065
    %2230 = vmatprep.subr.mxu0 0.0
    %2231 = vmatpush2.msra.mxu0 0.0
    %2232 = vmatprep.subr.mxu0 0.0
    %2233 = vmatpush2.msra.mxu0 0.0
    %2234 = vmatprep.subr.mxu0 0.0
    %2235 = vmatpush2.msra.mxu0 0.0
    %2236 = vmatprep.subr.mxu0 0.0
    %2237 = vmatpush2.msra.mxu0 0.0
    %2238 = vmatprep.subr.mxu0 0.0
    %2239 = vmatpush2.msra.mxu0 0.0
    %2240 = vmatprep.subr.mxu0 0.0
    %2241 = vmatpush2.msra.mxu0 0.0
    %2242 = vmatprep.subr.mxu0 0.0
    %2243 = vmatpush2.msra.mxu0 0.0
    %2244 = vmatprep.subr.mxu0 0.0
    %2245 = vmatpush2.msra.mxu0 0.0
    %2246 = vmatprep.subr.mxu0 0.0
    %2247 = vmatpush2.msra.mxu0 0.0
    %2248 = vmatprep.subr.mxu0 0.0
    %2249 = vmatpush2.msra.mxu0 0.0
    %2250 = vmatprep.subr.mxu0 0.0
    %2251 = vmatpush2.msra.mxu0 0.0
    %2252 = vmatprep.subr.mxu0 0.0
    %2253 = vmatpush2.msra.mxu0 0.0
    %2254 = vmatprep.subr.mxu0 0.0
    %2255 = vmatpush2.msra.mxu0 0.0
    %2256 = vmatprep.subr.mxu0 0.0
    %2257 = vmatpush2.msra.mxu0 0.0
    %2258 = vmatprep.subr.mxu0 0.0
    %2259 = vmatpush2.msra.mxu0 0.0
    %2260 = vmatprep.subr.mxu0 0.0
    %2261 = vmatpush2.msra.mxu0 0.0
    %2262 = vmatprep.mubr.f32.mxu0 0.0
    %2263 = vmatmul.mubr.f32.gmra.mxu0 %v2062
    %v2264 = vpop.f32.mrf.mxu0
    %v2265 = vadd.f32 %v448, %v2264
    %v2266 = vpop.f32.mrf.mxu0
    %v2267 = vadd.f32 %v452, %v2266
    %2268 = vdwg.mxu0
    %v2269 = vld [vmem:[#allocation9] sm:$0xff]
    %v2270 = vld [vmem:[#allocation9 + $0x8] sm:$0xff]
    %v2271 = vld [vmem:[#allocation9 + $0x10] sm:$0xff]
    %v2272 = vld [vmem:[#allocation9 + $0x18] sm:$0xff]
    %v2273 = vld [vmem:[#allocation9 + $0x20] sm:$0xff]
    %v2274 = vld [vmem:[#allocation9 + $0x28] sm:$0xff]
    %v2275 = vld [vmem:[#allocation9 + $0x30] sm:$0xff]
    %v2276 = vld [vmem:[#allocation9 + $0x38] sm:$0xff]
    %v2277 = vld [vmem:[#allocation9 + $0x40] sm:$0xff]
    %v2278 = vld [vmem:[#allocation9 + $0x48] sm:$0xff]
    %v2279 = vld [vmem:[#allocation9 + $0x50] sm:$0xff]
    %v2280 = vld [vmem:[#allocation9 + $0x58] sm:$0xff]
    %v2281 = vld [vmem:[#allocation9 + $0x60] sm:$0xff]
    %v2282 = vld [vmem:[#allocation9 + $0x68] sm:$0xff]
    %v2283 = vld [vmem:[#allocation9 + $0x70] sm:$0xff]
    %v2284 = vld [vmem:[#allocation9 + $0x78] sm:$0xff]
    %v2285 = vld [vmem:[#allocation9 + $0x80] sm:$0xff]
    %v2286 = vld [vmem:[#allocation9 + $0x88] sm:$0xff]
    %v2287 = vld [vmem:[#allocation9 + $0x90] sm:$0xff]
    %v2288 = vld [vmem:[#allocation9 + $0x98] sm:$0xff]
    %v2289 = vld [vmem:[#allocation9 + $0xa0] sm:$0xff]
    %v2290 = vld [vmem:[#allocation9 + $0xa8] sm:$0xff]
    %v2291 = vld [vmem:[#allocation9 + $0xb0] sm:$0xff]
    %v2292 = vld [vmem:[#allocation9 + $0xb8] sm:$0xff]
    %v2293 = vld [vmem:[#allocation9 + $0xc0] sm:$0xff]
    %v2294 = vld [vmem:[#allocation9 + $0xc8] sm:$0xff]
    %v2295 = vld [vmem:[#allocation9 + $0xd0] sm:$0xff]
    %v2296 = vld [vmem:[#allocation9 + $0xd8] sm:$0xff]
    %v2297 = vld [vmem:[#allocation9 + $0xe0] sm:$0xff]
    %v2298 = vld [vmem:[#allocation9 + $0xe8] sm:$0xff]
    %v2299 = vld [vmem:[#allocation9 + $0xf0] sm:$0xff]
    %v2300 = vld [vmem:[#allocation9 + $0xf8] sm:$0xff]
    %v2301 = vld [vmem:[#allocation9 + $0x100] sm:$0xff]
    %v2302 = vld [vmem:[#allocation9 + $0x108] sm:$0xff]
    %v2303 = vld [vmem:[#allocation9 + $0x110] sm:$0xff]
    %v2304 = vld [vmem:[#allocation9 + $0x118] sm:$0xff]
    %v2305 = vld [vmem:[#allocation9 + $0x120] sm:$0xff]
    %v2306 = vld [vmem:[#allocation9 + $0x128] sm:$0xff]
    %v2307 = vld [vmem:[#allocation9 + $0x130] sm:$0xff]
    %v2308 = vld [vmem:[#allocation9 + $0x138] sm:$0xff]
    %v2309 = vld [vmem:[#allocation9 + $0x140] sm:$0xff]
    %v2310 = vld [vmem:[#allocation9 + $0x148] sm:$0xff]
    %v2311 = vld [vmem:[#allocation9 + $0x150] sm:$0xff]
    %v2312 = vld [vmem:[#allocation9 + $0x158] sm:$0xff]
    %v2313 = vld [vmem:[#allocation9 + $0x160] sm:$0xff]
    %v2314 = vld [vmem:[#allocation9 + $0x168] sm:$0xff]
    %v2315 = vld [vmem:[#allocation9 + $0x170] sm:$0xff]
    %v2316 = vld [vmem:[#allocation9 + $0x178] sm:$0xff]
    %v2317 = vld [vmem:[#allocation9 + $0x180] sm:$0xff]
    %v2318 = vld [vmem:[#allocation9 + $0x188] sm:$0xff]
    %v2319 = vld [vmem:[#allocation9 + $0x190] sm:$0xff]
    %v2320 = vld [vmem:[#allocation9 + $0x198] sm:$0xff]
    %v2321 = vld [vmem:[#allocation9 + $0x1a0] sm:$0xff]
    %v2322 = vld [vmem:[#allocation9 + $0x1a8] sm:$0xff]
    %v2323 = vld [vmem:[#allocation9 + $0x1b0] sm:$0xff]
    %v2324 = vld [vmem:[#allocation9 + $0x1b8] sm:$0xff]
    %v2325 = vld [vmem:[#allocation9 + $0x1c0] sm:$0xff]
    %v2326 = vld [vmem:[#allocation9 + $0x1c8] sm:$0xff]
    %v2327 = vld [vmem:[#allocation9 + $0x1d0] sm:$0xff]
    %v2328 = vld [vmem:[#allocation9 + $0x1d8] sm:$0xff]
    %v2329 = vld [vmem:[#allocation9 + $0x1e0] sm:$0xff]
    %v2330 = vld [vmem:[#allocation9 + $0x1e8] sm:$0xff]
    %v2331 = vld [vmem:[#allocation9 + $0x1f0] sm:$0xff]
    %v2332 = vld [vmem:[#allocation9 + $0x1f8] sm:$0xff]
    %2333 = vmatprep.subr.mxu0 %v2330
    %2334 = vmatpush1.msra.mxu0 %v2329
    %2335 = vmatprep.subr.mxu0 %v2326
    %2336 = vmatpush1.msra.mxu0 %v2325
    %2337 = vmatprep.subr.mxu0 %v2322
    %2338 = vmatpush1.msra.mxu0 %v2321
    %2339 = vmatprep.subr.mxu0 %v2318
    %2340 = vmatpush1.msra.mxu0 %v2317
    %2341 = vmatprep.subr.mxu0 %v2314
    %2342 = vmatpush1.msra.mxu0 %v2313
    %2343 = vmatprep.subr.mxu0 %v2310
    %2344 = vmatpush1.msra.mxu0 %v2309
    %2345 = vmatprep.subr.mxu0 %v2306
    %2346 = vmatpush1.msra.mxu0 %v2305
    %2347 = vmatprep.subr.mxu0 %v2302
    %2348 = vmatpush1.msra.mxu0 %v2301
    %2349 = vmatprep.subr.mxu0 %v2298
    %2350 = vmatpush1.msra.mxu0 %v2297
    %2351 = vmatprep.subr.mxu0 %v2294
    %2352 = vmatpush1.msra.mxu0 %v2293
    %2353 = vmatprep.subr.mxu0 %v2290
    %2354 = vmatpush1.msra.mxu0 %v2289
    %2355 = vmatprep.subr.mxu0 %v2286
    %2356 = vmatpush1.msra.mxu0 %v2285
    %2357 = vmatprep.subr.mxu0 %v2282
    %2358 = vmatpush1.msra.mxu0 %v2281
    %2359 = vmatprep.subr.mxu0 %v2278
    %2360 = vmatpush1.msra.mxu0 %v2277
    %2361 = vmatprep.subr.mxu0 %v2274
    %2362 = vmatpush1.msra.mxu0 %v2273
    %2363 = vmatprep.subr.mxu0 %v2270
    %2364 = vmatpush1.msra.mxu0 %v2269
    %2365 = vmatprep.subr.mxu0 0.0
    %2366 = vmatpush2.msra.mxu0 0.0
    %2367 = vmatprep.subr.mxu0 0.0
    %2368 = vmatpush2.msra.mxu0 0.0
    %2369 = vmatprep.subr.mxu0 0.0
    %2370 = vmatpush2.msra.mxu0 0.0
    %2371 = vmatprep.subr.mxu0 0.0
    %2372 = vmatpush2.msra.mxu0 0.0
    %2373 = vmatprep.subr.mxu0 0.0
    %2374 = vmatpush2.msra.mxu0 0.0
    %2375 = vmatprep.subr.mxu0 0.0
    %2376 = vmatpush2.msra.mxu0 0.0
    %2377 = vmatprep.subr.mxu0 0.0
    %2378 = vmatpush2.msra.mxu0 0.0
    %2379 = vmatprep.subr.mxu0 0.0
    %2380 = vmatpush2.msra.mxu0 0.0
    %2381 = vmatprep.subr.mxu0 0.0
    %2382 = vmatpush2.msra.mxu0 0.0
    %2383 = vmatprep.subr.mxu0 0.0
    %2384 = vmatpush2.msra.mxu0 0.0
    %2385 = vmatprep.subr.mxu0 0.0
    %2386 = vmatpush2.msra.mxu0 0.0
    %2387 = vmatprep.subr.mxu0 0.0
    %2388 = vmatpush2.msra.mxu0 0.0
    %2389 = vmatprep.subr.mxu0 0.0
    %2390 = vmatpush2.msra.mxu0 0.0
    %2391 = vmatprep.subr.mxu0 0.0
    %2392 = vmatpush2.msra.mxu0 0.0
    %2393 = vmatprep.subr.mxu0 0.0
    %2394 = vmatpush2.msra.mxu0 0.0
    %2395 = vmatprep.subr.mxu0 0.0
    %2396 = vmatpush2.msra.mxu0 0.0
    %2397 = vmatprep.mubr.f32.mxu0 0.0
    %2398 = vmatmul.mubr.f32.gmra.mxu0 %v1819
    %v2399 = vpop.f32.mrf.mxu0
    %v2400 = vadd.f32 0.0, %v2399
    %v2401 = vpop.f32.mrf.mxu0
    %v2402 = vadd.f32 0.0, %v2401
    %2403 = vdwg.mxu0
    %2404 = vmatprep.subr.mxu0 %v2332
    %2405 = vmatpush1.msra.mxu0 %v2331
    %2406 = vmatprep.subr.mxu0 %v2328
    %2407 = vmatpush1.msra.mxu0 %v2327
    %2408 = vmatprep.subr.mxu0 %v2324
    %2409 = vmatpush1.msra.mxu0 %v2323
    %2410 = vmatprep.subr.mxu0 %v2320
    %2411 = vmatpush1.msra.mxu0 %v2319
    %2412 = vmatprep.subr.mxu0 %v2316
    %2413 = vmatpush1.msra.mxu0 %v2315
    %2414 = vmatprep.subr.mxu0 %v2312
    %2415 = vmatpush1.msra.mxu0 %v2311
    %2416 = vmatprep.subr.mxu0 %v2308
    %2417 = vmatpush1.msra.mxu0 %v2307
    %2418 = vmatprep.subr.mxu0 %v2304
    %2419 = vmatpush1.msra.mxu0 %v2303
    %2420 = vmatprep.subr.mxu0 %v2300
    %2421 = vmatpush1.msra.mxu0 %v2299
    %2422 = vmatprep.subr.mxu0 %v2296
    %2423 = vmatpush1.msra.mxu0 %v2295
    %2424 = vmatprep.subr.mxu0 %v2292
    %2425 = vmatpush1.msra.mxu0 %v2291
    %2426 = vmatprep.subr.mxu0 %v2288
    %2427 = vmatpush1.msra.mxu0 %v2287
    %2428 = vmatprep.subr.mxu0 %v2284
    %2429 = vmatpush1.msra.mxu0 %v2283
    %2430 = vmatprep.subr.mxu0 %v2280
    %2431 = vmatpush1.msra.mxu0 %v2279
    %2432 = vmatprep.subr.mxu0 %v2276
    %2433 = vmatpush1.msra.mxu0 %v2275
    %2434 = vmatprep.subr.mxu0 %v2272
    %2435 = vmatpush1.msra.mxu0 %v2271
    %2436 = vmatprep.subr.mxu0 0.0
    %2437 = vmatpush2.msra.mxu0 0.0
    %2438 = vmatprep.subr.mxu0 0.0
    %2439 = vmatpush2.msra.mxu0 0.0
    %2440 = vmatprep.subr.mxu0 0.0
    %2441 = vmatpush2.msra.mxu0 0.0
    %2442 = vmatprep.subr.mxu0 0.0
    %2443 = vmatpush2.msra.mxu0 0.0
    %2444 = vmatprep.subr.mxu0 0.0
    %2445 = vmatpush2.msra.mxu0 0.0
    %2446 = vmatprep.subr.mxu0 0.0
    %2447 = vmatpush2.msra.mxu0 0.0
    %2448 = vmatprep.subr.mxu0 0.0
    %2449 = vmatpush2.msra.mxu0 0.0
    %2450 = vmatprep.subr.mxu0 0.0
    %2451 = vmatpush2.msra.mxu0 0.0
    %2452 = vmatprep.subr.mxu0 0.0
    %2453 = vmatpush2.msra.mxu0 0.0
    %2454 = vmatprep.subr.mxu0 0.0
    %2455 = vmatpush2.msra.mxu0 0.0
    %2456 = vmatprep.subr.mxu0 0.0
    %2457 = vmatpush2.msra.mxu0 0.0
    %2458 = vmatprep.subr.mxu0 0.0
    %2459 = vmatpush2.msra.mxu0 0.0
    %2460 = vmatprep.subr.mxu0 0.0
    %2461 = vmatpush2.msra.mxu0 0.0
    %2462 = vmatprep.subr.mxu0 0.0
    %2463 = vmatpush2.msra.mxu0 0.0
    %2464 = vmatprep.subr.mxu0 0.0
    %2465 = vmatpush2.msra.mxu0 0.0
    %2466 = vmatprep.subr.mxu0 0.0
    %2467 = vmatpush2.msra.mxu0 0.0
    %2468 = vmatprep.mubr.f32.mxu0 0.0
    %2469 = vmatmul.mubr.f32.gmra.mxu0 %v1819
    %v2470 = vpop.f32.mrf.mxu0
    %v2471 = vadd.f32 0.0, %v2470
    %v2472 = vpop.f32.mrf.mxu0
    %v2473 = vadd.f32 0.0, %v2472
    %2474 = vdwg.mxu0
    %v2475 = vadd.f32 %v2194, %v2400
    %v2476 = vadd.f32 %v2196, %v2402
    %v2477 = vadd.f32 %v2265, %v2471
    %v2478 = vadd.f32 %v2267, %v2473
    %v2479 = vxor.u32 %v2475, 2147483648
    %v2480 = vxor.u32 %v2476, 2147483648
    %v2481 = vxor.u32 %v2477, 2147483648
    %v2482 = vmul.f32 %v2479, 1.442695
    %v2483 = vpow.pop %v2482
    %v2484 = vmul.f32 %v2480, 1.442695
    %v2485 = vpow.pop %v2484
    %v2486 = vmul.f32 %v2481, 1.442695
    %v2487 = vpow.pop %v2486
    %v2488 = vadd.f32 %v2483, 1.0
    %v2489 = vadd.f32 %v2485, 1.0
    %v2490 = vadd.f32 %v2487, 1.0
    %v2491 = vrcp.pop %v2488
    %v2492 = vmul.f32 1.0, %v2491
    %v2493 = vrcp.pop %v2489
    %v2494 = vmul.f32 1.0, %v2493
    %v2495 = vrcp.pop %v2490
    %v2496 = vmul.f32 1.0, %v2495
    %v2497 = vtanh.pop %v2478
    %v2498 = vmul.f32 %v2494, %v1817
    %v2499 = vmul.f32 %v2492, %v2497
    %v2500 = vadd.f32 %v2498, %v2499
    %v2501 = vtanh.pop %v2500
    %v2502 = vmul.f32 %v2496, %v2501
    %s2503 = scalar_lea.vmem [#allocation3], 16
    %2504 = vst [vmem:[%s2503] sm:$0xff] %v2502
    %s2505 = smul.u32 3, 4
    %s2506 = smul.addr %s2505, 8
    %s2507 = scalar_lea.vmem [#allocation2], %s2506
    %v2508 = vld [vmem:[%s2507] sm:$0xff]
    %v2509 = vld [vmem:[%s2507 + $0x8] sm:$0xff]
    %v2510 = vld [vmem:[%s2507 + $0x10] sm:$0xff]
    %v2511 = vld [vmem:[%s2507 + $0x18] sm:$0xff]
    %v2512 = vld [vmem:[#allocation4] sm:$0xff]
    %v2513 = vld [vmem:[#allocation4 + $0x8] sm:$0xff]
    %v2514 = vld [vmem:[#allocation4 + $0x10] sm:$0xff]
    %v2515 = vld [vmem:[#allocation4 + $0x18] sm:$0xff]
    %v2516 = vld [vmem:[#allocation4 + $0x20] sm:$0xff]
    %v2517 = vld [vmem:[#allocation4 + $0x28] sm:$0xff]
    %v2518 = vld [vmem:[#allocation4 + $0x30] sm:$0xff]
    %v2519 = vld [vmem:[#allocation4 + $0x38] sm:$0xff]
    %v2520 = vld [vmem:[#allocation4 + $0x40] sm:$0xff]
    %v2521 = vld [vmem:[#allocation4 + $0x48] sm:$0xff]
    %v2522 = vld [vmem:[#allocation4 + $0x50] sm:$0xff]
    %v2523 = vld [vmem:[#allocation4 + $0x58] sm:$0xff]
    %v2524 = vld [vmem:[#allocation4 + $0x60] sm:$0xff]
    %v2525 = vld [vmem:[#allocation4 + $0x68] sm:$0xff]
    %v2526 = vld [vmem:[#allocation4 + $0x70] sm:$0xff]
    %v2527 = vld [vmem:[#allocation4 + $0x78] sm:$0xff]
    %v2528 = vld [vmem:[#allocation4 + $0x80] sm:$0xff]
    %v2529 = vld [vmem:[#allocation4 + $0x88] sm:$0xff]
    %v2530 = vld [vmem:[#allocation4 + $0x90] sm:$0xff]
    %v2531 = vld [vmem:[#allocation4 + $0x98] sm:$0xff]
    %v2532 = vld [vmem:[#allocation4 + $0xa0] sm:$0xff]
    %v2533 = vld [vmem:[#allocation4 + $0xa8] sm:$0xff]
    %v2534 = vld [vmem:[#allocation4 + $0xb0] sm:$0xff]
    %v2535 = vld [vmem:[#allocation4 + $0xb8] sm:$0xff]
    %v2536 = vld [vmem:[#allocation4 + $0xc0] sm:$0xff]
    %v2537 = vld [vmem:[#allocation4 + $0xc8] sm:$0xff]
    %v2538 = vld [vmem:[#allocation4 + $0xd0] sm:$0xff]
    %v2539 = vld [vmem:[#allocation4 + $0xd8] sm:$0xff]
    %v2540 = vld [vmem:[#allocation4 + $0xe0] sm:$0xff]
    %v2541 = vld [vmem:[#allocation4 + $0xe8] sm:$0xff]
    %v2542 = vld [vmem:[#allocation4 + $0xf0] sm:$0xff]
    %v2543 = vld [vmem:[#allocation4 + $0xf8] sm:$0xff]
    %v2544 = vld [vmem:[#allocation4 + $0x100] sm:$0xff]
    %v2545 = vld [vmem:[#allocation4 + $0x108] sm:$0xff]
    %v2546 = vld [vmem:[#allocation4 + $0x110] sm:$0xff]
    %v2547 = vld [vmem:[#allocation4 + $0x118] sm:$0xff]
    %v2548 = vld [vmem:[#allocation4 + $0x120] sm:$0xff]
    %v2549 = vld [vmem:[#allocation4 + $0x128] sm:$0xff]
    %v2550 = vld [vmem:[#allocation4 + $0x130] sm:$0xff]
    %v2551 = vld [vmem:[#allocation4 + $0x138] sm:$0xff]
    %v2552 = vld [vmem:[#allocation4 + $0x140] sm:$0xff]
    %v2553 = vld [vmem:[#allocation4 + $0x148] sm:$0xff]
    %v2554 = vld [vmem:[#allocation4 + $0x150] sm:$0xff]
    %v2555 = vld [vmem:[#allocation4 + $0x158] sm:$0xff]
    %v2556 = vld [vmem:[#allocation4 + $0x160] sm:$0xff]
    %v2557 = vld [vmem:[#allocation4 + $0x168] sm:$0xff]
    %v2558 = vld [vmem:[#allocation4 + $0x170] sm:$0xff]
    %v2559 = vld [vmem:[#allocation4 + $0x178] sm:$0xff]
    %v2560 = vld [vmem:[#allocation4 + $0x180] sm:$0xff]
    %v2561 = vld [vmem:[#allocation4 + $0x188] sm:$0xff]
    %v2562 = vld [vmem:[#allocation4 + $0x190] sm:$0xff]
    %v2563 = vld [vmem:[#allocation4 + $0x198] sm:$0xff]
    %v2564 = vld [vmem:[#allocation4 + $0x1a0] sm:$0xff]
    %v2565 = vld [vmem:[#allocation4 + $0x1a8] sm:$0xff]
    %v2566 = vld [vmem:[#allocation4 + $0x1b0] sm:$0xff]
    %v2567 = vld [vmem:[#allocation4 + $0x1b8] sm:$0xff]
    %v2568 = vld [vmem:[#allocation4 + $0x1c0] sm:$0xff]
    %v2569 = vld [vmem:[#allocation4 + $0x1c8] sm:$0xff]
    %v2570 = vld [vmem:[#allocation4 + $0x1d0] sm:$0xff]
    %v2571 = vld [vmem:[#allocation4 + $0x1d8] sm:$0xff]
    %v2572 = vld [vmem:[#allocation4 + $0x1e0] sm:$0xff]
    %v2573 = vld [vmem:[#allocation4 + $0x1e8] sm:$0xff]
    %v2574 = vld [vmem:[#allocation4 + $0x1f0] sm:$0xff]
    %v2575 = vld [vmem:[#allocation4 + $0x1f8] sm:$0xff]
    %2576 = vmatprep.subr.mxu0 %v2573
    %2577 = vmatpush1.msra.mxu0 %v2572
    %2578 = vmatprep.subr.mxu0 %v2569
    %2579 = vmatpush1.msra.mxu0 %v2568
    %2580 = vmatprep.subr.mxu0 %v2565
    %2581 = vmatpush1.msra.mxu0 %v2564
    %2582 = vmatprep.subr.mxu0 %v2561
    %2583 = vmatpush1.msra.mxu0 %v2560
    %2584 = vmatprep.subr.mxu0 %v2557
    %2585 = vmatpush1.msra.mxu0 %v2556
    %2586 = vmatprep.subr.mxu0 %v2553
    %2587 = vmatpush1.msra.mxu0 %v2552
    %2588 = vmatprep.subr.mxu0 %v2549
    %2589 = vmatpush1.msra.mxu0 %v2548
    %2590 = vmatprep.subr.mxu0 %v2545
    %2591 = vmatpush1.msra.mxu0 %v2544
    %2592 = vmatprep.subr.mxu0 %v2541
    %2593 = vmatpush1.msra.mxu0 %v2540
    %2594 = vmatprep.subr.mxu0 %v2537
    %2595 = vmatpush1.msra.mxu0 %v2536
    %2596 = vmatprep.subr.mxu0 %v2533
    %2597 = vmatpush1.msra.mxu0 %v2532
    %2598 = vmatprep.subr.mxu0 %v2529
    %2599 = vmatpush1.msra.mxu0 %v2528
    %2600 = vmatprep.subr.mxu0 %v2525
    %2601 = vmatpush1.msra.mxu0 %v2524
    %2602 = vmatprep.subr.mxu0 %v2521
    %2603 = vmatpush1.msra.mxu0 %v2520
    %2604 = vmatprep.subr.mxu0 %v2517
    %2605 = vmatpush1.msra.mxu0 %v2516
    %2606 = vmatprep.subr.mxu0 %v2513
    %2607 = vmatpush1.msra.mxu0 %v2512
    %2608 = vmatprep.subr.mxu0 0.0
    %2609 = vmatpush2.msra.mxu0 0.0
    %2610 = vmatprep.subr.mxu0 0.0
    %2611 = vmatpush2.msra.mxu0 0.0
    %2612 = vmatprep.subr.mxu0 0.0
    %2613 = vmatpush2.msra.mxu0 0.0
    %2614 = vmatprep.subr.mxu0 0.0
    %2615 = vmatpush2.msra.mxu0 0.0
    %2616 = vmatprep.subr.mxu0 0.0
    %2617 = vmatpush2.msra.mxu0 0.0
    %2618 = vmatprep.subr.mxu0 0.0
    %2619 = vmatpush2.msra.mxu0 0.0
    %2620 = vmatprep.subr.mxu0 0.0
    %2621 = vmatpush2.msra.mxu0 0.0
    %2622 = vmatprep.subr.mxu0 0.0
    %2623 = vmatpush2.msra.mxu0 0.0
    %2624 = vmatprep.subr.mxu0 0.0
    %2625 = vmatpush2.msra.mxu0 0.0
    %2626 = vmatprep.subr.mxu0 0.0
    %2627 = vmatpush2.msra.mxu0 0.0
    %2628 = vmatprep.subr.mxu0 0.0
    %2629 = vmatpush2.msra.mxu0 0.0
    %2630 = vmatprep.subr.mxu0 0.0
    %2631 = vmatpush2.msra.mxu0 0.0
    %2632 = vmatprep.subr.mxu0 0.0
    %2633 = vmatpush2.msra.mxu0 0.0
    %2634 = vmatprep.subr.mxu0 0.0
    %2635 = vmatpush2.msra.mxu0 0.0
    %2636 = vmatprep.subr.mxu0 0.0
    %2637 = vmatpush2.msra.mxu0 0.0
    %2638 = vmatprep.subr.mxu0 0.0
    %2639 = vmatpush2.msra.mxu0 0.0
    %2640 = vmatprep.mubr.f32.mxu0 0.0
    %2641 = vmatmul.mubr.f32.gmra.mxu0 %v2062
    %v2642 = vpop.f32.mrf.mxu0
    %v2643 = vadd.f32 0.0, %v2642
    %v2644 = vpop.f32.mrf.mxu0
    %v2645 = vadd.f32 0.0, %v2644
    %2646 = vdwg.mxu0
    %2647 = vmatprep.subr.mxu0 %v2575
    %2648 = vmatpush1.msra.mxu0 %v2574
    %2649 = vmatprep.subr.mxu0 %v2571
    %2650 = vmatpush1.msra.mxu0 %v2570
    %2651 = vmatprep.subr.mxu0 %v2567
    %2652 = vmatpush1.msra.mxu0 %v2566
    %2653 = vmatprep.subr.mxu0 %v2563
    %2654 = vmatpush1.msra.mxu0 %v2562
    %2655 = vmatprep.subr.mxu0 %v2559
    %2656 = vmatpush1.msra.mxu0 %v2558
    %2657 = vmatprep.subr.mxu0 %v2555
    %2658 = vmatpush1.msra.mxu0 %v2554
    %2659 = vmatprep.subr.mxu0 %v2551
    %2660 = vmatpush1.msra.mxu0 %v2550
    %2661 = vmatprep.subr.mxu0 %v2547
    %2662 = vmatpush1.msra.mxu0 %v2546
    %2663 = vmatprep.subr.mxu0 %v2543
    %2664 = vmatpush1.msra.mxu0 %v2542
    %2665 = vmatprep.subr.mxu0 %v2539
    %2666 = vmatpush1.msra.mxu0 %v2538
    %2667 = vmatprep.subr.mxu0 %v2535
    %2668 = vmatpush1.msra.mxu0 %v2534
    %2669 = vmatprep.subr.mxu0 %v2531
    %2670 = vmatpush1.msra.mxu0 %v2530
    %2671 = vmatprep.subr.mxu0 %v2527
    %2672 = vmatpush1.msra.mxu0 %v2526
    %2673 = vmatprep.subr.mxu0 %v2523
    %2674 = vmatpush1.msra.mxu0 %v2522
    %2675 = vmatprep.subr.mxu0 %v2519
    %2676 = vmatpush1.msra.mxu0 %v2518
    %2677 = vmatprep.subr.mxu0 %v2515
    %2678 = vmatpush1.msra.mxu0 %v2514
    %2679 = vmatprep.subr.mxu0 0.0
    %2680 = vmatpush2.msra.mxu0 0.0
    %2681 = vmatprep.subr.mxu0 0.0
    %2682 = vmatpush2.msra.mxu0 0.0
    %2683 = vmatprep.subr.mxu0 0.0
    %2684 = vmatpush2.msra.mxu0 0.0
    %2685 = vmatprep.subr.mxu0 0.0
    %2686 = vmatpush2.msra.mxu0 0.0
    %2687 = vmatprep.subr.mxu0 0.0
    %2688 = vmatpush2.msra.mxu0 0.0
    %2689 = vmatprep.subr.mxu0 0.0
    %2690 = vmatpush2.msra.mxu0 0.0
    %2691 = vmatprep.subr.mxu0 0.0
    %2692 = vmatpush2.msra.mxu0 0.0
    %2693 = vmatprep.subr.mxu0 0.0
    %2694 = vmatpush2.msra.mxu0 0.0
    %2695 = vmatprep.subr.mxu0 0.0
    %2696 = vmatpush2.msra.mxu0 0.0
    %2697 = vmatprep.subr.mxu0 0.0
    %2698 = vmatpush2.msra.mxu0 0.0
    %2699 = vmatprep.subr.mxu0 0.0
    %2700 = vmatpush2.msra.mxu0 0.0
    %2701 = vmatprep.subr.mxu0 0.0
    %2702 = vmatpush2.msra.mxu0 0.0
    %2703 = vmatprep.subr.mxu0 0.0
    %2704 = vmatpush2.msra.mxu0 0.0
    %2705 = vmatprep.subr.mxu0 0.0
    %2706 = vmatpush2.msra.mxu0 0.0
    %2707 = vmatprep.subr.mxu0 0.0
    %2708 = vmatpush2.msra.mxu0 0.0
    %2709 = vmatprep.subr.mxu0 0.0
    %2710 = vmatpush2.msra.mxu0 0.0
    %2711 = vmatprep.mubr.f32.mxu0 0.0
    %2712 = vmatmul.mubr.f32.gmra.mxu0 %v2062
    %v2713 = vpop.f32.mrf.mxu0
    %v2714 = vadd.f32 0.0, %v2713
    %v2715 = vpop.f32.mrf.mxu0
    %v2716 = vadd.f32 0.0, %v2715
    %2717 = vdwg.mxu0
    %v2718 = vadd.f32 %v2508, %v2643
    %v2719 = vadd.f32 %v2509, %v2645
    %v2720 = vadd.f32 %v2510, %v2714
    %v2721 = vadd.f32 %v2511, %v2716
    %v2722 = vxor.u32 %v2718, 2147483648
    %v2723 = vxor.u32 %v2719, 2147483648
    %v2724 = vxor.u32 %v2720, 2147483648
    %v2725 = vmul.f32 %v2722, 1.442695
    %v2726 = vpow.pop %v2725
    %v2727 = vmul.f32 %v2723, 1.442695
    %v2728 = vpow.pop %v2727
    %v2729 = vmul.f32 %v2724, 1.442695
    %v2730 = vpow.pop %v2729
    %v2731 = vadd.f32 %v2726, 1.0
    %v2732 = vadd.f32 %v2728, 1.0
    %v2733 = vadd.f32 %v2730, 1.0
    %v2734 = vrcp.pop %v2731
    %v2735 = vmul.f32 1.0, %v2734
    %v2736 = vrcp.pop %v2732
    %v2737 = vmul.f32 1.0, %v2736
    %v2738 = vrcp.pop %v2733
    %v2739 = vmul.f32 1.0, %v2738
    %v2740 = vtanh.pop %v2721
    %v2741 = vmul.f32 %v2737, %v2060
    %v2742 = vmul.f32 %v2735, %v2740
    %v2743 = vadd.f32 %v2741, %v2742
    %v2744 = vtanh.pop %v2743
    %v2745 = vmul.f32 %v2739, %v2744
    %v2746 = vld [vmem:[#allocation7] sm:$0xff]
    %v2747 = vld [vmem:[#allocation7 + $0x8] sm:$0xff]
    %v2748 = vld [vmem:[#allocation7 + $0x10] sm:$0xff]
    %v2749 = vld [vmem:[#allocation7 + $0x18] sm:$0xff]
    %v2750 = vld [vmem:[#allocation7 + $0x20] sm:$0xff]
    %v2751 = vld [vmem:[#allocation7 + $0x28] sm:$0xff]
    %v2752 = vld [vmem:[#allocation7 + $0x30] sm:$0xff]
    %v2753 = vld [vmem:[#allocation7 + $0x38] sm:$0xff]
    %v2754 = vld [vmem:[#allocation7 + $0x40] sm:$0xff]
    %v2755 = vld [vmem:[#allocation7 + $0x48] sm:$0xff]
    %v2756 = vld [vmem:[#allocation7 + $0x50] sm:$0xff]
    %v2757 = vld [vmem:[#allocation7 + $0x58] sm:$0xff]
    %v2758 = vld [vmem:[#allocation7 + $0x60] sm:$0xff]
    %v2759 = vld [vmem:[#allocation7 + $0x68] sm:$0xff]
    %v2760 = vld [vmem:[#allocation7 + $0x70] sm:$0xff]
    %v2761 = vld [vmem:[#allocation7 + $0x78] sm:$0xff]
    %v2762 = vld [vmem:[#allocation7 + $0x80] sm:$0xff]
    %v2763 = vld [vmem:[#allocation7 + $0x88] sm:$0xff]
    %v2764 = vld [vmem:[#allocation7 + $0x90] sm:$0xff]
    %v2765 = vld [vmem:[#allocation7 + $0x98] sm:$0xff]
    %v2766 = vld [vmem:[#allocation7 + $0xa0] sm:$0xff]
    %v2767 = vld [vmem:[#allocation7 + $0xa8] sm:$0xff]
    %v2768 = vld [vmem:[#allocation7 + $0xb0] sm:$0xff]
    %v2769 = vld [vmem:[#allocation7 + $0xb8] sm:$0xff]
    %v2770 = vld [vmem:[#allocation7 + $0xc0] sm:$0xff]
    %v2771 = vld [vmem:[#allocation7 + $0xc8] sm:$0xff]
    %v2772 = vld [vmem:[#allocation7 + $0xd0] sm:$0xff]
    %v2773 = vld [vmem:[#allocation7 + $0xd8] sm:$0xff]
    %v2774 = vld [vmem:[#allocation7 + $0xe0] sm:$0xff]
    %v2775 = vld [vmem:[#allocation7 + $0xe8] sm:$0xff]
    %v2776 = vld [vmem:[#allocation7 + $0xf0] sm:$0xff]
    %v2777 = vld [vmem:[#allocation7 + $0xf8] sm:$0xff]
    %v2778 = vld [vmem:[#allocation7 + $0x100] sm:$0xff]
    %v2779 = vld [vmem:[#allocation7 + $0x108] sm:$0xff]
    %v2780 = vld [vmem:[#allocation7 + $0x110] sm:$0xff]
    %v2781 = vld [vmem:[#allocation7 + $0x118] sm:$0xff]
    %v2782 = vld [vmem:[#allocation7 + $0x120] sm:$0xff]
    %v2783 = vld [vmem:[#allocation7 + $0x128] sm:$0xff]
    %v2784 = vld [vmem:[#allocation7 + $0x130] sm:$0xff]
    %v2785 = vld [vmem:[#allocation7 + $0x138] sm:$0xff]
    %v2786 = vld [vmem:[#allocation7 + $0x140] sm:$0xff]
    %v2787 = vld [vmem:[#allocation7 + $0x148] sm:$0xff]
    %v2788 = vld [vmem:[#allocation7 + $0x150] sm:$0xff]
    %v2789 = vld [vmem:[#allocation7 + $0x158] sm:$0xff]
    %v2790 = vld [vmem:[#allocation7 + $0x160] sm:$0xff]
    %v2791 = vld [vmem:[#allocation7 + $0x168] sm:$0xff]
    %v2792 = vld [vmem:[#allocation7 + $0x170] sm:$0xff]
    %v2793 = vld [vmem:[#allocation7 + $0x178] sm:$0xff]
    %v2794 = vld [vmem:[#allocation7 + $0x180] sm:$0xff]
    %v2795 = vld [vmem:[#allocation7 + $0x188] sm:$0xff]
    %v2796 = vld [vmem:[#allocation7 + $0x190] sm:$0xff]
    %v2797 = vld [vmem:[#allocation7 + $0x198] sm:$0xff]
    %v2798 = vld [vmem:[#allocation7 + $0x1a0] sm:$0xff]
    %v2799 = vld [vmem:[#allocation7 + $0x1a8] sm:$0xff]
    %v2800 = vld [vmem:[#allocation7 + $0x1b0] sm:$0xff]
    %v2801 = vld [vmem:[#allocation7 + $0x1b8] sm:$0xff]
    %v2802 = vld [vmem:[#allocation7 + $0x1c0] sm:$0xff]
    %v2803 = vld [vmem:[#allocation7 + $0x1c8] sm:$0xff]
    %v2804 = vld [vmem:[#allocation7 + $0x1d0] sm:$0xff]
    %v2805 = vld [vmem:[#allocation7 + $0x1d8] sm:$0xff]
    %v2806 = vld [vmem:[#allocation7 + $0x1e0] sm:$0xff]
    %v2807 = vld [vmem:[#allocation7 + $0x1e8] sm:$0xff]
    %v2808 = vld [vmem:[#allocation7 + $0x1f0] sm:$0xff]
    %v2809 = vld [vmem:[#allocation7 + $0x1f8] sm:$0xff]
    %2810 = vmatprep.subr.mxu0 %v2807
    %2811 = vmatpush1.msra.mxu0 %v2806
    %2812 = vmatprep.subr.mxu0 %v2803
    %2813 = vmatpush1.msra.mxu0 %v2802
    %2814 = vmatprep.subr.mxu0 %v2799
    %2815 = vmatpush1.msra.mxu0 %v2798
    %2816 = vmatprep.subr.mxu0 %v2795
    %2817 = vmatpush1.msra.mxu0 %v2794
    %2818 = vmatprep.subr.mxu0 %v2791
    %2819 = vmatpush1.msra.mxu0 %v2790
    %2820 = vmatprep.subr.mxu0 %v2787
    %2821 = vmatpush1.msra.mxu0 %v2786
    %2822 = vmatprep.subr.mxu0 %v2783
    %2823 = vmatpush1.msra.mxu0 %v2782
    %2824 = vmatprep.subr.mxu0 %v2779
    %2825 = vmatpush1.msra.mxu0 %v2778
    %2826 = vmatprep.subr.mxu0 %v2775
    %2827 = vmatpush1.msra.mxu0 %v2774
    %2828 = vmatprep.subr.mxu0 %v2771
    %2829 = vmatpush1.msra.mxu0 %v2770
    %2830 = vmatprep.subr.mxu0 %v2767
    %2831 = vmatpush1.msra.mxu0 %v2766
    %2832 = vmatprep.subr.mxu0 %v2763
    %2833 = vmatpush1.msra.mxu0 %v2762
    %2834 = vmatprep.subr.mxu0 %v2759
    %2835 = vmatpush1.msra.mxu0 %v2758
    %2836 = vmatprep.subr.mxu0 %v2755
    %2837 = vmatpush1.msra.mxu0 %v2754
    %2838 = vmatprep.subr.mxu0 %v2751
    %2839 = vmatpush1.msra.mxu0 %v2750
    %2840 = vmatprep.subr.mxu0 %v2747
    %2841 = vmatpush1.msra.mxu0 %v2746
    %2842 = vmatprep.subr.mxu0 0.0
    %2843 = vmatpush2.msra.mxu0 0.0
    %2844 = vmatprep.subr.mxu0 0.0
    %2845 = vmatpush2.msra.mxu0 0.0
    %2846 = vmatprep.subr.mxu0 0.0
    %2847 = vmatpush2.msra.mxu0 0.0
    %2848 = vmatprep.subr.mxu0 0.0
    %2849 = vmatpush2.msra.mxu0 0.0
    %2850 = vmatprep.subr.mxu0 0.0
    %2851 = vmatpush2.msra.mxu0 0.0
    %2852 = vmatprep.subr.mxu0 0.0
    %2853 = vmatpush2.msra.mxu0 0.0
    %2854 = vmatprep.subr.mxu0 0.0
    %2855 = vmatpush2.msra.mxu0 0.0
    %2856 = vmatprep.subr.mxu0 0.0
    %2857 = vmatpush2.msra.mxu0 0.0
    %2858 = vmatprep.subr.mxu0 0.0
    %2859 = vmatpush2.msra.mxu0 0.0
    %2860 = vmatprep.subr.mxu0 0.0
    %2861 = vmatpush2.msra.mxu0 0.0
    %2862 = vmatprep.subr.mxu0 0.0
    %2863 = vmatpush2.msra.mxu0 0.0
    %2864 = vmatprep.subr.mxu0 0.0
    %2865 = vmatpush2.msra.mxu0 0.0
    %2866 = vmatprep.subr.mxu0 0.0
    %2867 = vmatpush2.msra.mxu0 0.0
    %2868 = vmatprep.subr.mxu0 0.0
    %2869 = vmatpush2.msra.mxu0 0.0
    %2870 = vmatprep.subr.mxu0 0.0
    %2871 = vmatpush2.msra.mxu0 0.0
    %2872 = vmatprep.subr.mxu0 0.0
    %2873 = vmatpush2.msra.mxu0 0.0
    %2874 = vmatprep.mubr.f32.mxu0 0.0
    %2875 = vmatmul.mubr.f32.gmra.mxu0 %v2745
    %v2876 = vpop.f32.mrf.mxu0
    %v2877 = vadd.f32 %v440, %v2876
    %v2878 = vpop.f32.mrf.mxu0
    %v2879 = vadd.f32 %v444, %v2878
    %2880 = vdwg.mxu0
    %2881 = vmatprep.subr.mxu0 %v2809
    %2882 = vmatpush1.msra.mxu0 %v2808
    %2883 = vmatprep.subr.mxu0 %v2805
    %2884 = vmatpush1.msra.mxu0 %v2804
    %2885 = vmatprep.subr.mxu0 %v2801
    %2886 = vmatpush1.msra.mxu0 %v2800
    %2887 = vmatprep.subr.mxu0 %v2797
    %2888 = vmatpush1.msra.mxu0 %v2796
    %2889 = vmatprep.subr.mxu0 %v2793
    %2890 = vmatpush1.msra.mxu0 %v2792
    %2891 = vmatprep.subr.mxu0 %v2789
    %2892 = vmatpush1.msra.mxu0 %v2788
    %2893 = vmatprep.subr.mxu0 %v2785
    %2894 = vmatpush1.msra.mxu0 %v2784
    %2895 = vmatprep.subr.mxu0 %v2781
    %2896 = vmatpush1.msra.mxu0 %v2780
    %2897 = vmatprep.subr.mxu0 %v2777
    %2898 = vmatpush1.msra.mxu0 %v2776
    %2899 = vmatprep.subr.mxu0 %v2773
    %2900 = vmatpush1.msra.mxu0 %v2772
    %2901 = vmatprep.subr.mxu0 %v2769
    %2902 = vmatpush1.msra.mxu0 %v2768
    %2903 = vmatprep.subr.mxu0 %v2765
    %2904 = vmatpush1.msra.mxu0 %v2764
    %2905 = vmatprep.subr.mxu0 %v2761
    %2906 = vmatpush1.msra.mxu0 %v2760
    %2907 = vmatprep.subr.mxu0 %v2757
    %2908 = vmatpush1.msra.mxu0 %v2756
    %2909 = vmatprep.subr.mxu0 %v2753
    %2910 = vmatpush1.msra.mxu0 %v2752
    %2911 = vmatprep.subr.mxu0 %v2749
    %2912 = vmatpush1.msra.mxu0 %v2748
    %2913 = vmatprep.subr.mxu0 0.0
    %2914 = vmatpush2.msra.mxu0 0.0
    %2915 = vmatprep.subr.mxu0 0.0
    %2916 = vmatpush2.msra.mxu0 0.0
    %2917 = vmatprep.subr.mxu0 0.0
    %2918 = vmatpush2.msra.mxu0 0.0
    %2919 = vmatprep.subr.mxu0 0.0
    %2920 = vmatpush2.msra.mxu0 0.0
    %2921 = vmatprep.subr.mxu0 0.0
    %2922 = vmatpush2.msra.mxu0 0.0
    %2923 = vmatprep.subr.mxu0 0.0
    %2924 = vmatpush2.msra.mxu0 0.0
    %2925 = vmatprep.subr.mxu0 0.0
    %2926 = vmatpush2.msra.mxu0 0.0
    %2927 = vmatprep.subr.mxu0 0.0
    %2928 = vmatpush2.msra.mxu0 0.0
    %2929 = vmatprep.subr.mxu0 0.0
    %2930 = vmatpush2.msra.mxu0 0.0
    %2931 = vmatprep.subr.mxu0 0.0
    %2932 = vmatpush2.msra.mxu0 0.0
    %2933 = vmatprep.subr.mxu0 0.0
    %2934 = vmatpush2.msra.mxu0 0.0
    %2935 = vmatprep.subr.mxu0 0.0
    %2936 = vmatpush2.msra.mxu0 0.0
    %2937 = vmatprep.subr.mxu0 0.0
    %2938 = vmatpush2.msra.mxu0 0.0
    %2939 = vmatprep.subr.mxu0 0.0
    %2940 = vmatpush2.msra.mxu0 0.0
    %2941 = vmatprep.subr.mxu0 0.0
    %2942 = vmatpush2.msra.mxu0 0.0
    %2943 = vmatprep.subr.mxu0 0.0
    %2944 = vmatpush2.msra.mxu0 0.0
    %2945 = vmatprep.mubr.f32.mxu0 0.0
    %2946 = vmatmul.mubr.f32.gmra.mxu0 %v2745
    %v2947 = vpop.f32.mrf.mxu0
    %v2948 = vadd.f32 %v448, %v2947
    %v2949 = vpop.f32.mrf.mxu0
    %v2950 = vadd.f32 %v452, %v2949
    %2951 = vdwg.mxu0
    %v2952 = vld [vmem:[#allocation9] sm:$0xff]
    %v2953 = vld [vmem:[#allocation9 + $0x8] sm:$0xff]
    %v2954 = vld [vmem:[#allocation9 + $0x10] sm:$0xff]
    %v2955 = vld [vmem:[#allocation9 + $0x18] sm:$0xff]
    %v2956 = vld [vmem:[#allocation9 + $0x20] sm:$0xff]
    %v2957 = vld [vmem:[#allocation9 + $0x28] sm:$0xff]
    %v2958 = vld [vmem:[#allocation9 + $0x30] sm:$0xff]
    %v2959 = vld [vmem:[#allocation9 + $0x38] sm:$0xff]
    %v2960 = vld [vmem:[#allocation9 + $0x40] sm:$0xff]
    %v2961 = vld [vmem:[#allocation9 + $0x48] sm:$0xff]
    %v2962 = vld [vmem:[#allocation9 + $0x50] sm:$0xff]
    %v2963 = vld [vmem:[#allocation9 + $0x58] sm:$0xff]
    %v2964 = vld [vmem:[#allocation9 + $0x60] sm:$0xff]
    %v2965 = vld [vmem:[#allocation9 + $0x68] sm:$0xff]
    %v2966 = vld [vmem:[#allocation9 + $0x70] sm:$0xff]
    %v2967 = vld [vmem:[#allocation9 + $0x78] sm:$0xff]
    %v2968 = vld [vmem:[#allocation9 + $0x80] sm:$0xff]
    %v2969 = vld [vmem:[#allocation9 + $0x88] sm:$0xff]
    %v2970 = vld [vmem:[#allocation9 + $0x90] sm:$0xff]
    %v2971 = vld [vmem:[#allocation9 + $0x98] sm:$0xff]
    %v2972 = vld [vmem:[#allocation9 + $0xa0] sm:$0xff]
    %v2973 = vld [vmem:[#allocation9 + $0xa8] sm:$0xff]
    %v2974 = vld [vmem:[#allocation9 + $0xb0] sm:$0xff]
    %v2975 = vld [vmem:[#allocation9 + $0xb8] sm:$0xff]
    %v2976 = vld [vmem:[#allocation9 + $0xc0] sm:$0xff]
    %v2977 = vld [vmem:[#allocation9 + $0xc8] sm:$0xff]
    %v2978 = vld [vmem:[#allocation9 + $0xd0] sm:$0xff]
    %v2979 = vld [vmem:[#allocation9 + $0xd8] sm:$0xff]
    %v2980 = vld [vmem:[#allocation9 + $0xe0] sm:$0xff]
    %v2981 = vld [vmem:[#allocation9 + $0xe8] sm:$0xff]
    %v2982 = vld [vmem:[#allocation9 + $0xf0] sm:$0xff]
    %v2983 = vld [vmem:[#allocation9 + $0xf8] sm:$0xff]
    %v2984 = vld [vmem:[#allocation9 + $0x100] sm:$0xff]
    %v2985 = vld [vmem:[#allocation9 + $0x108] sm:$0xff]
    %v2986 = vld [vmem:[#allocation9 + $0x110] sm:$0xff]
    %v2987 = vld [vmem:[#allocation9 + $0x118] sm:$0xff]
    %v2988 = vld [vmem:[#allocation9 + $0x120] sm:$0xff]
    %v2989 = vld [vmem:[#allocation9 + $0x128] sm:$0xff]
    %v2990 = vld [vmem:[#allocation9 + $0x130] sm:$0xff]
    %v2991 = vld [vmem:[#allocation9 + $0x138] sm:$0xff]
    %v2992 = vld [vmem:[#allocation9 + $0x140] sm:$0xff]
    %v2993 = vld [vmem:[#allocation9 + $0x148] sm:$0xff]
    %v2994 = vld [vmem:[#allocation9 + $0x150] sm:$0xff]
    %v2995 = vld [vmem:[#allocation9 + $0x158] sm:$0xff]
    %v2996 = vld [vmem:[#allocation9 + $0x160] sm:$0xff]
    %v2997 = vld [vmem:[#allocation9 + $0x168] sm:$0xff]
    %v2998 = vld [vmem:[#allocation9 + $0x170] sm:$0xff]
    %v2999 = vld [vmem:[#allocation9 + $0x178] sm:$0xff]
    %v3000 = vld [vmem:[#allocation9 + $0x180] sm:$0xff]
    %v3001 = vld [vmem:[#allocation9 + $0x188] sm:$0xff]
    %v3002 = vld [vmem:[#allocation9 + $0x190] sm:$0xff]
    %v3003 = vld [vmem:[#allocation9 + $0x198] sm:$0xff]
    %v3004 = vld [vmem:[#allocation9 + $0x1a0] sm:$0xff]
    %v3005 = vld [vmem:[#allocation9 + $0x1a8] sm:$0xff]
    %v3006 = vld [vmem:[#allocation9 + $0x1b0] sm:$0xff]
    %v3007 = vld [vmem:[#allocation9 + $0x1b8] sm:$0xff]
    %v3008 = vld [vmem:[#allocation9 + $0x1c0] sm:$0xff]
    %v3009 = vld [vmem:[#allocation9 + $0x1c8] sm:$0xff]
    %v3010 = vld [vmem:[#allocation9 + $0x1d0] sm:$0xff]
    %v3011 = vld [vmem:[#allocation9 + $0x1d8] sm:$0xff]
    %v3012 = vld [vmem:[#allocation9 + $0x1e0] sm:$0xff]
    %v3013 = vld [vmem:[#allocation9 + $0x1e8] sm:$0xff]
    %v3014 = vld [vmem:[#allocation9 + $0x1f0] sm:$0xff]
    %v3015 = vld [vmem:[#allocation9 + $0x1f8] sm:$0xff]
    %3016 = vmatprep.subr.mxu0 %v3013
    %3017 = vmatpush1.msra.mxu0 %v3012
    %3018 = vmatprep.subr.mxu0 %v3009
    %3019 = vmatpush1.msra.mxu0 %v3008
    %3020 = vmatprep.subr.mxu0 %v3005
    %3021 = vmatpush1.msra.mxu0 %v3004
    %3022 = vmatprep.subr.mxu0 %v3001
    %3023 = vmatpush1.msra.mxu0 %v3000
    %3024 = vmatprep.subr.mxu0 %v2997
    %3025 = vmatpush1.msra.mxu0 %v2996
    %3026 = vmatprep.subr.mxu0 %v2993
    %3027 = vmatpush1.msra.mxu0 %v2992
    %3028 = vmatprep.subr.mxu0 %v2989
    %3029 = vmatpush1.msra.mxu0 %v2988
    %3030 = vmatprep.subr.mxu0 %v2985
    %3031 = vmatpush1.msra.mxu0 %v2984
    %3032 = vmatprep.subr.mxu0 %v2981
    %3033 = vmatpush1.msra.mxu0 %v2980
    %3034 = vmatprep.subr.mxu0 %v2977
    %3035 = vmatpush1.msra.mxu0 %v2976
    %3036 = vmatprep.subr.mxu0 %v2973
    %3037 = vmatpush1.msra.mxu0 %v2972
    %3038 = vmatprep.subr.mxu0 %v2969
    %3039 = vmatpush1.msra.mxu0 %v2968
    %3040 = vmatprep.subr.mxu0 %v2965
    %3041 = vmatpush1.msra.mxu0 %v2964
    %3042 = vmatprep.subr.mxu0 %v2961
    %3043 = vmatpush1.msra.mxu0 %v2960
    %3044 = vmatprep.subr.mxu0 %v2957
    %3045 = vmatpush1.msra.mxu0 %v2956
    %3046 = vmatprep.subr.mxu0 %v2953
    %3047 = vmatpush1.msra.mxu0 %v2952
    %3048 = vmatprep.subr.mxu0 0.0
    %3049 = vmatpush2.msra.mxu0 0.0
    %3050 = vmatprep.subr.mxu0 0.0
    %3051 = vmatpush2.msra.mxu0 0.0
    %3052 = vmatprep.subr.mxu0 0.0
    %3053 = vmatpush2.msra.mxu0 0.0
    %3054 = vmatprep.subr.mxu0 0.0
    %3055 = vmatpush2.msra.mxu0 0.0
    %3056 = vmatprep.subr.mxu0 0.0
    %3057 = vmatpush2.msra.mxu0 0.0
    %3058 = vmatprep.subr.mxu0 0.0
    %3059 = vmatpush2.msra.mxu0 0.0
    %3060 = vmatprep.subr.mxu0 0.0
    %3061 = vmatpush2.msra.mxu0 0.0
    %3062 = vmatprep.subr.mxu0 0.0
    %3063 = vmatpush2.msra.mxu0 0.0
    %3064 = vmatprep.subr.mxu0 0.0
    %3065 = vmatpush2.msra.mxu0 0.0
    %3066 = vmatprep.subr.mxu0 0.0
    %3067 = vmatpush2.msra.mxu0 0.0
    %3068 = vmatprep.subr.mxu0 0.0
    %3069 = vmatpush2.msra.mxu0 0.0
    %3070 = vmatprep.subr.mxu0 0.0
    %3071 = vmatpush2.msra.mxu0 0.0
    %3072 = vmatprep.subr.mxu0 0.0
    %3073 = vmatpush2.msra.mxu0 0.0
    %3074 = vmatprep.subr.mxu0 0.0
    %3075 = vmatpush2.msra.mxu0 0.0
    %3076 = vmatprep.subr.mxu0 0.0
    %3077 = vmatpush2.msra.mxu0 0.0
    %3078 = vmatprep.subr.mxu0 0.0
    %3079 = vmatpush2.msra.mxu0 0.0
    %3080 = vmatprep.mubr.f32.mxu0 0.0
    %3081 = vmatmul.mubr.f32.gmra.mxu0 %v2502
    %v3082 = vpop.f32.mrf.mxu0
    %v3083 = vadd.f32 0.0, %v3082
    %v3084 = vpop.f32.mrf.mxu0
    %v3085 = vadd.f32 0.0, %v3084
    %3086 = vdwg.mxu0
    %3087 = vmatprep.subr.mxu0 %v3015
    %3088 = vmatpush1.msra.mxu0 %v3014
    %3089 = vmatprep.subr.mxu0 %v3011
    %3090 = vmatpush1.msra.mxu0 %v3010
    %3091 = vmatprep.subr.mxu0 %v3007
    %3092 = vmatpush1.msra.mxu0 %v3006
    %3093 = vmatprep.subr.mxu0 %v3003
    %3094 = vmatpush1.msra.mxu0 %v3002
    %3095 = vmatprep.subr.mxu0 %v2999
    %3096 = vmatpush1.msra.mxu0 %v2998
    %3097 = vmatprep.subr.mxu0 %v2995
    %3098 = vmatpush1.msra.mxu0 %v2994
    %3099 = vmatprep.subr.mxu0 %v2991
    %3100 = vmatpush1.msra.mxu0 %v2990
    %3101 = vmatprep.subr.mxu0 %v2987
    %3102 = vmatpush1.msra.mxu0 %v2986
    %3103 = vmatprep.subr.mxu0 %v2983
    %3104 = vmatpush1.msra.mxu0 %v2982
    %3105 = vmatprep.subr.mxu0 %v2979
    %3106 = vmatpush1.msra.mxu0 %v2978
    %3107 = vmatprep.subr.mxu0 %v2975
    %3108 = vmatpush1.msra.mxu0 %v2974
    %3109 = vmatprep.subr.mxu0 %v2971
    %3110 = vmatpush1.msra.mxu0 %v2970
    %3111 = vmatprep.subr.mxu0 %v2967
    %3112 = vmatpush1.msra.mxu0 %v2966
    %3113 = vmatprep.subr.mxu0 %v2963
    %3114 = vmatpush1.msra.mxu0 %v2962
    %3115 = vmatprep.subr.mxu0 %v2959
    %3116 = vmatpush1.msra.mxu0 %v2958
    %3117 = vmatprep.subr.mxu0 %v2955
    %3118 = vmatpush1.msra.mxu0 %v2954
    %3119 = vmatprep.subr.mxu0 0.0
    %3120 = vmatpush2.msra.mxu0 0.0
    %3121 = vmatprep.subr.mxu0 0.0
    %3122 = vmatpush2.msra.mxu0 0.0
    %3123 = vmatprep.subr.mxu0 0.0
    %3124 = vmatpush2.msra.mxu0 0.0
    %3125 = vmatprep.subr.mxu0 0.0
    %3126 = vmatpush2.msra.mxu0 0.0
    %3127 = vmatprep.subr.mxu0 0.0
    %3128 = vmatpush2.msra.mxu0 0.0
    %3129 = vmatprep.subr.mxu0 0.0
    %3130 = vmatpush2.msra.mxu0 0.0
    %3131 = vmatprep.subr.mxu0 0.0
    %3132 = vmatpush2.msra.mxu0 0.0
    %3133 = vmatprep.subr.mxu0 0.0
    %3134 = vmatpush2.msra.mxu0 0.0
    %3135 = vmatprep.subr.mxu0 0.0
    %3136 = vmatpush2.msra.mxu0 0.0
    %3137 = vmatprep.subr.mxu0 0.0
    %3138 = vmatpush2.msra.mxu0 0.0
    %3139 = vmatprep.subr.mxu0 0.0
    %3140 = vmatpush2.msra.mxu0 0.0
    %3141 = vmatprep.subr.mxu0 0.0
    %3142 = vmatpush2.msra.mxu0 0.0
    %3143 = vmatprep.subr.mxu0 0.0
    %3144 = vmatpush2.msra.mxu0 0.0
    %3145 = vmatprep.subr.mxu0 0.0
    %3146 = vmatpush2.msra.mxu0 0.0
    %3147 = vmatprep.subr.mxu0 0.0
    %3148 = vmatpush2.msra.mxu0 0.0
    %3149 = vmatprep.subr.mxu0 0.0
    %3150 = vmatpush2.msra.mxu0 0.0
    %3151 = vmatprep.mubr.f32.mxu0 0.0
    %3152 = vmatmul.mubr.f32.gmra.mxu0 %v2502
    %v3153 = vpop.f32.mrf.mxu0
    %v3154 = vadd.f32 0.0, %v3153
    %v3155 = vpop.f32.mrf.mxu0
    %v3156 = vadd.f32 0.0, %v3155
    %3157 = vdwg.mxu0
    %v3158 = vadd.f32 %v2877, %v3083
    %v3159 = vadd.f32 %v2879, %v3085
    %v3160 = vadd.f32 %v2948, %v3154
    %v3161 = vadd.f32 %v2950, %v3156
    %v3162 = vxor.u32 %v3158, 2147483648
    %v3163 = vxor.u32 %v3159, 2147483648
    %v3164 = vxor.u32 %v3160, 2147483648
    %v3165 = vmul.f32 %v3162, 1.442695
    %v3166 = vpow.pop %v3165
    %v3167 = vmul.f32 %v3163, 1.442695
    %v3168 = vpow.pop %v3167
    %v3169 = vmul.f32 %v3164, 1.442695
    %v3170 = vpow.pop %v3169
    %v3171 = vadd.f32 %v3166, 1.0
    %v3172 = vadd.f32 %v3168, 1.0
    %v3173 = vadd.f32 %v3170, 1.0
    %v3174 = vrcp.pop %v3171
    %v3175 = vmul.f32 1.0, %v3174
    %v3176 = vrcp.pop %v3172
    %v3177 = vmul.f32 1.0, %v3176
    %v3178 = vrcp.pop %v3173
    %v3179 = vmul.f32 1.0, %v3178
    %v3180 = vtanh.pop %v3161
    %v3181 = vmul.f32 %v3177, %v2500
    %v3182 = vmul.f32 %v3175, %v3180
    %v3183 = vadd.f32 %v3181, %v3182
    %v3184 = vtanh.pop %v3183
    %v3185 = vmul.f32 %v3179, %v3184
    %s3186 = scalar_lea.vmem [#allocation3], 24
    %3187 = vst [vmem:[%s3186] sm:$0xff] %v3185
    %s3188 = smul.u32 4, 4
    %s3189 = smul.addr %s3188, 8
    %s3190 = scalar_lea.vmem [#allocation2], %s3189
    %v3191 = vld [vmem:[%s3190] sm:$0xff]
    %v3192 = vld [vmem:[%s3190 + $0x8] sm:$0xff]
    %v3193 = vld [vmem:[%s3190 + $0x10] sm:$0xff]
    %v3194 = vld [vmem:[%s3190 + $0x18] sm:$0xff]
    %v3195 = vld [vmem:[#allocation4] sm:$0xff]
    %v3196 = vld [vmem:[#allocation4 + $0x8] sm:$0xff]
    %v3197 = vld [vmem:[#allocation4 + $0x10] sm:$0xff]
    %v3198 = vld [vmem:[#allocation4 + $0x18] sm:$0xff]
    %v3199 = vld [vmem:[#allocation4 + $0x20] sm:$0xff]
    %v3200 = vld [vmem:[#allocation4 + $0x28] sm:$0xff]
    %v3201 = vld [vmem:[#allocation4 + $0x30] sm:$0xff]
    %v3202 = vld [vmem:[#allocation4 + $0x38] sm:$0xff]
    %v3203 = vld [vmem:[#allocation4 + $0x40] sm:$0xff]
    %v3204 = vld [vmem:[#allocation4 + $0x48] sm:$0xff]
    %v3205 = vld [vmem:[#allocation4 + $0x50] sm:$0xff]
    %v3206 = vld [vmem:[#allocation4 + $0x58] sm:$0xff]
    %v3207 = vld [vmem:[#allocation4 + $0x60] sm:$0xff]
    %v3208 = vld [vmem:[#allocation4 + $0x68] sm:$0xff]
    %v3209 = vld [vmem:[#allocation4 + $0x70] sm:$0xff]
    %v3210 = vld [vmem:[#allocation4 + $0x78] sm:$0xff]
    %v3211 = vld [vmem:[#allocation4 + $0x80] sm:$0xff]
    %v3212 = vld [vmem:[#allocation4 + $0x88] sm:$0xff]
    %v3213 = vld [vmem:[#allocation4 + $0x90] sm:$0xff]
    %v3214 = vld [vmem:[#allocation4 + $0x98] sm:$0xff]
    %v3215 = vld [vmem:[#allocation4 + $0xa0] sm:$0xff]
    %v3216 = vld [vmem:[#allocation4 + $0xa8] sm:$0xff]
    %v3217 = vld [vmem:[#allocation4 + $0xb0] sm:$0xff]
    %v3218 = vld [vmem:[#allocation4 + $0xb8] sm:$0xff]
    %v3219 = vld [vmem:[#allocation4 + $0xc0] sm:$0xff]
    %v3220 = vld [vmem:[#allocation4 + $0xc8] sm:$0xff]
    %v3221 = vld [vmem:[#allocation4 + $0xd0] sm:$0xff]
    %v3222 = vld [vmem:[#allocation4 + $0xd8] sm:$0xff]
    %v3223 = vld [vmem:[#allocation4 + $0xe0] sm:$0xff]
    %v3224 = vld [vmem:[#allocation4 + $0xe8] sm:$0xff]
    %v3225 = vld [vmem:[#allocation4 + $0xf0] sm:$0xff]
    %v3226 = vld [vmem:[#allocation4 + $0xf8] sm:$0xff]
    %v3227 = vld [vmem:[#allocation4 + $0x100] sm:$0xff]
    %v3228 = vld [vmem:[#allocation4 + $0x108] sm:$0xff]
    %v3229 = vld [vmem:[#allocation4 + $0x110] sm:$0xff]
    %v3230 = vld [vmem:[#allocation4 + $0x118] sm:$0xff]
    %v3231 = vld [vmem:[#allocation4 + $0x120] sm:$0xff]
    %v3232 = vld [vmem:[#allocation4 + $0x128] sm:$0xff]
    %v3233 = vld [vmem:[#allocation4 + $0x130] sm:$0xff]
    %v3234 = vld [vmem:[#allocation4 + $0x138] sm:$0xff]
    %v3235 = vld [vmem:[#allocation4 + $0x140] sm:$0xff]
    %v3236 = vld [vmem:[#allocation4 + $0x148] sm:$0xff]
    %v3237 = vld [vmem:[#allocation4 + $0x150] sm:$0xff]
    %v3238 = vld [vmem:[#allocation4 + $0x158] sm:$0xff]
    %v3239 = vld [vmem:[#allocation4 + $0x160] sm:$0xff]
    %v3240 = vld [vmem:[#allocation4 + $0x168] sm:$0xff]
    %v3241 = vld [vmem:[#allocation4 + $0x170] sm:$0xff]
    %v3242 = vld [vmem:[#allocation4 + $0x178] sm:$0xff]
    %v3243 = vld [vmem:[#allocation4 + $0x180] sm:$0xff]
    %v3244 = vld [vmem:[#allocation4 + $0x188] sm:$0xff]
    %v3245 = vld [vmem:[#allocation4 + $0x190] sm:$0xff]
    %v3246 = vld [vmem:[#allocation4 + $0x198] sm:$0xff]
    %v3247 = vld [vmem:[#allocation4 + $0x1a0] sm:$0xff]
    %v3248 = vld [vmem:[#allocation4 + $0x1a8] sm:$0xff]
    %v3249 = vld [vmem:[#allocation4 + $0x1b0] sm:$0xff]
    %v3250 = vld [vmem:[#allocation4 + $0x1b8] sm:$0xff]
    %v3251 = vld [vmem:[#allocation4 + $0x1c0] sm:$0xff]
    %v3252 = vld [vmem:[#allocation4 + $0x1c8] sm:$0xff]
    %v3253 = vld [vmem:[#allocation4 + $0x1d0] sm:$0xff]
    %v3254 = vld [vmem:[#allocation4 + $0x1d8] sm:$0xff]
    %v3255 = vld [vmem:[#allocation4 + $0x1e0] sm:$0xff]
    %v3256 = vld [vmem:[#allocation4 + $0x1e8] sm:$0xff]
    %v3257 = vld [vmem:[#allocation4 + $0x1f0] sm:$0xff]
    %v3258 = vld [vmem:[#allocation4 + $0x1f8] sm:$0xff]
    %3259 = vmatprep.subr.mxu0 %v3256
    %3260 = vmatpush1.msra.mxu0 %v3255
    %3261 = vmatprep.subr.mxu0 %v3252
    %3262 = vmatpush1.msra.mxu0 %v3251
    %3263 = vmatprep.subr.mxu0 %v3248
    %3264 = vmatpush1.msra.mxu0 %v3247
    %3265 = vmatprep.subr.mxu0 %v3244
    %3266 = vmatpush1.msra.mxu0 %v3243
    %3267 = vmatprep.subr.mxu0 %v3240
    %3268 = vmatpush1.msra.mxu0 %v3239
    %3269 = vmatprep.subr.mxu0 %v3236
    %3270 = vmatpush1.msra.mxu0 %v3235
    %3271 = vmatprep.subr.mxu0 %v3232
    %3272 = vmatpush1.msra.mxu0 %v3231
    %3273 = vmatprep.subr.mxu0 %v3228
    %3274 = vmatpush1.msra.mxu0 %v3227
    %3275 = vmatprep.subr.mxu0 %v3224
    %3276 = vmatpush1.msra.mxu0 %v3223
    %3277 = vmatprep.subr.mxu0 %v3220
    %3278 = vmatpush1.msra.mxu0 %v3219
    %3279 = vmatprep.subr.mxu0 %v3216
    %3280 = vmatpush1.msra.mxu0 %v3215
    %3281 = vmatprep.subr.mxu0 %v3212
    %3282 = vmatpush1.msra.mxu0 %v3211
    %3283 = vmatprep.subr.mxu0 %v3208
    %3284 = vmatpush1.msra.mxu0 %v3207
    %3285 = vmatprep.subr.mxu0 %v3204
    %3286 = vmatpush1.msra.mxu0 %v3203
    %3287 = vmatprep.subr.mxu0 %v3200
    %3288 = vmatpush1.msra.mxu0 %v3199
    %3289 = vmatprep.subr.mxu0 %v3196
    %3290 = vmatpush1.msra.mxu0 %v3195
    %3291 = vmatprep.subr.mxu0 0.0
    %3292 = vmatpush2.msra.mxu0 0.0
    %3293 = vmatprep.subr.mxu0 0.0
    %3294 = vmatpush2.msra.mxu0 0.0
    %3295 = vmatprep.subr.mxu0 0.0
    %3296 = vmatpush2.msra.mxu0 0.0
    %3297 = vmatprep.subr.mxu0 0.0
    %3298 = vmatpush2.msra.mxu0 0.0
    %3299 = vmatprep.subr.mxu0 0.0
    %3300 = vmatpush2.msra.mxu0 0.0
    %3301 = vmatprep.subr.mxu0 0.0
    %3302 = vmatpush2.msra.mxu0 0.0
    %3303 = vmatprep.subr.mxu0 0.0
    %3304 = vmatpush2.msra.mxu0 0.0
    %3305 = vmatprep.subr.mxu0 0.0
    %3306 = vmatpush2.msra.mxu0 0.0
    %3307 = vmatprep.subr.mxu0 0.0
    %3308 = vmatpush2.msra.mxu0 0.0
    %3309 = vmatprep.subr.mxu0 0.0
    %3310 = vmatpush2.msra.mxu0 0.0
    %3311 = vmatprep.subr.mxu0 0.0
    %3312 = vmatpush2.msra.mxu0 0.0
    %3313 = vmatprep.subr.mxu0 0.0
    %3314 = vmatpush2.msra.mxu0 0.0
    %3315 = vmatprep.subr.mxu0 0.0
    %3316 = vmatpush2.msra.mxu0 0.0
    %3317 = vmatprep.subr.mxu0 0.0
    %3318 = vmatpush2.msra.mxu0 0.0
    %3319 = vmatprep.subr.mxu0 0.0
    %3320 = vmatpush2.msra.mxu0 0.0
    %3321 = vmatprep.subr.mxu0 0.0
    %3322 = vmatpush2.msra.mxu0 0.0
    %3323 = vmatprep.mubr.f32.mxu0 0.0
    %3324 = vmatmul.mubr.f32.gmra.mxu0 %v2745
    %v3325 = vpop.f32.mrf.mxu0
    %v3326 = vadd.f32 0.0, %v3325
    %v3327 = vpop.f32.mrf.mxu0
    %v3328 = vadd.f32 0.0, %v3327
    %3329 = vdwg.mxu0
    %3330 = vmatprep.subr.mxu0 %v3258
    %3331 = vmatpush1.msra.mxu0 %v3257
    %3332 = vmatprep.subr.mxu0 %v3254
    %3333 = vmatpush1.msra.mxu0 %v3253
    %3334 = vmatprep.subr.mxu0 %v3250
    %3335 = vmatpush1.msra.mxu0 %v3249
    %3336 = vmatprep.subr.mxu0 %v3246
    %3337 = vmatpush1.msra.mxu0 %v3245
    %3338 = vmatprep.subr.mxu0 %v3242
    %3339 = vmatpush1.msra.mxu0 %v3241
    %3340 = vmatprep.subr.mxu0 %v3238
    %3341 = vmatpush1.msra.mxu0 %v3237
    %3342 = vmatprep.subr.mxu0 %v3234
    %3343 = vmatpush1.msra.mxu0 %v3233
    %3344 = vmatprep.subr.mxu0 %v3230
    %3345 = vmatpush1.msra.mxu0 %v3229
    %3346 = vmatprep.subr.mxu0 %v3226
    %3347 = vmatpush1.msra.mxu0 %v3225
    %3348 = vmatprep.subr.mxu0 %v3222
    %3349 = vmatpush1.msra.mxu0 %v3221
    %3350 = vmatprep.subr.mxu0 %v3218
    %3351 = vmatpush1.msra.mxu0 %v3217
    %3352 = vmatprep.subr.mxu0 %v3214
    %3353 = vmatpush1.msra.mxu0 %v3213
    %3354 = vmatprep.subr.mxu0 %v3210
    %3355 = vmatpush1.msra.mxu0 %v3209
    %3356 = vmatprep.subr.mxu0 %v3206
    %3357 = vmatpush1.msra.mxu0 %v3205
    %3358 = vmatprep.subr.mxu0 %v3202
    %3359 = vmatpush1.msra.mxu0 %v3201
    %3360 = vmatprep.subr.mxu0 %v3198
    %3361 = vmatpush1.msra.mxu0 %v3197
    %3362 = vmatprep.subr.mxu0 0.0
    %3363 = vmatpush2.msra.mxu0 0.0
    %3364 = vmatprep.subr.mxu0 0.0
    %3365 = vmatpush2.msra.mxu0 0.0
    %3366 = vmatprep.subr.mxu0 0.0
    %3367 = vmatpush2.msra.mxu0 0.0
    %3368 = vmatprep.subr.mxu0 0.0
    %3369 = vmatpush2.msra.mxu0 0.0
    %3370 = vmatprep.subr.mxu0 0.0
    %3371 = vmatpush2.msra.mxu0 0.0
    %3372 = vmatprep.subr.mxu0 0.0
    %3373 = vmatpush2.msra.mxu0 0.0
    %3374 = vmatprep.subr.mxu0 0.0
    %3375 = vmatpush2.msra.mxu0 0.0
    %3376 = vmatprep.subr.mxu0 0.0
    %3377 = vmatpush2.msra.mxu0 0.0
    %3378 = vmatprep.subr.mxu0 0.0
    %3379 = vmatpush2.msra.mxu0 0.0
    %3380 = vmatprep.subr.mxu0 0.0
    %3381 = vmatpush2.msra.mxu0 0.0
    %3382 = vmatprep.subr.mxu0 0.0
    %3383 = vmatpush2.msra.mxu0 0.0
    %3384 = vmatprep.subr.mxu0 0.0
    %3385 = vmatpush2.msra.mxu0 0.0
    %3386 = vmatprep.subr.mxu0 0.0
    %3387 = vmatpush2.msra.mxu0 0.0
    %3388 = vmatprep.subr.mxu0 0.0
    %3389 = vmatpush2.msra.mxu0 0.0
    %3390 = vmatprep.subr.mxu0 0.0
    %3391 = vmatpush2.msra.mxu0 0.0
    %3392 = vmatprep.subr.mxu0 0.0
    %3393 = vmatpush2.msra.mxu0 0.0
    %3394 = vmatprep.mubr.f32.mxu0 0.0
    %3395 = vmatmul.mubr.f32.gmra.mxu0 %v2745
    %v3396 = vpop.f32.mrf.mxu0
    %v3397 = vadd.f32 0.0, %v3396
    %v3398 = vpop.f32.mrf.mxu0
    %v3399 = vadd.f32 0.0, %v3398
    %3400 = vdwg.mxu0
    %v3401 = vadd.f32 %v3191, %v3326
    %v3402 = vadd.f32 %v3192, %v3328
    %v3403 = vadd.f32 %v3193, %v3397
    %v3404 = vadd.f32 %v3194, %v3399
    %v3405 = vxor.u32 %v3401, 2147483648
    %v3406 = vxor.u32 %v3402, 2147483648
    %v3407 = vxor.u32 %v3403, 2147483648
    %v3408 = vmul.f32 %v3405, 1.442695
    %v3409 = vpow.pop %v3408
    %v3410 = vmul.f32 %v3406, 1.442695
    %v3411 = vpow.pop %v3410
    %v3412 = vmul.f32 %v3407, 1.442695
    %v3413 = vpow.pop %v3412
    %v3414 = vadd.f32 %v3409, 1.0
    %v3415 = vadd.f32 %v3411, 1.0
    %v3416 = vadd.f32 %v3413, 1.0
    %v3417 = vrcp.pop %v3414
    %v3418 = vmul.f32 1.0, %v3417
    %v3419 = vrcp.pop %v3415
    %v3420 = vmul.f32 1.0, %v3419
    %v3421 = vrcp.pop %v3416
    %v3422 = vmul.f32 1.0, %v3421
    %v3423 = vtanh.pop %v3404
    %v3424 = vmul.f32 %v3420, %v2743
    %v3425 = vmul.f32 %v3418, %v3423
    %v3426 = vadd.f32 %v3424, %v3425
    %v3427 = vtanh.pop %v3426
    %v3428 = vmul.f32 %v3422, %v3427
    %v3429 = vld [vmem:[#allocation7] sm:$0xff]
    %v3430 = vld [vmem:[#allocation7 + $0x8] sm:$0xff]
    %v3431 = vld [vmem:[#allocation7 + $0x10] sm:$0xff]
    %v3432 = vld [vmem:[#allocation7 + $0x18] sm:$0xff]
    %v3433 = vld [vmem:[#allocation7 + $0x20] sm:$0xff]
    %v3434 = vld [vmem:[#allocation7 + $0x28] sm:$0xff]
    %v3435 = vld [vmem:[#allocation7 + $0x30] sm:$0xff]
    %v3436 = vld [vmem:[#allocation7 + $0x38] sm:$0xff]
    %v3437 = vld [vmem:[#allocation7 + $0x40] sm:$0xff]
    %v3438 = vld [vmem:[#allocation7 + $0x48] sm:$0xff]
    %v3439 = vld [vmem:[#allocation7 + $0x50] sm:$0xff]
    %v3440 = vld [vmem:[#allocation7 + $0x58] sm:$0xff]
    %v3441 = vld [vmem:[#allocation7 + $0x60] sm:$0xff]
    %v3442 = vld [vmem:[#allocation7 + $0x68] sm:$0xff]
    %v3443 = vld [vmem:[#allocation7 + $0x70] sm:$0xff]
    %v3444 = vld [vmem:[#allocation7 + $0x78] sm:$0xff]
    %v3445 = vld [vmem:[#allocation7 + $0x80] sm:$0xff]
    %v3446 = vld [vmem:[#allocation7 + $0x88] sm:$0xff]
    %v3447 = vld [vmem:[#allocation7 + $0x90] sm:$0xff]
    %v3448 = vld [vmem:[#allocation7 + $0x98] sm:$0xff]
    %v3449 = vld [vmem:[#allocation7 + $0xa0] sm:$0xff]
    %v3450 = vld [vmem:[#allocation7 + $0xa8] sm:$0xff]
    %v3451 = vld [vmem:[#allocation7 + $0xb0] sm:$0xff]
    %v3452 = vld [vmem:[#allocation7 + $0xb8] sm:$0xff]
    %v3453 = vld [vmem:[#allocation7 + $0xc0] sm:$0xff]
    %v3454 = vld [vmem:[#allocation7 + $0xc8] sm:$0xff]
    %v3455 = vld [vmem:[#allocation7 + $0xd0] sm:$0xff]
    %v3456 = vld [vmem:[#allocation7 + $0xd8] sm:$0xff]
    %v3457 = vld [vmem:[#allocation7 + $0xe0] sm:$0xff]
    %v3458 = vld [vmem:[#allocation7 + $0xe8] sm:$0xff]
    %v3459 = vld [vmem:[#allocation7 + $0xf0] sm:$0xff]
    %v3460 = vld [vmem:[#allocation7 + $0xf8] sm:$0xff]
    %v3461 = vld [vmem:[#allocation7 + $0x100] sm:$0xff]
    %v3462 = vld [vmem:[#allocation7 + $0x108] sm:$0xff]
    %v3463 = vld [vmem:[#allocation7 + $0x110] sm:$0xff]
    %v3464 = vld [vmem:[#allocation7 + $0x118] sm:$0xff]
    %v3465 = vld [vmem:[#allocation7 + $0x120] sm:$0xff]
    %v3466 = vld [vmem:[#allocation7 + $0x128] sm:$0xff]
    %v3467 = vld [vmem:[#allocation7 + $0x130] sm:$0xff]
    %v3468 = vld [vmem:[#allocation7 + $0x138] sm:$0xff]
    %v3469 = vld [vmem:[#allocation7 + $0x140] sm:$0xff]
    %v3470 = vld [vmem:[#allocation7 + $0x148] sm:$0xff]
    %v3471 = vld [vmem:[#allocation7 + $0x150] sm:$0xff]
    %v3472 = vld [vmem:[#allocation7 + $0x158] sm:$0xff]
    %v3473 = vld [vmem:[#allocation7 + $0x160] sm:$0xff]
    %v3474 = vld [vmem:[#allocation7 + $0x168] sm:$0xff]
    %v3475 = vld [vmem:[#allocation7 + $0x170] sm:$0xff]
    %v3476 = vld [vmem:[#allocation7 + $0x178] sm:$0xff]
    %v3477 = vld [vmem:[#allocation7 + $0x180] sm:$0xff]
    %v3478 = vld [vmem:[#allocation7 + $0x188] sm:$0xff]
    %v3479 = vld [vmem:[#allocation7 + $0x190] sm:$0xff]
    %v3480 = vld [vmem:[#allocation7 + $0x198] sm:$0xff]
    %v3481 = vld [vmem:[#allocation7 + $0x1a0] sm:$0xff]
    %v3482 = vld [vmem:[#allocation7 + $0x1a8] sm:$0xff]
    %v3483 = vld [vmem:[#allocation7 + $0x1b0] sm:$0xff]
    %v3484 = vld [vmem:[#allocation7 + $0x1b8] sm:$0xff]
    %v3485 = vld [vmem:[#allocation7 + $0x1c0] sm:$0xff]
    %v3486 = vld [vmem:[#allocation7 + $0x1c8] sm:$0xff]
    %v3487 = vld [vmem:[#allocation7 + $0x1d0] sm:$0xff]
    %v3488 = vld [vmem:[#allocation7 + $0x1d8] sm:$0xff]
    %v3489 = vld [vmem:[#allocation7 + $0x1e0] sm:$0xff]
    %v3490 = vld [vmem:[#allocation7 + $0x1e8] sm:$0xff]
    %v3491 = vld [vmem:[#allocation7 + $0x1f0] sm:$0xff]
    %v3492 = vld [vmem:[#allocation7 + $0x1f8] sm:$0xff]
    %3493 = vmatprep.subr.mxu0 %v3490
    %3494 = vmatpush1.msra.mxu0 %v3489
    %3495 = vmatprep.subr.mxu0 %v3486
    %3496 = vmatpush1.msra.mxu0 %v3485
    %3497 = vmatprep.subr.mxu0 %v3482
    %3498 = vmatpush1.msra.mxu0 %v3481
    %3499 = vmatprep.subr.mxu0 %v3478
    %3500 = vmatpush1.msra.mxu0 %v3477
    %3501 = vmatprep.subr.mxu0 %v3474
    %3502 = vmatpush1.msra.mxu0 %v3473
    %3503 = vmatprep.subr.mxu0 %v3470
    %3504 = vmatpush1.msra.mxu0 %v3469
    %3505 = vmatprep.subr.mxu0 %v3466
    %3506 = vmatpush1.msra.mxu0 %v3465
    %3507 = vmatprep.subr.mxu0 %v3462
    %3508 = vmatpush1.msra.mxu0 %v3461
    %3509 = vmatprep.subr.mxu0 %v3458
    %3510 = vmatpush1.msra.mxu0 %v3457
    %3511 = vmatprep.subr.mxu0 %v3454
    %3512 = vmatpush1.msra.mxu0 %v3453
    %3513 = vmatprep.subr.mxu0 %v3450
    %3514 = vmatpush1.msra.mxu0 %v3449
    %3515 = vmatprep.subr.mxu0 %v3446
    %3516 = vmatpush1.msra.mxu0 %v3445
    %3517 = vmatprep.subr.mxu0 %v3442
    %3518 = vmatpush1.msra.mxu0 %v3441
    %3519 = vmatprep.subr.mxu0 %v3438
    %3520 = vmatpush1.msra.mxu0 %v3437
    %3521 = vmatprep.subr.mxu0 %v3434
    %3522 = vmatpush1.msra.mxu0 %v3433
    %3523 = vmatprep.subr.mxu0 %v3430
    %3524 = vmatpush1.msra.mxu0 %v3429
    %3525 = vmatprep.subr.mxu0 0.0
    %3526 = vmatpush2.msra.mxu0 0.0
    %3527 = vmatprep.subr.mxu0 0.0
    %3528 = vmatpush2.msra.mxu0 0.0
    %3529 = vmatprep.subr.mxu0 0.0
    %3530 = vmatpush2.msra.mxu0 0.0
    %3531 = vmatprep.subr.mxu0 0.0
    %3532 = vmatpush2.msra.mxu0 0.0
    %3533 = vmatprep.subr.mxu0 0.0
    %3534 = vmatpush2.msra.mxu0 0.0
    %3535 = vmatprep.subr.mxu0 0.0
    %3536 = vmatpush2.msra.mxu0 0.0
    %3537 = vmatprep.subr.mxu0 0.0
    %3538 = vmatpush2.msra.mxu0 0.0
    %3539 = vmatprep.subr.mxu0 0.0
    %3540 = vmatpush2.msra.mxu0 0.0
    %3541 = vmatprep.subr.mxu0 0.0
    %3542 = vmatpush2.msra.mxu0 0.0
    %3543 = vmatprep.subr.mxu0 0.0
    %3544 = vmatpush2.msra.mxu0 0.0
    %3545 = vmatprep.subr.mxu0 0.0
    %3546 = vmatpush2.msra.mxu0 0.0
    %3547 = vmatprep.subr.mxu0 0.0
    %3548 = vmatpush2.msra.mxu0 0.0
    %3549 = vmatprep.subr.mxu0 0.0
    %3550 = vmatpush2.msra.mxu0 0.0
    %3551 = vmatprep.subr.mxu0 0.0
    %3552 = vmatpush2.msra.mxu0 0.0
    %3553 = vmatprep.subr.mxu0 0.0
    %3554 = vmatpush2.msra.mxu0 0.0
    %3555 = vmatprep.subr.mxu0 0.0
    %3556 = vmatpush2.msra.mxu0 0.0
    %3557 = vmatprep.mubr.f32.mxu0 0.0
    %3558 = vmatmul.mubr.f32.gmra.mxu0 %v3428
    %v3559 = vpop.f32.mrf.mxu0
    %v3560 = vadd.f32 %v440, %v3559
    %v3561 = vpop.f32.mrf.mxu0
    %v3562 = vadd.f32 %v444, %v3561
    %3563 = vdwg.mxu0
    %3564 = vmatprep.subr.mxu0 %v3492
    %3565 = vmatpush1.msra.mxu0 %v3491
    %3566 = vmatprep.subr.mxu0 %v3488
    %3567 = vmatpush1.msra.mxu0 %v3487
    %3568 = vmatprep.subr.mxu0 %v3484
    %3569 = vmatpush1.msra.mxu0 %v3483
    %3570 = vmatprep.subr.mxu0 %v3480
    %3571 = vmatpush1.msra.mxu0 %v3479
    %3572 = vmatprep.subr.mxu0 %v3476
    %3573 = vmatpush1.msra.mxu0 %v3475
    %3574 = vmatprep.subr.mxu0 %v3472
    %3575 = vmatpush1.msra.mxu0 %v3471
    %3576 = vmatprep.subr.mxu0 %v3468
    %3577 = vmatpush1.msra.mxu0 %v3467
    %3578 = vmatprep.subr.mxu0 %v3464
    %3579 = vmatpush1.msra.mxu0 %v3463
    %3580 = vmatprep.subr.mxu0 %v3460
    %3581 = vmatpush1.msra.mxu0 %v3459
    %3582 = vmatprep.subr.mxu0 %v3456
    %3583 = vmatpush1.msra.mxu0 %v3455
    %3584 = vmatprep.subr.mxu0 %v3452
    %3585 = vmatpush1.msra.mxu0 %v3451
    %3586 = vmatprep.subr.mxu0 %v3448
    %3587 = vmatpush1.msra.mxu0 %v3447
    %3588 = vmatprep.subr.mxu0 %v3444
    %3589 = vmatpush1.msra.mxu0 %v3443
    %3590 = vmatprep.subr.mxu0 %v3440
    %3591 = vmatpush1.msra.mxu0 %v3439
    %3592 = vmatprep.subr.mxu0 %v3436
    %3593 = vmatpush1.msra.mxu0 %v3435
    %3594 = vmatprep.subr.mxu0 %v3432
    %3595 = vmatpush1.msra.mxu0 %v3431
    %3596 = vmatprep.subr.mxu0 0.0
    %3597 = vmatpush2.msra.mxu0 0.0
    %3598 = vmatprep.subr.mxu0 0.0
    %3599 = vmatpush2.msra.mxu0 0.0
    %3600 = vmatprep.subr.mxu0 0.0
    %3601 = vmatpush2.msra.mxu0 0.0
    %3602 = vmatprep.subr.mxu0 0.0
    %3603 = vmatpush2.msra.mxu0 0.0
    %3604 = vmatprep.subr.mxu0 0.0
    %3605 = vmatpush2.msra.mxu0 0.0
    %3606 = vmatprep.subr.mxu0 0.0
    %3607 = vmatpush2.msra.mxu0 0.0
    %3608 = vmatprep.subr.mxu0 0.0
    %3609 = vmatpush2.msra.mxu0 0.0
    %3610 = vmatprep.subr.mxu0 0.0
    %3611 = vmatpush2.msra.mxu0 0.0
    %3612 = vmatprep.subr.mxu0 0.0
    %3613 = vmatpush2.msra.mxu0 0.0
    %3614 = vmatprep.subr.mxu0 0.0
    %3615 = vmatpush2.msra.mxu0 0.0
    %3616 = vmatprep.subr.mxu0 0.0
    %3617 = vmatpush2.msra.mxu0 0.0
    %3618 = vmatprep.subr.mxu0 0.0
    %3619 = vmatpush2.msra.mxu0 0.0
    %3620 = vmatprep.subr.mxu0 0.0
    %3621 = vmatpush2.msra.mxu0 0.0
    %3622 = vmatprep.subr.mxu0 0.0
    %3623 = vmatpush2.msra.mxu0 0.0
    %3624 = vmatprep.subr.mxu0 0.0
    %3625 = vmatpush2.msra.mxu0 0.0
    %3626 = vmatprep.subr.mxu0 0.0
    %3627 = vmatpush2.msra.mxu0 0.0
    %3628 = vmatprep.mubr.f32.mxu0 0.0
    %3629 = vmatmul.mubr.f32.gmra.mxu0 %v3428
    %v3630 = vpop.f32.mrf.mxu0
    %v3631 = vadd.f32 %v448, %v3630
    %v3632 = vpop.f32.mrf.mxu0
    %v3633 = vadd.f32 %v452, %v3632
    %3634 = vdwg.mxu0
    %v3635 = vld [vmem:[#allocation9] sm:$0xff]
    %v3636 = vld [vmem:[#allocation9 + $0x8] sm:$0xff]
    %v3637 = vld [vmem:[#allocation9 + $0x10] sm:$0xff]
    %v3638 = vld [vmem:[#allocation9 + $0x18] sm:$0xff]
    %v3639 = vld [vmem:[#allocation9 + $0x20] sm:$0xff]
    %v3640 = vld [vmem:[#allocation9 + $0x28] sm:$0xff]
    %v3641 = vld [vmem:[#allocation9 + $0x30] sm:$0xff]
    %v3642 = vld [vmem:[#allocation9 + $0x38] sm:$0xff]
    %v3643 = vld [vmem:[#allocation9 + $0x40] sm:$0xff]
    %v3644 = vld [vmem:[#allocation9 + $0x48] sm:$0xff]
    %v3645 = vld [vmem:[#allocation9 + $0x50] sm:$0xff]
    %v3646 = vld [vmem:[#allocation9 + $0x58] sm:$0xff]
    %v3647 = vld [vmem:[#allocation9 + $0x60] sm:$0xff]
    %v3648 = vld [vmem:[#allocation9 + $0x68] sm:$0xff]
    %v3649 = vld [vmem:[#allocation9 + $0x70] sm:$0xff]
    %v3650 = vld [vmem:[#allocation9 + $0x78] sm:$0xff]
    %v3651 = vld [vmem:[#allocation9 + $0x80] sm:$0xff]
    %v3652 = vld [vmem:[#allocation9 + $0x88] sm:$0xff]
    %v3653 = vld [vmem:[#allocation9 + $0x90] sm:$0xff]
    %v3654 = vld [vmem:[#allocation9 + $0x98] sm:$0xff]
    %v3655 = vld [vmem:[#allocation9 + $0xa0] sm:$0xff]
    %v3656 = vld [vmem:[#allocation9 + $0xa8] sm:$0xff]
    %v3657 = vld [vmem:[#allocation9 + $0xb0] sm:$0xff]
    %v3658 = vld [vmem:[#allocation9 + $0xb8] sm:$0xff]
    %v3659 = vld [vmem:[#allocation9 + $0xc0] sm:$0xff]
    %v3660 = vld [vmem:[#allocation9 + $0xc8] sm:$0xff]
    %v3661 = vld [vmem:[#allocation9 + $0xd0] sm:$0xff]
    %v3662 = vld [vmem:[#allocation9 + $0xd8] sm:$0xff]
    %v3663 = vld [vmem:[#allocation9 + $0xe0] sm:$0xff]
    %v3664 = vld [vmem:[#allocation9 + $0xe8] sm:$0xff]
    %v3665 = vld [vmem:[#allocation9 + $0xf0] sm:$0xff]
    %v3666 = vld [vmem:[#allocation9 + $0xf8] sm:$0xff]
    %v3667 = vld [vmem:[#allocation9 + $0x100] sm:$0xff]
    %v3668 = vld [vmem:[#allocation9 + $0x108] sm:$0xff]
    %v3669 = vld [vmem:[#allocation9 + $0x110] sm:$0xff]
    %v3670 = vld [vmem:[#allocation9 + $0x118] sm:$0xff]
    %v3671 = vld [vmem:[#allocation9 + $0x120] sm:$0xff]
    %v3672 = vld [vmem:[#allocation9 + $0x128] sm:$0xff]
    %v3673 = vld [vmem:[#allocation9 + $0x130] sm:$0xff]
    %v3674 = vld [vmem:[#allocation9 + $0x138] sm:$0xff]
    %v3675 = vld [vmem:[#allocation9 + $0x140] sm:$0xff]
    %v3676 = vld [vmem:[#allocation9 + $0x148] sm:$0xff]
    %v3677 = vld [vmem:[#allocation9 + $0x150] sm:$0xff]
    %v3678 = vld [vmem:[#allocation9 + $0x158] sm:$0xff]
    %v3679 = vld [vmem:[#allocation9 + $0x160] sm:$0xff]
    %v3680 = vld [vmem:[#allocation9 + $0x168] sm:$0xff]
    %v3681 = vld [vmem:[#allocation9 + $0x170] sm:$0xff]
    %v3682 = vld [vmem:[#allocation9 + $0x178] sm:$0xff]
    %v3683 = vld [vmem:[#allocation9 + $0x180] sm:$0xff]
    %v3684 = vld [vmem:[#allocation9 + $0x188] sm:$0xff]
    %v3685 = vld [vmem:[#allocation9 + $0x190] sm:$0xff]
    %v3686 = vld [vmem:[#allocation9 + $0x198] sm:$0xff]
    %v3687 = vld [vmem:[#allocation9 + $0x1a0] sm:$0xff]
    %v3688 = vld [vmem:[#allocation9 + $0x1a8] sm:$0xff]
    %v3689 = vld [vmem:[#allocation9 + $0x1b0] sm:$0xff]
    %v3690 = vld [vmem:[#allocation9 + $0x1b8] sm:$0xff]
    %v3691 = vld [vmem:[#allocation9 + $0x1c0] sm:$0xff]
    %v3692 = vld [vmem:[#allocation9 + $0x1c8] sm:$0xff]
    %v3693 = vld [vmem:[#allocation9 + $0x1d0] sm:$0xff]
    %v3694 = vld [vmem:[#allocation9 + $0x1d8] sm:$0xff]
    %v3695 = vld [vmem:[#allocation9 + $0x1e0] sm:$0xff]
    %v3696 = vld [vmem:[#allocation9 + $0x1e8] sm:$0xff]
    %v3697 = vld [vmem:[#allocation9 + $0x1f0] sm:$0xff]
    %v3698 = vld [vmem:[#allocation9 + $0x1f8] sm:$0xff]
    %3699 = vmatprep.subr.mxu0 %v3696
    %3700 = vmatpush1.msra.mxu0 %v3695
    %3701 = vmatprep.subr.mxu0 %v3692
    %3702 = vmatpush1.msra.mxu0 %v3691
    %3703 = vmatprep.subr.mxu0 %v3688
    %3704 = vmatpush1.msra.mxu0 %v3687
    %3705 = vmatprep.subr.mxu0 %v3684
    %3706 = vmatpush1.msra.mxu0 %v3683
    %3707 = vmatprep.subr.mxu0 %v3680
    %3708 = vmatpush1.msra.mxu0 %v3679
    %3709 = vmatprep.subr.mxu0 %v3676
    %3710 = vmatpush1.msra.mxu0 %v3675
    %3711 = vmatprep.subr.mxu0 %v3672
    %3712 = vmatpush1.msra.mxu0 %v3671
    %3713 = vmatprep.subr.mxu0 %v3668
    %3714 = vmatpush1.msra.mxu0 %v3667
    %3715 = vmatprep.subr.mxu0 %v3664
    %3716 = vmatpush1.msra.mxu0 %v3663
    %3717 = vmatprep.subr.mxu0 %v3660
    %3718 = vmatpush1.msra.mxu0 %v3659
    %3719 = vmatprep.subr.mxu0 %v3656
    %3720 = vmatpush1.msra.mxu0 %v3655
    %3721 = vmatprep.subr.mxu0 %v3652
    %3722 = vmatpush1.msra.mxu0 %v3651
    %3723 = vmatprep.subr.mxu0 %v3648
    %3724 = vmatpush1.msra.mxu0 %v3647
    %3725 = vmatprep.subr.mxu0 %v3644
    %3726 = vmatpush1.msra.mxu0 %v3643
    %3727 = vmatprep.subr.mxu0 %v3640
    %3728 = vmatpush1.msra.mxu0 %v3639
    %3729 = vmatprep.subr.mxu0 %v3636
    %3730 = vmatpush1.msra.mxu0 %v3635
    %3731 = vmatprep.subr.mxu0 0.0
    %3732 = vmatpush2.msra.mxu0 0.0
    %3733 = vmatprep.subr.mxu0 0.0
    %3734 = vmatpush2.msra.mxu0 0.0
    %3735 = vmatprep.subr.mxu0 0.0
    %3736 = vmatpush2.msra.mxu0 0.0
    %3737 = vmatprep.subr.mxu0 0.0
    %3738 = vmatpush2.msra.mxu0 0.0
    %3739 = vmatprep.subr.mxu0 0.0
    %3740 = vmatpush2.msra.mxu0 0.0
    %3741 = vmatprep.subr.mxu0 0.0
    %3742 = vmatpush2.msra.mxu0 0.0
    %3743 = vmatprep.subr.mxu0 0.0
    %3744 = vmatpush2.msra.mxu0 0.0
    %3745 = vmatprep.subr.mxu0 0.0
    %3746 = vmatpush2.msra.mxu0 0.0
    %3747 = vmatprep.subr.mxu0 0.0
    %3748 = vmatpush2.msra.mxu0 0.0
    %3749 = vmatprep.subr.mxu0 0.0
    %3750 = vmatpush2.msra.mxu0 0.0
    %3751 = vmatprep.subr.mxu0 0.0
    %3752 = vmatpush2.msra.mxu0 0.0
    %3753 = vmatprep.subr.mxu0 0.0
    %3754 = vmatpush2.msra.mxu0 0.0
    %3755 = vmatprep.subr.mxu0 0.0
    %3756 = vmatpush2.msra.mxu0 0.0
    %3757 = vmatprep.subr.mxu0 0.0
    %3758 = vmatpush2.msra.mxu0 0.0
    %3759 = vmatprep.subr.mxu0 0.0
    %3760 = vmatpush2.msra.mxu0 0.0
    %3761 = vmatprep.subr.mxu0 0.0
    %3762 = vmatpush2.msra.mxu0 0.0
    %3763 = vmatprep.mubr.f32.mxu0 0.0
    %3764 = vmatmul.mubr.f32.gmra.mxu0 %v3185
    %v3765 = vpop.f32.mrf.mxu0
    %v3766 = vadd.f32 0.0, %v3765
    %v3767 = vpop.f32.mrf.mxu0
    %v3768 = vadd.f32 0.0, %v3767
    %3769 = vdwg.mxu0
    %3770 = vmatprep.subr.mxu0 %v3698
    %3771 = vmatpush1.msra.mxu0 %v3697
    %3772 = vmatprep.subr.mxu0 %v3694
    %3773 = vmatpush1.msra.mxu0 %v3693
    %3774 = vmatprep.subr.mxu0 %v3690
    %3775 = vmatpush1.msra.mxu0 %v3689
    %3776 = vmatprep.subr.mxu0 %v3686
    %3777 = vmatpush1.msra.mxu0 %v3685
    %3778 = vmatprep.subr.mxu0 %v3682
    %3779 = vmatpush1.msra.mxu0 %v3681
    %3780 = vmatprep.subr.mxu0 %v3678
    %3781 = vmatpush1.msra.mxu0 %v3677
    %3782 = vmatprep.subr.mxu0 %v3674
    %3783 = vmatpush1.msra.mxu0 %v3673
    %3784 = vmatprep.subr.mxu0 %v3670
    %3785 = vmatpush1.msra.mxu0 %v3669
    %3786 = vmatprep.subr.mxu0 %v3666
    %3787 = vmatpush1.msra.mxu0 %v3665
    %3788 = vmatprep.subr.mxu0 %v3662
    %3789 = vmatpush1.msra.mxu0 %v3661
    %3790 = vmatprep.subr.mxu0 %v3658
    %3791 = vmatpush1.msra.mxu0 %v3657
    %3792 = vmatprep.subr.mxu0 %v3654
    %3793 = vmatpush1.msra.mxu0 %v3653
    %3794 = vmatprep.subr.mxu0 %v3650
    %3795 = vmatpush1.msra.mxu0 %v3649
    %3796 = vmatprep.subr.mxu0 %v3646
    %3797 = vmatpush1.msra.mxu0 %v3645
    %3798 = vmatprep.subr.mxu0 %v3642
    %3799 = vmatpush1.msra.mxu0 %v3641
    %3800 = vmatprep.subr.mxu0 %v3638
    %3801 = vmatpush1.msra.mxu0 %v3637
    %3802 = vmatprep.subr.mxu0 0.0
    %3803 = vmatpush2.msra.mxu0 0.0
    %3804 = vmatprep.subr.mxu0 0.0
    %3805 = vmatpush2.msra.mxu0 0.0
    %3806 = vmatprep.subr.mxu0 0.0
    %3807 = vmatpush2.msra.mxu0 0.0
    %3808 = vmatprep.subr.mxu0 0.0
    %3809 = vmatpush2.msra.mxu0 0.0
    %3810 = vmatprep.subr.mxu0 0.0
    %3811 = vmatpush2.msra.mxu0 0.0
    %3812 = vmatprep.subr.mxu0 0.0
    %3813 = vmatpush2.msra.mxu0 0.0
    %3814 = vmatprep.subr.mxu0 0.0
    %3815 = vmatpush2.msra.mxu0 0.0
    %3816 = vmatprep.subr.mxu0 0.0
    %3817 = vmatpush2.msra.mxu0 0.0
    %3818 = vmatprep.subr.mxu0 0.0
    %3819 = vmatpush2.msra.mxu0 0.0
    %3820 = vmatprep.subr.mxu0 0.0
    %3821 = vmatpush2.msra.mxu0 0.0
    %3822 = vmatprep.subr.mxu0 0.0
    %3823 = vmatpush2.msra.mxu0 0.0
    %3824 = vmatprep.subr.mxu0 0.0
    %3825 = vmatpush2.msra.mxu0 0.0
    %3826 = vmatprep.subr.mxu0 0.0
    %3827 = vmatpush2.msra.mxu0 0.0
    %3828 = vmatprep.subr.mxu0 0.0
    %3829 = vmatpush2.msra.mxu0 0.0
    %3830 = vmatprep.subr.mxu0 0.0
    %3831 = vmatpush2.msra.mxu0 0.0
    %3832 = vmatprep.subr.mxu0 0.0
    %3833 = vmatpush2.msra.mxu0 0.0
    %3834 = vmatprep.mubr.f32.mxu0 0.0
    %3835 = vmatmul.mubr.f32.gmra.mxu0 %v3185
    %v3836 = vpop.f32.mrf.mxu0
    %v3837 = vadd.f32 0.0, %v3836
    %v3838 = vpop.f32.mrf.mxu0
    %v3839 = vadd.f32 0.0, %v3838
    %3840 = vdwg.mxu0
    %v3841 = vadd.f32 %v3560, %v3766
    %v3842 = vadd.f32 %v3562, %v3768
    %v3843 = vadd.f32 %v3631, %v3837
    %v3844 = vadd.f32 %v3633, %v3839
    %v3845 = vxor.u32 %v3841, 2147483648
    %v3846 = vxor.u32 %v3842, 2147483648
    %v3847 = vxor.u32 %v3843, 2147483648
    %v3848 = vmul.f32 %v3845, 1.442695
    %v3849 = vpow.pop %v3848
    %v3850 = vmul.f32 %v3846, 1.442695
    %v3851 = vpow.pop %v3850
    %v3852 = vmul.f32 %v3847, 1.442695
    %v3853 = vpow.pop %v3852
    %v3854 = vadd.f32 %v3849, 1.0
    %v3855 = vadd.f32 %v3851, 1.0
    %v3856 = vadd.f32 %v3853, 1.0
    %v3857 = vrcp.pop %v3854
    %v3858 = vmul.f32 1.0, %v3857
    %v3859 = vrcp.pop %v3855
    %v3860 = vmul.f32 1.0, %v3859
    %v3861 = vrcp.pop %v3856
    %v3862 = vmul.f32 1.0, %v3861
    %v3863 = vtanh.pop %v3844
    %v3864 = vmul.f32 %v3860, %v3183
    %v3865 = vmul.f32 %v3858, %v3863
    %v3866 = vadd.f32 %v3864, %v3865
    %v3867 = vtanh.pop %v3866
    %v3868 = vmul.f32 %v3862, %v3867
    %s3869 = scalar_lea.vmem [#allocation3], 32
    %3870 = vst [vmem:[%s3869] sm:$0xff] %v3868
    %s3871 = smul.u32 5, 4
    %s3872 = smul.addr %s3871, 8
    %s3873 = scalar_lea.vmem [#allocation2], %s3872
    %v3874 = vld [vmem:[%s3873] sm:$0xff]
    %v3875 = vld [vmem:[%s3873 + $0x8] sm:$0xff]
    %v3876 = vld [vmem:[%s3873 + $0x10] sm:$0xff]
    %v3877 = vld [vmem:[%s3873 + $0x18] sm:$0xff]
    %v3878 = vld [vmem:[#allocation4] sm:$0xff]
    %v3879 = vld [vmem:[#allocation4 + $0x8] sm:$0xff]
    %v3880 = vld [vmem:[#allocation4 + $0x10] sm:$0xff]
    %v3881 = vld [vmem:[#allocation4 + $0x18] sm:$0xff]
    %v3882 = vld [vmem:[#allocation4 + $0x20] sm:$0xff]
    %v3883 = vld [vmem:[#allocation4 + $0x28] sm:$0xff]
    %v3884 = vld [vmem:[#allocation4 + $0x30] sm:$0xff]
    %v3885 = vld [vmem:[#allocation4 + $0x38] sm:$0xff]
    %v3886 = vld [vmem:[#allocation4 + $0x40] sm:$0xff]
    %v3887 = vld [vmem:[#allocation4 + $0x48] sm:$0xff]
    %v3888 = vld [vmem:[#allocation4 + $0x50] sm:$0xff]
    %v3889 = vld [vmem:[#allocation4 + $0x58] sm:$0xff]
    %v3890 = vld [vmem:[#allocation4 + $0x60] sm:$0xff]
    %v3891 = vld [vmem:[#allocation4 + $0x68] sm:$0xff]
    %v3892 = vld [vmem:[#allocation4 + $0x70] sm:$0xff]
    %v3893 = vld [vmem:[#allocation4 + $0x78] sm:$0xff]
    %v3894 = vld [vmem:[#allocation4 + $0x80] sm:$0xff]
    %v3895 = vld [vmem:[#allocation4 + $0x88] sm:$0xff]
    %v3896 = vld [vmem:[#allocation4 + $0x90] sm:$0xff]
    %v3897 = vld [vmem:[#allocation4 + $0x98] sm:$0xff]
    %v3898 = vld [vmem:[#allocation4 + $0xa0] sm:$0xff]
    %v3899 = vld [vmem:[#allocation4 + $0xa8] sm:$0xff]
    %v3900 = vld [vmem:[#allocation4 + $0xb0] sm:$0xff]
    %v3901 = vld [vmem:[#allocation4 + $0xb8] sm:$0xff]
    %v3902 = vld [vmem:[#allocation4 + $0xc0] sm:$0xff]
    %v3903 = vld [vmem:[#allocation4 + $0xc8] sm:$0xff]
    %v3904 = vld [vmem:[#allocation4 + $0xd0] sm:$0xff]
    %v3905 = vld [vmem:[#allocation4 + $0xd8] sm:$0xff]
    %v3906 = vld [vmem:[#allocation4 + $0xe0] sm:$0xff]
    %v3907 = vld [vmem:[#allocation4 + $0xe8] sm:$0xff]
    %v3908 = vld [vmem:[#allocation4 + $0xf0] sm:$0xff]
    %v3909 = vld [vmem:[#allocation4 + $0xf8] sm:$0xff]
    %v3910 = vld [vmem:[#allocation4 + $0x100] sm:$0xff]
    %v3911 = vld [vmem:[#allocation4 + $0x108] sm:$0xff]
    %v3912 = vld [vmem:[#allocation4 + $0x110] sm:$0xff]
    %v3913 = vld [vmem:[#allocation4 + $0x118] sm:$0xff]
    %v3914 = vld [vmem:[#allocation4 + $0x120] sm:$0xff]
    %v3915 = vld [vmem:[#allocation4 + $0x128] sm:$0xff]
    %v3916 = vld [vmem:[#allocation4 + $0x130] sm:$0xff]
    %v3917 = vld [vmem:[#allocation4 + $0x138] sm:$0xff]
    %v3918 = vld [vmem:[#allocation4 + $0x140] sm:$0xff]
    %v3919 = vld [vmem:[#allocation4 + $0x148] sm:$0xff]
    %v3920 = vld [vmem:[#allocation4 + $0x150] sm:$0xff]
    %v3921 = vld [vmem:[#allocation4 + $0x158] sm:$0xff]
    %v3922 = vld [vmem:[#allocation4 + $0x160] sm:$0xff]
    %v3923 = vld [vmem:[#allocation4 + $0x168] sm:$0xff]
    %v3924 = vld [vmem:[#allocation4 + $0x170] sm:$0xff]
    %v3925 = vld [vmem:[#allocation4 + $0x178] sm:$0xff]
    %v3926 = vld [vmem:[#allocation4 + $0x180] sm:$0xff]
    %v3927 = vld [vmem:[#allocation4 + $0x188] sm:$0xff]
    %v3928 = vld [vmem:[#allocation4 + $0x190] sm:$0xff]
    %v3929 = vld [vmem:[#allocation4 + $0x198] sm:$0xff]
    %v3930 = vld [vmem:[#allocation4 + $0x1a0] sm:$0xff]
    %v3931 = vld [vmem:[#allocation4 + $0x1a8] sm:$0xff]
    %v3932 = vld [vmem:[#allocation4 + $0x1b0] sm:$0xff]
    %v3933 = vld [vmem:[#allocation4 + $0x1b8] sm:$0xff]
    %v3934 = vld [vmem:[#allocation4 + $0x1c0] sm:$0xff]
    %v3935 = vld [vmem:[#allocation4 + $0x1c8] sm:$0xff]
    %v3936 = vld [vmem:[#allocation4 + $0x1d0] sm:$0xff]
    %v3937 = vld [vmem:[#allocation4 + $0x1d8] sm:$0xff]
    %v3938 = vld [vmem:[#allocation4 + $0x1e0] sm:$0xff]
    %v3939 = vld [vmem:[#allocation4 + $0x1e8] sm:$0xff]
    %v3940 = vld [vmem:[#allocation4 + $0x1f0] sm:$0xff]
    %v3941 = vld [vmem:[#allocation4 + $0x1f8] sm:$0xff]
    %3942 = vmatprep.subr.mxu0 %v3939
    %3943 = vmatpush1.msra.mxu0 %v3938
    %3944 = vmatprep.subr.mxu0 %v3935
    %3945 = vmatpush1.msra.mxu0 %v3934
    %3946 = vmatprep.subr.mxu0 %v3931
    %3947 = vmatpush1.msra.mxu0 %v3930
    %3948 = vmatprep.subr.mxu0 %v3927
    %3949 = vmatpush1.msra.mxu0 %v3926
    %3950 = vmatprep.subr.mxu0 %v3923
    %3951 = vmatpush1.msra.mxu0 %v3922
    %3952 = vmatprep.subr.mxu0 %v3919
    %3953 = vmatpush1.msra.mxu0 %v3918
    %3954 = vmatprep.subr.mxu0 %v3915
    %3955 = vmatpush1.msra.mxu0 %v3914
    %3956 = vmatprep.subr.mxu0 %v3911
    %3957 = vmatpush1.msra.mxu0 %v3910
    %3958 = vmatprep.subr.mxu0 %v3907
    %3959 = vmatpush1.msra.mxu0 %v3906
    %3960 = vmatprep.subr.mxu0 %v3903
    %3961 = vmatpush1.msra.mxu0 %v3902
    %3962 = vmatprep.subr.mxu0 %v3899
    %3963 = vmatpush1.msra.mxu0 %v3898
    %3964 = vmatprep.subr.mxu0 %v3895
    %3965 = vmatpush1.msra.mxu0 %v3894
    %3966 = vmatprep.subr.mxu0 %v3891
    %3967 = vmatpush1.msra.mxu0 %v3890
    %3968 = vmatprep.subr.mxu0 %v3887
    %3969 = vmatpush1.msra.mxu0 %v3886
    %3970 = vmatprep.subr.mxu0 %v3883
    %3971 = vmatpush1.msra.mxu0 %v3882
    %3972 = vmatprep.subr.mxu0 %v3879
    %3973 = vmatpush1.msra.mxu0 %v3878
    %3974 = vmatprep.subr.mxu0 0.0
    %3975 = vmatpush2.msra.mxu0 0.0
    %3976 = vmatprep.subr.mxu0 0.0
    %3977 = vmatpush2.msra.mxu0 0.0
    %3978 = vmatprep.subr.mxu0 0.0
    %3979 = vmatpush2.msra.mxu0 0.0
    %3980 = vmatprep.subr.mxu0 0.0
    %3981 = vmatpush2.msra.mxu0 0.0
    %3982 = vmatprep.subr.mxu0 0.0
    %3983 = vmatpush2.msra.mxu0 0.0
    %3984 = vmatprep.subr.mxu0 0.0
    %3985 = vmatpush2.msra.mxu0 0.0
    %3986 = vmatprep.subr.mxu0 0.0
    %3987 = vmatpush2.msra.mxu0 0.0
    %3988 = vmatprep.subr.mxu0 0.0
    %3989 = vmatpush2.msra.mxu0 0.0
    %3990 = vmatprep.subr.mxu0 0.0
    %3991 = vmatpush2.msra.mxu0 0.0
    %3992 = vmatprep.subr.mxu0 0.0
    %3993 = vmatpush2.msra.mxu0 0.0
    %3994 = vmatprep.subr.mxu0 0.0
    %3995 = vmatpush2.msra.mxu0 0.0
    %3996 = vmatprep.subr.mxu0 0.0
    %3997 = vmatpush2.msra.mxu0 0.0
    %3998 = vmatprep.subr.mxu0 0.0
    %3999 = vmatpush2.msra.mxu0 0.0
    %4000 = vmatprep.subr.mxu0 0.0
    %4001 = vmatpush2.msra.mxu0 0.0
    %4002 = vmatprep.subr.mxu0 0.0
    %4003 = vmatpush2.msra.mxu0 0.0
    %4004 = vmatprep.subr.mxu0 0.0
    %4005 = vmatpush2.msra.mxu0 0.0
    %4006 = vmatprep.mubr.f32.mxu0 0.0
    %4007 = vmatmul.mubr.f32.gmra.mxu0 %v3428
    %v4008 = vpop.f32.mrf.mxu0
    %v4009 = vadd.f32 0.0, %v4008
    %v4010 = vpop.f32.mrf.mxu0
    %v4011 = vadd.f32 0.0, %v4010
    %4012 = vdwg.mxu0
    %4013 = vmatprep.subr.mxu0 %v3941
    %4014 = vmatpush1.msra.mxu0 %v3940
    %4015 = vmatprep.subr.mxu0 %v3937
    %4016 = vmatpush1.msra.mxu0 %v3936
    %4017 = vmatprep.subr.mxu0 %v3933
    %4018 = vmatpush1.msra.mxu0 %v3932
    %4019 = vmatprep.subr.mxu0 %v3929
    %4020 = vmatpush1.msra.mxu0 %v3928
    %4021 = vmatprep.subr.mxu0 %v3925
    %4022 = vmatpush1.msra.mxu0 %v3924
    %4023 = vmatprep.subr.mxu0 %v3921
    %4024 = vmatpush1.msra.mxu0 %v3920
    %4025 = vmatprep.subr.mxu0 %v3917
    %4026 = vmatpush1.msra.mxu0 %v3916
    %4027 = vmatprep.subr.mxu0 %v3913
    %4028 = vmatpush1.msra.mxu0 %v3912
    %4029 = vmatprep.subr.mxu0 %v3909
    %4030 = vmatpush1.msra.mxu0 %v3908
    %4031 = vmatprep.subr.mxu0 %v3905
    %4032 = vmatpush1.msra.mxu0 %v3904
    %4033 = vmatprep.subr.mxu0 %v3901
    %4034 = vmatpush1.msra.mxu0 %v3900
    %4035 = vmatprep.subr.mxu0 %v3897
    %4036 = vmatpush1.msra.mxu0 %v3896
    %4037 = vmatprep.subr.mxu0 %v3893
    %4038 = vmatpush1.msra.mxu0 %v3892
    %4039 = vmatprep.subr.mxu0 %v3889
    %4040 = vmatpush1.msra.mxu0 %v3888
    %4041 = vmatprep.subr.mxu0 %v3885
    %4042 = vmatpush1.msra.mxu0 %v3884
    %4043 = vmatprep.subr.mxu0 %v3881
    %4044 = vmatpush1.msra.mxu0 %v3880
    %4045 = vmatprep.subr.mxu0 0.0
    %4046 = vmatpush2.msra.mxu0 0.0
    %4047 = vmatprep.subr.mxu0 0.0
    %4048 = vmatpush2.msra.mxu0 0.0
    %4049 = vmatprep.subr.mxu0 0.0
    %4050 = vmatpush2.msra.mxu0 0.0
    %4051 = vmatprep.subr.mxu0 0.0
    %4052 = vmatpush2.msra.mxu0 0.0
    %4053 = vmatprep.subr.mxu0 0.0
    %4054 = vmatpush2.msra.mxu0 0.0
    %4055 = vmatprep.subr.mxu0 0.0
    %4056 = vmatpush2.msra.mxu0 0.0
    %4057 = vmatprep.subr.mxu0 0.0
    %4058 = vmatpush2.msra.mxu0 0.0
    %4059 = vmatprep.subr.mxu0 0.0
    %4060 = vmatpush2.msra.mxu0 0.0
    %4061 = vmatprep.subr.mxu0 0.0
    %4062 = vmatpush2.msra.mxu0 0.0
    %4063 = vmatprep.subr.mxu0 0.0
    %4064 = vmatpush2.msra.mxu0 0.0
    %4065 = vmatprep.subr.mxu0 0.0
    %4066 = vmatpush2.msra.mxu0 0.0
    %4067 = vmatprep.subr.mxu0 0.0
    %4068 = vmatpush2.msra.mxu0 0.0
    %4069 = vmatprep.subr.mxu0 0.0
    %4070 = vmatpush2.msra.mxu0 0.0
    %4071 = vmatprep.subr.mxu0 0.0
    %4072 = vmatpush2.msra.mxu0 0.0
    %4073 = vmatprep.subr.mxu0 0.0
    %4074 = vmatpush2.msra.mxu0 0.0
    %4075 = vmatprep.subr.mxu0 0.0
    %4076 = vmatpush2.msra.mxu0 0.0
    %4077 = vmatprep.mubr.f32.mxu0 0.0
    %4078 = vmatmul.mubr.f32.gmra.mxu0 %v3428
    %v4079 = vpop.f32.mrf.mxu0
    %v4080 = vadd.f32 0.0, %v4079
    %v4081 = vpop.f32.mrf.mxu0
    %v4082 = vadd.f32 0.0, %v4081
    %4083 = vdwg.mxu0
    %v4084 = vadd.f32 %v3874, %v4009
    %v4085 = vadd.f32 %v3875, %v4011
    %v4086 = vadd.f32 %v3876, %v4080
    %v4087 = vadd.f32 %v3877, %v4082
    %v4088 = vxor.u32 %v4084, 2147483648
    %v4089 = vxor.u32 %v4085, 2147483648
    %v4090 = vxor.u32 %v4086, 2147483648
    %v4091 = vmul.f32 %v4088, 1.442695
    %v4092 = vpow.pop %v4091
    %v4093 = vmul.f32 %v4089, 1.442695
    %v4094 = vpow.pop %v4093
    %v4095 = vmul.f32 %v4090, 1.442695
    %v4096 = vpow.pop %v4095
    %v4097 = vadd.f32 %v4092, 1.0
    %v4098 = vadd.f32 %v4094, 1.0
    %v4099 = vadd.f32 %v4096, 1.0
    %v4100 = vrcp.pop %v4097
    %v4101 = vmul.f32 1.0, %v4100
    %v4102 = vrcp.pop %v4098
    %v4103 = vmul.f32 1.0, %v4102
    %v4104 = vrcp.pop %v4099
    %v4105 = vmul.f32 1.0, %v4104
    %v4106 = vtanh.pop %v4087
    %v4107 = vmul.f32 %v4103, %v3426
    %v4108 = vmul.f32 %v4101, %v4106
    %v4109 = vadd.f32 %v4107, %v4108
    %v4110 = vtanh.pop %v4109
    %v4111 = vmul.f32 %v4105, %v4110
    %v4112 = vld [vmem:[#allocation7] sm:$0xff]
    %v4113 = vld [vmem:[#allocation7 + $0x8] sm:$0xff]
    %v4114 = vld [vmem:[#allocation7 + $0x10] sm:$0xff]
    %v4115 = vld [vmem:[#allocation7 + $0x18] sm:$0xff]
    %v4116 = vld [vmem:[#allocation7 + $0x20] sm:$0xff]
    %v4117 = vld [vmem:[#allocation7 + $0x28] sm:$0xff]
    %v4118 = vld [vmem:[#allocation7 + $0x30] sm:$0xff]
    %v4119 = vld [vmem:[#allocation7 + $0x38] sm:$0xff]
    %v4120 = vld [vmem:[#allocation7 + $0x40] sm:$0xff]
    %v4121 = vld [vmem:[#allocation7 + $0x48] sm:$0xff]
    %v4122 = vld [vmem:[#allocation7 + $0x50] sm:$0xff]
    %v4123 = vld [vmem:[#allocation7 + $0x58] sm:$0xff]
    %v4124 = vld [vmem:[#allocation7 + $0x60] sm:$0xff]
    %v4125 = vld [vmem:[#allocation7 + $0x68] sm:$0xff]
    %v4126 = vld [vmem:[#allocation7 + $0x70] sm:$0xff]
    %v4127 = vld [vmem:[#allocation7 + $0x78] sm:$0xff]
    %v4128 = vld [vmem:[#allocation7 + $0x80] sm:$0xff]
    %v4129 = vld [vmem:[#allocation7 + $0x88] sm:$0xff]
    %v4130 = vld [vmem:[#allocation7 + $0x90] sm:$0xff]
    %v4131 = vld [vmem:[#allocation7 + $0x98] sm:$0xff]
    %v4132 = vld [vmem:[#allocation7 + $0xa0] sm:$0xff]
    %v4133 = vld [vmem:[#allocation7 + $0xa8] sm:$0xff]
    %v4134 = vld [vmem:[#allocation7 + $0xb0] sm:$0xff]
    %v4135 = vld [vmem:[#allocation7 + $0xb8] sm:$0xff]
    %v4136 = vld [vmem:[#allocation7 + $0xc0] sm:$0xff]
    %v4137 = vld [vmem:[#allocation7 + $0xc8] sm:$0xff]
    %v4138 = vld [vmem:[#allocation7 + $0xd0] sm:$0xff]
    %v4139 = vld [vmem:[#allocation7 + $0xd8] sm:$0xff]
    %v4140 = vld [vmem:[#allocation7 + $0xe0] sm:$0xff]
    %v4141 = vld [vmem:[#allocation7 + $0xe8] sm:$0xff]
    %v4142 = vld [vmem:[#allocation7 + $0xf0] sm:$0xff]
    %v4143 = vld [vmem:[#allocation7 + $0xf8] sm:$0xff]
    %v4144 = vld [vmem:[#allocation7 + $0x100] sm:$0xff]
    %v4145 = vld [vmem:[#allocation7 + $0x108] sm:$0xff]
    %v4146 = vld [vmem:[#allocation7 + $0x110] sm:$0xff]
    %v4147 = vld [vmem:[#allocation7 + $0x118] sm:$0xff]
    %v4148 = vld [vmem:[#allocation7 + $0x120] sm:$0xff]
    %v4149 = vld [vmem:[#allocation7 + $0x128] sm:$0xff]
    %v4150 = vld [vmem:[#allocation7 + $0x130] sm:$0xff]
    %v4151 = vld [vmem:[#allocation7 + $0x138] sm:$0xff]
    %v4152 = vld [vmem:[#allocation7 + $0x140] sm:$0xff]
    %v4153 = vld [vmem:[#allocation7 + $0x148] sm:$0xff]
    %v4154 = vld [vmem:[#allocation7 + $0x150] sm:$0xff]
    %v4155 = vld [vmem:[#allocation7 + $0x158] sm:$0xff]
    %v4156 = vld [vmem:[#allocation7 + $0x160] sm:$0xff]
    %v4157 = vld [vmem:[#allocation7 + $0x168] sm:$0xff]
    %v4158 = vld [vmem:[#allocation7 + $0x170] sm:$0xff]
    %v4159 = vld [vmem:[#allocation7 + $0x178] sm:$0xff]
    %v4160 = vld [vmem:[#allocation7 + $0x180] sm:$0xff]
    %v4161 = vld [vmem:[#allocation7 + $0x188] sm:$0xff]
    %v4162 = vld [vmem:[#allocation7 + $0x190] sm:$0xff]
    %v4163 = vld [vmem:[#allocation7 + $0x198] sm:$0xff]
    %v4164 = vld [vmem:[#allocation7 + $0x1a0] sm:$0xff]
    %v4165 = vld [vmem:[#allocation7 + $0x1a8] sm:$0xff]
    %v4166 = vld [vmem:[#allocation7 + $0x1b0] sm:$0xff]
    %v4167 = vld [vmem:[#allocation7 + $0x1b8] sm:$0xff]
    %v4168 = vld [vmem:[#allocation7 + $0x1c0] sm:$0xff]
    %v4169 = vld [vmem:[#allocation7 + $0x1c8] sm:$0xff]
    %v4170 = vld [vmem:[#allocation7 + $0x1d0] sm:$0xff]
    %v4171 = vld [vmem:[#allocation7 + $0x1d8] sm:$0xff]
    %v4172 = vld [vmem:[#allocation7 + $0x1e0] sm:$0xff]
    %v4173 = vld [vmem:[#allocation7 + $0x1e8] sm:$0xff]
    %v4174 = vld [vmem:[#allocation7 + $0x1f0] sm:$0xff]
    %v4175 = vld [vmem:[#allocation7 + $0x1f8] sm:$0xff]
    %4176 = vmatprep.subr.mxu0 %v4173
    %4177 = vmatpush1.msra.mxu0 %v4172
    %4178 = vmatprep.subr.mxu0 %v4169
    %4179 = vmatpush1.msra.mxu0 %v4168
    %4180 = vmatprep.subr.mxu0 %v4165
    %4181 = vmatpush1.msra.mxu0 %v4164
    %4182 = vmatprep.subr.mxu0 %v4161
    %4183 = vmatpush1.msra.mxu0 %v4160
    %4184 = vmatprep.subr.mxu0 %v4157
    %4185 = vmatpush1.msra.mxu0 %v4156
    %4186 = vmatprep.subr.mxu0 %v4153
    %4187 = vmatpush1.msra.mxu0 %v4152
    %4188 = vmatprep.subr.mxu0 %v4149
    %4189 = vmatpush1.msra.mxu0 %v4148
    %4190 = vmatprep.subr.mxu0 %v4145
    %4191 = vmatpush1.msra.mxu0 %v4144
    %4192 = vmatprep.subr.mxu0 %v4141
    %4193 = vmatpush1.msra.mxu0 %v4140
    %4194 = vmatprep.subr.mxu0 %v4137
    %4195 = vmatpush1.msra.mxu0 %v4136
    %4196 = vmatprep.subr.mxu0 %v4133
    %4197 = vmatpush1.msra.mxu0 %v4132
    %4198 = vmatprep.subr.mxu0 %v4129
    %4199 = vmatpush1.msra.mxu0 %v4128
    %4200 = vmatprep.subr.mxu0 %v4125
    %4201 = vmatpush1.msra.mxu0 %v4124
    %4202 = vmatprep.subr.mxu0 %v4121
    %4203 = vmatpush1.msra.mxu0 %v4120
    %4204 = vmatprep.subr.mxu0 %v4117
    %4205 = vmatpush1.msra.mxu0 %v4116
    %4206 = vmatprep.subr.mxu0 %v4113
    %4207 = vmatpush1.msra.mxu0 %v4112
    %4208 = vmatprep.subr.mxu0 0.0
    %4209 = vmatpush2.msra.mxu0 0.0
    %4210 = vmatprep.subr.mxu0 0.0
    %4211 = vmatpush2.msra.mxu0 0.0
    %4212 = vmatprep.subr.mxu0 0.0
    %4213 = vmatpush2.msra.mxu0 0.0
    %4214 = vmatprep.subr.mxu0 0.0
    %4215 = vmatpush2.msra.mxu0 0.0
    %4216 = vmatprep.subr.mxu0 0.0
    %4217 = vmatpush2.msra.mxu0 0.0
    %4218 = vmatprep.subr.mxu0 0.0
    %4219 = vmatpush2.msra.mxu0 0.0
    %4220 = vmatprep.subr.mxu0 0.0
    %4221 = vmatpush2.msra.mxu0 0.0
    %4222 = vmatprep.subr.mxu0 0.0
    %4223 = vmatpush2.msra.mxu0 0.0
    %4224 = vmatprep.subr.mxu0 0.0
    %4225 = vmatpush2.msra.mxu0 0.0
    %4226 = vmatprep.subr.mxu0 0.0
    %4227 = vmatpush2.msra.mxu0 0.0
    %4228 = vmatprep.subr.mxu0 0.0
    %4229 = vmatpush2.msra.mxu0 0.0
    %4230 = vmatprep.subr.mxu0 0.0
    %4231 = vmatpush2.msra.mxu0 0.0
    %4232 = vmatprep.subr.mxu0 0.0
    %4233 = vmatpush2.msra.mxu0 0.0
    %4234 = vmatprep.subr.mxu0 0.0
    %4235 = vmatpush2.msra.mxu0 0.0
    %4236 = vmatprep.subr.mxu0 0.0
    %4237 = vmatpush2.msra.mxu0 0.0
    %4238 = vmatprep.subr.mxu0 0.0
    %4239 = vmatpush2.msra.mxu0 0.0
    %4240 = vmatprep.mubr.f32.mxu0 0.0
    %4241 = vmatmul.mubr.f32.gmra.mxu0 %v4111
    %v4242 = vpop.f32.mrf.mxu0
    %v4243 = vadd.f32 %v440, %v4242
    %v4244 = vpop.f32.mrf.mxu0
    %v4245 = vadd.f32 %v444, %v4244
    %4246 = vdwg.mxu0
    %4247 = vmatprep.subr.mxu0 %v4175
    %4248 = vmatpush1.msra.mxu0 %v4174
    %4249 = vmatprep.subr.mxu0 %v4171
    %4250 = vmatpush1.msra.mxu0 %v4170
    %4251 = vmatprep.subr.mxu0 %v4167
    %4252 = vmatpush1.msra.mxu0 %v4166
    %4253 = vmatprep.subr.mxu0 %v4163
    %4254 = vmatpush1.msra.mxu0 %v4162
    %4255 = vmatprep.subr.mxu0 %v4159
    %4256 = vmatpush1.msra.mxu0 %v4158
    %4257 = vmatprep.subr.mxu0 %v4155
    %4258 = vmatpush1.msra.mxu0 %v4154
    %4259 = vmatprep.subr.mxu0 %v4151
    %4260 = vmatpush1.msra.mxu0 %v4150
    %4261 = vmatprep.subr.mxu0 %v4147
    %4262 = vmatpush1.msra.mxu0 %v4146
    %4263 = vmatprep.subr.mxu0 %v4143
    %4264 = vmatpush1.msra.mxu0 %v4142
    %4265 = vmatprep.subr.mxu0 %v4139
    %4266 = vmatpush1.msra.mxu0 %v4138
    %4267 = vmatprep.subr.mxu0 %v4135
    %4268 = vmatpush1.msra.mxu0 %v4134
    %4269 = vmatprep.subr.mxu0 %v4131
    %4270 = vmatpush1.msra.mxu0 %v4130
    %4271 = vmatprep.subr.mxu0 %v4127
    %4272 = vmatpush1.msra.mxu0 %v4126
    %4273 = vmatprep.subr.mxu0 %v4123
    %4274 = vmatpush1.msra.mxu0 %v4122
    %4275 = vmatprep.subr.mxu0 %v4119
    %4276 = vmatpush1.msra.mxu0 %v4118
    %4277 = vmatprep.subr.mxu0 %v4115
    %4278 = vmatpush1.msra.mxu0 %v4114
    %4279 = vmatprep.subr.mxu0 0.0
    %4280 = vmatpush2.msra.mxu0 0.0
    %4281 = vmatprep.subr.mxu0 0.0
    %4282 = vmatpush2.msra.mxu0 0.0
    %4283 = vmatprep.subr.mxu0 0.0
    %4284 = vmatpush2.msra.mxu0 0.0
    %4285 = vmatprep.subr.mxu0 0.0
    %4286 = vmatpush2.msra.mxu0 0.0
    %4287 = vmatprep.subr.mxu0 0.0
    %4288 = vmatpush2.msra.mxu0 0.0
    %4289 = vmatprep.subr.mxu0 0.0
    %4290 = vmatpush2.msra.mxu0 0.0
    %4291 = vmatprep.subr.mxu0 0.0
    %4292 = vmatpush2.msra.mxu0 0.0
    %4293 = vmatprep.subr.mxu0 0.0
    %4294 = vmatpush2.msra.mxu0 0.0
    %4295 = vmatprep.subr.mxu0 0.0
    %4296 = vmatpush2.msra.mxu0 0.0
    %4297 = vmatprep.subr.mxu0 0.0
    %4298 = vmatpush2.msra.mxu0 0.0
    %4299 = vmatprep.subr.mxu0 0.0
    %4300 = vmatpush2.msra.mxu0 0.0
    %4301 = vmatprep.subr.mxu0 0.0
    %4302 = vmatpush2.msra.mxu0 0.0
    %4303 = vmatprep.subr.mxu0 0.0
    %4304 = vmatpush2.msra.mxu0 0.0
    %4305 = vmatprep.subr.mxu0 0.0
    %4306 = vmatpush2.msra.mxu0 0.0
    %4307 = vmatprep.subr.mxu0 0.0
    %4308 = vmatpush2.msra.mxu0 0.0
    %4309 = vmatprep.subr.mxu0 0.0
    %4310 = vmatpush2.msra.mxu0 0.0
    %4311 = vmatprep.mubr.f32.mxu0 0.0
    %4312 = vmatmul.mubr.f32.gmra.mxu0 %v4111
    %v4313 = vpop.f32.mrf.mxu0
    %v4314 = vadd.f32 %v448, %v4313
    %v4315 = vpop.f32.mrf.mxu0
    %v4316 = vadd.f32 %v452, %v4315
    %4317 = vdwg.mxu0
    %v4318 = vld [vmem:[#allocation9] sm:$0xff]
    %v4319 = vld [vmem:[#allocation9 + $0x8] sm:$0xff]
    %v4320 = vld [vmem:[#allocation9 + $0x10] sm:$0xff]
    %v4321 = vld [vmem:[#allocation9 + $0x18] sm:$0xff]
    %v4322 = vld [vmem:[#allocation9 + $0x20] sm:$0xff]
    %v4323 = vld [vmem:[#allocation9 + $0x28] sm:$0xff]
    %v4324 = vld [vmem:[#allocation9 + $0x30] sm:$0xff]
    %v4325 = vld [vmem:[#allocation9 + $0x38] sm:$0xff]
    %v4326 = vld [vmem:[#allocation9 + $0x40] sm:$0xff]
    %v4327 = vld [vmem:[#allocation9 + $0x48] sm:$0xff]
    %v4328 = vld [vmem:[#allocation9 + $0x50] sm:$0xff]
    %v4329 = vld [vmem:[#allocation9 + $0x58] sm:$0xff]
    %v4330 = vld [vmem:[#allocation9 + $0x60] sm:$0xff]
    %v4331 = vld [vmem:[#allocation9 + $0x68] sm:$0xff]
    %v4332 = vld [vmem:[#allocation9 + $0x70] sm:$0xff]
    %v4333 = vld [vmem:[#allocation9 + $0x78] sm:$0xff]
    %v4334 = vld [vmem:[#allocation9 + $0x80] sm:$0xff]
    %v4335 = vld [vmem:[#allocation9 + $0x88] sm:$0xff]
    %v4336 = vld [vmem:[#allocation9 + $0x90] sm:$0xff]
    %v4337 = vld [vmem:[#allocation9 + $0x98] sm:$0xff]
    %v4338 = vld [vmem:[#allocation9 + $0xa0] sm:$0xff]
    %v4339 = vld [vmem:[#allocation9 + $0xa8] sm:$0xff]
    %v4340 = vld [vmem:[#allocation9 + $0xb0] sm:$0xff]
    %v4341 = vld [vmem:[#allocation9 + $0xb8] sm:$0xff]
    %v4342 = vld [vmem:[#allocation9 + $0xc0] sm:$0xff]
    %v4343 = vld [vmem:[#allocation9 + $0xc8] sm:$0xff]
    %v4344 = vld [vmem:[#allocation9 + $0xd0] sm:$0xff]
    %v4345 = vld [vmem:[#allocation9 + $0xd8] sm:$0xff]
    %v4346 = vld [vmem:[#allocation9 + $0xe0] sm:$0xff]
    %v4347 = vld [vmem:[#allocation9 + $0xe8] sm:$0xff]
    %v4348 = vld [vmem:[#allocation9 + $0xf0] sm:$0xff]
    %v4349 = vld [vmem:[#allocation9 + $0xf8] sm:$0xff]
    %v4350 = vld [vmem:[#allocation9 + $0x100] sm:$0xff]
    %v4351 = vld [vmem:[#allocation9 + $0x108] sm:$0xff]
    %v4352 = vld [vmem:[#allocation9 + $0x110] sm:$0xff]
    %v4353 = vld [vmem:[#allocation9 + $0x118] sm:$0xff]
    %v4354 = vld [vmem:[#allocation9 + $0x120] sm:$0xff]
    %v4355 = vld [vmem:[#allocation9 + $0x128] sm:$0xff]
    %v4356 = vld [vmem:[#allocation9 + $0x130] sm:$0xff]
    %v4357 = vld [vmem:[#allocation9 + $0x138] sm:$0xff]
    %v4358 = vld [vmem:[#allocation9 + $0x140] sm:$0xff]
    %v4359 = vld [vmem:[#allocation9 + $0x148] sm:$0xff]
    %v4360 = vld [vmem:[#allocation9 + $0x150] sm:$0xff]
    %v4361 = vld [vmem:[#allocation9 + $0x158] sm:$0xff]
    %v4362 = vld [vmem:[#allocation9 + $0x160] sm:$0xff]
    %v4363 = vld [vmem:[#allocation9 + $0x168] sm:$0xff]
    %v4364 = vld [vmem:[#allocation9 + $0x170] sm:$0xff]
    %v4365 = vld [vmem:[#allocation9 + $0x178] sm:$0xff]
    %v4366 = vld [vmem:[#allocation9 + $0x180] sm:$0xff]
    %v4367 = vld [vmem:[#allocation9 + $0x188] sm:$0xff]
    %v4368 = vld [vmem:[#allocation9 + $0x190] sm:$0xff]
    %v4369 = vld [vmem:[#allocation9 + $0x198] sm:$0xff]
    %v4370 = vld [vmem:[#allocation9 + $0x1a0] sm:$0xff]
    %v4371 = vld [vmem:[#allocation9 + $0x1a8] sm:$0xff]
    %v4372 = vld [vmem:[#allocation9 + $0x1b0] sm:$0xff]
    %v4373 = vld [vmem:[#allocation9 + $0x1b8] sm:$0xff]
    %v4374 = vld [vmem:[#allocation9 + $0x1c0] sm:$0xff]
    %v4375 = vld [vmem:[#allocation9 + $0x1c8] sm:$0xff]
    %v4376 = vld [vmem:[#allocation9 + $0x1d0] sm:$0xff]
    %v4377 = vld [vmem:[#allocation9 + $0x1d8] sm:$0xff]
    %v4378 = vld [vmem:[#allocation9 + $0x1e0] sm:$0xff]
    %v4379 = vld [vmem:[#allocation9 + $0x1e8] sm:$0xff]
    %v4380 = vld [vmem:[#allocation9 + $0x1f0] sm:$0xff]
    %v4381 = vld [vmem:[#allocation9 + $0x1f8] sm:$0xff]
    %4382 = vmatprep.subr.mxu0 %v4379
    %4383 = vmatpush1.msra.mxu0 %v4378
    %4384 = vmatprep.subr.mxu0 %v4375
    %4385 = vmatpush1.msra.mxu0 %v4374
    %4386 = vmatprep.subr.mxu0 %v4371
    %4387 = vmatpush1.msra.mxu0 %v4370
    %4388 = vmatprep.subr.mxu0 %v4367
    %4389 = vmatpush1.msra.mxu0 %v4366
    %4390 = vmatprep.subr.mxu0 %v4363
    %4391 = vmatpush1.msra.mxu0 %v4362
    %4392 = vmatprep.subr.mxu0 %v4359
    %4393 = vmatpush1.msra.mxu0 %v4358
    %4394 = vmatprep.subr.mxu0 %v4355
    %4395 = vmatpush1.msra.mxu0 %v4354
    %4396 = vmatprep.subr.mxu0 %v4351
    %4397 = vmatpush1.msra.mxu0 %v4350
    %4398 = vmatprep.subr.mxu0 %v4347
    %4399 = vmatpush1.msra.mxu0 %v4346
    %4400 = vmatprep.subr.mxu0 %v4343
    %4401 = vmatpush1.msra.mxu0 %v4342
    %4402 = vmatprep.subr.mxu0 %v4339
    %4403 = vmatpush1.msra.mxu0 %v4338
    %4404 = vmatprep.subr.mxu0 %v4335
    %4405 = vmatpush1.msra.mxu0 %v4334
    %4406 = vmatprep.subr.mxu0 %v4331
    %4407 = vmatpush1.msra.mxu0 %v4330
    %4408 = vmatprep.subr.mxu0 %v4327
    %4409 = vmatpush1.msra.mxu0 %v4326
    %4410 = vmatprep.subr.mxu0 %v4323
    %4411 = vmatpush1.msra.mxu0 %v4322
    %4412 = vmatprep.subr.mxu0 %v4319
    %4413 = vmatpush1.msra.mxu0 %v4318
    %4414 = vmatprep.subr.mxu0 0.0
    %4415 = vmatpush2.msra.mxu0 0.0
    %4416 = vmatprep.subr.mxu0 0.0
    %4417 = vmatpush2.msra.mxu0 0.0
    %4418 = vmatprep.subr.mxu0 0.0
    %4419 = vmatpush2.msra.mxu0 0.0
    %4420 = vmatprep.subr.mxu0 0.0
    %4421 = vmatpush2.msra.mxu0 0.0
    %4422 = vmatprep.subr.mxu0 0.0
    %4423 = vmatpush2.msra.mxu0 0.0
    %4424 = vmatprep.subr.mxu0 0.0
    %4425 = vmatpush2.msra.mxu0 0.0
    %4426 = vmatprep.subr.mxu0 0.0
    %4427 = vmatpush2.msra.mxu0 0.0
    %4428 = vmatprep.subr.mxu0 0.0
    %4429 = vmatpush2.msra.mxu0 0.0
    %4430 = vmatprep.subr.mxu0 0.0
    %4431 = vmatpush2.msra.mxu0 0.0
    %4432 = vmatprep.subr.mxu0 0.0
    %4433 = vmatpush2.msra.mxu0 0.0
    %4434 = vmatprep.subr.mxu0 0.0
    %4435 = vmatpush2.msra.mxu0 0.0
    %4436 = vmatprep.subr.mxu0 0.0
    %4437 = vmatpush2.msra.mxu0 0.0
    %4438 = vmatprep.subr.mxu0 0.0
    %4439 = vmatpush2.msra.mxu0 0.0
    %4440 = vmatprep.subr.mxu0 0.0
    %4441 = vmatpush2.msra.mxu0 0.0
    %4442 = vmatprep.subr.mxu0 0.0
    %4443 = vmatpush2.msra.mxu0 0.0
    %4444 = vmatprep.subr.mxu0 0.0
    %4445 = vmatpush2.msra.mxu0 0.0
    %4446 = vmatprep.mubr.f32.mxu0 0.0
    %4447 = vmatmul.mubr.f32.gmra.mxu0 %v3868
    %v4448 = vpop.f32.mrf.mxu0
    %v4449 = vadd.f32 0.0, %v4448
    %v4450 = vpop.f32.mrf.mxu0
    %v4451 = vadd.f32 0.0, %v4450
    %4452 = vdwg.mxu0
    %4453 = vmatprep.subr.mxu0 %v4381
    %4454 = vmatpush1.msra.mxu0 %v4380
    %4455 = vmatprep.subr.mxu0 %v4377
    %4456 = vmatpush1.msra.mxu0 %v4376
    %4457 = vmatprep.subr.mxu0 %v4373
    %4458 = vmatpush1.msra.mxu0 %v4372
    %4459 = vmatprep.subr.mxu0 %v4369
    %4460 = vmatpush1.msra.mxu0 %v4368
    %4461 = vmatprep.subr.mxu0 %v4365
    %4462 = vmatpush1.msra.mxu0 %v4364
    %4463 = vmatprep.subr.mxu0 %v4361
    %4464 = vmatpush1.msra.mxu0 %v4360
    %4465 = vmatprep.subr.mxu0 %v4357
    %4466 = vmatpush1.msra.mxu0 %v4356
    %4467 = vmatprep.subr.mxu0 %v4353
    %4468 = vmatpush1.msra.mxu0 %v4352
    %4469 = vmatprep.subr.mxu0 %v4349
    %4470 = vmatpush1.msra.mxu0 %v4348
    %4471 = vmatprep.subr.mxu0 %v4345
    %4472 = vmatpush1.msra.mxu0 %v4344
    %4473 = vmatprep.subr.mxu0 %v4341
    %4474 = vmatpush1.msra.mxu0 %v4340
    %4475 = vmatprep.subr.mxu0 %v4337
    %4476 = vmatpush1.msra.mxu0 %v4336
    %4477 = vmatprep.subr.mxu0 %v4333
    %4478 = vmatpush1.msra.mxu0 %v4332
    %4479 = vmatprep.subr.mxu0 %v4329
    %4480 = vmatpush1.msra.mxu0 %v4328
    %4481 = vmatprep.subr.mxu0 %v4325
    %4482 = vmatpush1.msra.mxu0 %v4324
    %4483 = vmatprep.subr.mxu0 %v4321
    %4484 = vmatpush1.msra.mxu0 %v4320
    %4485 = vmatprep.subr.mxu0 0.0
    %4486 = vmatpush2.msra.mxu0 0.0
    %4487 = vmatprep.subr.mxu0 0.0
    %4488 = vmatpush2.msra.mxu0 0.0
    %4489 = vmatprep.subr.mxu0 0.0
    %4490 = vmatpush2.msra.mxu0 0.0
    %4491 = vmatprep.subr.mxu0 0.0
    %4492 = vmatpush2.msra.mxu0 0.0
    %4493 = vmatprep.subr.mxu0 0.0
    %4494 = vmatpush2.msra.mxu0 0.0
    %4495 = vmatprep.subr.mxu0 0.0
    %4496 = vmatpush2.msra.mxu0 0.0
    %4497 = vmatprep.subr.mxu0 0.0
    %4498 = vmatpush2.msra.mxu0 0.0
    %4499 = vmatprep.subr.mxu0 0.0
    %4500 = vmatpush2.msra.mxu0 0.0
    %4501 = vmatprep.subr.mxu0 0.0
    %4502 = vmatpush2.msra.mxu0 0.0
    %4503 = vmatprep.subr.mxu0 0.0
    %4504 = vmatpush2.msra.mxu0 0.0
    %4505 = vmatprep.subr.mxu0 0.0
    %4506 = vmatpush2.msra.mxu0 0.0
    %4507 = vmatprep.subr.mxu0 0.0
    %4508 = vmatpush2.msra.mxu0 0.0
    %4509 = vmatprep.subr.mxu0 0.0
    %4510 = vmatpush2.msra.mxu0 0.0
    %4511 = vmatprep.subr.mxu0 0.0
    %4512 = vmatpush2.msra.mxu0 0.0
    %4513 = vmatprep.subr.mxu0 0.0
    %4514 = vmatpush2.msra.mxu0 0.0
    %4515 = vmatprep.subr.mxu0 0.0
    %4516 = vmatpush2.msra.mxu0 0.0
    %4517 = vmatprep.mubr.f32.mxu0 0.0
    %4518 = vmatmul.mubr.f32.gmra.mxu0 %v3868
    %v4519 = vpop.f32.mrf.mxu0
    %v4520 = vadd.f32 0.0, %v4519
    %v4521 = vpop.f32.mrf.mxu0
    %v4522 = vadd.f32 0.0, %v4521
    %4523 = vdwg.mxu0
    %v4524 = vadd.f32 %v4243, %v4449
    %v4525 = vadd.f32 %v4245, %v4451
    %v4526 = vadd.f32 %v4314, %v4520
    %v4527 = vadd.f32 %v4316, %v4522
    %v4528 = vxor.u32 %v4524, 2147483648
    %v4529 = vxor.u32 %v4525, 2147483648
    %v4530 = vxor.u32 %v4526, 2147483648
    %v4531 = vmul.f32 %v4528, 1.442695
    %v4532 = vpow.pop %v4531
    %v4533 = vmul.f32 %v4529, 1.442695
    %v4534 = vpow.pop %v4533
    %v4535 = vmul.f32 %v4530, 1.442695
    %v4536 = vpow.pop %v4535
    %v4537 = vadd.f32 %v4532, 1.0
    %v4538 = vadd.f32 %v4534, 1.0
    %v4539 = vadd.f32 %v4536, 1.0
    %v4540 = vrcp.pop %v4537
    %v4541 = vmul.f32 1.0, %v4540
    %v4542 = vrcp.pop %v4538
    %v4543 = vmul.f32 1.0, %v4542
    %v4544 = vrcp.pop %v4539
    %v4545 = vmul.f32 1.0, %v4544
    %v4546 = vtanh.pop %v4527
    %v4547 = vmul.f32 %v4543, %v3866
    %v4548 = vmul.f32 %v4541, %v4546
    %v4549 = vadd.f32 %v4547, %v4548
    %v4550 = vtanh.pop %v4549
    %v4551 = vmul.f32 %v4545, %v4550
    %s4552 = scalar_lea.vmem [#allocation3], 40
    %4553 = vst [vmem:[%s4552] sm:$0xff] %v4551
    %s4554 = smul.u32 6, 4
    %s4555 = smul.addr %s4554, 8
    %s4556 = scalar_lea.vmem [#allocation2], %s4555
    %v4557 = vld [vmem:[%s4556] sm:$0xff]
    %v4558 = vld [vmem:[%s4556 + $0x8] sm:$0xff]
    %v4559 = vld [vmem:[%s4556 + $0x10] sm:$0xff]
    %v4560 = vld [vmem:[%s4556 + $0x18] sm:$0xff]
    %v4561 = vld [vmem:[#allocation4] sm:$0xff]
    %v4562 = vld [vmem:[#allocation4 + $0x8] sm:$0xff]
    %v4563 = vld [vmem:[#allocation4 + $0x10] sm:$0xff]
    %v4564 = vld [vmem:[#allocation4 + $0x18] sm:$0xff]
    %v4565 = vld [vmem:[#allocation4 + $0x20] sm:$0xff]
    %v4566 = vld [vmem:[#allocation4 + $0x28] sm:$0xff]
    %v4567 = vld [vmem:[#allocation4 + $0x30] sm:$0xff]
    %v4568 = vld [vmem:[#allocation4 + $0x38] sm:$0xff]
    %v4569 = vld [vmem:[#allocation4 + $0x40] sm:$0xff]
    %v4570 = vld [vmem:[#allocation4 + $0x48] sm:$0xff]
    %v4571 = vld [vmem:[#allocation4 + $0x50] sm:$0xff]
    %v4572 = vld [vmem:[#allocation4 + $0x58] sm:$0xff]
    %v4573 = vld [vmem:[#allocation4 + $0x60] sm:$0xff]
    %v4574 = vld [vmem:[#allocation4 + $0x68] sm:$0xff]
    %v4575 = vld [vmem:[#allocation4 + $0x70] sm:$0xff]
    %v4576 = vld [vmem:[#allocation4 + $0x78] sm:$0xff]
    %v4577 = vld [vmem:[#allocation4 + $0x80] sm:$0xff]
    %v4578 = vld [vmem:[#allocation4 + $0x88] sm:$0xff]
    %v4579 = vld [vmem:[#allocation4 + $0x90] sm:$0xff]
    %v4580 = vld [vmem:[#allocation4 + $0x98] sm:$0xff]
    %v4581 = vld [vmem:[#allocation4 + $0xa0] sm:$0xff]
    %v4582 = vld [vmem:[#allocation4 + $0xa8] sm:$0xff]
    %v4583 = vld [vmem:[#allocation4 + $0xb0] sm:$0xff]
    %v4584 = vld [vmem:[#allocation4 + $0xb8] sm:$0xff]
    %v4585 = vld [vmem:[#allocation4 + $0xc0] sm:$0xff]
    %v4586 = vld [vmem:[#allocation4 + $0xc8] sm:$0xff]
    %v4587 = vld [vmem:[#allocation4 + $0xd0] sm:$0xff]
    %v4588 = vld [vmem:[#allocation4 + $0xd8] sm:$0xff]
    %v4589 = vld [vmem:[#allocation4 + $0xe0] sm:$0xff]
    %v4590 = vld [vmem:[#allocation4 + $0xe8] sm:$0xff]
    %v4591 = vld [vmem:[#allocation4 + $0xf0] sm:$0xff]
    %v4592 = vld [vmem:[#allocation4 + $0xf8] sm:$0xff]
    %v4593 = vld [vmem:[#allocation4 + $0x100] sm:$0xff]
    %v4594 = vld [vmem:[#allocation4 + $0x108] sm:$0xff]
    %v4595 = vld [vmem:[#allocation4 + $0x110] sm:$0xff]
    %v4596 = vld [vmem:[#allocation4 + $0x118] sm:$0xff]
    %v4597 = vld [vmem:[#allocation4 + $0x120] sm:$0xff]
    %v4598 = vld [vmem:[#allocation4 + $0x128] sm:$0xff]
    %v4599 = vld [vmem:[#allocation4 + $0x130] sm:$0xff]
    %v4600 = vld [vmem:[#allocation4 + $0x138] sm:$0xff]
    %v4601 = vld [vmem:[#allocation4 + $0x140] sm:$0xff]
    %v4602 = vld [vmem:[#allocation4 + $0x148] sm:$0xff]
    %v4603 = vld [vmem:[#allocation4 + $0x150] sm:$0xff]
    %v4604 = vld [vmem:[#allocation4 + $0x158] sm:$0xff]
    %v4605 = vld [vmem:[#allocation4 + $0x160] sm:$0xff]
    %v4606 = vld [vmem:[#allocation4 + $0x168] sm:$0xff]
    %v4607 = vld [vmem:[#allocation4 + $0x170] sm:$0xff]
    %v4608 = vld [vmem:[#allocation4 + $0x178] sm:$0xff]
    %v4609 = vld [vmem:[#allocation4 + $0x180] sm:$0xff]
    %v4610 = vld [vmem:[#allocation4 + $0x188] sm:$0xff]
    %v4611 = vld [vmem:[#allocation4 + $0x190] sm:$0xff]
    %v4612 = vld [vmem:[#allocation4 + $0x198] sm:$0xff]
    %v4613 = vld [vmem:[#allocation4 + $0x1a0] sm:$0xff]
    %v4614 = vld [vmem:[#allocation4 + $0x1a8] sm:$0xff]
    %v4615 = vld [vmem:[#allocation4 + $0x1b0] sm:$0xff]
    %v4616 = vld [vmem:[#allocation4 + $0x1b8] sm:$0xff]
    %v4617 = vld [vmem:[#allocation4 + $0x1c0] sm:$0xff]
    %v4618 = vld [vmem:[#allocation4 + $0x1c8] sm:$0xff]
    %v4619 = vld [vmem:[#allocation4 + $0x1d0] sm:$0xff]
    %v4620 = vld [vmem:[#allocation4 + $0x1d8] sm:$0xff]
    %v4621 = vld [vmem:[#allocation4 + $0x1e0] sm:$0xff]
    %v4622 = vld [vmem:[#allocation4 + $0x1e8] sm:$0xff]
    %v4623 = vld [vmem:[#allocation4 + $0x1f0] sm:$0xff]
    %v4624 = vld [vmem:[#allocation4 + $0x1f8] sm:$0xff]
    %4625 = vmatprep.subr.mxu0 %v4622
    %4626 = vmatpush1.msra.mxu0 %v4621
    %4627 = vmatprep.subr.mxu0 %v4618
    %4628 = vmatpush1.msra.mxu0 %v4617
    %4629 = vmatprep.subr.mxu0 %v4614
    %4630 = vmatpush1.msra.mxu0 %v4613
    %4631 = vmatprep.subr.mxu0 %v4610
    %4632 = vmatpush1.msra.mxu0 %v4609
    %4633 = vmatprep.subr.mxu0 %v4606
    %4634 = vmatpush1.msra.mxu0 %v4605
    %4635 = vmatprep.subr.mxu0 %v4602
    %4636 = vmatpush1.msra.mxu0 %v4601
    %4637 = vmatprep.subr.mxu0 %v4598
    %4638 = vmatpush1.msra.mxu0 %v4597
    %4639 = vmatprep.subr.mxu0 %v4594
    %4640 = vmatpush1.msra.mxu0 %v4593
    %4641 = vmatprep.subr.mxu0 %v4590
    %4642 = vmatpush1.msra.mxu0 %v4589
    %4643 = vmatprep.subr.mxu0 %v4586
    %4644 = vmatpush1.msra.mxu0 %v4585
    %4645 = vmatprep.subr.mxu0 %v4582
    %4646 = vmatpush1.msra.mxu0 %v4581
    %4647 = vmatprep.subr.mxu0 %v4578
    %4648 = vmatpush1.msra.mxu0 %v4577
    %4649 = vmatprep.subr.mxu0 %v4574
    %4650 = vmatpush1.msra.mxu0 %v4573
    %4651 = vmatprep.subr.mxu0 %v4570
    %4652 = vmatpush1.msra.mxu0 %v4569
    %4653 = vmatprep.subr.mxu0 %v4566
    %4654 = vmatpush1.msra.mxu0 %v4565
    %4655 = vmatprep.subr.mxu0 %v4562
    %4656 = vmatpush1.msra.mxu0 %v4561
    %4657 = vmatprep.subr.mxu0 0.0
    %4658 = vmatpush2.msra.mxu0 0.0
    %4659 = vmatprep.subr.mxu0 0.0
    %4660 = vmatpush2.msra.mxu0 0.0
    %4661 = vmatprep.subr.mxu0 0.0
    %4662 = vmatpush2.msra.mxu0 0.0
    %4663 = vmatprep.subr.mxu0 0.0
    %4664 = vmatpush2.msra.mxu0 0.0
    %4665 = vmatprep.subr.mxu0 0.0
    %4666 = vmatpush2.msra.mxu0 0.0
    %4667 = vmatprep.subr.mxu0 0.0
    %4668 = vmatpush2.msra.mxu0 0.0
    %4669 = vmatprep.subr.mxu0 0.0
    %4670 = vmatpush2.msra.mxu0 0.0
    %4671 = vmatprep.subr.mxu0 0.0
    %4672 = vmatpush2.msra.mxu0 0.0
    %4673 = vmatprep.subr.mxu0 0.0
    %4674 = vmatpush2.msra.mxu0 0.0
    %4675 = vmatprep.subr.mxu0 0.0
    %4676 = vmatpush2.msra.mxu0 0.0
    %4677 = vmatprep.subr.mxu0 0.0
    %4678 = vmatpush2.msra.mxu0 0.0
    %4679 = vmatprep.subr.mxu0 0.0
    %4680 = vmatpush2.msra.mxu0 0.0
    %4681 = vmatprep.subr.mxu0 0.0
    %4682 = vmatpush2.msra.mxu0 0.0
    %4683 = vmatprep.subr.mxu0 0.0
    %4684 = vmatpush2.msra.mxu0 0.0
    %4685 = vmatprep.subr.mxu0 0.0
    %4686 = vmatpush2.msra.mxu0 0.0
    %4687 = vmatprep.subr.mxu0 0.0
    %4688 = vmatpush2.msra.mxu0 0.0
    %4689 = vmatprep.mubr.f32.mxu0 0.0
    %4690 = vmatmul.mubr.f32.gmra.mxu0 %v4111
    %v4691 = vpop.f32.mrf.mxu0
    %v4692 = vadd.f32 0.0, %v4691
    %v4693 = vpop.f32.mrf.mxu0
    %v4694 = vadd.f32 0.0, %v4693
    %4695 = vdwg.mxu0
    %4696 = vmatprep.subr.mxu0 %v4624
    %4697 = vmatpush1.msra.mxu0 %v4623
    %4698 = vmatprep.subr.mxu0 %v4620
    %4699 = vmatpush1.msra.mxu0 %v4619
    %4700 = vmatprep.subr.mxu0 %v4616
    %4701 = vmatpush1.msra.mxu0 %v4615
    %4702 = vmatprep.subr.mxu0 %v4612
    %4703 = vmatpush1.msra.mxu0 %v4611
    %4704 = vmatprep.subr.mxu0 %v4608
    %4705 = vmatpush1.msra.mxu0 %v4607
    %4706 = vmatprep.subr.mxu0 %v4604
    %4707 = vmatpush1.msra.mxu0 %v4603
    %4708 = vmatprep.subr.mxu0 %v4600
    %4709 = vmatpush1.msra.mxu0 %v4599
    %4710 = vmatprep.subr.mxu0 %v4596
    %4711 = vmatpush1.msra.mxu0 %v4595
    %4712 = vmatprep.subr.mxu0 %v4592
    %4713 = vmatpush1.msra.mxu0 %v4591
    %4714 = vmatprep.subr.mxu0 %v4588
    %4715 = vmatpush1.msra.mxu0 %v4587
    %4716 = vmatprep.subr.mxu0 %v4584
    %4717 = vmatpush1.msra.mxu0 %v4583
    %4718 = vmatprep.subr.mxu0 %v4580
    %4719 = vmatpush1.msra.mxu0 %v4579
    %4720 = vmatprep.subr.mxu0 %v4576
    %4721 = vmatpush1.msra.mxu0 %v4575
    %4722 = vmatprep.subr.mxu0 %v4572
    %4723 = vmatpush1.msra.mxu0 %v4571
    %4724 = vmatprep.subr.mxu0 %v4568
    %4725 = vmatpush1.msra.mxu0 %v4567
    %4726 = vmatprep.subr.mxu0 %v4564
    %4727 = vmatpush1.msra.mxu0 %v4563
    %4728 = vmatprep.subr.mxu0 0.0
    %4729 = vmatpush2.msra.mxu0 0.0
    %4730 = vmatprep.subr.mxu0 0.0
    %4731 = vmatpush2.msra.mxu0 0.0
    %4732 = vmatprep.subr.mxu0 0.0
    %4733 = vmatpush2.msra.mxu0 0.0
    %4734 = vmatprep.subr.mxu0 0.0
    %4735 = vmatpush2.msra.mxu0 0.0
    %4736 = vmatprep.subr.mxu0 0.0
    %4737 = vmatpush2.msra.mxu0 0.0
    %4738 = vmatprep.subr.mxu0 0.0
    %4739 = vmatpush2.msra.mxu0 0.0
    %4740 = vmatprep.subr.mxu0 0.0
    %4741 = vmatpush2.msra.mxu0 0.0
    %4742 = vmatprep.subr.mxu0 0.0
    %4743 = vmatpush2.msra.mxu0 0.0
    %4744 = vmatprep.subr.mxu0 0.0
    %4745 = vmatpush2.msra.mxu0 0.0
    %4746 = vmatprep.subr.mxu0 0.0
    %4747 = vmatpush2.msra.mxu0 0.0
    %4748 = vmatprep.subr.mxu0 0.0
    %4749 = vmatpush2.msra.mxu0 0.0
    %4750 = vmatprep.subr.mxu0 0.0
    %4751 = vmatpush2.msra.mxu0 0.0
    %4752 = vmatprep.subr.mxu0 0.0
    %4753 = vmatpush2.msra.mxu0 0.0
    %4754 = vmatprep.subr.mxu0 0.0
    %4755 = vmatpush2.msra.mxu0 0.0
    %4756 = vmatprep.subr.mxu0 0.0
    %4757 = vmatpush2.msra.mxu0 0.0
    %4758 = vmatprep.subr.mxu0 0.0
    %4759 = vmatpush2.msra.mxu0 0.0
    %4760 = vmatprep.mubr.f32.mxu0 0.0
    %4761 = vmatmul.mubr.f32.gmra.mxu0 %v4111
    %v4762 = vpop.f32.mrf.mxu0
    %v4763 = vadd.f32 0.0, %v4762
    %v4764 = vpop.f32.mrf.mxu0
    %v4765 = vadd.f32 0.0, %v4764
    %4766 = vdwg.mxu0
    %v4767 = vadd.f32 %v4557, %v4692
    %v4768 = vadd.f32 %v4558, %v4694
    %v4769 = vadd.f32 %v4559, %v4763
    %v4770 = vadd.f32 %v4560, %v4765
    %v4771 = vxor.u32 %v4767, 2147483648
    %v4772 = vxor.u32 %v4768, 2147483648
    %v4773 = vxor.u32 %v4769, 2147483648
    %v4774 = vmul.f32 %v4771, 1.442695
    %v4775 = vpow.pop %v4774
    %v4776 = vmul.f32 %v4772, 1.442695
    %v4777 = vpow.pop %v4776
    %v4778 = vmul.f32 %v4773, 1.442695
    %v4779 = vpow.pop %v4778
    %v4780 = vadd.f32 %v4775, 1.0
    %v4781 = vadd.f32 %v4777, 1.0
    %v4782 = vadd.f32 %v4779, 1.0
    %v4783 = vrcp.pop %v4780
    %v4784 = vmul.f32 1.0, %v4783
    %v4785 = vrcp.pop %v4781
    %v4786 = vmul.f32 1.0, %v4785
    %v4787 = vrcp.pop %v4782
    %v4788 = vmul.f32 1.0, %v4787
    %v4789 = vtanh.pop %v4770
    %v4790 = vmul.f32 %v4786, %v4109
    %v4791 = vmul.f32 %v4784, %v4789
    %v4792 = vadd.f32 %v4790, %v4791
    %v4793 = vtanh.pop %v4792
    %v4794 = vmul.f32 %v4788, %v4793
    %v4795 = vld [vmem:[#allocation7] sm:$0xff]
    %v4796 = vld [vmem:[#allocation7 + $0x8] sm:$0xff]
    %v4797 = vld [vmem:[#allocation7 + $0x10] sm:$0xff]
    %v4798 = vld [vmem:[#allocation7 + $0x18] sm:$0xff]
    %v4799 = vld [vmem:[#allocation7 + $0x20] sm:$0xff]
    %v4800 = vld [vmem:[#allocation7 + $0x28] sm:$0xff]
    %v4801 = vld [vmem:[#allocation7 + $0x30] sm:$0xff]
    %v4802 = vld [vmem:[#allocation7 + $0x38] sm:$0xff]
    %v4803 = vld [vmem:[#allocation7 + $0x40] sm:$0xff]
    %v4804 = vld [vmem:[#allocation7 + $0x48] sm:$0xff]
    %v4805 = vld [vmem:[#allocation7 + $0x50] sm:$0xff]
    %v4806 = vld [vmem:[#allocation7 + $0x58] sm:$0xff]
    %v4807 = vld [vmem:[#allocation7 + $0x60] sm:$0xff]
    %v4808 = vld [vmem:[#allocation7 + $0x68] sm:$0xff]
    %v4809 = vld [vmem:[#allocation7 + $0x70] sm:$0xff]
    %v4810 = vld [vmem:[#allocation7 + $0x78] sm:$0xff]
    %v4811 = vld [vmem:[#allocation7 + $0x80] sm:$0xff]
    %v4812 = vld [vmem:[#allocation7 + $0x88] sm:$0xff]
    %v4813 = vld [vmem:[#allocation7 + $0x90] sm:$0xff]
    %v4814 = vld [vmem:[#allocation7 + $0x98] sm:$0xff]
    %v4815 = vld [vmem:[#allocation7 + $0xa0] sm:$0xff]
    %v4816 = vld [vmem:[#allocation7 + $0xa8] sm:$0xff]
    %v4817 = vld [vmem:[#allocation7 + $0xb0] sm:$0xff]
    %v4818 = vld [vmem:[#allocation7 + $0xb8] sm:$0xff]
    %v4819 = vld [vmem:[#allocation7 + $0xc0] sm:$0xff]
    %v4820 = vld [vmem:[#allocation7 + $0xc8] sm:$0xff]
    %v4821 = vld [vmem:[#allocation7 + $0xd0] sm:$0xff]
    %v4822 = vld [vmem:[#allocation7 + $0xd8] sm:$0xff]
    %v4823 = vld [vmem:[#allocation7 + $0xe0] sm:$0xff]
    %v4824 = vld [vmem:[#allocation7 + $0xe8] sm:$0xff]
    %v4825 = vld [vmem:[#allocation7 + $0xf0] sm:$0xff]
    %v4826 = vld [vmem:[#allocation7 + $0xf8] sm:$0xff]
    %v4827 = vld [vmem:[#allocation7 + $0x100] sm:$0xff]
    %v4828 = vld [vmem:[#allocation7 + $0x108] sm:$0xff]
    %v4829 = vld [vmem:[#allocation7 + $0x110] sm:$0xff]
    %v4830 = vld [vmem:[#allocation7 + $0x118] sm:$0xff]
    %v4831 = vld [vmem:[#allocation7 + $0x120] sm:$0xff]
    %v4832 = vld [vmem:[#allocation7 + $0x128] sm:$0xff]
    %v4833 = vld [vmem:[#allocation7 + $0x130] sm:$0xff]
    %v4834 = vld [vmem:[#allocation7 + $0x138] sm:$0xff]
    %v4835 = vld [vmem:[#allocation7 + $0x140] sm:$0xff]
    %v4836 = vld [vmem:[#allocation7 + $0x148] sm:$0xff]
    %v4837 = vld [vmem:[#allocation7 + $0x150] sm:$0xff]
    %v4838 = vld [vmem:[#allocation7 + $0x158] sm:$0xff]
    %v4839 = vld [vmem:[#allocation7 + $0x160] sm:$0xff]
    %v4840 = vld [vmem:[#allocation7 + $0x168] sm:$0xff]
    %v4841 = vld [vmem:[#allocation7 + $0x170] sm:$0xff]
    %v4842 = vld [vmem:[#allocation7 + $0x178] sm:$0xff]
    %v4843 = vld [vmem:[#allocation7 + $0x180] sm:$0xff]
    %v4844 = vld [vmem:[#allocation7 + $0x188] sm:$0xff]
    %v4845 = vld [vmem:[#allocation7 + $0x190] sm:$0xff]
    %v4846 = vld [vmem:[#allocation7 + $0x198] sm:$0xff]
    %v4847 = vld [vmem:[#allocation7 + $0x1a0] sm:$0xff]
    %v4848 = vld [vmem:[#allocation7 + $0x1a8] sm:$0xff]
    %v4849 = vld [vmem:[#allocation7 + $0x1b0] sm:$0xff]
    %v4850 = vld [vmem:[#allocation7 + $0x1b8] sm:$0xff]
    %v4851 = vld [vmem:[#allocation7 + $0x1c0] sm:$0xff]
    %v4852 = vld [vmem:[#allocation7 + $0x1c8] sm:$0xff]
    %v4853 = vld [vmem:[#allocation7 + $0x1d0] sm:$0xff]
    %v4854 = vld [vmem:[#allocation7 + $0x1d8] sm:$0xff]
    %v4855 = vld [vmem:[#allocation7 + $0x1e0] sm:$0xff]
    %v4856 = vld [vmem:[#allocation7 + $0x1e8] sm:$0xff]
    %v4857 = vld [vmem:[#allocation7 + $0x1f0] sm:$0xff]
    %v4858 = vld [vmem:[#allocation7 + $0x1f8] sm:$0xff]
    %4859 = vmatprep.subr.mxu0 %v4856
    %4860 = vmatpush1.msra.mxu0 %v4855
    %4861 = vmatprep.subr.mxu0 %v4852
    %4862 = vmatpush1.msra.mxu0 %v4851
    %4863 = vmatprep.subr.mxu0 %v4848
    %4864 = vmatpush1.msra.mxu0 %v4847
    %4865 = vmatprep.subr.mxu0 %v4844
    %4866 = vmatpush1.msra.mxu0 %v4843
    %4867 = vmatprep.subr.mxu0 %v4840
    %4868 = vmatpush1.msra.mxu0 %v4839
    %4869 = vmatprep.subr.mxu0 %v4836
    %4870 = vmatpush1.msra.mxu0 %v4835
    %4871 = vmatprep.subr.mxu0 %v4832
    %4872 = vmatpush1.msra.mxu0 %v4831
    %4873 = vmatprep.subr.mxu0 %v4828
    %4874 = vmatpush1.msra.mxu0 %v4827
    %4875 = vmatprep.subr.mxu0 %v4824
    %4876 = vmatpush1.msra.mxu0 %v4823
    %4877 = vmatprep.subr.mxu0 %v4820
    %4878 = vmatpush1.msra.mxu0 %v4819
    %4879 = vmatprep.subr.mxu0 %v4816
    %4880 = vmatpush1.msra.mxu0 %v4815
    %4881 = vmatprep.subr.mxu0 %v4812
    %4882 = vmatpush1.msra.mxu0 %v4811
    %4883 = vmatprep.subr.mxu0 %v4808
    %4884 = vmatpush1.msra.mxu0 %v4807
    %4885 = vmatprep.subr.mxu0 %v4804
    %4886 = vmatpush1.msra.mxu0 %v4803
    %4887 = vmatprep.subr.mxu0 %v4800
    %4888 = vmatpush1.msra.mxu0 %v4799
    %4889 = vmatprep.subr.mxu0 %v4796
    %4890 = vmatpush1.msra.mxu0 %v4795
    %4891 = vmatprep.subr.mxu0 0.0
    %4892 = vmatpush2.msra.mxu0 0.0
    %4893 = vmatprep.subr.mxu0 0.0
    %4894 = vmatpush2.msra.mxu0 0.0
    %4895 = vmatprep.subr.mxu0 0.0
    %4896 = vmatpush2.msra.mxu0 0.0
    %4897 = vmatprep.subr.mxu0 0.0
    %4898 = vmatpush2.msra.mxu0 0.0
    %4899 = vmatprep.subr.mxu0 0.0
    %4900 = vmatpush2.msra.mxu0 0.0
    %4901 = vmatprep.subr.mxu0 0.0
    %4902 = vmatpush2.msra.mxu0 0.0
    %4903 = vmatprep.subr.mxu0 0.0
    %4904 = vmatpush2.msra.mxu0 0.0
    %4905 = vmatprep.subr.mxu0 0.0
    %4906 = vmatpush2.msra.mxu0 0.0
    %4907 = vmatprep.subr.mxu0 0.0
    %4908 = vmatpush2.msra.mxu0 0.0
    %4909 = vmatprep.subr.mxu0 0.0
    %4910 = vmatpush2.msra.mxu0 0.0
    %4911 = vmatprep.subr.mxu0 0.0
    %4912 = vmatpush2.msra.mxu0 0.0
    %4913 = vmatprep.subr.mxu0 0.0
    %4914 = vmatpush2.msra.mxu0 0.0
    %4915 = vmatprep.subr.mxu0 0.0
    %4916 = vmatpush2.msra.mxu0 0.0
    %4917 = vmatprep.subr.mxu0 0.0
    %4918 = vmatpush2.msra.mxu0 0.0
    %4919 = vmatprep.subr.mxu0 0.0
    %4920 = vmatpush2.msra.mxu0 0.0
    %4921 = vmatprep.subr.mxu0 0.0
    %4922 = vmatpush2.msra.mxu0 0.0
    %4923 = vmatprep.mubr.f32.mxu0 0.0
    %4924 = vmatmul.mubr.f32.gmra.mxu0 %v4794
    %v4925 = vpop.f32.mrf.mxu0
    %v4926 = vadd.f32 %v440, %v4925
    %v4927 = vpop.f32.mrf.mxu0
    %v4928 = vadd.f32 %v444, %v4927
    %4929 = vdwg.mxu0
    %4930 = vmatprep.subr.mxu0 %v4858
    %4931 = vmatpush1.msra.mxu0 %v4857
    %4932 = vmatprep.subr.mxu0 %v4854
    %4933 = vmatpush1.msra.mxu0 %v4853
    %4934 = vmatprep.subr.mxu0 %v4850
    %4935 = vmatpush1.msra.mxu0 %v4849
    %4936 = vmatprep.subr.mxu0 %v4846
    %4937 = vmatpush1.msra.mxu0 %v4845
    %4938 = vmatprep.subr.mxu0 %v4842
    %4939 = vmatpush1.msra.mxu0 %v4841
    %4940 = vmatprep.subr.mxu0 %v4838
    %4941 = vmatpush1.msra.mxu0 %v4837
    %4942 = vmatprep.subr.mxu0 %v4834
    %4943 = vmatpush1.msra.mxu0 %v4833
    %4944 = vmatprep.subr.mxu0 %v4830
    %4945 = vmatpush1.msra.mxu0 %v4829
    %4946 = vmatprep.subr.mxu0 %v4826
    %4947 = vmatpush1.msra.mxu0 %v4825
    %4948 = vmatprep.subr.mxu0 %v4822
    %4949 = vmatpush1.msra.mxu0 %v4821
    %4950 = vmatprep.subr.mxu0 %v4818
    %4951 = vmatpush1.msra.mxu0 %v4817
    %4952 = vmatprep.subr.mxu0 %v4814
    %4953 = vmatpush1.msra.mxu0 %v4813
    %4954 = vmatprep.subr.mxu0 %v4810
    %4955 = vmatpush1.msra.mxu0 %v4809
    %4956 = vmatprep.subr.mxu0 %v4806
    %4957 = vmatpush1.msra.mxu0 %v4805
    %4958 = vmatprep.subr.mxu0 %v4802
    %4959 = vmatpush1.msra.mxu0 %v4801
    %4960 = vmatprep.subr.mxu0 %v4798
    %4961 = vmatpush1.msra.mxu0 %v4797
    %4962 = vmatprep.subr.mxu0 0.0
    %4963 = vmatpush2.msra.mxu0 0.0
    %4964 = vmatprep.subr.mxu0 0.0
    %4965 = vmatpush2.msra.mxu0 0.0
    %4966 = vmatprep.subr.mxu0 0.0
    %4967 = vmatpush2.msra.mxu0 0.0
    %4968 = vmatprep.subr.mxu0 0.0
    %4969 = vmatpush2.msra.mxu0 0.0
    %4970 = vmatprep.subr.mxu0 0.0
    %4971 = vmatpush2.msra.mxu0 0.0
    %4972 = vmatprep.subr.mxu0 0.0
    %4973 = vmatpush2.msra.mxu0 0.0
    %4974 = vmatprep.subr.mxu0 0.0
    %4975 = vmatpush2.msra.mxu0 0.0
    %4976 = vmatprep.subr.mxu0 0.0
    %4977 = vmatpush2.msra.mxu0 0.0
    %4978 = vmatprep.subr.mxu0 0.0
    %4979 = vmatpush2.msra.mxu0 0.0
    %4980 = vmatprep.subr.mxu0 0.0
    %4981 = vmatpush2.msra.mxu0 0.0
    %4982 = vmatprep.subr.mxu0 0.0
    %4983 = vmatpush2.msra.mxu0 0.0
    %4984 = vmatprep.subr.mxu0 0.0
    %4985 = vmatpush2.msra.mxu0 0.0
    %4986 = vmatprep.subr.mxu0 0.0
    %4987 = vmatpush2.msra.mxu0 0.0
    %4988 = vmatprep.subr.mxu0 0.0
    %4989 = vmatpush2.msra.mxu0 0.0
    %4990 = vmatprep.subr.mxu0 0.0
    %4991 = vmatpush2.msra.mxu0 0.0
    %4992 = vmatprep.subr.mxu0 0.0
    %4993 = vmatpush2.msra.mxu0 0.0
    %4994 = vmatprep.mubr.f32.mxu0 0.0
    %4995 = vmatmul.mubr.f32.gmra.mxu0 %v4794
    %v4996 = vpop.f32.mrf.mxu0
    %v4997 = vadd.f32 %v448, %v4996
    %v4998 = vpop.f32.mrf.mxu0
    %v4999 = vadd.f32 %v452, %v4998
    %5000 = vdwg.mxu0
    %v5001 = vld [vmem:[#allocation9] sm:$0xff]
    %v5002 = vld [vmem:[#allocation9 + $0x8] sm:$0xff]
    %v5003 = vld [vmem:[#allocation9 + $0x10] sm:$0xff]
    %v5004 = vld [vmem:[#allocation9 + $0x18] sm:$0xff]
    %v5005 = vld [vmem:[#allocation9 + $0x20] sm:$0xff]
    %v5006 = vld [vmem:[#allocation9 + $0x28] sm:$0xff]
    %v5007 = vld [vmem:[#allocation9 + $0x30] sm:$0xff]
    %v5008 = vld [vmem:[#allocation9 + $0x38] sm:$0xff]
    %v5009 = vld [vmem:[#allocation9 + $0x40] sm:$0xff]
    %v5010 = vld [vmem:[#allocation9 + $0x48] sm:$0xff]
    %v5011 = vld [vmem:[#allocation9 + $0x50] sm:$0xff]
    %v5012 = vld [vmem:[#allocation9 + $0x58] sm:$0xff]
    %v5013 = vld [vmem:[#allocation9 + $0x60] sm:$0xff]
    %v5014 = vld [vmem:[#allocation9 + $0x68] sm:$0xff]
    %v5015 = vld [vmem:[#allocation9 + $0x70] sm:$0xff]
    %v5016 = vld [vmem:[#allocation9 + $0x78] sm:$0xff]
    %v5017 = vld [vmem:[#allocation9 + $0x80] sm:$0xff]
    %v5018 = vld [vmem:[#allocation9 + $0x88] sm:$0xff]
    %v5019 = vld [vmem:[#allocation9 + $0x90] sm:$0xff]
    %v5020 = vld [vmem:[#allocation9 + $0x98] sm:$0xff]
    %v5021 = vld [vmem:[#allocation9 + $0xa0] sm:$0xff]
    %v5022 = vld [vmem:[#allocation9 + $0xa8] sm:$0xff]
    %v5023 = vld [vmem:[#allocation9 + $0xb0] sm:$0xff]
    %v5024 = vld [vmem:[#allocation9 + $0xb8] sm:$0xff]
    %v5025 = vld [vmem:[#allocation9 + $0xc0] sm:$0xff]
    %v5026 = vld [vmem:[#allocation9 + $0xc8] sm:$0xff]
    %v5027 = vld [vmem:[#allocation9 + $0xd0] sm:$0xff]
    %v5028 = vld [vmem:[#allocation9 + $0xd8] sm:$0xff]
    %v5029 = vld [vmem:[#allocation9 + $0xe0] sm:$0xff]
    %v5030 = vld [vmem:[#allocation9 + $0xe8] sm:$0xff]
    %v5031 = vld [vmem:[#allocation9 + $0xf0] sm:$0xff]
    %v5032 = vld [vmem:[#allocation9 + $0xf8] sm:$0xff]
    %v5033 = vld [vmem:[#allocation9 + $0x100] sm:$0xff]
    %v5034 = vld [vmem:[#allocation9 + $0x108] sm:$0xff]
    %v5035 = vld [vmem:[#allocation9 + $0x110] sm:$0xff]
    %v5036 = vld [vmem:[#allocation9 + $0x118] sm:$0xff]
    %v5037 = vld [vmem:[#allocation9 + $0x120] sm:$0xff]
    %v5038 = vld [vmem:[#allocation9 + $0x128] sm:$0xff]
    %v5039 = vld [vmem:[#allocation9 + $0x130] sm:$0xff]
    %v5040 = vld [vmem:[#allocation9 + $0x138] sm:$0xff]
    %v5041 = vld [vmem:[#allocation9 + $0x140] sm:$0xff]
    %v5042 = vld [vmem:[#allocation9 + $0x148] sm:$0xff]
    %v5043 = vld [vmem:[#allocation9 + $0x150] sm:$0xff]
    %v5044 = vld [vmem:[#allocation9 + $0x158] sm:$0xff]
    %v5045 = vld [vmem:[#allocation9 + $0x160] sm:$0xff]
    %v5046 = vld [vmem:[#allocation9 + $0x168] sm:$0xff]
    %v5047 = vld [vmem:[#allocation9 + $0x170] sm:$0xff]
    %v5048 = vld [vmem:[#allocation9 + $0x178] sm:$0xff]
    %v5049 = vld [vmem:[#allocation9 + $0x180] sm:$0xff]
    %v5050 = vld [vmem:[#allocation9 + $0x188] sm:$0xff]
    %v5051 = vld [vmem:[#allocation9 + $0x190] sm:$0xff]
    %v5052 = vld [vmem:[#allocation9 + $0x198] sm:$0xff]
    %v5053 = vld [vmem:[#allocation9 + $0x1a0] sm:$0xff]
    %v5054 = vld [vmem:[#allocation9 + $0x1a8] sm:$0xff]
    %v5055 = vld [vmem:[#allocation9 + $0x1b0] sm:$0xff]
    %v5056 = vld [vmem:[#allocation9 + $0x1b8] sm:$0xff]
    %v5057 = vld [vmem:[#allocation9 + $0x1c0] sm:$0xff]
    %v5058 = vld [vmem:[#allocation9 + $0x1c8] sm:$0xff]
    %v5059 = vld [vmem:[#allocation9 + $0x1d0] sm:$0xff]
    %v5060 = vld [vmem:[#allocation9 + $0x1d8] sm:$0xff]
    %v5061 = vld [vmem:[#allocation9 + $0x1e0] sm:$0xff]
    %v5062 = vld [vmem:[#allocation9 + $0x1e8] sm:$0xff]
    %v5063 = vld [vmem:[#allocation9 + $0x1f0] sm:$0xff]
    %v5064 = vld [vmem:[#allocation9 + $0x1f8] sm:$0xff]
    %5065 = vmatprep.subr.mxu0 %v5062
    %5066 = vmatpush1.msra.mxu0 %v5061
    %5067 = vmatprep.subr.mxu0 %v5058
    %5068 = vmatpush1.msra.mxu0 %v5057
    %5069 = vmatprep.subr.mxu0 %v5054
    %5070 = vmatpush1.msra.mxu0 %v5053
    %5071 = vmatprep.subr.mxu0 %v5050
    %5072 = vmatpush1.msra.mxu0 %v5049
    %5073 = vmatprep.subr.mxu0 %v5046
    %5074 = vmatpush1.msra.mxu0 %v5045
    %5075 = vmatprep.subr.mxu0 %v5042
    %5076 = vmatpush1.msra.mxu0 %v5041
    %5077 = vmatprep.subr.mxu0 %v5038
    %5078 = vmatpush1.msra.mxu0 %v5037
    %5079 = vmatprep.subr.mxu0 %v5034
    %5080 = vmatpush1.msra.mxu0 %v5033
    %5081 = vmatprep.subr.mxu0 %v5030
    %5082 = vmatpush1.msra.mxu0 %v5029
    %5083 = vmatprep.subr.mxu0 %v5026
    %5084 = vmatpush1.msra.mxu0 %v5025
    %5085 = vmatprep.subr.mxu0 %v5022
    %5086 = vmatpush1.msra.mxu0 %v5021
    %5087 = vmatprep.subr.mxu0 %v5018
    %5088 = vmatpush1.msra.mxu0 %v5017
    %5089 = vmatprep.subr.mxu0 %v5014
    %5090 = vmatpush1.msra.mxu0 %v5013
    %5091 = vmatprep.subr.mxu0 %v5010
    %5092 = vmatpush1.msra.mxu0 %v5009
    %5093 = vmatprep.subr.mxu0 %v5006
    %5094 = vmatpush1.msra.mxu0 %v5005
    %5095 = vmatprep.subr.mxu0 %v5002
    %5096 = vmatpush1.msra.mxu0 %v5001
    %5097 = vmatprep.subr.mxu0 0.0
    %5098 = vmatpush2.msra.mxu0 0.0
    %5099 = vmatprep.subr.mxu0 0.0
    %5100 = vmatpush2.msra.mxu0 0.0
    %5101 = vmatprep.subr.mxu0 0.0
    %5102 = vmatpush2.msra.mxu0 0.0
    %5103 = vmatprep.subr.mxu0 0.0
    %5104 = vmatpush2.msra.mxu0 0.0
    %5105 = vmatprep.subr.mxu0 0.0
    %5106 = vmatpush2.msra.mxu0 0.0
    %5107 = vmatprep.subr.mxu0 0.0
    %5108 = vmatpush2.msra.mxu0 0.0
    %5109 = vmatprep.subr.mxu0 0.0
    %5110 = vmatpush2.msra.mxu0 0.0
    %5111 = vmatprep.subr.mxu0 0.0
    %5112 = vmatpush2.msra.mxu0 0.0
    %5113 = vmatprep.subr.mxu0 0.0
    %5114 = vmatpush2.msra.mxu0 0.0
    %5115 = vmatprep.subr.mxu0 0.0
    %5116 = vmatpush2.msra.mxu0 0.0
    %5117 = vmatprep.subr.mxu0 0.0
    %5118 = vmatpush2.msra.mxu0 0.0
    %5119 = vmatprep.subr.mxu0 0.0
    %5120 = vmatpush2.msra.mxu0 0.0
    %5121 = vmatprep.subr.mxu0 0.0
    %5122 = vmatpush2.msra.mxu0 0.0
    %5123 = vmatprep.subr.mxu0 0.0
    %5124 = vmatpush2.msra.mxu0 0.0
    %5125 = vmatprep.subr.mxu0 0.0
    %5126 = vmatpush2.msra.mxu0 0.0
    %5127 = vmatprep.subr.mxu0 0.0
    %5128 = vmatpush2.msra.mxu0 0.0
    %5129 = vmatprep.mubr.f32.mxu0 0.0
    %5130 = vmatmul.mubr.f32.gmra.mxu0 %v4551
    %v5131 = vpop.f32.mrf.mxu0
    %v5132 = vadd.f32 0.0, %v5131
    %v5133 = vpop.f32.mrf.mxu0
    %v5134 = vadd.f32 0.0, %v5133
    %5135 = vdwg.mxu0
    %5136 = vmatprep.subr.mxu0 %v5064
    %5137 = vmatpush1.msra.mxu0 %v5063
    %5138 = vmatprep.subr.mxu0 %v5060
    %5139 = vmatpush1.msra.mxu0 %v5059
    %5140 = vmatprep.subr.mxu0 %v5056
    %5141 = vmatpush1.msra.mxu0 %v5055
    %5142 = vmatprep.subr.mxu0 %v5052
    %5143 = vmatpush1.msra.mxu0 %v5051
    %5144 = vmatprep.subr.mxu0 %v5048
    %5145 = vmatpush1.msra.mxu0 %v5047
    %5146 = vmatprep.subr.mxu0 %v5044
    %5147 = vmatpush1.msra.mxu0 %v5043
    %5148 = vmatprep.subr.mxu0 %v5040
    %5149 = vmatpush1.msra.mxu0 %v5039
    %5150 = vmatprep.subr.mxu0 %v5036
    %5151 = vmatpush1.msra.mxu0 %v5035
    %5152 = vmatprep.subr.mxu0 %v5032
    %5153 = vmatpush1.msra.mxu0 %v5031
    %5154 = vmatprep.subr.mxu0 %v5028
    %5155 = vmatpush1.msra.mxu0 %v5027
    %5156 = vmatprep.subr.mxu0 %v5024
    %5157 = vmatpush1.msra.mxu0 %v5023
    %5158 = vmatprep.subr.mxu0 %v5020
    %5159 = vmatpush1.msra.mxu0 %v5019
    %5160 = vmatprep.subr.mxu0 %v5016
    %5161 = vmatpush1.msra.mxu0 %v5015
    %5162 = vmatprep.subr.mxu0 %v5012
    %5163 = vmatpush1.msra.mxu0 %v5011
    %5164 = vmatprep.subr.mxu0 %v5008
    %5165 = vmatpush1.msra.mxu0 %v5007
    %5166 = vmatprep.subr.mxu0 %v5004
    %5167 = vmatpush1.msra.mxu0 %v5003
    %5168 = vmatprep.subr.mxu0 0.0
    %5169 = vmatpush2.msra.mxu0 0.0
    %5170 = vmatprep.subr.mxu0 0.0
    %5171 = vmatpush2.msra.mxu0 0.0
    %5172 = vmatprep.subr.mxu0 0.0
    %5173 = vmatpush2.msra.mxu0 0.0
    %5174 = vmatprep.subr.mxu0 0.0
    %5175 = vmatpush2.msra.mxu0 0.0
    %5176 = vmatprep.subr.mxu0 0.0
    %5177 = vmatpush2.msra.mxu0 0.0
    %5178 = vmatprep.subr.mxu0 0.0
    %5179 = vmatpush2.msra.mxu0 0.0
    %5180 = vmatprep.subr.mxu0 0.0
    %5181 = vmatpush2.msra.mxu0 0.0
    %5182 = vmatprep.subr.mxu0 0.0
    %5183 = vmatpush2.msra.mxu0 0.0
    %5184 = vmatprep.subr.mxu0 0.0
    %5185 = vmatpush2.msra.mxu0 0.0
    %5186 = vmatprep.subr.mxu0 0.0
    %5187 = vmatpush2.msra.mxu0 0.0
    %5188 = vmatprep.subr.mxu0 0.0
    %5189 = vmatpush2.msra.mxu0 0.0
    %5190 = vmatprep.subr.mxu0 0.0
    %5191 = vmatpush2.msra.mxu0 0.0
    %5192 = vmatprep.subr.mxu0 0.0
    %5193 = vmatpush2.msra.mxu0 0.0
    %5194 = vmatprep.subr.mxu0 0.0
    %5195 = vmatpush2.msra.mxu0 0.0
    %5196 = vmatprep.subr.mxu0 0.0
    %5197 = vmatpush2.msra.mxu0 0.0
    %5198 = vmatprep.subr.mxu0 0.0
    %5199 = vmatpush2.msra.mxu0 0.0
    %5200 = vmatprep.mubr.f32.mxu0 0.0
    %5201 = vmatmul.mubr.f32.gmra.mxu0 %v4551
    %v5202 = vpop.f32.mrf.mxu0
    %v5203 = vadd.f32 0.0, %v5202
    %v5204 = vpop.f32.mrf.mxu0
    %v5205 = vadd.f32 0.0, %v5204
    %5206 = vdwg.mxu0
    %v5207 = vadd.f32 %v4926, %v5132
    %v5208 = vadd.f32 %v4928, %v5134
    %v5209 = vadd.f32 %v4997, %v5203
    %v5210 = vadd.f32 %v4999, %v5205
    %v5211 = vxor.u32 %v5207, 2147483648
    %v5212 = vxor.u32 %v5208, 2147483648
    %v5213 = vxor.u32 %v5209, 2147483648
    %v5214 = vmul.f32 %v5211, 1.442695
    %v5215 = vpow.pop %v5214
    %v5216 = vmul.f32 %v5212, 1.442695
    %v5217 = vpow.pop %v5216
    %v5218 = vmul.f32 %v5213, 1.442695
    %v5219 = vpow.pop %v5218
    %v5220 = vadd.f32 %v5215, 1.0
    %v5221 = vadd.f32 %v5217, 1.0
    %v5222 = vadd.f32 %v5219, 1.0
    %v5223 = vrcp.pop %v5220
    %v5224 = vmul.f32 1.0, %v5223
    %v5225 = vrcp.pop %v5221
    %v5226 = vmul.f32 1.0, %v5225
    %v5227 = vrcp.pop %v5222
    %v5228 = vmul.f32 1.0, %v5227
    %v5229 = vtanh.pop %v5210
    %v5230 = vmul.f32 %v5226, %v4549
    %v5231 = vmul.f32 %v5224, %v5229
    %v5232 = vadd.f32 %v5230, %v5231
    %v5233 = vtanh.pop %v5232
    %v5234 = vmul.f32 %v5228, %v5233
    %s5235 = scalar_lea.vmem [#allocation3], 48
    %5236 = vst [vmem:[%s5235] sm:$0xff] %v5234
    %s5237 = smul.u32 7, 4
    %s5238 = smul.addr %s5237, 8
    %s5239 = scalar_lea.vmem [#allocation2], %s5238
    %v5240 = vld [vmem:[%s5239] sm:$0xff]
    %v5241 = vld [vmem:[%s5239 + $0x8] sm:$0xff]
    %v5242 = vld [vmem:[%s5239 + $0x10] sm:$0xff]
    %v5243 = vld [vmem:[%s5239 + $0x18] sm:$0xff]
    %v5244 = vld [vmem:[#allocation4] sm:$0xff]
    %v5245 = vld [vmem:[#allocation4 + $0x8] sm:$0xff]
    %v5246 = vld [vmem:[#allocation4 + $0x10] sm:$0xff]
    %v5247 = vld [vmem:[#allocation4 + $0x18] sm:$0xff]
    %v5248 = vld [vmem:[#allocation4 + $0x20] sm:$0xff]
    %v5249 = vld [vmem:[#allocation4 + $0x28] sm:$0xff]
    %v5250 = vld [vmem:[#allocation4 + $0x30] sm:$0xff]
    %v5251 = vld [vmem:[#allocation4 + $0x38] sm:$0xff]
    %v5252 = vld [vmem:[#allocation4 + $0x40] sm:$0xff]
    %v5253 = vld [vmem:[#allocation4 + $0x48] sm:$0xff]
    %v5254 = vld [vmem:[#allocation4 + $0x50] sm:$0xff]
    %v5255 = vld [vmem:[#allocation4 + $0x58] sm:$0xff]
    %v5256 = vld [vmem:[#allocation4 + $0x60] sm:$0xff]
    %v5257 = vld [vmem:[#allocation4 + $0x68] sm:$0xff]
    %v5258 = vld [vmem:[#allocation4 + $0x70] sm:$0xff]
    %v5259 = vld [vmem:[#allocation4 + $0x78] sm:$0xff]
    %v5260 = vld [vmem:[#allocation4 + $0x80] sm:$0xff]
    %v5261 = vld [vmem:[#allocation4 + $0x88] sm:$0xff]
    %v5262 = vld [vmem:[#allocation4 + $0x90] sm:$0xff]
    %v5263 = vld [vmem:[#allocation4 + $0x98] sm:$0xff]
    %v5264 = vld [vmem:[#allocation4 + $0xa0] sm:$0xff]
    %v5265 = vld [vmem:[#allocation4 + $0xa8] sm:$0xff]
    %v5266 = vld [vmem:[#allocation4 + $0xb0] sm:$0xff]
    %v5267 = vld [vmem:[#allocation4 + $0xb8] sm:$0xff]
    %v5268 = vld [vmem:[#allocation4 + $0xc0] sm:$0xff]
    %v5269 = vld [vmem:[#allocation4 + $0xc8] sm:$0xff]
    %v5270 = vld [vmem:[#allocation4 + $0xd0] sm:$0xff]
    %v5271 = vld [vmem:[#allocation4 + $0xd8] sm:$0xff]
    %v5272 = vld [vmem:[#allocation4 + $0xe0] sm:$0xff]
    %v5273 = vld [vmem:[#allocation4 + $0xe8] sm:$0xff]
    %v5274 = vld [vmem:[#allocation4 + $0xf0] sm:$0xff]
    %v5275 = vld [vmem:[#allocation4 + $0xf8] sm:$0xff]
    %v5276 = vld [vmem:[#allocation4 + $0x100] sm:$0xff]
    %v5277 = vld [vmem:[#allocation4 + $0x108] sm:$0xff]
    %v5278 = vld [vmem:[#allocation4 + $0x110] sm:$0xff]
    %v5279 = vld [vmem:[#allocation4 + $0x118] sm:$0xff]
    %v5280 = vld [vmem:[#allocation4 + $0x120] sm:$0xff]
    %v5281 = vld [vmem:[#allocation4 + $0x128] sm:$0xff]
    %v5282 = vld [vmem:[#allocation4 + $0x130] sm:$0xff]
    %v5283 = vld [vmem:[#allocation4 + $0x138] sm:$0xff]
    %v5284 = vld [vmem:[#allocation4 + $0x140] sm:$0xff]
    %v5285 = vld [vmem:[#allocation4 + $0x148] sm:$0xff]
    %v5286 = vld [vmem:[#allocation4 + $0x150] sm:$0xff]
    %v5287 = vld [vmem:[#allocation4 + $0x158] sm:$0xff]
    %v5288 = vld [vmem:[#allocation4 + $0x160] sm:$0xff]
    %v5289 = vld [vmem:[#allocation4 + $0x168] sm:$0xff]
    %v5290 = vld [vmem:[#allocation4 + $0x170] sm:$0xff]
    %v5291 = vld [vmem:[#allocation4 + $0x178] sm:$0xff]
    %v5292 = vld [vmem:[#allocation4 + $0x180] sm:$0xff]
    %v5293 = vld [vmem:[#allocation4 + $0x188] sm:$0xff]
    %v5294 = vld [vmem:[#allocation4 + $0x190] sm:$0xff]
    %v5295 = vld [vmem:[#allocation4 + $0x198] sm:$0xff]
    %v5296 = vld [vmem:[#allocation4 + $0x1a0] sm:$0xff]
    %v5297 = vld [vmem:[#allocation4 + $0x1a8] sm:$0xff]
    %v5298 = vld [vmem:[#allocation4 + $0x1b0] sm:$0xff]
    %v5299 = vld [vmem:[#allocation4 + $0x1b8] sm:$0xff]
    %v5300 = vld [vmem:[#allocation4 + $0x1c0] sm:$0xff]
    %v5301 = vld [vmem:[#allocation4 + $0x1c8] sm:$0xff]
    %v5302 = vld [vmem:[#allocation4 + $0x1d0] sm:$0xff]
    %v5303 = vld [vmem:[#allocation4 + $0x1d8] sm:$0xff]
    %v5304 = vld [vmem:[#allocation4 + $0x1e0] sm:$0xff]
    %v5305 = vld [vmem:[#allocation4 + $0x1e8] sm:$0xff]
    %v5306 = vld [vmem:[#allocation4 + $0x1f0] sm:$0xff]
    %v5307 = vld [vmem:[#allocation4 + $0x1f8] sm:$0xff]
    %5308 = vmatprep.subr.mxu0 %v5305
    %5309 = vmatpush1.msra.mxu0 %v5304
    %5310 = vmatprep.subr.mxu0 %v5301
    %5311 = vmatpush1.msra.mxu0 %v5300
    %5312 = vmatprep.subr.mxu0 %v5297
    %5313 = vmatpush1.msra.mxu0 %v5296
    %5314 = vmatprep.subr.mxu0 %v5293
    %5315 = vmatpush1.msra.mxu0 %v5292
    %5316 = vmatprep.subr.mxu0 %v5289
    %5317 = vmatpush1.msra.mxu0 %v5288
    %5318 = vmatprep.subr.mxu0 %v5285
    %5319 = vmatpush1.msra.mxu0 %v5284
    %5320 = vmatprep.subr.mxu0 %v5281
    %5321 = vmatpush1.msra.mxu0 %v5280
    %5322 = vmatprep.subr.mxu0 %v5277
    %5323 = vmatpush1.msra.mxu0 %v5276
    %5324 = vmatprep.subr.mxu0 %v5273
    %5325 = vmatpush1.msra.mxu0 %v5272
    %5326 = vmatprep.subr.mxu0 %v5269
    %5327 = vmatpush1.msra.mxu0 %v5268
    %5328 = vmatprep.subr.mxu0 %v5265
    %5329 = vmatpush1.msra.mxu0 %v5264
    %5330 = vmatprep.subr.mxu0 %v5261
    %5331 = vmatpush1.msra.mxu0 %v5260
    %5332 = vmatprep.subr.mxu0 %v5257
    %5333 = vmatpush1.msra.mxu0 %v5256
    %5334 = vmatprep.subr.mxu0 %v5253
    %5335 = vmatpush1.msra.mxu0 %v5252
    %5336 = vmatprep.subr.mxu0 %v5249
    %5337 = vmatpush1.msra.mxu0 %v5248
    %5338 = vmatprep.subr.mxu0 %v5245
    %5339 = vmatpush1.msra.mxu0 %v5244
    %5340 = vmatprep.subr.mxu0 0.0
    %5341 = vmatpush2.msra.mxu0 0.0
    %5342 = vmatprep.subr.mxu0 0.0
    %5343 = vmatpush2.msra.mxu0 0.0
    %5344 = vmatprep.subr.mxu0 0.0
    %5345 = vmatpush2.msra.mxu0 0.0
    %5346 = vmatprep.subr.mxu0 0.0
    %5347 = vmatpush2.msra.mxu0 0.0
    %5348 = vmatprep.subr.mxu0 0.0
    %5349 = vmatpush2.msra.mxu0 0.0
    %5350 = vmatprep.subr.mxu0 0.0
    %5351 = vmatpush2.msra.mxu0 0.0
    %5352 = vmatprep.subr.mxu0 0.0
    %5353 = vmatpush2.msra.mxu0 0.0
    %5354 = vmatprep.subr.mxu0 0.0
    %5355 = vmatpush2.msra.mxu0 0.0
    %5356 = vmatprep.subr.mxu0 0.0
    %5357 = vmatpush2.msra.mxu0 0.0
    %5358 = vmatprep.subr.mxu0 0.0
    %5359 = vmatpush2.msra.mxu0 0.0
    %5360 = vmatprep.subr.mxu0 0.0
    %5361 = vmatpush2.msra.mxu0 0.0
    %5362 = vmatprep.subr.mxu0 0.0
    %5363 = vmatpush2.msra.mxu0 0.0
    %5364 = vmatprep.subr.mxu0 0.0
    %5365 = vmatpush2.msra.mxu0 0.0
    %5366 = vmatprep.subr.mxu0 0.0
    %5367 = vmatpush2.msra.mxu0 0.0
    %5368 = vmatprep.subr.mxu0 0.0
    %5369 = vmatpush2.msra.mxu0 0.0
    %5370 = vmatprep.subr.mxu0 0.0
    %5371 = vmatpush2.msra.mxu0 0.0
    %5372 = vmatprep.mubr.f32.mxu0 0.0
    %5373 = vmatmul.mubr.f32.gmra.mxu0 %v4794
    %v5374 = vpop.f32.mrf.mxu0
    %v5375 = vadd.f32 0.0, %v5374
    %v5376 = vpop.f32.mrf.mxu0
    %v5377 = vadd.f32 0.0, %v5376
    %5378 = vdwg.mxu0
    %5379 = vmatprep.subr.mxu0 %v5307
    %5380 = vmatpush1.msra.mxu0 %v5306
    %5381 = vmatprep.subr.mxu0 %v5303
    %5382 = vmatpush1.msra.mxu0 %v5302
    %5383 = vmatprep.subr.mxu0 %v5299
    %5384 = vmatpush1.msra.mxu0 %v5298
    %5385 = vmatprep.subr.mxu0 %v5295
    %5386 = vmatpush1.msra.mxu0 %v5294
    %5387 = vmatprep.subr.mxu0 %v5291
    %5388 = vmatpush1.msra.mxu0 %v5290
    %5389 = vmatprep.subr.mxu0 %v5287
    %5390 = vmatpush1.msra.mxu0 %v5286
    %5391 = vmatprep.subr.mxu0 %v5283
    %5392 = vmatpush1.msra.mxu0 %v5282
    %5393 = vmatprep.subr.mxu0 %v5279
    %5394 = vmatpush1.msra.mxu0 %v5278
    %5395 = vmatprep.subr.mxu0 %v5275
    %5396 = vmatpush1.msra.mxu0 %v5274
    %5397 = vmatprep.subr.mxu0 %v5271
    %5398 = vmatpush1.msra.mxu0 %v5270
    %5399 = vmatprep.subr.mxu0 %v5267
    %5400 = vmatpush1.msra.mxu0 %v5266
    %5401 = vmatprep.subr.mxu0 %v5263
    %5402 = vmatpush1.msra.mxu0 %v5262
    %5403 = vmatprep.subr.mxu0 %v5259
    %5404 = vmatpush1.msra.mxu0 %v5258
    %5405 = vmatprep.subr.mxu0 %v5255
    %5406 = vmatpush1.msra.mxu0 %v5254
    %5407 = vmatprep.subr.mxu0 %v5251
    %5408 = vmatpush1.msra.mxu0 %v5250
    %5409 = vmatprep.subr.mxu0 %v5247
    %5410 = vmatpush1.msra.mxu0 %v5246
    %5411 = vmatprep.subr.mxu0 0.0
    %5412 = vmatpush2.msra.mxu0 0.0
    %5413 = vmatprep.subr.mxu0 0.0
    %5414 = vmatpush2.msra.mxu0 0.0
    %5415 = vmatprep.subr.mxu0 0.0
    %5416 = vmatpush2.msra.mxu0 0.0
    %5417 = vmatprep.subr.mxu0 0.0
    %5418 = vmatpush2.msra.mxu0 0.0
    %5419 = vmatprep.subr.mxu0 0.0
    %5420 = vmatpush2.msra.mxu0 0.0
    %5421 = vmatprep.subr.mxu0 0.0
    %5422 = vmatpush2.msra.mxu0 0.0
    %5423 = vmatprep.subr.mxu0 0.0
    %5424 = vmatpush2.msra.mxu0 0.0
    %5425 = vmatprep.subr.mxu0 0.0
    %5426 = vmatpush2.msra.mxu0 0.0
    %5427 = vmatprep.subr.mxu0 0.0
    %5428 = vmatpush2.msra.mxu0 0.0
    %5429 = vmatprep.subr.mxu0 0.0
    %5430 = vmatpush2.msra.mxu0 0.0
    %5431 = vmatprep.subr.mxu0 0.0
    %5432 = vmatpush2.msra.mxu0 0.0
    %5433 = vmatprep.subr.mxu0 0.0
    %5434 = vmatpush2.msra.mxu0 0.0
    %5435 = vmatprep.subr.mxu0 0.0
    %5436 = vmatpush2.msra.mxu0 0.0
    %5437 = vmatprep.subr.mxu0 0.0
    %5438 = vmatpush2.msra.mxu0 0.0
    %5439 = vmatprep.subr.mxu0 0.0
    %5440 = vmatpush2.msra.mxu0 0.0
    %5441 = vmatprep.subr.mxu0 0.0
    %5442 = vmatpush2.msra.mxu0 0.0
    %5443 = vmatprep.mubr.f32.mxu0 0.0
    %5444 = vmatmul.mubr.f32.gmra.mxu0 %v4794
    %v5445 = vpop.f32.mrf.mxu0
    %v5446 = vadd.f32 0.0, %v5445
    %v5447 = vpop.f32.mrf.mxu0
    %v5448 = vadd.f32 0.0, %v5447
    %5449 = vdwg.mxu0
    %v5450 = vadd.f32 %v5240, %v5375
    %v5451 = vadd.f32 %v5241, %v5377
    %v5452 = vadd.f32 %v5242, %v5446
    %v5453 = vadd.f32 %v5243, %v5448
    %v5454 = vxor.u32 %v5450, 2147483648
    %v5455 = vxor.u32 %v5451, 2147483648
    %v5456 = vxor.u32 %v5452, 2147483648
    %v5457 = vmul.f32 %v5454, 1.442695
    %v5458 = vpow.pop %v5457
    %v5459 = vmul.f32 %v5455, 1.442695
    %v5460 = vpow.pop %v5459
    %v5461 = vmul.f32 %v5456, 1.442695
    %v5462 = vpow.pop %v5461
    %v5463 = vadd.f32 %v5458, 1.0
    %v5464 = vadd.f32 %v5460, 1.0
    %v5465 = vadd.f32 %v5462, 1.0
    %v5466 = vrcp.pop %v5463
    %v5467 = vmul.f32 1.0, %v5466
    %v5468 = vrcp.pop %v5464
    %v5469 = vmul.f32 1.0, %v5468
    %v5470 = vrcp.pop %v5465
    %v5471 = vmul.f32 1.0, %v5470
    %v5472 = vtanh.pop %v5453
    %v5473 = vmul.f32 %v5469, %v4792
    %v5474 = vmul.f32 %v5467, %v5472
    %v5475 = vadd.f32 %v5473, %v5474
    %v5476 = vtanh.pop %v5475
    %v5477 = vmul.f32 %v5471, %v5476
    %v5478 = vld [vmem:[#allocation7] sm:$0xff]
    %v5479 = vld [vmem:[#allocation7 + $0x8] sm:$0xff]
    %v5480 = vld [vmem:[#allocation7 + $0x10] sm:$0xff]
    %v5481 = vld [vmem:[#allocation7 + $0x18] sm:$0xff]
    %v5482 = vld [vmem:[#allocation7 + $0x20] sm:$0xff]
    %v5483 = vld [vmem:[#allocation7 + $0x28] sm:$0xff]
    %v5484 = vld [vmem:[#allocation7 + $0x30] sm:$0xff]
    %v5485 = vld [vmem:[#allocation7 + $0x38] sm:$0xff]
    %v5486 = vld [vmem:[#allocation7 + $0x40] sm:$0xff]
    %v5487 = vld [vmem:[#allocation7 + $0x48] sm:$0xff]
    %v5488 = vld [vmem:[#allocation7 + $0x50] sm:$0xff]
    %v5489 = vld [vmem:[#allocation7 + $0x58] sm:$0xff]
    %v5490 = vld [vmem:[#allocation7 + $0x60] sm:$0xff]
    %v5491 = vld [vmem:[#allocation7 + $0x68] sm:$0xff]
    %v5492 = vld [vmem:[#allocation7 + $0x70] sm:$0xff]
    %v5493 = vld [vmem:[#allocation7 + $0x78] sm:$0xff]
    %v5494 = vld [vmem:[#allocation7 + $0x80] sm:$0xff]
    %v5495 = vld [vmem:[#allocation7 + $0x88] sm:$0xff]
    %v5496 = vld [vmem:[#allocation7 + $0x90] sm:$0xff]
    %v5497 = vld [vmem:[#allocation7 + $0x98] sm:$0xff]
    %v5498 = vld [vmem:[#allocation7 + $0xa0] sm:$0xff]
    %v5499 = vld [vmem:[#allocation7 + $0xa8] sm:$0xff]
    %v5500 = vld [vmem:[#allocation7 + $0xb0] sm:$0xff]
    %v5501 = vld [vmem:[#allocation7 + $0xb8] sm:$0xff]
    %v5502 = vld [vmem:[#allocation7 + $0xc0] sm:$0xff]
    %v5503 = vld [vmem:[#allocation7 + $0xc8] sm:$0xff]
    %v5504 = vld [vmem:[#allocation7 + $0xd0] sm:$0xff]
    %v5505 = vld [vmem:[#allocation7 + $0xd8] sm:$0xff]
    %v5506 = vld [vmem:[#allocation7 + $0xe0] sm:$0xff]
    %v5507 = vld [vmem:[#allocation7 + $0xe8] sm:$0xff]
    %v5508 = vld [vmem:[#allocation7 + $0xf0] sm:$0xff]
    %v5509 = vld [vmem:[#allocation7 + $0xf8] sm:$0xff]
    %v5510 = vld [vmem:[#allocation7 + $0x100] sm:$0xff]
    %v5511 = vld [vmem:[#allocation7 + $0x108] sm:$0xff]
    %v5512 = vld [vmem:[#allocation7 + $0x110] sm:$0xff]
    %v5513 = vld [vmem:[#allocation7 + $0x118] sm:$0xff]
    %v5514 = vld [vmem:[#allocation7 + $0x120] sm:$0xff]
    %v5515 = vld [vmem:[#allocation7 + $0x128] sm:$0xff]
    %v5516 = vld [vmem:[#allocation7 + $0x130] sm:$0xff]
    %v5517 = vld [vmem:[#allocation7 + $0x138] sm:$0xff]
    %v5518 = vld [vmem:[#allocation7 + $0x140] sm:$0xff]
    %v5519 = vld [vmem:[#allocation7 + $0x148] sm:$0xff]
    %v5520 = vld [vmem:[#allocation7 + $0x150] sm:$0xff]
    %v5521 = vld [vmem:[#allocation7 + $0x158] sm:$0xff]
    %v5522 = vld [vmem:[#allocation7 + $0x160] sm:$0xff]
    %v5523 = vld [vmem:[#allocation7 + $0x168] sm:$0xff]
    %v5524 = vld [vmem:[#allocation7 + $0x170] sm:$0xff]
    %v5525 = vld [vmem:[#allocation7 + $0x178] sm:$0xff]
    %v5526 = vld [vmem:[#allocation7 + $0x180] sm:$0xff]
    %v5527 = vld [vmem:[#allocation7 + $0x188] sm:$0xff]
    %v5528 = vld [vmem:[#allocation7 + $0x190] sm:$0xff]
    %v5529 = vld [vmem:[#allocation7 + $0x198] sm:$0xff]
    %v5530 = vld [vmem:[#allocation7 + $0x1a0] sm:$0xff]
    %v5531 = vld [vmem:[#allocation7 + $0x1a8] sm:$0xff]
    %v5532 = vld [vmem:[#allocation7 + $0x1b0] sm:$0xff]
    %v5533 = vld [vmem:[#allocation7 + $0x1b8] sm:$0xff]
    %v5534 = vld [vmem:[#allocation7 + $0x1c0] sm:$0xff]
    %v5535 = vld [vmem:[#allocation7 + $0x1c8] sm:$0xff]
    %v5536 = vld [vmem:[#allocation7 + $0x1d0] sm:$0xff]
    %v5537 = vld [vmem:[#allocation7 + $0x1d8] sm:$0xff]
    %v5538 = vld [vmem:[#allocation7 + $0x1e0] sm:$0xff]
    %v5539 = vld [vmem:[#allocation7 + $0x1e8] sm:$0xff]
    %v5540 = vld [vmem:[#allocation7 + $0x1f0] sm:$0xff]
    %v5541 = vld [vmem:[#allocation7 + $0x1f8] sm:$0xff]
    %5542 = vmatprep.subr.mxu0 %v5539
    %5543 = vmatpush1.msra.mxu0 %v5538
    %5544 = vmatprep.subr.mxu0 %v5535
    %5545 = vmatpush1.msra.mxu0 %v5534
    %5546 = vmatprep.subr.mxu0 %v5531
    %5547 = vmatpush1.msra.mxu0 %v5530
    %5548 = vmatprep.subr.mxu0 %v5527
    %5549 = vmatpush1.msra.mxu0 %v5526
    %5550 = vmatprep.subr.mxu0 %v5523
    %5551 = vmatpush1.msra.mxu0 %v5522
    %5552 = vmatprep.subr.mxu0 %v5519
    %5553 = vmatpush1.msra.mxu0 %v5518
    %5554 = vmatprep.subr.mxu0 %v5515
    %5555 = vmatpush1.msra.mxu0 %v5514
    %5556 = vmatprep.subr.mxu0 %v5511
    %5557 = vmatpush1.msra.mxu0 %v5510
    %5558 = vmatprep.subr.mxu0 %v5507
    %5559 = vmatpush1.msra.mxu0 %v5506
    %5560 = vmatprep.subr.mxu0 %v5503
    %5561 = vmatpush1.msra.mxu0 %v5502
    %5562 = vmatprep.subr.mxu0 %v5499
    %5563 = vmatpush1.msra.mxu0 %v5498
    %5564 = vmatprep.subr.mxu0 %v5495
    %5565 = vmatpush1.msra.mxu0 %v5494
    %5566 = vmatprep.subr.mxu0 %v5491
    %5567 = vmatpush1.msra.mxu0 %v5490
    %5568 = vmatprep.subr.mxu0 %v5487
    %5569 = vmatpush1.msra.mxu0 %v5486
    %5570 = vmatprep.subr.mxu0 %v5483
    %5571 = vmatpush1.msra.mxu0 %v5482
    %5572 = vmatprep.subr.mxu0 %v5479
    %5573 = vmatpush1.msra.mxu0 %v5478
    %5574 = vmatprep.subr.mxu0 0.0
    %5575 = vmatpush2.msra.mxu0 0.0
    %5576 = vmatprep.subr.mxu0 0.0
    %5577 = vmatpush2.msra.mxu0 0.0
    %5578 = vmatprep.subr.mxu0 0.0
    %5579 = vmatpush2.msra.mxu0 0.0
    %5580 = vmatprep.subr.mxu0 0.0
    %5581 = vmatpush2.msra.mxu0 0.0
    %5582 = vmatprep.subr.mxu0 0.0
    %5583 = vmatpush2.msra.mxu0 0.0
    %5584 = vmatprep.subr.mxu0 0.0
    %5585 = vmatpush2.msra.mxu0 0.0
    %5586 = vmatprep.subr.mxu0 0.0
    %5587 = vmatpush2.msra.mxu0 0.0
    %5588 = vmatprep.subr.mxu0 0.0
    %5589 = vmatpush2.msra.mxu0 0.0
    %5590 = vmatprep.subr.mxu0 0.0
    %5591 = vmatpush2.msra.mxu0 0.0
    %5592 = vmatprep.subr.mxu0 0.0
    %5593 = vmatpush2.msra.mxu0 0.0
    %5594 = vmatprep.subr.mxu0 0.0
    %5595 = vmatpush2.msra.mxu0 0.0
    %5596 = vmatprep.subr.mxu0 0.0
    %5597 = vmatpush2.msra.mxu0 0.0
    %5598 = vmatprep.subr.mxu0 0.0
    %5599 = vmatpush2.msra.mxu0 0.0
    %5600 = vmatprep.subr.mxu0 0.0
    %5601 = vmatpush2.msra.mxu0 0.0
    %5602 = vmatprep.subr.mxu0 0.0
    %5603 = vmatpush2.msra.mxu0 0.0
    %5604 = vmatprep.subr.mxu0 0.0
    %5605 = vmatpush2.msra.mxu0 0.0
    %5606 = vmatprep.mubr.f32.mxu0 0.0
    %5607 = vmatmul.mubr.f32.gmra.mxu0 %v5477
    %v5608 = vpop.f32.mrf.mxu0
    %v5609 = vadd.f32 %v440, %v5608
    %v5610 = vpop.f32.mrf.mxu0
    %v5611 = vadd.f32 %v444, %v5610
    %5612 = vdwg.mxu0
    %5613 = vmatprep.subr.mxu0 %v5541
    %5614 = vmatpush1.msra.mxu0 %v5540
    %5615 = vmatprep.subr.mxu0 %v5537
    %5616 = vmatpush1.msra.mxu0 %v5536
    %5617 = vmatprep.subr.mxu0 %v5533
    %5618 = vmatpush1.msra.mxu0 %v5532
    %5619 = vmatprep.subr.mxu0 %v5529
    %5620 = vmatpush1.msra.mxu0 %v5528
    %5621 = vmatprep.subr.mxu0 %v5525
    %5622 = vmatpush1.msra.mxu0 %v5524
    %5623 = vmatprep.subr.mxu0 %v5521
    %5624 = vmatpush1.msra.mxu0 %v5520
    %5625 = vmatprep.subr.mxu0 %v5517
    %5626 = vmatpush1.msra.mxu0 %v5516
    %5627 = vmatprep.subr.mxu0 %v5513
    %5628 = vmatpush1.msra.mxu0 %v5512
    %5629 = vmatprep.subr.mxu0 %v5509
    %5630 = vmatpush1.msra.mxu0 %v5508
    %5631 = vmatprep.subr.mxu0 %v5505
    %5632 = vmatpush1.msra.mxu0 %v5504
    %5633 = vmatprep.subr.mxu0 %v5501
    %5634 = vmatpush1.msra.mxu0 %v5500
    %5635 = vmatprep.subr.mxu0 %v5497
    %5636 = vmatpush1.msra.mxu0 %v5496
    %5637 = vmatprep.subr.mxu0 %v5493
    %5638 = vmatpush1.msra.mxu0 %v5492
    %5639 = vmatprep.subr.mxu0 %v5489
    %5640 = vmatpush1.msra.mxu0 %v5488
    %5641 = vmatprep.subr.mxu0 %v5485
    %5642 = vmatpush1.msra.mxu0 %v5484
    %5643 = vmatprep.subr.mxu0 %v5481
    %5644 = vmatpush1.msra.mxu0 %v5480
    %5645 = vmatprep.subr.mxu0 0.0
    %5646 = vmatpush2.msra.mxu0 0.0
    %5647 = vmatprep.subr.mxu0 0.0
    %5648 = vmatpush2.msra.mxu0 0.0
    %5649 = vmatprep.subr.mxu0 0.0
    %5650 = vmatpush2.msra.mxu0 0.0
    %5651 = vmatprep.subr.mxu0 0.0
    %5652 = vmatpush2.msra.mxu0 0.0
    %5653 = vmatprep.subr.mxu0 0.0
    %5654 = vmatpush2.msra.mxu0 0.0
    %5655 = vmatprep.subr.mxu0 0.0
    %5656 = vmatpush2.msra.mxu0 0.0
    %5657 = vmatprep.subr.mxu0 0.0
    %5658 = vmatpush2.msra.mxu0 0.0
    %5659 = vmatprep.subr.mxu0 0.0
    %5660 = vmatpush2.msra.mxu0 0.0
    %5661 = vmatprep.subr.mxu0 0.0
    %5662 = vmatpush2.msra.mxu0 0.0
    %5663 = vmatprep.subr.mxu0 0.0
    %5664 = vmatpush2.msra.mxu0 0.0
    %5665 = vmatprep.subr.mxu0 0.0
    %5666 = vmatpush2.msra.mxu0 0.0
    %5667 = vmatprep.subr.mxu0 0.0
    %5668 = vmatpush2.msra.mxu0 0.0
    %5669 = vmatprep.subr.mxu0 0.0
    %5670 = vmatpush2.msra.mxu0 0.0
    %5671 = vmatprep.subr.mxu0 0.0
    %5672 = vmatpush2.msra.mxu0 0.0
    %5673 = vmatprep.subr.mxu0 0.0
    %5674 = vmatpush2.msra.mxu0 0.0
    %5675 = vmatprep.subr.mxu0 0.0
    %5676 = vmatpush2.msra.mxu0 0.0
    %5677 = vmatprep.mubr.f32.mxu0 0.0
    %5678 = vmatmul.mubr.f32.gmra.mxu0 %v5477
    %v5679 = vpop.f32.mrf.mxu0
    %v5680 = vadd.f32 %v448, %v5679
    %v5681 = vpop.f32.mrf.mxu0
    %v5682 = vadd.f32 %v452, %v5681
    %5683 = vdwg.mxu0
    %v5684 = vld [vmem:[#allocation9] sm:$0xff]
    %v5685 = vld [vmem:[#allocation9 + $0x8] sm:$0xff]
    %v5686 = vld [vmem:[#allocation9 + $0x10] sm:$0xff]
    %v5687 = vld [vmem:[#allocation9 + $0x18] sm:$0xff]
    %v5688 = vld [vmem:[#allocation9 + $0x20] sm:$0xff]
    %v5689 = vld [vmem:[#allocation9 + $0x28] sm:$0xff]
    %v5690 = vld [vmem:[#allocation9 + $0x30] sm:$0xff]
    %v5691 = vld [vmem:[#allocation9 + $0x38] sm:$0xff]
    %v5692 = vld [vmem:[#allocation9 + $0x40] sm:$0xff]
    %v5693 = vld [vmem:[#allocation9 + $0x48] sm:$0xff]
    %v5694 = vld [vmem:[#allocation9 + $0x50] sm:$0xff]
    %v5695 = vld [vmem:[#allocation9 + $0x58] sm:$0xff]
    %v5696 = vld [vmem:[#allocation9 + $0x60] sm:$0xff]
    %v5697 = vld [vmem:[#allocation9 + $0x68] sm:$0xff]
    %v5698 = vld [vmem:[#allocation9 + $0x70] sm:$0xff]
    %v5699 = vld [vmem:[#allocation9 + $0x78] sm:$0xff]
    %v5700 = vld [vmem:[#allocation9 + $0x80] sm:$0xff]
    %v5701 = vld [vmem:[#allocation9 + $0x88] sm:$0xff]
    %v5702 = vld [vmem:[#allocation9 + $0x90] sm:$0xff]
    %v5703 = vld [vmem:[#allocation9 + $0x98] sm:$0xff]
    %v5704 = vld [vmem:[#allocation9 + $0xa0] sm:$0xff]
    %v5705 = vld [vmem:[#allocation9 + $0xa8] sm:$0xff]
    %v5706 = vld [vmem:[#allocation9 + $0xb0] sm:$0xff]
    %v5707 = vld [vmem:[#allocation9 + $0xb8] sm:$0xff]
    %v5708 = vld [vmem:[#allocation9 + $0xc0] sm:$0xff]
    %v5709 = vld [vmem:[#allocation9 + $0xc8] sm:$0xff]
    %v5710 = vld [vmem:[#allocation9 + $0xd0] sm:$0xff]
    %v5711 = vld [vmem:[#allocation9 + $0xd8] sm:$0xff]
    %v5712 = vld [vmem:[#allocation9 + $0xe0] sm:$0xff]
    %v5713 = vld [vmem:[#allocation9 + $0xe8] sm:$0xff]
    %v5714 = vld [vmem:[#allocation9 + $0xf0] sm:$0xff]
    %v5715 = vld [vmem:[#allocation9 + $0xf8] sm:$0xff]
    %v5716 = vld [vmem:[#allocation9 + $0x100] sm:$0xff]
    %v5717 = vld [vmem:[#allocation9 + $0x108] sm:$0xff]
    %v5718 = vld [vmem:[#allocation9 + $0x110] sm:$0xff]
    %v5719 = vld [vmem:[#allocation9 + $0x118] sm:$0xff]
    %v5720 = vld [vmem:[#allocation9 + $0x120] sm:$0xff]
    %v5721 = vld [vmem:[#allocation9 + $0x128] sm:$0xff]
    %v5722 = vld [vmem:[#allocation9 + $0x130] sm:$0xff]
    %v5723 = vld [vmem:[#allocation9 + $0x138] sm:$0xff]
    %v5724 = vld [vmem:[#allocation9 + $0x140] sm:$0xff]
    %v5725 = vld [vmem:[#allocation9 + $0x148] sm:$0xff]
    %v5726 = vld [vmem:[#allocation9 + $0x150] sm:$0xff]
    %v5727 = vld [vmem:[#allocation9 + $0x158] sm:$0xff]
    %v5728 = vld [vmem:[#allocation9 + $0x160] sm:$0xff]
    %v5729 = vld [vmem:[#allocation9 + $0x168] sm:$0xff]
    %v5730 = vld [vmem:[#allocation9 + $0x170] sm:$0xff]
    %v5731 = vld [vmem:[#allocation9 + $0x178] sm:$0xff]
    %v5732 = vld [vmem:[#allocation9 + $0x180] sm:$0xff]
    %v5733 = vld [vmem:[#allocation9 + $0x188] sm:$0xff]
    %v5734 = vld [vmem:[#allocation9 + $0x190] sm:$0xff]
    %v5735 = vld [vmem:[#allocation9 + $0x198] sm:$0xff]
    %v5736 = vld [vmem:[#allocation9 + $0x1a0] sm:$0xff]
    %v5737 = vld [vmem:[#allocation9 + $0x1a8] sm:$0xff]
    %v5738 = vld [vmem:[#allocation9 + $0x1b0] sm:$0xff]
    %v5739 = vld [vmem:[#allocation9 + $0x1b8] sm:$0xff]
    %v5740 = vld [vmem:[#allocation9 + $0x1c0] sm:$0xff]
    %v5741 = vld [vmem:[#allocation9 + $0x1c8] sm:$0xff]
    %v5742 = vld [vmem:[#allocation9 + $0x1d0] sm:$0xff]
    %v5743 = vld [vmem:[#allocation9 + $0x1d8] sm:$0xff]
    %v5744 = vld [vmem:[#allocation9 + $0x1e0] sm:$0xff]
    %v5745 = vld [vmem:[#allocation9 + $0x1e8] sm:$0xff]
    %v5746 = vld [vmem:[#allocation9 + $0x1f0] sm:$0xff]
    %v5747 = vld [vmem:[#allocation9 + $0x1f8] sm:$0xff]
    %5748 = vmatprep.subr.mxu0 %v5745
    %5749 = vmatpush1.msra.mxu0 %v5744
    %5750 = vmatprep.subr.mxu0 %v5741
    %5751 = vmatpush1.msra.mxu0 %v5740
    %5752 = vmatprep.subr.mxu0 %v5737
    %5753 = vmatpush1.msra.mxu0 %v5736
    %5754 = vmatprep.subr.mxu0 %v5733
    %5755 = vmatpush1.msra.mxu0 %v5732
    %5756 = vmatprep.subr.mxu0 %v5729
    %5757 = vmatpush1.msra.mxu0 %v5728
    %5758 = vmatprep.subr.mxu0 %v5725
    %5759 = vmatpush1.msra.mxu0 %v5724
    %5760 = vmatprep.subr.mxu0 %v5721
    %5761 = vmatpush1.msra.mxu0 %v5720
    %5762 = vmatprep.subr.mxu0 %v5717
    %5763 = vmatpush1.msra.mxu0 %v5716
    %5764 = vmatprep.subr.mxu0 %v5713
    %5765 = vmatpush1.msra.mxu0 %v5712
    %5766 = vmatprep.subr.mxu0 %v5709
    %5767 = vmatpush1.msra.mxu0 %v5708
    %5768 = vmatprep.subr.mxu0 %v5705
    %5769 = vmatpush1.msra.mxu0 %v5704
    %5770 = vmatprep.subr.mxu0 %v5701
    %5771 = vmatpush1.msra.mxu0 %v5700
    %5772 = vmatprep.subr.mxu0 %v5697
    %5773 = vmatpush1.msra.mxu0 %v5696
    %5774 = vmatprep.subr.mxu0 %v5693
    %5775 = vmatpush1.msra.mxu0 %v5692
    %5776 = vmatprep.subr.mxu0 %v5689
    %5777 = vmatpush1.msra.mxu0 %v5688
    %5778 = vmatprep.subr.mxu0 %v5685
    %5779 = vmatpush1.msra.mxu0 %v5684
    %5780 = vmatprep.subr.mxu0 0.0
    %5781 = vmatpush2.msra.mxu0 0.0
    %5782 = vmatprep.subr.mxu0 0.0
    %5783 = vmatpush2.msra.mxu0 0.0
    %5784 = vmatprep.subr.mxu0 0.0
    %5785 = vmatpush2.msra.mxu0 0.0
    %5786 = vmatprep.subr.mxu0 0.0
    %5787 = vmatpush2.msra.mxu0 0.0
    %5788 = vmatprep.subr.mxu0 0.0
    %5789 = vmatpush2.msra.mxu0 0.0
    %5790 = vmatprep.subr.mxu0 0.0
    %5791 = vmatpush2.msra.mxu0 0.0
    %5792 = vmatprep.subr.mxu0 0.0
    %5793 = vmatpush2.msra.mxu0 0.0
    %5794 = vmatprep.subr.mxu0 0.0
    %5795 = vmatpush2.msra.mxu0 0.0
    %5796 = vmatprep.subr.mxu0 0.0
    %5797 = vmatpush2.msra.mxu0 0.0
    %5798 = vmatprep.subr.mxu0 0.0
    %5799 = vmatpush2.msra.mxu0 0.0
    %5800 = vmatprep.subr.mxu0 0.0
    %5801 = vmatpush2.msra.mxu0 0.0
    %5802 = vmatprep.subr.mxu0 0.0
    %5803 = vmatpush2.msra.mxu0 0.0
    %5804 = vmatprep.subr.mxu0 0.0
    %5805 = vmatpush2.msra.mxu0 0.0
    %5806 = vmatprep.subr.mxu0 0.0
    %5807 = vmatpush2.msra.mxu0 0.0
    %5808 = vmatprep.subr.mxu0 0.0
    %5809 = vmatpush2.msra.mxu0 0.0
    %5810 = vmatprep.subr.mxu0 0.0
    %5811 = vmatpush2.msra.mxu0 0.0
    %5812 = vmatprep.mubr.f32.mxu0 0.0
    %5813 = vmatmul.mubr.f32.gmra.mxu0 %v5234
    %v5814 = vpop.f32.mrf.mxu0
    %v5815 = vadd.f32 0.0, %v5814
    %v5816 = vpop.f32.mrf.mxu0
    %v5817 = vadd.f32 0.0, %v5816
    %5818 = vdwg.mxu0
    %5819 = vmatprep.subr.mxu0 %v5747
    %5820 = vmatpush1.msra.mxu0 %v5746
    %5821 = vmatprep.subr.mxu0 %v5743
    %5822 = vmatpush1.msra.mxu0 %v5742
    %5823 = vmatprep.subr.mxu0 %v5739
    %5824 = vmatpush1.msra.mxu0 %v5738
    %5825 = vmatprep.subr.mxu0 %v5735
    %5826 = vmatpush1.msra.mxu0 %v5734
    %5827 = vmatprep.subr.mxu0 %v5731
    %5828 = vmatpush1.msra.mxu0 %v5730
    %5829 = vmatprep.subr.mxu0 %v5727
    %5830 = vmatpush1.msra.mxu0 %v5726
    %5831 = vmatprep.subr.mxu0 %v5723
    %5832 = vmatpush1.msra.mxu0 %v5722
    %5833 = vmatprep.subr.mxu0 %v5719
    %5834 = vmatpush1.msra.mxu0 %v5718
    %5835 = vmatprep.subr.mxu0 %v5715
    %5836 = vmatpush1.msra.mxu0 %v5714
    %5837 = vmatprep.subr.mxu0 %v5711
    %5838 = vmatpush1.msra.mxu0 %v5710
    %5839 = vmatprep.subr.mxu0 %v5707
    %5840 = vmatpush1.msra.mxu0 %v5706
    %5841 = vmatprep.subr.mxu0 %v5703
    %5842 = vmatpush1.msra.mxu0 %v5702
    %5843 = vmatprep.subr.mxu0 %v5699
    %5844 = vmatpush1.msra.mxu0 %v5698
    %5845 = vmatprep.subr.mxu0 %v5695
    %5846 = vmatpush1.msra.mxu0 %v5694
    %5847 = vmatprep.subr.mxu0 %v5691
    %5848 = vmatpush1.msra.mxu0 %v5690
    %5849 = vmatprep.subr.mxu0 %v5687
    %5850 = vmatpush1.msra.mxu0 %v5686
    %5851 = vmatprep.subr.mxu0 0.0
    %5852 = vmatpush2.msra.mxu0 0.0
    %5853 = vmatprep.subr.mxu0 0.0
    %5854 = vmatpush2.msra.mxu0 0.0
    %5855 = vmatprep.subr.mxu0 0.0
    %5856 = vmatpush2.msra.mxu0 0.0
    %5857 = vmatprep.subr.mxu0 0.0
    %5858 = vmatpush2.msra.mxu0 0.0
    %5859 = vmatprep.subr.mxu0 0.0
    %5860 = vmatpush2.msra.mxu0 0.0
    %5861 = vmatprep.subr.mxu0 0.0
    %5862 = vmatpush2.msra.mxu0 0.0
    %5863 = vmatprep.subr.mxu0 0.0
    %5864 = vmatpush2.msra.mxu0 0.0
    %5865 = vmatprep.subr.mxu0 0.0
    %5866 = vmatpush2.msra.mxu0 0.0
    %5867 = vmatprep.subr.mxu0 0.0
    %5868 = vmatpush2.msra.mxu0 0.0
    %5869 = vmatprep.subr.mxu0 0.0
    %5870 = vmatpush2.msra.mxu0 0.0
    %5871 = vmatprep.subr.mxu0 0.0
    %5872 = vmatpush2.msra.mxu0 0.0
    %5873 = vmatprep.subr.mxu0 0.0
    %5874 = vmatpush2.msra.mxu0 0.0
    %5875 = vmatprep.subr.mxu0 0.0
    %5876 = vmatpush2.msra.mxu0 0.0
    %5877 = vmatprep.subr.mxu0 0.0
    %5878 = vmatpush2.msra.mxu0 0.0
    %5879 = vmatprep.subr.mxu0 0.0
    %5880 = vmatpush2.msra.mxu0 0.0
    %5881 = vmatprep.subr.mxu0 0.0
    %5882 = vmatpush2.msra.mxu0 0.0
    %5883 = vmatprep.mubr.f32.mxu0 0.0
    %5884 = vmatmul.mubr.f32.gmra.mxu0 %v5234
    %v5885 = vpop.f32.mrf.mxu0
    %v5886 = vadd.f32 0.0, %v5885
    %v5887 = vpop.f32.mrf.mxu0
    %v5888 = vadd.f32 0.0, %v5887
    %5889 = vdwg.mxu0
    %v5890 = vadd.f32 %v5609, %v5815
    %v5891 = vadd.f32 %v5611, %v5817
    %v5892 = vadd.f32 %v5680, %v5886
    %v5893 = vadd.f32 %v5682, %v5888
    %v5894 = vxor.u32 %v5890, 2147483648
    %v5895 = vxor.u32 %v5891, 2147483648
    %v5896 = vxor.u32 %v5892, 2147483648
    %v5897 = vmul.f32 %v5894, 1.442695
    %v5898 = vpow.pop %v5897
    %v5899 = vmul.f32 %v5895, 1.442695
    %v5900 = vpow.pop %v5899
    %v5901 = vmul.f32 %v5896, 1.442695
    %v5902 = vpow.pop %v5901
    %v5903 = vadd.f32 %v5898, 1.0
    %v5904 = vadd.f32 %v5900, 1.0
    %v5905 = vadd.f32 %v5902, 1.0
    %v5906 = vrcp.pop %v5903
    %v5907 = vmul.f32 1.0, %v5906
    %v5908 = vrcp.pop %v5904
    %v5909 = vmul.f32 1.0, %v5908
    %v5910 = vrcp.pop %v5905
    %v5911 = vmul.f32 1.0, %v5910
    %v5912 = vtanh.pop %v5893
    %v5913 = vmul.f32 %v5909, %v5232
    %v5914 = vmul.f32 %v5907, %v5912
    %v5915 = vadd.f32 %v5913, %v5914
    %v5916 = vtanh.pop %v5915
    %v5917 = vmul.f32 %v5911, %v5916
    %s5918 = scalar_lea.vmem [#allocation3], 56
    %5919 = vst [vmem:[%s5918] sm:$0xff] %v5917
    %v5920 = vld [vmem:[#allocation3] sm:$0xff]
    %v5921 = vld [vmem:[#allocation3 + $0x8] sm:$0xff]
    %v5922 = vld [vmem:[#allocation3 + $0x10] sm:$0xff]
    %v5923 = vld [vmem:[#allocation3 + $0x18] sm:$0xff]
    %v5924 = vld [vmem:[#allocation3 + $0x20] sm:$0xff]
    %v5925 = vld [vmem:[#allocation3 + $0x28] sm:$0xff]
    %v5926 = vld [vmem:[#allocation3 + $0x30] sm:$0xff]
    %v5927 = vld [vmem:[#allocation3 + $0x38] sm:$0xff]
    %v5928 = vld [vmem:[#allocation10] sm:$0xff]
    %v5929 = vld [vmem:[#allocation10 + $0x8] sm:$0xff]
    %v5930 = vld [vmem:[#allocation10 + $0x10] sm:$0xff]
    %v5931 = vld [vmem:[#allocation10 + $0x18] sm:$0xff]
    %v5932 = vld [vmem:[#allocation10 + $0x20] sm:$0xff]
    %v5933 = vld [vmem:[#allocation10 + $0x28] sm:$0xff]
    %v5934 = vld [vmem:[#allocation10 + $0x30] sm:$0xff]
    %v5935 = vld [vmem:[#allocation10 + $0x38] sm:$0xff]
    %v5936 = vld [vmem:[#allocation10 + $0x40] sm:$0xff]
    %v5937 = vld [vmem:[#allocation10 + $0x48] sm:$0xff]
    %v5938 = vld [vmem:[#allocation10 + $0x50] sm:$0xff]
    %v5939 = vld [vmem:[#allocation10 + $0x58] sm:$0xff]
    %v5940 = vld [vmem:[#allocation10 + $0x60] sm:$0xff]
    %v5941 = vld [vmem:[#allocation10 + $0x68] sm:$0xff]
    %v5942 = vld [vmem:[#allocation10 + $0x70] sm:$0xff]
    %v5943 = vld [vmem:[#allocation10 + $0x78] sm:$0xff]
    %v5944 = vld [vmem:[%s8] sm:$0x1]
    %v5946 = vlaneseq
    %v5947 = vshrl.u32 %v5946, 7
    %v5948 = vsub.s32 0, %v5947
    %v5949 = vrot.slane %v5944, %v5948
    %5951 = vmatprep.subr.mxu0 0.0
    %5952 = vmatpush1.msra.mxu0 %v5943
    %5953 = vmatprep.subr.mxu0 0.0
    %5954 = vmatpush1.msra.mxu0 %v5942
    %5955 = vmatprep.subr.mxu0 0.0
    %5956 = vmatpush1.msra.mxu0 %v5941
    %5957 = vmatprep.subr.mxu0 0.0
    %5958 = vmatpush1.msra.mxu0 %v5940
    %5959 = vmatprep.subr.mxu0 0.0
    %5960 = vmatpush1.msra.mxu0 %v5939
    %5961 = vmatprep.subr.mxu0 0.0
    %5962 = vmatpush1.msra.mxu0 %v5938
    %5963 = vmatprep.subr.mxu0 0.0
    %5964 = vmatpush1.msra.mxu0 %v5937
    %5965 = vmatprep.subr.mxu0 0.0
    %5966 = vmatpush1.msra.mxu0 %v5936
    %5967 = vmatprep.subr.mxu0 0.0
    %5968 = vmatpush1.msra.mxu0 %v5935
    %5969 = vmatprep.subr.mxu0 0.0
    %5970 = vmatpush1.msra.mxu0 %v5934
    %5971 = vmatprep.subr.mxu0 0.0
    %5972 = vmatpush1.msra.mxu0 %v5933
    %5973 = vmatprep.subr.mxu0 0.0
    %5974 = vmatpush1.msra.mxu0 %v5932
    %5975 = vmatprep.subr.mxu0 0.0
    %5976 = vmatpush1.msra.mxu0 %v5931
    %5977 = vmatprep.subr.mxu0 0.0
    %5978 = vmatpush1.msra.mxu0 %v5930
    %5979 = vmatprep.subr.mxu0 0.0
    %5980 = vmatpush1.msra.mxu0 %v5929
    %5981 = vmatprep.subr.mxu0 0.0
    %5982 = vmatpush1.msra.mxu0 %v5928
    %5983 = vmatprep.subr.mxu0 0.0
    %5984 = vmatpush2.msra.mxu0 0.0
    %5985 = vmatprep.subr.mxu0 0.0
    %5986 = vmatpush2.msra.mxu0 0.0
    %5987 = vmatprep.subr.mxu0 0.0
    %5988 = vmatpush2.msra.mxu0 0.0
    %5989 = vmatprep.subr.mxu0 0.0
    %5990 = vmatpush2.msra.mxu0 0.0
    %5991 = vmatprep.subr.mxu0 0.0
    %5992 = vmatpush2.msra.mxu0 0.0
    %5993 = vmatprep.subr.mxu0 0.0
    %5994 = vmatpush2.msra.mxu0 0.0
    %5995 = vmatprep.subr.mxu0 0.0
    %5996 = vmatpush2.msra.mxu0 0.0
    %5997 = vmatprep.subr.mxu0 0.0
    %5998 = vmatpush2.msra.mxu0 0.0
    %5999 = vmatprep.subr.mxu0 0.0
    %6000 = vmatpush2.msra.mxu0 0.0
    %6001 = vmatprep.subr.mxu0 0.0
    %6002 = vmatpush2.msra.mxu0 0.0
    %6003 = vmatprep.subr.mxu0 0.0
    %6004 = vmatpush2.msra.mxu0 0.0
    %6005 = vmatprep.subr.mxu0 0.0
    %6006 = vmatpush2.msra.mxu0 0.0
    %6007 = vmatprep.subr.mxu0 0.0
    %6008 = vmatpush2.msra.mxu0 0.0
    %6009 = vmatprep.subr.mxu0 0.0
    %6010 = vmatpush2.msra.mxu0 0.0
    %6011 = vmatprep.subr.mxu0 0.0
    %6012 = vmatpush2.msra.mxu0 0.0
    %6013 = vmatprep.subr.mxu0 0.0
    %6014 = vmatpush2.msra.mxu0 0.0
    %6015 = vmatprep.mubr.f32.mxu0 0.0
    %6016 = vmatmul.mubr.f32.gmra.mxu0 %v5920
    %v6017 = vpop.f32.mrf.mxu0
    %v6018 = vadd.f32 %v5949, %v6017
    %v6019 = vpop.f32.mrf.mxu0
    %6020 = vmatprep.mubr.f32.mxu0 0.0
    %6021 = vmatmul.mubr.f32.gmra.mxu0 %v5921
    %v6022 = vpop.f32.mrf.mxu0
    %v6023 = vadd.f32 %v5949, %v6022
    %v6024 = vpop.f32.mrf.mxu0
    %6025 = vmatprep.mubr.f32.mxu0 0.0
    %6026 = vmatmul.mubr.f32.gmra.mxu0 %v5922
    %v6027 = vpop.f32.mrf.mxu0
    %v6028 = vadd.f32 %v5949, %v6027
    %v6029 = vpop.f32.mrf.mxu0
    %6030 = vmatprep.mubr.f32.mxu0 0.0
    %6031 = vmatmul.mubr.f32.gmra.mxu0 %v5923
    %v6032 = vpop.f32.mrf.mxu0
    %v6033 = vadd.f32 %v5949, %v6032
    %v6034 = vpop.f32.mrf.mxu0
    %6035 = vmatprep.mubr.f32.mxu0 0.0
    %6036 = vmatmul.mubr.f32.gmra.mxu0 %v5924
    %v6037 = vpop.f32.mrf.mxu0
    %v6038 = vadd.f32 %v5949, %v6037
    %v6039 = vpop.f32.mrf.mxu0
    %6040 = vmatprep.mubr.f32.mxu0 0.0
    %6041 = vmatmul.mubr.f32.gmra.mxu0 %v5925
    %v6042 = vpop.f32.mrf.mxu0
    %v6043 = vadd.f32 %v5949, %v6042
    %v6044 = vpop.f32.mrf.mxu0
    %6045 = vmatprep.mubr.f32.mxu0 0.0
    %6046 = vmatmul.mubr.f32.gmra.mxu0 %v5926
    %v6047 = vpop.f32.mrf.mxu0
    %v6048 = vadd.f32 %v5949, %v6047
    %v6049 = vpop.f32.mrf.mxu0
    %6050 = vmatprep.mubr.f32.mxu0 0.0
    %6051 = vmatmul.mubr.f32.gmra.mxu0 %v5927
    %v6052 = vpop.f32.mrf.mxu0
    %v6053 = vadd.f32 %v5949, %v6052
    %v6054 = vpop.f32.mrf.mxu0
    %6055 = vdwg.mxu0
    %v6056 = vtanh.pop %v6018
    %v6057 = vtanh.pop %v6023
    %v6058 = vtanh.pop %v6028
    %v6059 = vtanh.pop %v6033
    %v6060 = vtanh.pop %v6038
    %v6061 = vtanh.pop %v6043
    %v6062 = vtanh.pop %v6048
    %v6063 = vtanh.pop %v6053
    %v6064 = vld [vmem:[#allocation12] sm:$0xff]
    %v6065 = vld [vmem:[#allocation12 + $0x8] sm:$0xff]
    %v6066 = vld [vmem:[#allocation12 + $0x10] sm:$0xff]
    %v6067 = vld [vmem:[#allocation12 + $0x18] sm:$0xff]
    %v6068 = vld [vmem:[#allocation12 + $0x20] sm:$0xff]
    %v6069 = vld [vmem:[#allocation12 + $0x28] sm:$0xff]
    %v6070 = vld [vmem:[#allocation12 + $0x30] sm:$0xff]
    %v6071 = vld [vmem:[#allocation12 + $0x38] sm:$0xff]
    %v6072 = vld [vmem:[#allocation12 + $0x40] sm:$0xff]
    %v6073 = vld [vmem:[#allocation12 + $0x48] sm:$0xff]
    %v6074 = vld [vmem:[#allocation12 + $0x50] sm:$0xff]
    %v6075 = vld [vmem:[#allocation12 + $0x58] sm:$0xff]
    %v6076 = vld [vmem:[#allocation12 + $0x60] sm:$0xff]
    %v6077 = vld [vmem:[#allocation12 + $0x68] sm:$0xff]
    %v6078 = vld [vmem:[#allocation12 + $0x70] sm:$0xff]
    %v6079 = vld [vmem:[#allocation12 + $0x78] sm:$0xff]
    %v6080 = vld [vmem:[%s10] sm:$0x1]
    %v6082 = vlaneseq
    %v6083 = vshrl.u32 %v6082, 7
    %v6084 = vsub.s32 0, %v6083
    %v6085 = vrot.slane %v6080, %v6084
    %6087 = vmatprep.subr.mxu0 0.0
    %6088 = vmatpush1.msra.mxu0 %v6079
    %6089 = vmatprep.subr.mxu0 0.0
    %6090 = vmatpush1.msra.mxu0 %v6078
    %6091 = vmatprep.subr.mxu0 0.0
    %6092 = vmatpush1.msra.mxu0 %v6077
    %6093 = vmatprep.subr.mxu0 0.0
    %6094 = vmatpush1.msra.mxu0 %v6076
    %6095 = vmatprep.subr.mxu0 0.0
    %6096 = vmatpush1.msra.mxu0 %v6075
    %6097 = vmatprep.subr.mxu0 0.0
    %6098 = vmatpush1.msra.mxu0 %v6074
    %6099 = vmatprep.subr.mxu0 0.0
    %6100 = vmatpush1.msra.mxu0 %v6073
    %6101 = vmatprep.subr.mxu0 0.0
    %6102 = vmatpush1.msra.mxu0 %v6072
    %6103 = vmatprep.subr.mxu0 0.0
    %6104 = vmatpush1.msra.mxu0 %v6071
    %6105 = vmatprep.subr.mxu0 0.0
    %6106 = vmatpush1.msra.mxu0 %v6070
    %6107 = vmatprep.subr.mxu0 0.0
    %6108 = vmatpush1.msra.mxu0 %v6069
    %6109 = vmatprep.subr.mxu0 0.0
    %6110 = vmatpush1.msra.mxu0 %v6068
    %6111 = vmatprep.subr.mxu0 0.0
    %6112 = vmatpush1.msra.mxu0 %v6067
    %6113 = vmatprep.subr.mxu0 0.0
    %6114 = vmatpush1.msra.mxu0 %v6066
    %6115 = vmatprep.subr.mxu0 0.0
    %6116 = vmatpush1.msra.mxu0 %v6065
    %6117 = vmatprep.subr.mxu0 0.0
    %6118 = vmatpush1.msra.mxu0 %v6064
    %6119 = vmatprep.subr.mxu0 0.0
    %6120 = vmatpush2.msra.mxu0 0.0
    %6121 = vmatprep.subr.mxu0 0.0
    %6122 = vmatpush2.msra.mxu0 0.0
    %6123 = vmatprep.subr.mxu0 0.0
    %6124 = vmatpush2.msra.mxu0 0.0
    %6125 = vmatprep.subr.mxu0 0.0
    %6126 = vmatpush2.msra.mxu0 0.0
    %6127 = vmatprep.subr.mxu0 0.0
    %6128 = vmatpush2.msra.mxu0 0.0
    %6129 = vmatprep.subr.mxu0 0.0
    %6130 = vmatpush2.msra.mxu0 0.0
    %6131 = vmatprep.subr.mxu0 0.0
    %6132 = vmatpush2.msra.mxu0 0.0
    %6133 = vmatprep.subr.mxu0 0.0
    %6134 = vmatpush2.msra.mxu0 0.0
    %6135 = vmatprep.subr.mxu0 0.0
    %6136 = vmatpush2.msra.mxu0 0.0
    %6137 = vmatprep.subr.mxu0 0.0
    %6138 = vmatpush2.msra.mxu0 0.0
    %6139 = vmatprep.subr.mxu0 0.0
    %6140 = vmatpush2.msra.mxu0 0.0
    %6141 = vmatprep.subr.mxu0 0.0
    %6142 = vmatpush2.msra.mxu0 0.0
    %6143 = vmatprep.subr.mxu0 0.0
    %6144 = vmatpush2.msra.mxu0 0.0
    %6145 = vmatprep.subr.mxu0 0.0
    %6146 = vmatpush2.msra.mxu0 0.0
    %6147 = vmatprep.subr.mxu0 0.0
    %6148 = vmatpush2.msra.mxu0 0.0
    %6149 = vmatprep.subr.mxu0 0.0
    %6150 = vmatpush2.msra.mxu0 0.0
    %6151 = vmatprep.mubr.f32.mxu0 0.0
    %6152 = vmatmul.mubr.f32.gmra.mxu0 %v6056
    %v6153 = vpop.f32.mrf.mxu0
    %v6154 = vadd.f32 %v6085, %v6153
    %v6155 = vpop.f32.mrf.mxu0
    %6156 = vmatprep.mubr.f32.mxu0 0.0
    %6157 = vmatmul.mubr.f32.gmra.mxu0 %v6057
    %v6158 = vpop.f32.mrf.mxu0
    %v6159 = vadd.f32 %v6085, %v6158
    %v6160 = vpop.f32.mrf.mxu0
    %6161 = vmatprep.mubr.f32.mxu0 0.0
    %6162 = vmatmul.mubr.f32.gmra.mxu0 %v6058
    %v6163 = vpop.f32.mrf.mxu0
    %v6164 = vadd.f32 %v6085, %v6163
    %v6165 = vpop.f32.mrf.mxu0
    %6166 = vmatprep.mubr.f32.mxu0 0.0
    %6167 = vmatmul.mubr.f32.gmra.mxu0 %v6059
    %v6168 = vpop.f32.mrf.mxu0
    %v6169 = vadd.f32 %v6085, %v6168
    %v6170 = vpop.f32.mrf.mxu0
    %6171 = vmatprep.mubr.f32.mxu0 0.0
    %6172 = vmatmul.mubr.f32.gmra.mxu0 %v6060
    %v6173 = vpop.f32.mrf.mxu0
    %v6174 = vadd.f32 %v6085, %v6173
    %v6175 = vpop.f32.mrf.mxu0
    %6176 = vmatprep.mubr.f32.mxu0 0.0
    %6177 = vmatmul.mubr.f32.gmra.mxu0 %v6061
    %v6178 = vpop.f32.mrf.mxu0
    %v6179 = vadd.f32 %v6085, %v6178
    %v6180 = vpop.f32.mrf.mxu0
    %6181 = vmatprep.mubr.f32.mxu0 0.0
    %6182 = vmatmul.mubr.f32.gmra.mxu0 %v6062
    %v6183 = vpop.f32.mrf.mxu0
    %v6184 = vadd.f32 %v6085, %v6183
    %v6185 = vpop.f32.mrf.mxu0
    %6186 = vmatprep.mubr.f32.mxu0 0.0
    %6187 = vmatmul.mubr.f32.gmra.mxu0 %v6063
    %v6188 = vpop.f32.mrf.mxu0
    %v6189 = vadd.f32 %v6085, %v6188
    %v6190 = vpop.f32.mrf.mxu0
    %6191 = vdwg.mxu0
    %6192 = vst [vmem:[#allocation13] sm:$0xff] %v6154
    %6193 = vst [vmem:[#allocation13 + $0x8] sm:$0xff] %v6159
    %6194 = vst [vmem:[#allocation13 + $0x10] sm:$0xff] %v6164
    %6195 = vst [vmem:[#allocation13 + $0x18] sm:$0xff] %v6169
    %6196 = vst [vmem:[#allocation13 + $0x20] sm:$0xff] %v6174
    %6197 = vst [vmem:[#allocation13 + $0x28] sm:$0xff] %v6179
    %6198 = vst [vmem:[#allocation13 + $0x30] sm:$0xff] %v6184
    %6199 = vst [vmem:[#allocation13 + $0x38] sm:$0xff] %v6189
    // Predicated region
    $region66: #{tpu_custom_call.1} parent=1 // pred_check
      _
    $region67: #{tpu_custom_call.1} parent=1 // pred_check_branch
      %6201 = sbr.rel (0) target = $region69
    $region68: #{tpu_custom_call.1} parent=1 // pred_region
      %s6203 = ssub.s32 1024, 1024
      %6204 = vsyncadd [#allocation6], %s6203
      %s6205 = sshll.u32 [#allocation13], 4
      %s6206 = int_to_ptr.vmem [resolvable:$true] %s6205
      %6211 = dma.vmem_to_hbm [thread:$0]  %s6206, 1024, %s11, [#allocation6], 128, 128, 8
    $region69: #{tpu_custom_call.1} parent=1 // pred_fallthru
      _
    // Predicated region
    $region70: #{tpu_custom_call.1} parent=1 // pred_check
      _
    $region71: #{tpu_custom_call.1} parent=1 // pred_check_branch
      %6213 = sbr.rel (0) target = $region73
    $region72: #{tpu_custom_call.1} parent=1 // pred_region
      %6214 = dma.done [#allocation6], 1024
    $region73: #{tpu_custom_call.1} parent=1 // pred_fallthru
      _
    %6215 = vsyncpa [#allocation5], 1
    %6216 = vsyncpa [#allocation8], 1
    %6217 = vsyncpa [#allocation11], 1
    %6218 = vsyncpa [#allocation6], 1

</llo_original>
